<compile_context>
chip_gen: v7x
topology: tpu7x:2x2x1
jax: 0.10.0
libtpu: 0.0.40
codegen_flags: <defaults>
</compile_context>

<pallas_src>
import jax
import jax.numpy as jnp
from jax.experimental import pallas as pl
from jax.experimental.pallas import tpu as pltpu

_K1, _K2 = 3, 5
_PAD = (_K1 // 2) + (_K2 // 2)       # 3 = fused halo (1 for conv3 + 2 for conv5)
_NACC = 4                            # independent partial accumulators (ILP)


def _make_hfeu_kernel(Nb, C, H, W):
    Wp = W + 2 * _PAD
    Hp = H + 2 * _PAD
    L = H * Wp                       # lane-dense flat strip: H padded rows
    ROWBASE = _PAD * Wp + _PAD       # flat offset of image pixel (0, 0)

    def accumulate(xpad_ref, w_ref, K):
        """All K*K*C taps accumulated into one (C, L) strip."""
        shift = _PAD - K // 2        # where tap (0,0) sits inside the padded frame
        parts = [None] * _NACC
        idx = 0
        for kh in range(K):
            for kw in range(K):
                off = (kh + shift) * Wp + (kw + shift)
                for ci in range(C):
                    patch = xpad_ref[pl.ds(ci, 1), pl.ds(off, L)]      # (1, L)
                    wc = w_ref[:, pl.ds((kh * K + kw) * C + ci, 1)]    # (C, 1)
                    term = wc * patch                                  # (C, L)
                    s = idx % _NACC
                    parts[s] = term if parts[s] is None else parts[s] + term
                    idx += 1
        acc = parts[0]
        for p in parts[1:]:
            if p is not None:
                acc = acc + p
        return acc

    def kernel(w1_ref, w2_ref, mask_ref, x_ref, o_ref, xpad_ref):
        # w1_ref  : (C, 9*C)   f32 VMEM   w1[co, (kh*3+kw)*C + ci]
        # w2_ref  : (C, 25*C)  f32 VMEM
        # mask_ref: (1, L)     f32 VMEM   1.0 on real columns, 0.0 on pad columns
        # x_ref   : (Nb, C, H, W) VMEM    NCHW block
        # o_ref   : (Nb, C, H, W) VMEM
        # xpad_ref: (C, Hp*Wp) f32 VMEM   merged scratch: padded x / x_res / out
        mask = mask_ref[...]                                           # (1, L)

        for b in range(Nb):                                            # unrolled
            # ---- zero halo + fill interior (dense flat layout) --------------
            xpad_ref[...] = jnp.zeros_like(xpad_ref)
            for h in range(H):
                xpad_ref[:, pl.ds(ROWBASE + h * Wp, W)] = (
                    x_ref[b, :, h, :].astype(jnp.float32))

            # ---- stage 1: x_res = relu(conv3x3(x)) - x  (written in place) ---
            acc1 = accumulate(xpad_ref, w1_ref, _K1)
            x_cent = xpad_ref[:, pl.ds(ROWBASE, L)]        # x at the centre tap
            xpad_ref[:, pl.ds(ROWBASE, L)] = (
                (jnp.maximum(acc1, 0.0) - x_cent) * mask)  # pad columns -> 0

            # ---- stage 2: out = relu(conv5x5(x_res)) + x ---------------------
            acc2 = accumulate(xpad_ref, w2_ref, _K2)
            xpad_ref[:, pl.ds(ROWBASE, L)] = jnp.maximum(acc2, 0.0)   # staging

            for h in range(H):
                row = xpad_ref[:, pl.ds(ROWBASE + h * Wp, W)]          # (C, W)
                o_ref[b, :, h, :] = (
                    row + x_ref[b, :, h, :].astype(jnp.float32)
                ).astype(o_ref.dtype)

    return kernel


def _pick_images_per_block(n):
    """Fold images per grid step, but keep >= 2 parallel steps (v7x megacore)."""
    best = 1
    for nb in range(1, min(n // 2, 8) + 1):
        if n % nb == 0:
            best = nb
    return best


def hfeu_forward(x_nchw, w1_oihw, w2_oihw, *, images_per_block=None):
    """Fused HFEU forward.  Input/output NCHW, weights OIHW (PyTorch layout)."""
    N, C, H, W = x_nchw.shape
    assert w1_oihw.shape == (C, C, _K1, _K1), "HFEU requires Cin == Cout"
    assert w2_oihw.shape == (C, C, _K2, _K2), "HFEU requires Cin == Cout"

    Nb = images_per_block if images_per_block is not None else _pick_images_per_block(N)
    assert N % Nb == 0, "images_per_block must divide the batch"

    Wp = W + 2 * _PAD
    Hp = H + 2 * _PAD
    L = H * Wp

    # OIHW -> (Cout, K*K*Cin): column (kh*K+kw)*Cin+ci is one tap's (Cout,) weights.
    w1_mat = jnp.transpose(w1_oihw, (0, 2, 3, 1)).reshape(C, _K1 * _K1 * C).astype(jnp.float32)
    w2_mat = jnp.transpose(w2_oihw, (0, 2, 3, 1)).reshape(C, _K2 * _K2 * C).astype(jnp.float32)

    # 1.0 on real image columns of a flat padded strip, 0.0 on the pad columns.
    mask = ((jnp.arange(L) % Wp) < W).astype(jnp.float32).reshape(1, L)

    kernel = _make_hfeu_kernel(Nb, C, H, W)

    # Deliberate scoped-VMEM sizing from the real footprint (blocks are double
    # buffered by the pipeline; weights/mask/scratch are resident).
    blk_bytes = Nb * C * H * W * 4
    resident_bytes = (C * _K1 * _K1 * C + C * _K2 * _K2 * C + L + C * Hp * Wp) * 4
    vmem_limit = int(min(64 * 2**20,
                         max(16 * 2**20, 4 * (2 * 2 * blk_bytes + resident_bytes))))

    grid_spec = pltpu.PrefetchScalarGridSpec(
        num_scalar_prefetch=0,
        grid=(N // Nb,),
        in_specs=[
            pl.BlockSpec((C, _K1 * _K1 * C), lambda n: (0, 0)),   # w1 (resident)
            pl.BlockSpec((C, _K2 * _K2 * C), lambda n: (0, 0)),   # w2 (resident)
            pl.BlockSpec((1, L), lambda n: (0, 0)),               # column mask
            pl.BlockSpec((Nb, C, H, W), lambda n: (n, 0, 0, 0)),  # x
        ],
        out_specs=pl.BlockSpec((Nb, C, H, W), lambda n: (n, 0, 0, 0)),
        scratch_shapes=[pltpu.VMEM((C, Hp * Wp), jnp.float32)],   # merged scratch
    )
    return pl.pallas_call(
        kernel,
        out_shape=jax.ShapeDtypeStruct((N, C, H, W), x_nchw.dtype),
        grid_spec=grid_spec,
        compiler_params=pltpu.CompilerParams(
            dimension_semantics=("parallel",),
            vmem_limit_bytes=vmem_limit,
        ),
    )(w1_mat, w2_mat, mask, x_nchw)


def _ref_forward(x, w1_oihw, w2_oihw):
    """Pure-JAX reference (lax.conv, NCHW) for correctness checking."""
    dn = ("NCHW", "OIHW", "NCHW")
    xh = jnp.maximum(
        jax.lax.conv_general_dilated(x, w1_oihw, (1, 1), "SAME",
                                     dimension_numbers=dn), 0.0)
    xr = xh - x
    return jnp.maximum(
        jax.lax.conv_general_dilated(xr, w2_oihw, (1, 1), "SAME",
                                     dimension_numbers=dn), 0.0) + x


if __name__ == "__main__":
    N, C, H, W = 2, 4, 16, 16
    key = jax.random.PRNGKey(0)
    kx, k1, k2 = jax.random.split(key, 3)

    x = jax.random.normal(kx, (N, C, H, W), dtype=jnp.float32)

    # Deterministic "kaiming-uniform-like" init in PyTorch OIHW layout.
    b1 = 1.0 / jnp.sqrt(C * 3 * 3)
    b2 = 1.0 / jnp.sqrt(C * 5 * 5)
    w1 = jax.random.uniform(k1, (C, C, 3, 3), jnp.float32, -b1, b1)
    w2 = jax.random.uniform(k2, (C, C, 5, 5), jnp.float32, -b2, b2)

    out = jax.block_until_ready(hfeu_forward(x, w1, w2))
    ref = jax.block_until_ready(_ref_forward(x, w1, w2))

    assert out.shape == (N, C, H, W)
    assert jnp.allclose(out, ref, atol=3e-5, rtol=3e-5), \
        float(jnp.max(jnp.abs(out - ref)))
    print("KERNEL_OK")
</pallas_src>

<mosaic_0001>
module attributes {stable_mosaic.version = 11 : i64} {
  func.func @kernel(%arg0: i32, %arg1: memref<4x36xf32, #tpu.memory_space<vmem>>, %arg2: memref<4x100xf32, #tpu.memory_space<vmem>>, %arg3: memref<1x352xf32, #tpu.memory_space<vmem>>, %arg4: memref<1x4x16x16xf32, #tpu.memory_space<vmem>>, %arg5: memref<1x4x16x16xf32, #tpu.memory_space<vmem>>, %arg6: memref<4x484xf32, #tpu.memory_space<vmem>>) attributes {dimension_semantics = [#tpu.dimension_semantics<parallel>], iteration_bounds = array<i64: 2>, scalar_prefetch = 0 : i64, scratch_operands = 1 : i64, tpu.core_type = #tpu.core_type<tc>, window_params = [{pipeline_mode = #tpu.pipeline_mode<synchronous>, transform_indices = @transform_0, window_bounds = array<i64: 4, 36>}, {pipeline_mode = #tpu.pipeline_mode<synchronous>, transform_indices = @transform_1, window_bounds = array<i64: 4, 100>}, {pipeline_mode = #tpu.pipeline_mode<synchronous>, transform_indices = @transform_2, window_bounds = array<i64: 1, 352>}, {transform_indices = @transform_3, window_bounds = array<i64: 1, 4, 16, 16>}, {transform_indices = @transform_4, window_bounds = array<i64: 1, 4, 16, 16>}]} {
    %c0 = arith.constant 0 : index
    %c0_0 = arith.constant 0 : index
    %0 = vector.load %arg3[%c0, %c0_0] : memref<1x352xf32, #tpu.memory_space<vmem>>, vector<1x352xf32>
    %cst = arith.constant 0.000000e+00 : f32
    %1 = vector.broadcast %cst : f32 to vector<4x484xf32>
    %c0_1 = arith.constant 0 : index
    %c0_2 = arith.constant 0 : index
    %2 = vector.load %arg6[%c0_1, %c0_2] : memref<4x484xf32, #tpu.memory_space<vmem>>, vector<4x484xf32>
    tpu.vector_store %arg6[%c0_1, %c0_2], %1 {strides = array<i32>} : memref<4x484xf32, #tpu.memory_space<vmem>>, vector<4x484xf32>,
    %c0_3 = arith.constant 0 : index
    %c0_4 = arith.constant 0 : index
    %c0_5 = arith.constant 0 : index
    %c0_6 = arith.constant 0 : index
    %3 = vector.load %arg4[%c0_3, %c0_4, %c0_5, %c0_6] : memref<1x4x16x16xf32, #tpu.memory_space<vmem>>, vector<1x4x1x16xf32>
    %4 = vector.shape_cast %3 : vector<1x4x1x16xf32> to vector<4x16xf32>
    %c0_7 = arith.constant 0 : index
    %c69 = arith.constant 69 : index
    %5 = vector.load %arg6[%c0_7, %c69] : memref<4x484xf32, #tpu.memory_space<vmem>>, vector<4x16xf32>
    tpu.vector_store %arg6[%c0_7, %c69], %4 {strides = array<i32>} : memref<4x484xf32, #tpu.memory_space<vmem>>, vector<4x16xf32>,
    %c0_8 = arith.constant 0 : index
    %c0_9 = arith.constant 0 : index
    %c1 = arith.constant 1 : index
    %c0_10 = arith.constant 0 : index
    %6 = vector.load %arg4[%c0_8, %c0_9, %c1, %c0_10] : memref<1x4x16x16xf32, #tpu.memory_space<vmem>>, vector<1x4x1x16xf32>
    %7 = vector.shape_cast %6 : vector<1x4x1x16xf32> to vector<4x16xf32>
    %c0_11 = arith.constant 0 : index
    %c91 = arith.constant 91 : index
    %8 = vector.load %arg6[%c0_11, %c91] : memref<4x484xf32, #tpu.memory_space<vmem>>, vector<4x16xf32>
    tpu.vector_store %arg6[%c0_11, %c91], %7 {strides = array<i32>} : memref<4x484xf32, #tpu.memory_space<vmem>>, vector<4x16xf32>,
    %c0_12 = arith.constant 0 : index
    %c0_13 = arith.constant 0 : index
    %c2 = arith.constant 2 : index
    %c0_14 = arith.constant 0 : index
    %9 = vector.load %arg4[%c0_12, %c0_13, %c2, %c0_14] : memref<1x4x16x16xf32, #tpu.memory_space<vmem>>, vector<1x4x1x16xf32>
    %10 = vector.shape_cast %9 : vector<1x4x1x16xf32> to vector<4x16xf32>
    %c0_15 = arith.constant 0 : index
    %c113 = arith.constant 113 : index
    %11 = vector.load %arg6[%c0_15, %c113] : memref<4x484xf32, #tpu.memory_space<vmem>>, vector<4x16xf32>
    tpu.vector_store %arg6[%c0_15, %c113], %10 {strides = array<i32>} : memref<4x484xf32, #tpu.memory_space<vmem>>, vector<4x16xf32>,
    %c0_16 = arith.constant 0 : index
    %c0_17 = arith.constant 0 : index
    %c3 = arith.constant 3 : index
    %c0_18 = arith.constant 0 : index
    %12 = vector.load %arg4[%c0_16, %c0_17, %c3, %c0_18] : memref<1x4x16x16xf32, #tpu.memory_space<vmem>>, vector<1x4x1x16xf32>
    %13 = vector.shape_cast %12 : vector<1x4x1x16xf32> to vector<4x16xf32>
    %c0_19 = arith.constant 0 : index
    %c135 = arith.constant 135 : index
    %14 = vector.load %arg6[%c0_19, %c135] : memref<4x484xf32, #tpu.memory_space<vmem>>, vector<4x16xf32>
    tpu.vector_store %arg6[%c0_19, %c135], %13 {strides = array<i32>} : memref<4x484xf32, #tpu.memory_space<vmem>>, vector<4x16xf32>,
    %c0_20 = arith.constant 0 : index
    %c0_21 = arith.constant 0 : index
    %c4 = arith.constant 4 : index
    %c0_22 = arith.constant 0 : index
    %15 = vector.load %arg4[%c0_20, %c0_21, %c4, %c0_22] : memref<1x4x16x16xf32, #tpu.memory_space<vmem>>, vector<1x4x1x16xf32>
    %16 = vector.shape_cast %15 : vector<1x4x1x16xf32> to vector<4x16xf32>
    %c0_23 = arith.constant 0 : index
    %c157 = arith.constant 157 : index
    %17 = vector.load %arg6[%c0_23, %c157] : memref<4x484xf32, #tpu.memory_space<vmem>>, vector<4x16xf32>
    tpu.vector_store %arg6[%c0_23, %c157], %16 {strides = array<i32>} : memref<4x484xf32, #tpu.memory_space<vmem>>, vector<4x16xf32>,
    %c0_24 = arith.constant 0 : index
    %c0_25 = arith.constant 0 : index
    %c5 = arith.constant 5 : index
    %c0_26 = arith.constant 0 : index
    %18 = vector.load %arg4[%c0_24, %c0_25, %c5, %c0_26] : memref<1x4x16x16xf32, #tpu.memory_space<vmem>>, vector<1x4x1x16xf32>
    %19 = vector.shape_cast %18 : vector<1x4x1x16xf32> to vector<4x16xf32>
    %c0_27 = arith.constant 0 : index
    %c179 = arith.constant 179 : index
    %20 = vector.load %arg6[%c0_27, %c179] : memref<4x484xf32, #tpu.memory_space<vmem>>, vector<4x16xf32>
    tpu.vector_store %arg6[%c0_27, %c179], %19 {strides = array<i32>} : memref<4x484xf32, #tpu.memory_space<vmem>>, vector<4x16xf32>,
    %c0_28 = arith.constant 0 : index
    %c0_29 = arith.constant 0 : index
    %c6 = arith.constant 6 : index
    %c0_30 = arith.constant 0 : index
    %21 = vector.load %arg4[%c0_28, %c0_29, %c6, %c0_30] : memref<1x4x16x16xf32, #tpu.memory_space<vmem>>, vector<1x4x1x16xf32>
    %22 = vector.shape_cast %21 : vector<1x4x1x16xf32> to vector<4x16xf32>
    %c0_31 = arith.constant 0 : index
    %c201 = arith.constant 201 : index
    %23 = vector.load %arg6[%c0_31, %c201] : memref<4x484xf32, #tpu.memory_space<vmem>>, vector<4x16xf32>
    tpu.vector_store %arg6[%c0_31, %c201], %22 {strides = array<i32>} : memref<4x484xf32, #tpu.memory_space<vmem>>, vector<4x16xf32>,
    %c0_32 = arith.constant 0 : index
    %c0_33 = arith.constant 0 : index
    %c7 = arith.constant 7 : index
    %c0_34 = arith.constant 0 : index
    %24 = vector.load %arg4[%c0_32, %c0_33, %c7, %c0_34] : memref<1x4x16x16xf32, #tpu.memory_space<vmem>>, vector<1x4x1x16xf32>
    %25 = vector.shape_cast %24 : vector<1x4x1x16xf32> to vector<4x16xf32>
    %c0_35 = arith.constant 0 : index
    %c223 = arith.constant 223 : index
    %26 = vector.load %arg6[%c0_35, %c223] : memref<4x484xf32, #tpu.memory_space<vmem>>, vector<4x16xf32>
    tpu.vector_store %arg6[%c0_35, %c223], %25 {strides = array<i32>} : memref<4x484xf32, #tpu.memory_space<vmem>>, vector<4x16xf32>,
    %c0_36 = arith.constant 0 : index
    %c0_37 = arith.constant 0 : index
    %c8 = arith.constant 8 : index
    %c0_38 = arith.constant 0 : index
    %27 = vector.load %arg4[%c0_36, %c0_37, %c8, %c0_38] : memref<1x4x16x16xf32, #tpu.memory_space<vmem>>, vector<1x4x1x16xf32>
    %28 = vector.shape_cast %27 : vector<1x4x1x16xf32> to vector<4x16xf32>
    %c0_39 = arith.constant 0 : index
    %c245 = arith.constant 245 : index
    %29 = vector.load %arg6[%c0_39, %c245] : memref<4x484xf32, #tpu.memory_space<vmem>>, vector<4x16xf32>
    tpu.vector_store %arg6[%c0_39, %c245], %28 {strides = array<i32>} : memref<4x484xf32, #tpu.memory_space<vmem>>, vector<4x16xf32>,
    %c0_40 = arith.constant 0 : index
    %c0_41 = arith.constant 0 : index
    %c9 = arith.constant 9 : index
    %c0_42 = arith.constant 0 : index
    %30 = vector.load %arg4[%c0_40, %c0_41, %c9, %c0_42] : memref<1x4x16x16xf32, #tpu.memory_space<vmem>>, vector<1x4x1x16xf32>
    %31 = vector.shape_cast %30 : vector<1x4x1x16xf32> to vector<4x16xf32>
    %c0_43 = arith.constant 0 : index
    %c267 = arith.constant 267 : index
    %32 = vector.load %arg6[%c0_43, %c267] : memref<4x484xf32, #tpu.memory_space<vmem>>, vector<4x16xf32>
    tpu.vector_store %arg6[%c0_43, %c267], %31 {strides = array<i32>} : memref<4x484xf32, #tpu.memory_space<vmem>>, vector<4x16xf32>,
    %c0_44 = arith.constant 0 : index
    %c0_45 = arith.constant 0 : index
    %c10 = arith.constant 10 : index
    %c0_46 = arith.constant 0 : index
    %33 = vector.load %arg4[%c0_44, %c0_45, %c10, %c0_46] : memref<1x4x16x16xf32, #tpu.memory_space<vmem>>, vector<1x4x1x16xf32>
    %34 = vector.shape_cast %33 : vector<1x4x1x16xf32> to vector<4x16xf32>
    %c0_47 = arith.constant 0 : index
    %c289 = arith.constant 289 : index
    %35 = vector.load %arg6[%c0_47, %c289] : memref<4x484xf32, #tpu.memory_space<vmem>>, vector<4x16xf32>
    tpu.vector_store %arg6[%c0_47, %c289], %34 {strides = array<i32>} : memref<4x484xf32, #tpu.memory_space<vmem>>, vector<4x16xf32>,
    %c0_48 = arith.constant 0 : index
    %c0_49 = arith.constant 0 : index
    %c11 = arith.constant 11 : index
    %c0_50 = arith.constant 0 : index
    %36 = vector.load %arg4[%c0_48, %c0_49, %c11, %c0_50] : memref<1x4x16x16xf32, #tpu.memory_space<vmem>>, vector<1x4x1x16xf32>
    %37 = vector.shape_cast %36 : vector<1x4x1x16xf32> to vector<4x16xf32>
    %c0_51 = arith.constant 0 : index
    %c311 = arith.constant 311 : index
    %38 = vector.load %arg6[%c0_51, %c311] : memref<4x484xf32, #tpu.memory_space<vmem>>, vector<4x16xf32>
    tpu.vector_store %arg6[%c0_51, %c311], %37 {strides = array<i32>} : memref<4x484xf32, #tpu.memory_space<vmem>>, vector<4x16xf32>,
    %c0_52 = arith.constant 0 : index
    %c0_53 = arith.constant 0 : index
    %c12 = arith.constant 12 : index
    %c0_54 = arith.constant 0 : index
    %39 = vector.load %arg4[%c0_52, %c0_53, %c12, %c0_54] : memref<1x4x16x16xf32, #tpu.memory_space<vmem>>, vector<1x4x1x16xf32>
    %40 = vector.shape_cast %39 : vector<1x4x1x16xf32> to vector<4x16xf32>
    %c0_55 = arith.constant 0 : index
    %c333 = arith.constant 333 : index
    %41 = vector.load %arg6[%c0_55, %c333] : memref<4x484xf32, #tpu.memory_space<vmem>>, vector<4x16xf32>
    tpu.vector_store %arg6[%c0_55, %c333], %40 {strides = array<i32>} : memref<4x484xf32, #tpu.memory_space<vmem>>, vector<4x16xf32>,
    %c0_56 = arith.constant 0 : index
    %c0_57 = arith.constant 0 : index
    %c13 = arith.constant 13 : index
    %c0_58 = arith.constant 0 : index
    %42 = vector.load %arg4[%c0_56, %c0_57, %c13, %c0_58] : memref<1x4x16x16xf32, #tpu.memory_space<vmem>>, vector<1x4x1x16xf32>
    %43 = vector.shape_cast %42 : vector<1x4x1x16xf32> to vector<4x16xf32>
    %c0_59 = arith.constant 0 : index
    %c355 = arith.constant 355 : index
    %44 = vector.load %arg6[%c0_59, %c355] : memref<4x484xf32, #tpu.memory_space<vmem>>, vector<4x16xf32>
    tpu.vector_store %arg6[%c0_59, %c355], %43 {strides = array<i32>} : memref<4x484xf32, #tpu.memory_space<vmem>>, vector<4x16xf32>,
    %c0_60 = arith.constant 0 : index
    %c0_61 = arith.constant 0 : index
    %c14 = arith.constant 14 : index
    %c0_62 = arith.constant 0 : index
    %45 = vector.load %arg4[%c0_60, %c0_61, %c14, %c0_62] : memref<1x4x16x16xf32, #tpu.memory_space<vmem>>, vector<1x4x1x16xf32>
    %46 = vector.shape_cast %45 : vector<1x4x1x16xf32> to vector<4x16xf32>
    %c0_63 = arith.constant 0 : index
    %c377 = arith.constant 377 : index
    %47 = vector.load %arg6[%c0_63, %c377] : memref<4x484xf32, #tpu.memory_space<vmem>>, vector<4x16xf32>
    tpu.vector_store %arg6[%c0_63, %c377], %46 {strides = array<i32>} : memref<4x484xf32, #tpu.memory_space<vmem>>, vector<4x16xf32>,
    %c0_64 = arith.constant 0 : index
    %c0_65 = arith.constant 0 : index
    %c15 = arith.constant 15 : index
    %c0_66 = arith.constant 0 : index
    %48 = vector.load %arg4[%c0_64, %c0_65, %c15, %c0_66] : memref<1x4x16x16xf32, #tpu.memory_space<vmem>>, vector<1x4x1x16xf32>
    %49 = vector.shape_cast %48 : vector<1x4x1x16xf32> to vector<4x16xf32>
    %c0_67 = arith.constant 0 : index
    %c399 = arith.constant 399 : index
    %50 = vector.load %arg6[%c0_67, %c399] : memref<4x484xf32, #tpu.memory_space<vmem>>, vector<4x16xf32>
    tpu.vector_store %arg6[%c0_67, %c399], %49 {strides = array<i32>} : memref<4x484xf32, #tpu.memory_space<vmem>>, vector<4x16xf32>,
    %c0_68 = arith.constant 0 : index
    %c46 = arith.constant 46 : index
    %51 = vector.load %arg6[%c0_68, %c46] : memref<4x484xf32, #tpu.memory_space<vmem>>, vector<1x352xf32>
    %c0_69 = arith.constant 0 : index
    %c0_70 = arith.constant 0 : index
    %52 = vector.load %arg1[%c0_69, %c0_70] : memref<4x36xf32, #tpu.memory_space<vmem>>, vector<4x1xf32>
    %53 = vector.broadcast %52 : vector<4x1xf32> to vector<4x352xf32>
    %54 = vector.broadcast %51 : vector<1x352xf32> to vector<4x352xf32>
    %55 = arith.mulf %53, %54 : vector<4x352xf32>
    %c1_71 = arith.constant 1 : index
    %c46_72 = arith.constant 46 : index
    %56 = vector.load %arg6[%c1_71, %c46_72] : memref<4x484xf32, #tpu.memory_space<vmem>>, vector<1x352xf32>
    %c0_73 = arith.constant 0 : index
    %c1_74 = arith.constant 1 : index
    %57 = vector.load %arg1[%c0_73, %c1_74] : memref<4x36xf32, #tpu.memory_space<vmem>>, vector<4x1xf32>
    %58 = vector.broadcast %57 : vector<4x1xf32> to vector<4x352xf32>
    %59 = vector.broadcast %56 : vector<1x352xf32> to vector<4x352xf32>
    %60 = arith.mulf %58, %59 : vector<4x352xf32>
    %c2_75 = arith.constant 2 : index
    %c46_76 = arith.constant 46 : index
    %61 = vector.load %arg6[%c2_75, %c46_76] : memref<4x484xf32, #tpu.memory_space<vmem>>, vector<1x352xf32>
    %c0_77 = arith.constant 0 : index
    %c2_78 = arith.constant 2 : index
    %62 = vector.load %arg1[%c0_77, %c2_78] : memref<4x36xf32, #tpu.memory_space<vmem>>, vector<4x1xf32>
    %63 = vector.broadcast %62 : vector<4x1xf32> to vector<4x352xf32>
    %64 = vector.broadcast %61 : vector<1x352xf32> to vector<4x352xf32>
    %65 = arith.mulf %63, %64 : vector<4x352xf32>
    %c3_79 = arith.constant 3 : index
    %c46_80 = arith.constant 46 : index
    %66 = vector.load %arg6[%c3_79, %c46_80] : memref<4x484xf32, #tpu.memory_space<vmem>>, vector<1x352xf32>
    %c0_81 = arith.constant 0 : index
    %c3_82 = arith.constant 3 : index
    %67 = vector.load %arg1[%c0_81, %c3_82] : memref<4x36xf32, #tpu.memory_space<vmem>>, vector<4x1xf32>
    %68 = vector.broadcast %67 : vector<4x1xf32> to vector<4x352xf32>
    %69 = vector.broadcast %66 : vector<1x352xf32> to vector<4x352xf32>
    %70 = arith.mulf %68, %69 : vector<4x352xf32>
    %c0_83 = arith.constant 0 : index
    %c47 = arith.constant 47 : index
    %71 = vector.load %arg6[%c0_83, %c47] : memref<4x484xf32, #tpu.memory_space<vmem>>, vector<1x352xf32>
    %c0_84 = arith.constant 0 : index
    %c4_85 = arith.constant 4 : index
    %72 = vector.load %arg1[%c0_84, %c4_85] : memref<4x36xf32, #tpu.memory_space<vmem>>, vector<4x1xf32>
    %73 = vector.broadcast %72 : vector<4x1xf32> to vector<4x352xf32>
    %74 = vector.broadcast %71 : vector<1x352xf32> to vector<4x352xf32>
    %75 = arith.mulf %73, %74 : vector<4x352xf32>
    %76 = arith.addf %55, %75 : vector<4x352xf32>
    %c1_86 = arith.constant 1 : index
    %c47_87 = arith.constant 47 : index
    %77 = vector.load %arg6[%c1_86, %c47_87] : memref<4x484xf32, #tpu.memory_space<vmem>>, vector<1x352xf32>
    %c0_88 = arith.constant 0 : index
    %c5_89 = arith.constant 5 : index
    %78 = vector.load %arg1[%c0_88, %c5_89] : memref<4x36xf32, #tpu.memory_space<vmem>>, vector<4x1xf32>
    %79 = vector.broadcast %78 : vector<4x1xf32> to vector<4x352xf32>
    %80 = vector.broadcast %77 : vector<1x352xf32> to vector<4x352xf32>
    %81 = arith.mulf %79, %80 : vector<4x352xf32>
    %82 = arith.addf %60, %81 : vector<4x352xf32>
    %c2_90 = arith.constant 2 : index
    %c47_91 = arith.constant 47 : index
    %83 = vector.load %arg6[%c2_90, %c47_91] : memref<4x484xf32, #tpu.memory_space<vmem>>, vector<1x352xf32>
    %c0_92 = arith.constant 0 : index
    %c6_93 = arith.constant 6 : index
    %84 = vector.load %arg1[%c0_92, %c6_93] : memref<4x36xf32, #tpu.memory_space<vmem>>, vector<4x1xf32>
    %85 = vector.broadcast %84 : vector<4x1xf32> to vector<4x352xf32>
    %86 = vector.broadcast %83 : vector<1x352xf32> to vector<4x352xf32>
    %87 = arith.mulf %85, %86 : vector<4x352xf32>
    %88 = arith.addf %65, %87 : vector<4x352xf32>
    %c3_94 = arith.constant 3 : index
    %c47_95 = arith.constant 47 : index
    %89 = vector.load %arg6[%c3_94, %c47_95] : memref<4x484xf32, #tpu.memory_space<vmem>>, vector<1x352xf32>
    %c0_96 = arith.constant 0 : index
    %c7_97 = arith.constant 7 : index
    %90 = vector.load %arg1[%c0_96, %c7_97] : memref<4x36xf32, #tpu.memory_space<vmem>>, vector<4x1xf32>
    %91 = vector.broadcast %90 : vector<4x1xf32> to vector<4x352xf32>
    %92 = vector.broadcast %89 : vector<1x352xf32> to vector<4x352xf32>
    %93 = arith.mulf %91, %92 : vector<4x352xf32>
    %94 = arith.addf %70, %93 : vector<4x352xf32>
    %c0_98 = arith.constant 0 : index
    %c48 = arith.constant 48 : index
    %95 = vector.load %arg6[%c0_98, %c48] : memref<4x484xf32, #tpu.memory_space<vmem>>, vector<1x352xf32>
    %c0_99 = arith.constant 0 : index
    %c8_100 = arith.constant 8 : index
    %96 = vector.load %arg1[%c0_99, %c8_100] : memref<4x36xf32, #tpu.memory_space<vmem>>, vector<4x1xf32>
    %97 = vector.broadcast %96 : vector<4x1xf32> to vector<4x352xf32>
    %98 = vector.broadcast %95 : vector<1x352xf32> to vector<4x352xf32>
    %99 = arith.mulf %97, %98 : vector<4x352xf32>
    %100 = arith.addf %76, %99 : vector<4x352xf32>
    %c1_101 = arith.constant 1 : index
    %c48_102 = arith.constant 48 : index
    %101 = vector.load %arg6[%c1_101, %c48_102] : memref<4x484xf32, #tpu.memory_space<vmem>>, vector<1x352xf32>
    %c0_103 = arith.constant 0 : index
    %c9_104 = arith.constant 9 : index
    %102 = vector.load %arg1[%c0_103, %c9_104] : memref<4x36xf32, #tpu.memory_space<vmem>>, vector<4x1xf32>
    %103 = vector.broadcast %102 : vector<4x1xf32> to vector<4x352xf32>
    %104 = vector.broadcast %101 : vector<1x352xf32> to vector<4x352xf32>
    %105 = arith.mulf %103, %104 : vector<4x352xf32>
    %106 = arith.addf %82, %105 : vector<4x352xf32>
    %c2_105 = arith.constant 2 : index
    %c48_106 = arith.constant 48 : index
    %107 = vector.load %arg6[%c2_105, %c48_106] : memref<4x484xf32, #tpu.memory_space<vmem>>, vector<1x352xf32>
    %c0_107 = arith.constant 0 : index
    %c10_108 = arith.constant 10 : index
    %108 = vector.load %arg1[%c0_107, %c10_108] : memref<4x36xf32, #tpu.memory_space<vmem>>, vector<4x1xf32>
    %109 = vector.broadcast %108 : vector<4x1xf32> to vector<4x352xf32>
    %110 = vector.broadcast %107 : vector<1x352xf32> to vector<4x352xf32>
    %111 = arith.mulf %109, %110 : vector<4x352xf32>
    %112 = arith.addf %88, %111 : vector<4x352xf32>
    %c3_109 = arith.constant 3 : index
    %c48_110 = arith.constant 48 : index
    %113 = vector.load %arg6[%c3_109, %c48_110] : memref<4x484xf32, #tpu.memory_space<vmem>>, vector<1x352xf32>
    %c0_111 = arith.constant 0 : index
    %c11_112 = arith.constant 11 : index
    %114 = vector.load %arg1[%c0_111, %c11_112] : memref<4x36xf32, #tpu.memory_space<vmem>>, vector<4x1xf32>
    %115 = vector.broadcast %114 : vector<4x1xf32> to vector<4x352xf32>
    %116 = vector.broadcast %113 : vector<1x352xf32> to vector<4x352xf32>
    %117 = arith.mulf %115, %116 : vector<4x352xf32>
    %118 = arith.addf %94, %117 : vector<4x352xf32>
    %c0_113 = arith.constant 0 : index
    %c68 = arith.constant 68 : index
    %119 = vector.load %arg6[%c0_113, %c68] : memref<4x484xf32, #tpu.memory_space<vmem>>, vector<1x352xf32>
    %c0_114 = arith.constant 0 : index
    %c12_115 = arith.constant 12 : index
    %120 = vector.load %arg1[%c0_114, %c12_115] : memref<4x36xf32, #tpu.memory_space<vmem>>, vector<4x1xf32>
    %121 = vector.broadcast %120 : vector<4x1xf32> to vector<4x352xf32>
    %122 = vector.broadcast %119 : vector<1x352xf32> to vector<4x352xf32>
    %123 = arith.mulf %121, %122 : vector<4x352xf32>
    %124 = arith.addf %100, %123 : vector<4x352xf32>
    %c1_116 = arith.constant 1 : index
    %c68_117 = arith.constant 68 : index
    %125 = vector.load %arg6[%c1_116, %c68_117] : memref<4x484xf32, #tpu.memory_space<vmem>>, vector<1x352xf32>
    %c0_118 = arith.constant 0 : index
    %c13_119 = arith.constant 13 : index
    %126 = vector.load %arg1[%c0_118, %c13_119] : memref<4x36xf32, #tpu.memory_space<vmem>>, vector<4x1xf32>
    %127 = vector.broadcast %126 : vector<4x1xf32> to vector<4x352xf32>
    %128 = vector.broadcast %125 : vector<1x352xf32> to vector<4x352xf32>
    %129 = arith.mulf %127, %128 : vector<4x352xf32>
    %130 = arith.addf %106, %129 : vector<4x352xf32>
    %c2_120 = arith.constant 2 : index
    %c68_121 = arith.constant 68 : index
    %131 = vector.load %arg6[%c2_120, %c68_121] : memref<4x484xf32, #tpu.memory_space<vmem>>, vector<1x352xf32>
    %c0_122 = arith.constant 0 : index
    %c14_123 = arith.constant 14 : index
    %132 = vector.load %arg1[%c0_122, %c14_123] : memref<4x36xf32, #tpu.memory_space<vmem>>, vector<4x1xf32>
    %133 = vector.broadcast %132 : vector<4x1xf32> to vector<4x352xf32>
    %134 = vector.broadcast %131 : vector<1x352xf32> to vector<4x352xf32>
    %135 = arith.mulf %133, %134 : vector<4x352xf32>
    %136 = arith.addf %112, %135 : vector<4x352xf32>
    %c3_124 = arith.constant 3 : index
    %c68_125 = arith.constant 68 : index
    %137 = vector.load %arg6[%c3_124, %c68_125] : memref<4x484xf32, #tpu.memory_space<vmem>>, vector<1x352xf32>
    %c0_126 = arith.constant 0 : index
    %c15_127 = arith.constant 15 : index
    %138 = vector.load %arg1[%c0_126, %c15_127] : memref<4x36xf32, #tpu.memory_space<vmem>>, vector<4x1xf32>
    %139 = vector.broadcast %138 : vector<4x1xf32> to vector<4x352xf32>
    %140 = vector.broadcast %137 : vector<1x352xf32> to vector<4x352xf32>
    %141 = arith.mulf %139, %140 : vector<4x352xf32>
    %142 = arith.addf %118, %141 : vector<4x352xf32>
    %c0_128 = arith.constant 0 : index
    %c69_129 = arith.constant 69 : index
    %143 = vector.load %arg6[%c0_128, %c69_129] : memref<4x484xf32, #tpu.memory_space<vmem>>, vector<1x352xf32>
    %c0_130 = arith.constant 0 : index
    %c16 = arith.constant 16 : index
    %144 = vector.load %arg1[%c0_130, %c16] : memref<4x36xf32, #tpu.memory_space<vmem>>, vector<4x1xf32>
    %145 = vector.broadcast %144 : vector<4x1xf32> to vector<4x352xf32>
    %146 = vector.broadcast %143 : vector<1x352xf32> to vector<4x352xf32>
    %147 = arith.mulf %145, %146 : vector<4x352xf32>
    %148 = arith.addf %124, %147 : vector<4x352xf32>
    %c1_131 = arith.constant 1 : index
    %c69_132 = arith.constant 69 : index
    %149 = vector.load %arg6[%c1_131, %c69_132] : memref<4x484xf32, #tpu.memory_space<vmem>>, vector<1x352xf32>
    %c0_133 = arith.constant 0 : index
    %c17 = arith.constant 17 : index
    %150 = vector.load %arg1[%c0_133, %c17] : memref<4x36xf32, #tpu.memory_space<vmem>>, vector<4x1xf32>
    %151 = vector.broadcast %150 : vector<4x1xf32> to vector<4x352xf32>
    %152 = vector.broadcast %149 : vector<1x352xf32> to vector<4x352xf32>
    %153 = arith.mulf %151, %152 : vector<4x352xf32>
    %154 = arith.addf %130, %153 : vector<4x352xf32>
    %c2_134 = arith.constant 2 : index
    %c69_135 = arith.constant 69 : index
    %155 = vector.load %arg6[%c2_134, %c69_135] : memref<4x484xf32, #tpu.memory_space<vmem>>, vector<1x352xf32>
    %c0_136 = arith.constant 0 : index
    %c18 = arith.constant 18 : index
    %156 = vector.load %arg1[%c0_136, %c18] : memref<4x36xf32, #tpu.memory_space<vmem>>, vector<4x1xf32>
    %157 = vector.broadcast %156 : vector<4x1xf32> to vector<4x352xf32>
    %158 = vector.broadcast %155 : vector<1x352xf32> to vector<4x352xf32>
    %159 = arith.mulf %157, %158 : vector<4x352xf32>
    %160 = arith.addf %136, %159 : vector<4x352xf32>
    %c3_137 = arith.constant 3 : index
    %c69_138 = arith.constant 69 : index
    %161 = vector.load %arg6[%c3_137, %c69_138] : memref<4x484xf32, #tpu.memory_space<vmem>>, vector<1x352xf32>
    %c0_139 = arith.constant 0 : index
    %c19 = arith.constant 19 : index
    %162 = vector.load %arg1[%c0_139, %c19] : memref<4x36xf32, #tpu.memory_space<vmem>>, vector<4x1xf32>
    %163 = vector.broadcast %162 : vector<4x1xf32> to vector<4x352xf32>
    %164 = vector.broadcast %161 : vector<1x352xf32> to vector<4x352xf32>
    %165 = arith.mulf %163, %164 : vector<4x352xf32>
    %166 = arith.addf %142, %165 : vector<4x352xf32>
    %c0_140 = arith.constant 0 : index
    %c70 = arith.constant 70 : index
    %167 = vector.load %arg6[%c0_140, %c70] : memref<4x484xf32, #tpu.memory_space<vmem>>, vector<1x352xf32>
    %c0_141 = arith.constant 0 : index
    %c20 = arith.constant 20 : index
    %168 = vector.load %arg1[%c0_141, %c20] : memref<4x36xf32, #tpu.memory_space<vmem>>, vector<4x1xf32>
    %169 = vector.broadcast %168 : vector<4x1xf32> to vector<4x352xf32>
    %170 = vector.broadcast %167 : vector<1x352xf32> to vector<4x352xf32>
    %171 = arith.mulf %169, %170 : vector<4x352xf32>
    %172 = arith.addf %148, %171 : vector<4x352xf32>
    %c1_142 = arith.constant 1 : index
    %c70_143 = arith.constant 70 : index
    %173 = vector.load %arg6[%c1_142, %c70_143] : memref<4x484xf32, #tpu.memory_space<vmem>>, vector<1x352xf32>
    %c0_144 = arith.constant 0 : index
    %c21 = arith.constant 21 : index
    %174 = vector.load %arg1[%c0_144, %c21] : memref<4x36xf32, #tpu.memory_space<vmem>>, vector<4x1xf32>
    %175 = vector.broadcast %174 : vector<4x1xf32> to vector<4x352xf32>
    %176 = vector.broadcast %173 : vector<1x352xf32> to vector<4x352xf32>
    %177 = arith.mulf %175, %176 : vector<4x352xf32>
    %178 = arith.addf %154, %177 : vector<4x352xf32>
    %c2_145 = arith.constant 2 : index
    %c70_146 = arith.constant 70 : index
    %179 = vector.load %arg6[%c2_145, %c70_146] : memref<4x484xf32, #tpu.memory_space<vmem>>, vector<1x352xf32>
    %c0_147 = arith.constant 0 : index
    %c22 = arith.constant 22 : index
    %180 = vector.load %arg1[%c0_147, %c22] : memref<4x36xf32, #tpu.memory_space<vmem>>, vector<4x1xf32>
    %181 = vector.broadcast %180 : vector<4x1xf32> to vector<4x352xf32>
    %182 = vector.broadcast %179 : vector<1x352xf32> to vector<4x352xf32>
    %183 = arith.mulf %181, %182 : vector<4x352xf32>
    %184 = arith.addf %160, %183 : vector<4x352xf32>
    %c3_148 = arith.constant 3 : index
    %c70_149 = arith.constant 70 : index
    %185 = vector.load %arg6[%c3_148, %c70_149] : memref<4x484xf32, #tpu.memory_space<vmem>>, vector<1x352xf32>
    %c0_150 = arith.constant 0 : index
    %c23 = arith.constant 23 : index
    %186 = vector.load %arg1[%c0_150, %c23] : memref<4x36xf32, #tpu.memory_space<vmem>>, vector<4x1xf32>
    %187 = vector.broadcast %186 : vector<4x1xf32> to vector<4x352xf32>
    %188 = vector.broadcast %185 : vector<1x352xf32> to vector<4x352xf32>
    %189 = arith.mulf %187, %188 : vector<4x352xf32>
    %190 = arith.addf %166, %189 : vector<4x352xf32>
    %c0_151 = arith.constant 0 : index
    %c90 = arith.constant 90 : index
    %191 = vector.load %arg6[%c0_151, %c90] : memref<4x484xf32, #tpu.memory_space<vmem>>, vector<1x352xf32>
    %c0_152 = arith.constant 0 : index
    %c24 = arith.constant 24 : index
    %192 = vector.load %arg1[%c0_152, %c24] : memref<4x36xf32, #tpu.memory_space<vmem>>, vector<4x1xf32>
    %193 = vector.broadcast %192 : vector<4x1xf32> to vector<4x352xf32>
    %194 = vector.broadcast %191 : vector<1x352xf32> to vector<4x352xf32>
    %195 = arith.mulf %193, %194 : vector<4x352xf32>
    %196 = arith.addf %172, %195 : vector<4x352xf32>
    %c1_153 = arith.constant 1 : index
    %c90_154 = arith.constant 90 : index
    %197 = vector.load %arg6[%c1_153, %c90_154] : memref<4x484xf32, #tpu.memory_space<vmem>>, vector<1x352xf32>
    %c0_155 = arith.constant 0 : index
    %c25 = arith.constant 25 : index
    %198 = vector.load %arg1[%c0_155, %c25] : memref<4x36xf32, #tpu.memory_space<vmem>>, vector<4x1xf32>
    %199 = vector.broadcast %198 : vector<4x1xf32> to vector<4x352xf32>
    %200 = vector.broadcast %197 : vector<1x352xf32> to vector<4x352xf32>
    %201 = arith.mulf %199, %200 : vector<4x352xf32>
    %202 = arith.addf %178, %201 : vector<4x352xf32>
    %c2_156 = arith.constant 2 : index
    %c90_157 = arith.constant 90 : index
    %203 = vector.load %arg6[%c2_156, %c90_157] : memref<4x484xf32, #tpu.memory_space<vmem>>, vector<1x352xf32>
    %c0_158 = arith.constant 0 : index
    %c26 = arith.constant 26 : index
    %204 = vector.load %arg1[%c0_158, %c26] : memref<4x36xf32, #tpu.memory_space<vmem>>, vector<4x1xf32>
    %205 = vector.broadcast %204 : vector<4x1xf32> to vector<4x352xf32>
    %206 = vector.broadcast %203 : vector<1x352xf32> to vector<4x352xf32>
    %207 = arith.mulf %205, %206 : vector<4x352xf32>
    %208 = arith.addf %184, %207 : vector<4x352xf32>
    %c3_159 = arith.constant 3 : index
    %c90_160 = arith.constant 90 : index
    %209 = vector.load %arg6[%c3_159, %c90_160] : memref<4x484xf32, #tpu.memory_space<vmem>>, vector<1x352xf32>
    %c0_161 = arith.constant 0 : index
    %c27 = arith.constant 27 : index
    %210 = vector.load %arg1[%c0_161, %c27] : memref<4x36xf32, #tpu.memory_space<vmem>>, vector<4x1xf32>
    %211 = vector.broadcast %210 : vector<4x1xf32> to vector<4x352xf32>
    %212 = vector.broadcast %209 : vector<1x352xf32> to vector<4x352xf32>
    %213 = arith.mulf %211, %212 : vector<4x352xf32>
    %214 = arith.addf %190, %213 : vector<4x352xf32>
    %c0_162 = arith.constant 0 : index
    %c91_163 = arith.constant 91 : index
    %215 = vector.load %arg6[%c0_162, %c91_163] : memref<4x484xf32, #tpu.memory_space<vmem>>, vector<1x352xf32>
    %c0_164 = arith.constant 0 : index
    %c28 = arith.constant 28 : index
    %216 = vector.load %arg1[%c0_164, %c28] : memref<4x36xf32, #tpu.memory_space<vmem>>, vector<4x1xf32>
    %217 = vector.broadcast %216 : vector<4x1xf32> to vector<4x352xf32>
    %218 = vector.broadcast %215 : vector<1x352xf32> to vector<4x352xf32>
    %219 = arith.mulf %217, %218 : vector<4x352xf32>
    %220 = arith.addf %196, %219 : vector<4x352xf32>
    %c1_165 = arith.constant 1 : index
    %c91_166 = arith.constant 91 : index
    %221 = vector.load %arg6[%c1_165, %c91_166] : memref<4x484xf32, #tpu.memory_space<vmem>>, vector<1x352xf32>
    %c0_167 = arith.constant 0 : index
    %c29 = arith.constant 29 : index
    %222 = vector.load %arg1[%c0_167, %c29] : memref<4x36xf32, #tpu.memory_space<vmem>>, vector<4x1xf32>
    %223 = vector.broadcast %222 : vector<4x1xf32> to vector<4x352xf32>
    %224 = vector.broadcast %221 : vector<1x352xf32> to vector<4x352xf32>
    %225 = arith.mulf %223, %224 : vector<4x352xf32>
    %226 = arith.addf %202, %225 : vector<4x352xf32>
    %c2_168 = arith.constant 2 : index
    %c91_169 = arith.constant 91 : index
    %227 = vector.load %arg6[%c2_168, %c91_169] : memref<4x484xf32, #tpu.memory_space<vmem>>, vector<1x352xf32>
    %c0_170 = arith.constant 0 : index
    %c30 = arith.constant 30 : index
    %228 = vector.load %arg1[%c0_170, %c30] : memref<4x36xf32, #tpu.memory_space<vmem>>, vector<4x1xf32>
    %229 = vector.broadcast %228 : vector<4x1xf32> to vector<4x352xf32>
    %230 = vector.broadcast %227 : vector<1x352xf32> to vector<4x352xf32>
    %231 = arith.mulf %229, %230 : vector<4x352xf32>
    %232 = arith.addf %208, %231 : vector<4x352xf32>
    %c3_171 = arith.constant 3 : index
    %c91_172 = arith.constant 91 : index
    %233 = vector.load %arg6[%c3_171, %c91_172] : memref<4x484xf32, #tpu.memory_space<vmem>>, vector<1x352xf32>
    %c0_173 = arith.constant 0 : index
    %c31 = arith.constant 31 : index
    %234 = vector.load %arg1[%c0_173, %c31] : memref<4x36xf32, #tpu.memory_space<vmem>>, vector<4x1xf32>
    %235 = vector.broadcast %234 : vector<4x1xf32> to vector<4x352xf32>
    %236 = vector.broadcast %233 : vector<1x352xf32> to vector<4x352xf32>
    %237 = arith.mulf %235, %236 : vector<4x352xf32>
    %238 = arith.addf %214, %237 : vector<4x352xf32>
    %c0_174 = arith.constant 0 : index
    %c92 = arith.constant 92 : index
    %239 = vector.load %arg6[%c0_174, %c92] : memref<4x484xf32, #tpu.memory_space<vmem>>, vector<1x352xf32>
    %c0_175 = arith.constant 0 : index
    %c32 = arith.constant 32 : index
    %240 = vector.load %arg1[%c0_175, %c32] : memref<4x36xf32, #tpu.memory_space<vmem>>, vector<4x1xf32>
    %241 = vector.broadcast %240 : vector<4x1xf32> to vector<4x352xf32>
    %242 = vector.broadcast %239 : vector<1x352xf32> to vector<4x352xf32>
    %243 = arith.mulf %241, %242 : vector<4x352xf32>
    %244 = arith.addf %220, %243 : vector<4x352xf32>
    %c1_176 = arith.constant 1 : index
    %c92_177 = arith.constant 92 : index
    %245 = vector.load %arg6[%c1_176, %c92_177] : memref<4x484xf32, #tpu.memory_space<vmem>>, vector<1x352xf32>
    %c0_178 = arith.constant 0 : index
    %c33 = arith.constant 33 : index
    %246 = vector.load %arg1[%c0_178, %c33] : memref<4x36xf32, #tpu.memory_space<vmem>>, vector<4x1xf32>
    %247 = vector.broadcast %246 : vector<4x1xf32> to vector<4x352xf32>
    %248 = vector.broadcast %245 : vector<1x352xf32> to vector<4x352xf32>
    %249 = arith.mulf %247, %248 : vector<4x352xf32>
    %250 = arith.addf %226, %249 : vector<4x352xf32>
    %c2_179 = arith.constant 2 : index
    %c92_180 = arith.constant 92 : index
    %251 = vector.load %arg6[%c2_179, %c92_180] : memref<4x484xf32, #tpu.memory_space<vmem>>, vector<1x352xf32>
    %c0_181 = arith.constant 0 : index
    %c34 = arith.constant 34 : index
    %252 = vector.load %arg1[%c0_181, %c34] : memref<4x36xf32, #tpu.memory_space<vmem>>, vector<4x1xf32>
    %253 = vector.broadcast %252 : vector<4x1xf32> to vector<4x352xf32>
    %254 = vector.broadcast %251 : vector<1x352xf32> to vector<4x352xf32>
    %255 = arith.mulf %253, %254 : vector<4x352xf32>
    %256 = arith.addf %232, %255 : vector<4x352xf32>
    %c3_182 = arith.constant 3 : index
    %c92_183 = arith.constant 92 : index
    %257 = vector.load %arg6[%c3_182, %c92_183] : memref<4x484xf32, #tpu.memory_space<vmem>>, vector<1x352xf32>
    %c0_184 = arith.constant 0 : index
    %c35 = arith.constant 35 : index
    %258 = vector.load %arg1[%c0_184, %c35] : memref<4x36xf32, #tpu.memory_space<vmem>>, vector<4x1xf32>
    %259 = vector.broadcast %258 : vector<4x1xf32> to vector<4x352xf32>
    %260 = vector.broadcast %257 : vector<1x352xf32> to vector<4x352xf32>
    %261 = arith.mulf %259, %260 : vector<4x352xf32>
    %262 = arith.addf %238, %261 : vector<4x352xf32>
    %263 = arith.addf %244, %250 : vector<4x352xf32>
    %264 = arith.addf %263, %256 : vector<4x352xf32>
    %265 = arith.addf %264, %262 : vector<4x352xf32>
    %c0_185 = arith.constant 0 : index
    %c69_186 = arith.constant 69 : index
    %266 = vector.load %arg6[%c0_185, %c69_186] : memref<4x484xf32, #tpu.memory_space<vmem>>, vector<4x352xf32>
    %cst_187 = arith.constant 0.000000e+00 : f32
    %267 = vector.broadcast %cst_187 : f32 to vector<4x352xf32>
    %268 = arith.maximumf %265, %267 : vector<4x352xf32>
    %269 = arith.subf %268, %266 : vector<4x352xf32>
    %270 = vector.broadcast %0 : vector<1x352xf32> to vector<4x352xf32>
    %271 = arith.mulf %269, %270 : vector<4x352xf32>
    %c0_188 = arith.constant 0 : index
    %c69_189 = arith.constant 69 : index
    %272 = vector.load %arg6[%c0_188, %c69_189] : memref<4x484xf32, #tpu.memory_space<vmem>>, vector<4x352xf32>
    tpu.vector_store %arg6[%c0_188, %c69_189], %271 {strides = array<i32>} : memref<4x484xf32, #tpu.memory_space<vmem>>, vector<4x352xf32>,
    %c0_190 = arith.constant 0 : index
    %c23_191 = arith.constant 23 : index
    %273 = vector.load %arg6[%c0_190, %c23_191] : memref<4x484xf32, #tpu.memory_space<vmem>>, vector<1x352xf32>
    %c0_192 = arith.constant 0 : index
    %c0_193 = arith.constant 0 : index
    %274 = vector.load %arg2[%c0_192, %c0_193] : memref<4x100xf32, #tpu.memory_space<vmem>>, vector<4x1xf32>
    %275 = vector.broadcast %274 : vector<4x1xf32> to vector<4x352xf32>
    %276 = vector.broadcast %273 : vector<1x352xf32> to vector<4x352xf32>
    %277 = arith.mulf %275, %276 : vector<4x352xf32>
    %c1_194 = arith.constant 1 : index
    %c23_195 = arith.constant 23 : index
    %278 = vector.load %arg6[%c1_194, %c23_195] : memref<4x484xf32, #tpu.memory_space<vmem>>, vector<1x352xf32>
    %c0_196 = arith.constant 0 : index
    %c1_197 = arith.constant 1 : index
    %279 = vector.load %arg2[%c0_196, %c1_197] : memref<4x100xf32, #tpu.memory_space<vmem>>, vector<4x1xf32>
    %280 = vector.broadcast %279 : vector<4x1xf32> to vector<4x352xf32>
    %281 = vector.broadcast %278 : vector<1x352xf32> to vector<4x352xf32>
    %282 = arith.mulf %280, %281 : vector<4x352xf32>
    %c2_198 = arith.constant 2 : index
    %c23_199 = arith.constant 23 : index
    %283 = vector.load %arg6[%c2_198, %c23_199] : memref<4x484xf32, #tpu.memory_space<vmem>>, vector<1x352xf32>
    %c0_200 = arith.constant 0 : index
    %c2_201 = arith.constant 2 : index
    %284 = vector.load %arg2[%c0_200, %c2_201] : memref<4x100xf32, #tpu.memory_space<vmem>>, vector<4x1xf32>
    %285 = vector.broadcast %284 : vector<4x1xf32> to vector<4x352xf32>
    %286 = vector.broadcast %283 : vector<1x352xf32> to vector<4x352xf32>
    %287 = arith.mulf %285, %286 : vector<4x352xf32>
    %c3_202 = arith.constant 3 : index
    %c23_203 = arith.constant 23 : index
    %288 = vector.load %arg6[%c3_202, %c23_203] : memref<4x484xf32, #tpu.memory_space<vmem>>, vector<1x352xf32>
    %c0_204 = arith.constant 0 : index
    %c3_205 = arith.constant 3 : index
    %289 = vector.load %arg2[%c0_204, %c3_205] : memref<4x100xf32, #tpu.memory_space<vmem>>, vector<4x1xf32>
    %290 = vector.broadcast %289 : vector<4x1xf32> to vector<4x352xf32>
    %291 = vector.broadcast %288 : vector<1x352xf32> to vector<4x352xf32>
    %292 = arith.mulf %290, %291 : vector<4x352xf32>
    %c0_206 = arith.constant 0 : index
    %c24_207 = arith.constant 24 : index
    %293 = vector.load %arg6[%c0_206, %c24_207] : memref<4x484xf32, #tpu.memory_space<vmem>>, vector<1x352xf32>
    %c0_208 = arith.constant 0 : index
    %c4_209 = arith.constant 4 : index
    %294 = vector.load %arg2[%c0_208, %c4_209] : memref<4x100xf32, #tpu.memory_space<vmem>>, vector<4x1xf32>
    %295 = vector.broadcast %294 : vector<4x1xf32> to vector<4x352xf32>
    %296 = vector.broadcast %293 : vector<1x352xf32> to vector<4x352xf32>
    %297 = arith.mulf %295, %296 : vector<4x352xf32>
    %298 = arith.addf %277, %297 : vector<4x352xf32>
    %c1_210 = arith.constant 1 : index
    %c24_211 = arith.constant 24 : index
    %299 = vector.load %arg6[%c1_210, %c24_211] : memref<4x484xf32, #tpu.memory_space<vmem>>, vector<1x352xf32>
    %c0_212 = arith.constant 0 : index
    %c5_213 = arith.constant 5 : index
    %300 = vector.load %arg2[%c0_212, %c5_213] : memref<4x100xf32, #tpu.memory_space<vmem>>, vector<4x1xf32>
    %301 = vector.broadcast %300 : vector<4x1xf32> to vector<4x352xf32>
    %302 = vector.broadcast %299 : vector<1x352xf32> to vector<4x352xf32>
    %303 = arith.mulf %301, %302 : vector<4x352xf32>
    %304 = arith.addf %282, %303 : vector<4x352xf32>
    %c2_214 = arith.constant 2 : index
    %c24_215 = arith.constant 24 : index
    %305 = vector.load %arg6[%c2_214, %c24_215] : memref<4x484xf32, #tpu.memory_space<vmem>>, vector<1x352xf32>
    %c0_216 = arith.constant 0 : index
    %c6_217 = arith.constant 6 : index
    %306 = vector.load %arg2[%c0_216, %c6_217] : memref<4x100xf32, #tpu.memory_space<vmem>>, vector<4x1xf32>
    %307 = vector.broadcast %306 : vector<4x1xf32> to vector<4x352xf32>
    %308 = vector.broadcast %305 : vector<1x352xf32> to vector<4x352xf32>
    %309 = arith.mulf %307, %308 : vector<4x352xf32>
    %310 = arith.addf %287, %309 : vector<4x352xf32>
    %c3_218 = arith.constant 3 : index
    %c24_219 = arith.constant 24 : index
    %311 = vector.load %arg6[%c3_218, %c24_219] : memref<4x484xf32, #tpu.memory_space<vmem>>, vector<1x352xf32>
    %c0_220 = arith.constant 0 : index
    %c7_221 = arith.constant 7 : index
    %312 = vector.load %arg2[%c0_220, %c7_221] : memref<4x100xf32, #tpu.memory_space<vmem>>, vector<4x1xf32>
    %313 = vector.broadcast %312 : vector<4x1xf32> to vector<4x352xf32>
    %314 = vector.broadcast %311 : vector<1x352xf32> to vector<4x352xf32>
    %315 = arith.mulf %313, %314 : vector<4x352xf32>
    %316 = arith.addf %292, %315 : vector<4x352xf32>
    %c0_222 = arith.constant 0 : index
    %c25_223 = arith.constant 25 : index
    %317 = vector.load %arg6[%c0_222, %c25_223] : memref<4x484xf32, #tpu.memory_space<vmem>>, vector<1x352xf32>
    %c0_224 = arith.constant 0 : index
    %c8_225 = arith.constant 8 : index
    %318 = vector.load %arg2[%c0_224, %c8_225] : memref<4x100xf32, #tpu.memory_space<vmem>>, vector<4x1xf32>
    %319 = vector.broadcast %318 : vector<4x1xf32> to vector<4x352xf32>
    %320 = vector.broadcast %317 : vector<1x352xf32> to vector<4x352xf32>
    %321 = arith.mulf %319, %320 : vector<4x352xf32>
    %322 = arith.addf %298, %321 : vector<4x352xf32>
    %c1_226 = arith.constant 1 : index
    %c25_227 = arith.constant 25 : index
    %323 = vector.load %arg6[%c1_226, %c25_227] : memref<4x484xf32, #tpu.memory_space<vmem>>, vector<1x352xf32>
    %c0_228 = arith.constant 0 : index
    %c9_229 = arith.constant 9 : index
    %324 = vector.load %arg2[%c0_228, %c9_229] : memref<4x100xf32, #tpu.memory_space<vmem>>, vector<4x1xf32>
    %325 = vector.broadcast %324 : vector<4x1xf32> to vector<4x352xf32>
    %326 = vector.broadcast %323 : vector<1x352xf32> to vector<4x352xf32>
    %327 = arith.mulf %325, %326 : vector<4x352xf32>
    %328 = arith.addf %304, %327 : vector<4x352xf32>
    %c2_230 = arith.constant 2 : index
    %c25_231 = arith.constant 25 : index
    %329 = vector.load %arg6[%c2_230, %c25_231] : memref<4x484xf32, #tpu.memory_space<vmem>>, vector<1x352xf32>
    %c0_232 = arith.constant 0 : index
    %c10_233 = arith.constant 10 : index
    %330 = vector.load %arg2[%c0_232, %c10_233] : memref<4x100xf32, #tpu.memory_space<vmem>>, vector<4x1xf32>
    %331 = vector.broadcast %330 : vector<4x1xf32> to vector<4x352xf32>
    %332 = vector.broadcast %329 : vector<1x352xf32> to vector<4x352xf32>
    %333 = arith.mulf %331, %332 : vector<4x352xf32>
    %334 = arith.addf %310, %333 : vector<4x352xf32>
    %c3_234 = arith.constant 3 : index
    %c25_235 = arith.constant 25 : index
    %335 = vector.load %arg6[%c3_234, %c25_235] : memref<4x484xf32, #tpu.memory_space<vmem>>, vector<1x352xf32>
    %c0_236 = arith.constant 0 : index
    %c11_237 = arith.constant 11 : index
    %336 = vector.load %arg2[%c0_236, %c11_237] : memref<4x100xf32, #tpu.memory_space<vmem>>, vector<4x1xf32>
    %337 = vector.broadcast %336 : vector<4x1xf32> to vector<4x352xf32>
    %338 = vector.broadcast %335 : vector<1x352xf32> to vector<4x352xf32>
    %339 = arith.mulf %337, %338 : vector<4x352xf32>
    %340 = arith.addf %316, %339 : vector<4x352xf32>
    %c0_238 = arith.constant 0 : index
    %c26_239 = arith.constant 26 : index
    %341 = vector.load %arg6[%c0_238, %c26_239] : memref<4x484xf32, #tpu.memory_space<vmem>>, vector<1x352xf32>
    %c0_240 = arith.constant 0 : index
    %c12_241 = arith.constant 12 : index
    %342 = vector.load %arg2[%c0_240, %c12_241] : memref<4x100xf32, #tpu.memory_space<vmem>>, vector<4x1xf32>
    %343 = vector.broadcast %342 : vector<4x1xf32> to vector<4x352xf32>
    %344 = vector.broadcast %341 : vector<1x352xf32> to vector<4x352xf32>
    %345 = arith.mulf %343, %344 : vector<4x352xf32>
    %346 = arith.addf %322, %345 : vector<4x352xf32>
    %c1_242 = arith.constant 1 : index
    %c26_243 = arith.constant 26 : index
    %347 = vector.load %arg6[%c1_242, %c26_243] : memref<4x484xf32, #tpu.memory_space<vmem>>, vector<1x352xf32>
    %c0_244 = arith.constant 0 : index
    %c13_245 = arith.constant 13 : index
    %348 = vector.load %arg2[%c0_244, %c13_245] : memref<4x100xf32, #tpu.memory_space<vmem>>, vector<4x1xf32>
    %349 = vector.broadcast %348 : vector<4x1xf32> to vector<4x352xf32>
    %350 = vector.broadcast %347 : vector<1x352xf32> to vector<4x352xf32>
    %351 = arith.mulf %349, %350 : vector<4x352xf32>
    %352 = arith.addf %328, %351 : vector<4x352xf32>
    %c2_246 = arith.constant 2 : index
    %c26_247 = arith.constant 26 : index
    %353 = vector.load %arg6[%c2_246, %c26_247] : memref<4x484xf32, #tpu.memory_space<vmem>>, vector<1x352xf32>
    %c0_248 = arith.constant 0 : index
    %c14_249 = arith.constant 14 : index
    %354 = vector.load %arg2[%c0_248, %c14_249] : memref<4x100xf32, #tpu.memory_space<vmem>>, vector<4x1xf32>
    %355 = vector.broadcast %354 : vector<4x1xf32> to vector<4x352xf32>
    %356 = vector.broadcast %353 : vector<1x352xf32> to vector<4x352xf32>
    %357 = arith.mulf %355, %356 : vector<4x352xf32>
    %358 = arith.addf %334, %357 : vector<4x352xf32>
    %c3_250 = arith.constant 3 : index
    %c26_251 = arith.constant 26 : index
    %359 = vector.load %arg6[%c3_250, %c26_251] : memref<4x484xf32, #tpu.memory_space<vmem>>, vector<1x352xf32>
    %c0_252 = arith.constant 0 : index
    %c15_253 = arith.constant 15 : index
    %360 = vector.load %arg2[%c0_252, %c15_253] : memref<4x100xf32, #tpu.memory_space<vmem>>, vector<4x1xf32>
    %361 = vector.broadcast %360 : vector<4x1xf32> to vector<4x352xf32>
    %362 = vector.broadcast %359 : vector<1x352xf32> to vector<4x352xf32>
    %363 = arith.mulf %361, %362 : vector<4x352xf32>
    %364 = arith.addf %340, %363 : vector<4x352xf32>
    %c0_254 = arith.constant 0 : index
    %c27_255 = arith.constant 27 : index
    %365 = vector.load %arg6[%c0_254, %c27_255] : memref<4x484xf32, #tpu.memory_space<vmem>>, vector<1x352xf32>
    %c0_256 = arith.constant 0 : index
    %c16_257 = arith.constant 16 : index
    %366 = vector.load %arg2[%c0_256, %c16_257] : memref<4x100xf32, #tpu.memory_space<vmem>>, vector<4x1xf32>
    %367 = vector.broadcast %366 : vector<4x1xf32> to vector<4x352xf32>
    %368 = vector.broadcast %365 : vector<1x352xf32> to vector<4x352xf32>
    %369 = arith.mulf %367, %368 : vector<4x352xf32>
    %370 = arith.addf %346, %369 : vector<4x352xf32>
    %c1_258 = arith.constant 1 : index
    %c27_259 = arith.constant 27 : index
    %371 = vector.load %arg6[%c1_258, %c27_259] : memref<4x484xf32, #tpu.memory_space<vmem>>, vector<1x352xf32>
    %c0_260 = arith.constant 0 : index
    %c17_261 = arith.constant 17 : index
    %372 = vector.load %arg2[%c0_260, %c17_261] : memref<4x100xf32, #tpu.memory_space<vmem>>, vector<4x1xf32>
    %373 = vector.broadcast %372 : vector<4x1xf32> to vector<4x352xf32>
    %374 = vector.broadcast %371 : vector<1x352xf32> to vector<4x352xf32>
    %375 = arith.mulf %373, %374 : vector<4x352xf32>
    %376 = arith.addf %352, %375 : vector<4x352xf32>
    %c2_262 = arith.constant 2 : index
    %c27_263 = arith.constant 27 : index
    %377 = vector.load %arg6[%c2_262, %c27_263] : memref<4x484xf32, #tpu.memory_space<vmem>>, vector<1x352xf32>
    %c0_264 = arith.constant 0 : index
    %c18_265 = arith.constant 18 : index
    %378 = vector.load %arg2[%c0_264, %c18_265] : memref<4x100xf32, #tpu.memory_space<vmem>>, vector<4x1xf32>
    %379 = vector.broadcast %378 : vector<4x1xf32> to vector<4x352xf32>
    %380 = vector.broadcast %377 : vector<1x352xf32> to vector<4x352xf32>
    %381 = arith.mulf %379, %380 : vector<4x352xf32>
    %382 = arith.addf %358, %381 : vector<4x352xf32>
    %c3_266 = arith.constant 3 : index
    %c27_267 = arith.constant 27 : index
    %383 = vector.load %arg6[%c3_266, %c27_267] : memref<4x484xf32, #tpu.memory_space<vmem>>, vector<1x352xf32>
    %c0_268 = arith.constant 0 : index
    %c19_269 = arith.constant 19 : index
    %384 = vector.load %arg2[%c0_268, %c19_269] : memref<4x100xf32, #tpu.memory_space<vmem>>, vector<4x1xf32>
    %385 = vector.broadcast %384 : vector<4x1xf32> to vector<4x352xf32>
    %386 = vector.broadcast %383 : vector<1x352xf32> to vector<4x352xf32>
    %387 = arith.mulf %385, %386 : vector<4x352xf32>
    %388 = arith.addf %364, %387 : vector<4x352xf32>
    %c0_270 = arith.constant 0 : index
    %c45 = arith.constant 45 : index
    %389 = vector.load %arg6[%c0_270, %c45] : memref<4x484xf32, #tpu.memory_space<vmem>>, vector<1x352xf32>
    %c0_271 = arith.constant 0 : index
    %c20_272 = arith.constant 20 : index
    %390 = vector.load %arg2[%c0_271, %c20_272] : memref<4x100xf32, #tpu.memory_space<vmem>>, vector<4x1xf32>
    %391 = vector.broadcast %390 : vector<4x1xf32> to vector<4x352xf32>
    %392 = vector.broadcast %389 : vector<1x352xf32> to vector<4x352xf32>
    %393 = arith.mulf %391, %392 : vector<4x352xf32>
    %394 = arith.addf %370, %393 : vector<4x352xf32>
    %c1_273 = arith.constant 1 : index
    %c45_274 = arith.constant 45 : index
    %395 = vector.load %arg6[%c1_273, %c45_274] : memref<4x484xf32, #tpu.memory_space<vmem>>, vector<1x352xf32>
    %c0_275 = arith.constant 0 : index
    %c21_276 = arith.constant 21 : index
    %396 = vector.load %arg2[%c0_275, %c21_276] : memref<4x100xf32, #tpu.memory_space<vmem>>, vector<4x1xf32>
    %397 = vector.broadcast %396 : vector<4x1xf32> to vector<4x352xf32>
    %398 = vector.broadcast %395 : vector<1x352xf32> to vector<4x352xf32>
    %399 = arith.mulf %397, %398 : vector<4x352xf32>
    %400 = arith.addf %376, %399 : vector<4x352xf32>
    %c2_277 = arith.constant 2 : index
    %c45_278 = arith.constant 45 : index
    %401 = vector.load %arg6[%c2_277, %c45_278] : memref<4x484xf32, #tpu.memory_space<vmem>>, vector<1x352xf32>
    %c0_279 = arith.constant 0 : index
    %c22_280 = arith.constant 22 : index
    %402 = vector.load %arg2[%c0_279, %c22_280] : memref<4x100xf32, #tpu.memory_space<vmem>>, vector<4x1xf32>
    %403 = vector.broadcast %402 : vector<4x1xf32> to vector<4x352xf32>
    %404 = vector.broadcast %401 : vector<1x352xf32> to vector<4x352xf32>
    %405 = arith.mulf %403, %404 : vector<4x352xf32>
    %406 = arith.addf %382, %405 : vector<4x352xf32>
    %c3_281 = arith.constant 3 : index
    %c45_282 = arith.constant 45 : index
    %407 = vector.load %arg6[%c3_281, %c45_282] : memref<4x484xf32, #tpu.memory_space<vmem>>, vector<1x352xf32>
    %c0_283 = arith.constant 0 : index
    %c23_284 = arith.constant 23 : index
    %408 = vector.load %arg2[%c0_283, %c23_284] : memref<4x100xf32, #tpu.memory_space<vmem>>, vector<4x1xf32>
    %409 = vector.broadcast %408 : vector<4x1xf32> to vector<4x352xf32>
    %410 = vector.broadcast %407 : vector<1x352xf32> to vector<4x352xf32>
    %411 = arith.mulf %409, %410 : vector<4x352xf32>
    %412 = arith.addf %388, %411 : vector<4x352xf32>
    %c0_285 = arith.constant 0 : index
    %c46_286 = arith.constant 46 : index
    %413 = vector.load %arg6[%c0_285, %c46_286] : memref<4x484xf32, #tpu.memory_space<vmem>>, vector<1x352xf32>
    %c0_287 = arith.constant 0 : index
    %c24_288 = arith.constant 24 : index
    %414 = vector.load %arg2[%c0_287, %c24_288] : memref<4x100xf32, #tpu.memory_space<vmem>>, vector<4x1xf32>
    %415 = vector.broadcast %414 : vector<4x1xf32> to vector<4x352xf32>
    %416 = vector.broadcast %413 : vector<1x352xf32> to vector<4x352xf32>
    %417 = arith.mulf %415, %416 : vector<4x352xf32>
    %418 = arith.addf %394, %417 : vector<4x352xf32>
    %c1_289 = arith.constant 1 : index
    %c46_290 = arith.constant 46 : index
    %419 = vector.load %arg6[%c1_289, %c46_290] : memref<4x484xf32, #tpu.memory_space<vmem>>, vector<1x352xf32>
    %c0_291 = arith.constant 0 : index
    %c25_292 = arith.constant 25 : index
    %420 = vector.load %arg2[%c0_291, %c25_292] : memref<4x100xf32, #tpu.memory_space<vmem>>, vector<4x1xf32>
    %421 = vector.broadcast %420 : vector<4x1xf32> to vector<4x352xf32>
    %422 = vector.broadcast %419 : vector<1x352xf32> to vector<4x352xf32>
    %423 = arith.mulf %421, %422 : vector<4x352xf32>
    %424 = arith.addf %400, %423 : vector<4x352xf32>
    %c2_293 = arith.constant 2 : index
    %c46_294 = arith.constant 46 : index
    %425 = vector.load %arg6[%c2_293, %c46_294] : memref<4x484xf32, #tpu.memory_space<vmem>>, vector<1x352xf32>
    %c0_295 = arith.constant 0 : index
    %c26_296 = arith.constant 26 : index
    %426 = vector.load %arg2[%c0_295, %c26_296] : memref<4x100xf32, #tpu.memory_space<vmem>>, vector<4x1xf32>
    %427 = vector.broadcast %426 : vector<4x1xf32> to vector<4x352xf32>
    %428 = vector.broadcast %425 : vector<1x352xf32> to vector<4x352xf32>
    %429 = arith.mulf %427, %428 : vector<4x352xf32>
    %430 = arith.addf %406, %429 : vector<4x352xf32>
    %c3_297 = arith.constant 3 : index
    %c46_298 = arith.constant 46 : index
    %431 = vector.load %arg6[%c3_297, %c46_298] : memref<4x484xf32, #tpu.memory_space<vmem>>, vector<1x352xf32>
    %c0_299 = arith.constant 0 : index
    %c27_300 = arith.constant 27 : index
    %432 = vector.load %arg2[%c0_299, %c27_300] : memref<4x100xf32, #tpu.memory_space<vmem>>, vector<4x1xf32>
    %433 = vector.broadcast %432 : vector<4x1xf32> to vector<4x352xf32>
    %434 = vector.broadcast %431 : vector<1x352xf32> to vector<4x352xf32>
    %435 = arith.mulf %433, %434 : vector<4x352xf32>
    %436 = arith.addf %412, %435 : vector<4x352xf32>
    %c0_301 = arith.constant 0 : index
    %c47_302 = arith.constant 47 : index
    %437 = vector.load %arg6[%c0_301, %c47_302] : memref<4x484xf32, #tpu.memory_space<vmem>>, vector<1x352xf32>
    %c0_303 = arith.constant 0 : index
    %c28_304 = arith.constant 28 : index
    %438 = vector.load %arg2[%c0_303, %c28_304] : memref<4x100xf32, #tpu.memory_space<vmem>>, vector<4x1xf32>
    %439 = vector.broadcast %438 : vector<4x1xf32> to vector<4x352xf32>
    %440 = vector.broadcast %437 : vector<1x352xf32> to vector<4x352xf32>
    %441 = arith.mulf %439, %440 : vector<4x352xf32>
    %442 = arith.addf %418, %441 : vector<4x352xf32>
    %c1_305 = arith.constant 1 : index
    %c47_306 = arith.constant 47 : index
    %443 = vector.load %arg6[%c1_305, %c47_306] : memref<4x484xf32, #tpu.memory_space<vmem>>, vector<1x352xf32>
    %c0_307 = arith.constant 0 : index
    %c29_308 = arith.constant 29 : index
    %444 = vector.load %arg2[%c0_307, %c29_308] : memref<4x100xf32, #tpu.memory_space<vmem>>, vector<4x1xf32>
    %445 = vector.broadcast %444 : vector<4x1xf32> to vector<4x352xf32>
    %446 = vector.broadcast %443 : vector<1x352xf32> to vector<4x352xf32>
    %447 = arith.mulf %445, %446 : vector<4x352xf32>
    %448 = arith.addf %424, %447 : vector<4x352xf32>
    %c2_309 = arith.constant 2 : index
    %c47_310 = arith.constant 47 : index
    %449 = vector.load %arg6[%c2_309, %c47_310] : memref<4x484xf32, #tpu.memory_space<vmem>>, vector<1x352xf32>
    %c0_311 = arith.constant 0 : index
    %c30_312 = arith.constant 30 : index
    %450 = vector.load %arg2[%c0_311, %c30_312] : memref<4x100xf32, #tpu.memory_space<vmem>>, vector<4x1xf32>
    %451 = vector.broadcast %450 : vector<4x1xf32> to vector<4x352xf32>
    %452 = vector.broadcast %449 : vector<1x352xf32> to vector<4x352xf32>
    %453 = arith.mulf %451, %452 : vector<4x352xf32>
    %454 = arith.addf %430, %453 : vector<4x352xf32>
    %c3_313 = arith.constant 3 : index
    %c47_314 = arith.constant 47 : index
    %455 = vector.load %arg6[%c3_313, %c47_314] : memref<4x484xf32, #tpu.memory_space<vmem>>, vector<1x352xf32>
    %c0_315 = arith.constant 0 : index
    %c31_316 = arith.constant 31 : index
    %456 = vector.load %arg2[%c0_315, %c31_316] : memref<4x100xf32, #tpu.memory_space<vmem>>, vector<4x1xf32>
    %457 = vector.broadcast %456 : vector<4x1xf32> to vector<4x352xf32>
    %458 = vector.broadcast %455 : vector<1x352xf32> to vector<4x352xf32>
    %459 = arith.mulf %457, %458 : vector<4x352xf32>
    %460 = arith.addf %436, %459 : vector<4x352xf32>
    %c0_317 = arith.constant 0 : index
    %c48_318 = arith.constant 48 : index
    %461 = vector.load %arg6[%c0_317, %c48_318] : memref<4x484xf32, #tpu.memory_space<vmem>>, vector<1x352xf32>
    %c0_319 = arith.constant 0 : index
    %c32_320 = arith.constant 32 : index
    %462 = vector.load %arg2[%c0_319, %c32_320] : memref<4x100xf32, #tpu.memory_space<vmem>>, vector<4x1xf32>
    %463 = vector.broadcast %462 : vector<4x1xf32> to vector<4x352xf32>
    %464 = vector.broadcast %461 : vector<1x352xf32> to vector<4x352xf32>
    %465 = arith.mulf %463, %464 : vector<4x352xf32>
    %466 = arith.addf %442, %465 : vector<4x352xf32>
    %c1_321 = arith.constant 1 : index
    %c48_322 = arith.constant 48 : index
    %467 = vector.load %arg6[%c1_321, %c48_322] : memref<4x484xf32, #tpu.memory_space<vmem>>, vector<1x352xf32>
    %c0_323 = arith.constant 0 : index
    %c33_324 = arith.constant 33 : index
    %468 = vector.load %arg2[%c0_323, %c33_324] : memref<4x100xf32, #tpu.memory_space<vmem>>, vector<4x1xf32>
    %469 = vector.broadcast %468 : vector<4x1xf32> to vector<4x352xf32>
    %470 = vector.broadcast %467 : vector<1x352xf32> to vector<4x352xf32>
    %471 = arith.mulf %469, %470 : vector<4x352xf32>
    %472 = arith.addf %448, %471 : vector<4x352xf32>
    %c2_325 = arith.constant 2 : index
    %c48_326 = arith.constant 48 : index
    %473 = vector.load %arg6[%c2_325, %c48_326] : memref<4x484xf32, #tpu.memory_space<vmem>>, vector<1x352xf32>
    %c0_327 = arith.constant 0 : index
    %c34_328 = arith.constant 34 : index
    %474 = vector.load %arg2[%c0_327, %c34_328] : memref<4x100xf32, #tpu.memory_space<vmem>>, vector<4x1xf32>
    %475 = vector.broadcast %474 : vector<4x1xf32> to vector<4x352xf32>
    %476 = vector.broadcast %473 : vector<1x352xf32> to vector<4x352xf32>
    %477 = arith.mulf %475, %476 : vector<4x352xf32>
    %478 = arith.addf %454, %477 : vector<4x352xf32>
    %c3_329 = arith.constant 3 : index
    %c48_330 = arith.constant 48 : index
    %479 = vector.load %arg6[%c3_329, %c48_330] : memref<4x484xf32, #tpu.memory_space<vmem>>, vector<1x352xf32>
    %c0_331 = arith.constant 0 : index
    %c35_332 = arith.constant 35 : index
    %480 = vector.load %arg2[%c0_331, %c35_332] : memref<4x100xf32, #tpu.memory_space<vmem>>, vector<4x1xf32>
    %481 = vector.broadcast %480 : vector<4x1xf32> to vector<4x352xf32>
    %482 = vector.broadcast %479 : vector<1x352xf32> to vector<4x352xf32>
    %483 = arith.mulf %481, %482 : vector<4x352xf32>
    %484 = arith.addf %460, %483 : vector<4x352xf32>
    %c0_333 = arith.constant 0 : index
    %c49 = arith.constant 49 : index
    %485 = vector.load %arg6[%c0_333, %c49] : memref<4x484xf32, #tpu.memory_space<vmem>>, vector<1x352xf32>
    %c0_334 = arith.constant 0 : index
    %c36 = arith.constant 36 : index
    %486 = vector.load %arg2[%c0_334, %c36] : memref<4x100xf32, #tpu.memory_space<vmem>>, vector<4x1xf32>
    %487 = vector.broadcast %486 : vector<4x1xf32> to vector<4x352xf32>
    %488 = vector.broadcast %485 : vector<1x352xf32> to vector<4x352xf32>
    %489 = arith.mulf %487, %488 : vector<4x352xf32>
    %490 = arith.addf %466, %489 : vector<4x352xf32>
    %c1_335 = arith.constant 1 : index
    %c49_336 = arith.constant 49 : index
    %491 = vector.load %arg6[%c1_335, %c49_336] : memref<4x484xf32, #tpu.memory_space<vmem>>, vector<1x352xf32>
    %c0_337 = arith.constant 0 : index
    %c37 = arith.constant 37 : index
    %492 = vector.load %arg2[%c0_337, %c37] : memref<4x100xf32, #tpu.memory_space<vmem>>, vector<4x1xf32>
    %493 = vector.broadcast %492 : vector<4x1xf32> to vector<4x352xf32>
    %494 = vector.broadcast %491 : vector<1x352xf32> to vector<4x352xf32>
    %495 = arith.mulf %493, %494 : vector<4x352xf32>
    %496 = arith.addf %472, %495 : vector<4x352xf32>
    %c2_338 = arith.constant 2 : index
    %c49_339 = arith.constant 49 : index
    %497 = vector.load %arg6[%c2_338, %c49_339] : memref<4x484xf32, #tpu.memory_space<vmem>>, vector<1x352xf32>
    %c0_340 = arith.constant 0 : index
    %c38 = arith.constant 38 : index
    %498 = vector.load %arg2[%c0_340, %c38] : memref<4x100xf32, #tpu.memory_space<vmem>>, vector<4x1xf32>
    %499 = vector.broadcast %498 : vector<4x1xf32> to vector<4x352xf32>
    %500 = vector.broadcast %497 : vector<1x352xf32> to vector<4x352xf32>
    %501 = arith.mulf %499, %500 : vector<4x352xf32>
    %502 = arith.addf %478, %501 : vector<4x352xf32>
    %c3_341 = arith.constant 3 : index
    %c49_342 = arith.constant 49 : index
    %503 = vector.load %arg6[%c3_341, %c49_342] : memref<4x484xf32, #tpu.memory_space<vmem>>, vector<1x352xf32>
    %c0_343 = arith.constant 0 : index
    %c39 = arith.constant 39 : index
    %504 = vector.load %arg2[%c0_343, %c39] : memref<4x100xf32, #tpu.memory_space<vmem>>, vector<4x1xf32>
    %505 = vector.broadcast %504 : vector<4x1xf32> to vector<4x352xf32>
    %506 = vector.broadcast %503 : vector<1x352xf32> to vector<4x352xf32>
    %507 = arith.mulf %505, %506 : vector<4x352xf32>
    %508 = arith.addf %484, %507 : vector<4x352xf32>
    %c0_344 = arith.constant 0 : index
    %c67 = arith.constant 67 : index
    %509 = vector.load %arg6[%c0_344, %c67] : memref<4x484xf32, #tpu.memory_space<vmem>>, vector<1x352xf32>
    %c0_345 = arith.constant 0 : index
    %c40 = arith.constant 40 : index
    %510 = vector.load %arg2[%c0_345, %c40] : memref<4x100xf32, #tpu.memory_space<vmem>>, vector<4x1xf32>
    %511 = vector.broadcast %510 : vector<4x1xf32> to vector<4x352xf32>
    %512 = vector.broadcast %509 : vector<1x352xf32> to vector<4x352xf32>
    %513 = arith.mulf %511, %512 : vector<4x352xf32>
    %514 = arith.addf %490, %513 : vector<4x352xf32>
    %c1_346 = arith.constant 1 : index
    %c67_347 = arith.constant 67 : index
    %515 = vector.load %arg6[%c1_346, %c67_347] : memref<4x484xf32, #tpu.memory_space<vmem>>, vector<1x352xf32>
    %c0_348 = arith.constant 0 : index
    %c41 = arith.constant 41 : index
    %516 = vector.load %arg2[%c0_348, %c41] : memref<4x100xf32, #tpu.memory_space<vmem>>, vector<4x1xf32>
    %517 = vector.broadcast %516 : vector<4x1xf32> to vector<4x352xf32>
    %518 = vector.broadcast %515 : vector<1x352xf32> to vector<4x352xf32>
    %519 = arith.mulf %517, %518 : vector<4x352xf32>
    %520 = arith.addf %496, %519 : vector<4x352xf32>
    %c2_349 = arith.constant 2 : index
    %c67_350 = arith.constant 67 : index
    %521 = vector.load %arg6[%c2_349, %c67_350] : memref<4x484xf32, #tpu.memory_space<vmem>>, vector<1x352xf32>
    %c0_351 = arith.constant 0 : index
    %c42 = arith.constant 42 : index
    %522 = vector.load %arg2[%c0_351, %c42] : memref<4x100xf32, #tpu.memory_space<vmem>>, vector<4x1xf32>
    %523 = vector.broadcast %522 : vector<4x1xf32> to vector<4x352xf32>
    %524 = vector.broadcast %521 : vector<1x352xf32> to vector<4x352xf32>
    %525 = arith.mulf %523, %524 : vector<4x352xf32>
    %526 = arith.addf %502, %525 : vector<4x352xf32>
    %c3_352 = arith.constant 3 : index
    %c67_353 = arith.constant 67 : index
    %527 = vector.load %arg6[%c3_352, %c67_353] : memref<4x484xf32, #tpu.memory_space<vmem>>, vector<1x352xf32>
    %c0_354 = arith.constant 0 : index
    %c43 = arith.constant 43 : index
    %528 = vector.load %arg2[%c0_354, %c43] : memref<4x100xf32, #tpu.memory_space<vmem>>, vector<4x1xf32>
    %529 = vector.broadcast %528 : vector<4x1xf32> to vector<4x352xf32>
    %530 = vector.broadcast %527 : vector<1x352xf32> to vector<4x352xf32>
    %531 = arith.mulf %529, %530 : vector<4x352xf32>
    %532 = arith.addf %508, %531 : vector<4x352xf32>
    %c0_355 = arith.constant 0 : index
    %c68_356 = arith.constant 68 : index
    %533 = vector.load %arg6[%c0_355, %c68_356] : memref<4x484xf32, #tpu.memory_space<vmem>>, vector<1x352xf32>
    %c0_357 = arith.constant 0 : index
    %c44 = arith.constant 44 : index
    %534 = vector.load %arg2[%c0_357, %c44] : memref<4x100xf32, #tpu.memory_space<vmem>>, vector<4x1xf32>
    %535 = vector.broadcast %534 : vector<4x1xf32> to vector<4x352xf32>
    %536 = vector.broadcast %533 : vector<1x352xf32> to vector<4x352xf32>
    %537 = arith.mulf %535, %536 : vector<4x352xf32>
    %538 = arith.addf %514, %537 : vector<4x352xf32>
    %c1_358 = arith.constant 1 : index
    %c68_359 = arith.constant 68 : index
    %539 = vector.load %arg6[%c1_358, %c68_359] : memref<4x484xf32, #tpu.memory_space<vmem>>, vector<1x352xf32>
    %c0_360 = arith.constant 0 : index
    %c45_361 = arith.constant 45 : index
    %540 = vector.load %arg2[%c0_360, %c45_361] : memref<4x100xf32, #tpu.memory_space<vmem>>, vector<4x1xf32>
    %541 = vector.broadcast %540 : vector<4x1xf32> to vector<4x352xf32>
    %542 = vector.broadcast %539 : vector<1x352xf32> to vector<4x352xf32>
    %543 = arith.mulf %541, %542 : vector<4x352xf32>
    %544 = arith.addf %520, %543 : vector<4x352xf32>
    %c2_362 = arith.constant 2 : index
    %c68_363 = arith.constant 68 : index
    %545 = vector.load %arg6[%c2_362, %c68_363] : memref<4x484xf32, #tpu.memory_space<vmem>>, vector<1x352xf32>
    %c0_364 = arith.constant 0 : index
    %c46_365 = arith.constant 46 : index
    %546 = vector.load %arg2[%c0_364, %c46_365] : memref<4x100xf32, #tpu.memory_space<vmem>>, vector<4x1xf32>
    %547 = vector.broadcast %546 : vector<4x1xf32> to vector<4x352xf32>
    %548 = vector.broadcast %545 : vector<1x352xf32> to vector<4x352xf32>
    %549 = arith.mulf %547, %548 : vector<4x352xf32>
    %550 = arith.addf %526, %549 : vector<4x352xf32>
    %c3_366 = arith.constant 3 : index
    %c68_367 = arith.constant 68 : index
    %551 = vector.load %arg6[%c3_366, %c68_367] : memref<4x484xf32, #tpu.memory_space<vmem>>, vector<1x352xf32>
    %c0_368 = arith.constant 0 : index
    %c47_369 = arith.constant 47 : index
    %552 = vector.load %arg2[%c0_368, %c47_369] : memref<4x100xf32, #tpu.memory_space<vmem>>, vector<4x1xf32>
    %553 = vector.broadcast %552 : vector<4x1xf32> to vector<4x352xf32>
    %554 = vector.broadcast %551 : vector<1x352xf32> to vector<4x352xf32>
    %555 = arith.mulf %553, %554 : vector<4x352xf32>
    %556 = arith.addf %532, %555 : vector<4x352xf32>
    %c0_370 = arith.constant 0 : index
    %c69_371 = arith.constant 69 : index
    %557 = vector.load %arg6[%c0_370, %c69_371] : memref<4x484xf32, #tpu.memory_space<vmem>>, vector<1x352xf32>
    %c0_372 = arith.constant 0 : index
    %c48_373 = arith.constant 48 : index
    %558 = vector.load %arg2[%c0_372, %c48_373] : memref<4x100xf32, #tpu.memory_space<vmem>>, vector<4x1xf32>
    %559 = vector.broadcast %558 : vector<4x1xf32> to vector<4x352xf32>
    %560 = vector.broadcast %557 : vector<1x352xf32> to vector<4x352xf32>
    %561 = arith.mulf %559, %560 : vector<4x352xf32>
    %562 = arith.addf %538, %561 : vector<4x352xf32>
    %c1_374 = arith.constant 1 : index
    %c69_375 = arith.constant 69 : index
    %563 = vector.load %arg6[%c1_374, %c69_375] : memref<4x484xf32, #tpu.memory_space<vmem>>, vector<1x352xf32>
    %c0_376 = arith.constant 0 : index
    %c49_377 = arith.constant 49 : index
    %564 = vector.load %arg2[%c0_376, %c49_377] : memref<4x100xf32, #tpu.memory_space<vmem>>, vector<4x1xf32>
    %565 = vector.broadcast %564 : vector<4x1xf32> to vector<4x352xf32>
    %566 = vector.broadcast %563 : vector<1x352xf32> to vector<4x352xf32>
    %567 = arith.mulf %565, %566 : vector<4x352xf32>
    %568 = arith.addf %544, %567 : vector<4x352xf32>
    %c2_378 = arith.constant 2 : index
    %c69_379 = arith.constant 69 : index
    %569 = vector.load %arg6[%c2_378, %c69_379] : memref<4x484xf32, #tpu.memory_space<vmem>>, vector<1x352xf32>
    %c0_380 = arith.constant 0 : index
    %c50 = arith.constant 50 : index
    %570 = vector.load %arg2[%c0_380, %c50] : memref<4x100xf32, #tpu.memory_space<vmem>>, vector<4x1xf32>
    %571 = vector.broadcast %570 : vector<4x1xf32> to vector<4x352xf32>
    %572 = vector.broadcast %569 : vector<1x352xf32> to vector<4x352xf32>
    %573 = arith.mulf %571, %572 : vector<4x352xf32>
    %574 = arith.addf %550, %573 : vector<4x352xf32>
    %c3_381 = arith.constant 3 : index
    %c69_382 = arith.constant 69 : index
    %575 = vector.load %arg6[%c3_381, %c69_382] : memref<4x484xf32, #tpu.memory_space<vmem>>, vector<1x352xf32>
    %c0_383 = arith.constant 0 : index
    %c51 = arith.constant 51 : index
    %576 = vector.load %arg2[%c0_383, %c51] : memref<4x100xf32, #tpu.memory_space<vmem>>, vector<4x1xf32>
    %577 = vector.broadcast %576 : vector<4x1xf32> to vector<4x352xf32>
    %578 = vector.broadcast %575 : vector<1x352xf32> to vector<4x352xf32>
    %579 = arith.mulf %577, %578 : vector<4x352xf32>
    %580 = arith.addf %556, %579 : vector<4x352xf32>
    %c0_384 = arith.constant 0 : index
    %c70_385 = arith.constant 70 : index
    %581 = vector.load %arg6[%c0_384, %c70_385] : memref<4x484xf32, #tpu.memory_space<vmem>>, vector<1x352xf32>
    %c0_386 = arith.constant 0 : index
    %c52 = arith.constant 52 : index
    %582 = vector.load %arg2[%c0_386, %c52] : memref<4x100xf32, #tpu.memory_space<vmem>>, vector<4x1xf32>
    %583 = vector.broadcast %582 : vector<4x1xf32> to vector<4x352xf32>
    %584 = vector.broadcast %581 : vector<1x352xf32> to vector<4x352xf32>
    %585 = arith.mulf %583, %584 : vector<4x352xf32>
    %586 = arith.addf %562, %585 : vector<4x352xf32>
    %c1_387 = arith.constant 1 : index
    %c70_388 = arith.constant 70 : index
    %587 = vector.load %arg6[%c1_387, %c70_388] : memref<4x484xf32, #tpu.memory_space<vmem>>, vector<1x352xf32>
    %c0_389 = arith.constant 0 : index
    %c53 = arith.constant 53 : index
    %588 = vector.load %arg2[%c0_389, %c53] : memref<4x100xf32, #tpu.memory_space<vmem>>, vector<4x1xf32>
    %589 = vector.broadcast %588 : vector<4x1xf32> to vector<4x352xf32>
    %590 = vector.broadcast %587 : vector<1x352xf32> to vector<4x352xf32>
    %591 = arith.mulf %589, %590 : vector<4x352xf32>
    %592 = arith.addf %568, %591 : vector<4x352xf32>
    %c2_390 = arith.constant 2 : index
    %c70_391 = arith.constant 70 : index
    %593 = vector.load %arg6[%c2_390, %c70_391] : memref<4x484xf32, #tpu.memory_space<vmem>>, vector<1x352xf32>
    %c0_392 = arith.constant 0 : index
    %c54 = arith.constant 54 : index
    %594 = vector.load %arg2[%c0_392, %c54] : memref<4x100xf32, #tpu.memory_space<vmem>>, vector<4x1xf32>
    %595 = vector.broadcast %594 : vector<4x1xf32> to vector<4x352xf32>
    %596 = vector.broadcast %593 : vector<1x352xf32> to vector<4x352xf32>
    %597 = arith.mulf %595, %596 : vector<4x352xf32>
    %598 = arith.addf %574, %597 : vector<4x352xf32>
    %c3_393 = arith.constant 3 : index
    %c70_394 = arith.constant 70 : index
    %599 = vector.load %arg6[%c3_393, %c70_394] : memref<4x484xf32, #tpu.memory_space<vmem>>, vector<1x352xf32>
    %c0_395 = arith.constant 0 : index
    %c55 = arith.constant 55 : index
    %600 = vector.load %arg2[%c0_395, %c55] : memref<4x100xf32, #tpu.memory_space<vmem>>, vector<4x1xf32>
    %601 = vector.broadcast %600 : vector<4x1xf32> to vector<4x352xf32>
    %602 = vector.broadcast %599 : vector<1x352xf32> to vector<4x352xf32>
    %603 = arith.mulf %601, %602 : vector<4x352xf32>
    %604 = arith.addf %580, %603 : vector<4x352xf32>
    %c0_396 = arith.constant 0 : index
    %c71 = arith.constant 71 : index
    %605 = vector.load %arg6[%c0_396, %c71] : memref<4x484xf32, #tpu.memory_space<vmem>>, vector<1x352xf32>
    %c0_397 = arith.constant 0 : index
    %c56 = arith.constant 56 : index
    %606 = vector.load %arg2[%c0_397, %c56] : memref<4x100xf32, #tpu.memory_space<vmem>>, vector<4x1xf32>
    %607 = vector.broadcast %606 : vector<4x1xf32> to vector<4x352xf32>
    %608 = vector.broadcast %605 : vector<1x352xf32> to vector<4x352xf32>
    %609 = arith.mulf %607, %608 : vector<4x352xf32>
    %610 = arith.addf %586, %609 : vector<4x352xf32>
    %c1_398 = arith.constant 1 : index
    %c71_399 = arith.constant 71 : index
    %611 = vector.load %arg6[%c1_398, %c71_399] : memref<4x484xf32, #tpu.memory_space<vmem>>, vector<1x352xf32>
    %c0_400 = arith.constant 0 : index
    %c57 = arith.constant 57 : index
    %612 = vector.load %arg2[%c0_400, %c57] : memref<4x100xf32, #tpu.memory_space<vmem>>, vector<4x1xf32>
    %613 = vector.broadcast %612 : vector<4x1xf32> to vector<4x352xf32>
    %614 = vector.broadcast %611 : vector<1x352xf32> to vector<4x352xf32>
    %615 = arith.mulf %613, %614 : vector<4x352xf32>
    %616 = arith.addf %592, %615 : vector<4x352xf32>
    %c2_401 = arith.constant 2 : index
    %c71_402 = arith.constant 71 : index
    %617 = vector.load %arg6[%c2_401, %c71_402] : memref<4x484xf32, #tpu.memory_space<vmem>>, vector<1x352xf32>
    %c0_403 = arith.constant 0 : index
    %c58 = arith.constant 58 : index
    %618 = vector.load %arg2[%c0_403, %c58] : memref<4x100xf32, #tpu.memory_space<vmem>>, vector<4x1xf32>
    %619 = vector.broadcast %618 : vector<4x1xf32> to vector<4x352xf32>
    %620 = vector.broadcast %617 : vector<1x352xf32> to vector<4x352xf32>
    %621 = arith.mulf %619, %620 : vector<4x352xf32>
    %622 = arith.addf %598, %621 : vector<4x352xf32>
    %c3_404 = arith.constant 3 : index
    %c71_405 = arith.constant 71 : index
    %623 = vector.load %arg6[%c3_404, %c71_405] : memref<4x484xf32, #tpu.memory_space<vmem>>, vector<1x352xf32>
    %c0_406 = arith.constant 0 : index
    %c59 = arith.constant 59 : index
    %624 = vector.load %arg2[%c0_406, %c59] : memref<4x100xf32, #tpu.memory_space<vmem>>, vector<4x1xf32>
    %625 = vector.broadcast %624 : vector<4x1xf32> to vector<4x352xf32>
    %626 = vector.broadcast %623 : vector<1x352xf32> to vector<4x352xf32>
    %627 = arith.mulf %625, %626 : vector<4x352xf32>
    %628 = arith.addf %604, %627 : vector<4x352xf32>
    %c0_407 = arith.constant 0 : index
    %c89 = arith.constant 89 : index
    %629 = vector.load %arg6[%c0_407, %c89] : memref<4x484xf32, #tpu.memory_space<vmem>>, vector<1x352xf32>
    %c0_408 = arith.constant 0 : index
    %c60 = arith.constant 60 : index
    %630 = vector.load %arg2[%c0_408, %c60] : memref<4x100xf32, #tpu.memory_space<vmem>>, vector<4x1xf32>
    %631 = vector.broadcast %630 : vector<4x1xf32> to vector<4x352xf32>
    %632 = vector.broadcast %629 : vector<1x352xf32> to vector<4x352xf32>
    %633 = arith.mulf %631, %632 : vector<4x352xf32>
    %634 = arith.addf %610, %633 : vector<4x352xf32>
    %c1_409 = arith.constant 1 : index
    %c89_410 = arith.constant 89 : index
    %635 = vector.load %arg6[%c1_409, %c89_410] : memref<4x484xf32, #tpu.memory_space<vmem>>, vector<1x352xf32>
    %c0_411 = arith.constant 0 : index
    %c61 = arith.constant 61 : index
    %636 = vector.load %arg2[%c0_411, %c61] : memref<4x100xf32, #tpu.memory_space<vmem>>, vector<4x1xf32>
    %637 = vector.broadcast %636 : vector<4x1xf32> to vector<4x352xf32>
    %638 = vector.broadcast %635 : vector<1x352xf32> to vector<4x352xf32>
    %639 = arith.mulf %637, %638 : vector<4x352xf32>
    %640 = arith.addf %616, %639 : vector<4x352xf32>
    %c2_412 = arith.constant 2 : index
    %c89_413 = arith.constant 89 : index
    %641 = vector.load %arg6[%c2_412, %c89_413] : memref<4x484xf32, #tpu.memory_space<vmem>>, vector<1x352xf32>
    %c0_414 = arith.constant 0 : index
    %c62 = arith.constant 62 : index
    %642 = vector.load %arg2[%c0_414, %c62] : memref<4x100xf32, #tpu.memory_space<vmem>>, vector<4x1xf32>
    %643 = vector.broadcast %642 : vector<4x1xf32> to vector<4x352xf32>
    %644 = vector.broadcast %641 : vector<1x352xf32> to vector<4x352xf32>
    %645 = arith.mulf %643, %644 : vector<4x352xf32>
    %646 = arith.addf %622, %645 : vector<4x352xf32>
    %c3_415 = arith.constant 3 : index
    %c89_416 = arith.constant 89 : index
    %647 = vector.load %arg6[%c3_415, %c89_416] : memref<4x484xf32, #tpu.memory_space<vmem>>, vector<1x352xf32>
    %c0_417 = arith.constant 0 : index
    %c63 = arith.constant 63 : index
    %648 = vector.load %arg2[%c0_417, %c63] : memref<4x100xf32, #tpu.memory_space<vmem>>, vector<4x1xf32>
    %649 = vector.broadcast %648 : vector<4x1xf32> to vector<4x352xf32>
    %650 = vector.broadcast %647 : vector<1x352xf32> to vector<4x352xf32>
    %651 = arith.mulf %649, %650 : vector<4x352xf32>
    %652 = arith.addf %628, %651 : vector<4x352xf32>
    %c0_418 = arith.constant 0 : index
    %c90_419 = arith.constant 90 : index
    %653 = vector.load %arg6[%c0_418, %c90_419] : memref<4x484xf32, #tpu.memory_space<vmem>>, vector<1x352xf32>
    %c0_420 = arith.constant 0 : index
    %c64 = arith.constant 64 : index
    %654 = vector.load %arg2[%c0_420, %c64] : memref<4x100xf32, #tpu.memory_space<vmem>>, vector<4x1xf32>
    %655 = vector.broadcast %654 : vector<4x1xf32> to vector<4x352xf32>
    %656 = vector.broadcast %653 : vector<1x352xf32> to vector<4x352xf32>
    %657 = arith.mulf %655, %656 : vector<4x352xf32>
    %658 = arith.addf %634, %657 : vector<4x352xf32>
    %c1_421 = arith.constant 1 : index
    %c90_422 = arith.constant 90 : index
    %659 = vector.load %arg6[%c1_421, %c90_422] : memref<4x484xf32, #tpu.memory_space<vmem>>, vector<1x352xf32>
    %c0_423 = arith.constant 0 : index
    %c65 = arith.constant 65 : index
    %660 = vector.load %arg2[%c0_423, %c65] : memref<4x100xf32, #tpu.memory_space<vmem>>, vector<4x1xf32>
    %661 = vector.broadcast %660 : vector<4x1xf32> to vector<4x352xf32>
    %662 = vector.broadcast %659 : vector<1x352xf32> to vector<4x352xf32>
    %663 = arith.mulf %661, %662 : vector<4x352xf32>
    %664 = arith.addf %640, %663 : vector<4x352xf32>
    %c2_424 = arith.constant 2 : index
    %c90_425 = arith.constant 90 : index
    %665 = vector.load %arg6[%c2_424, %c90_425] : memref<4x484xf32, #tpu.memory_space<vmem>>, vector<1x352xf32>
    %c0_426 = arith.constant 0 : index
    %c66 = arith.constant 66 : index
    %666 = vector.load %arg2[%c0_426, %c66] : memref<4x100xf32, #tpu.memory_space<vmem>>, vector<4x1xf32>
    %667 = vector.broadcast %666 : vector<4x1xf32> to vector<4x352xf32>
    %668 = vector.broadcast %665 : vector<1x352xf32> to vector<4x352xf32>
    %669 = arith.mulf %667, %668 : vector<4x352xf32>
    %670 = arith.addf %646, %669 : vector<4x352xf32>
    %c3_427 = arith.constant 3 : index
    %c90_428 = arith.constant 90 : index
    %671 = vector.load %arg6[%c3_427, %c90_428] : memref<4x484xf32, #tpu.memory_space<vmem>>, vector<1x352xf32>
    %c0_429 = arith.constant 0 : index
    %c67_430 = arith.constant 67 : index
    %672 = vector.load %arg2[%c0_429, %c67_430] : memref<4x100xf32, #tpu.memory_space<vmem>>, vector<4x1xf32>
    %673 = vector.broadcast %672 : vector<4x1xf32> to vector<4x352xf32>
    %674 = vector.broadcast %671 : vector<1x352xf32> to vector<4x352xf32>
    %675 = arith.mulf %673, %674 : vector<4x352xf32>
    %676 = arith.addf %652, %675 : vector<4x352xf32>
    %c0_431 = arith.constant 0 : index
    %c91_432 = arith.constant 91 : index
    %677 = vector.load %arg6[%c0_431, %c91_432] : memref<4x484xf32, #tpu.memory_space<vmem>>, vector<1x352xf32>
    %c0_433 = arith.constant 0 : index
    %c68_434 = arith.constant 68 : index
    %678 = vector.load %arg2[%c0_433, %c68_434] : memref<4x100xf32, #tpu.memory_space<vmem>>, vector<4x1xf32>
    %679 = vector.broadcast %678 : vector<4x1xf32> to vector<4x352xf32>
    %680 = vector.broadcast %677 : vector<1x352xf32> to vector<4x352xf32>
    %681 = arith.mulf %679, %680 : vector<4x352xf32>
    %682 = arith.addf %658, %681 : vector<4x352xf32>
    %c1_435 = arith.constant 1 : index
    %c91_436 = arith.constant 91 : index
    %683 = vector.load %arg6[%c1_435, %c91_436] : memref<4x484xf32, #tpu.memory_space<vmem>>, vector<1x352xf32>
    %c0_437 = arith.constant 0 : index
    %c69_438 = arith.constant 69 : index
    %684 = vector.load %arg2[%c0_437, %c69_438] : memref<4x100xf32, #tpu.memory_space<vmem>>, vector<4x1xf32>
    %685 = vector.broadcast %684 : vector<4x1xf32> to vector<4x352xf32>
    %686 = vector.broadcast %683 : vector<1x352xf32> to vector<4x352xf32>
    %687 = arith.mulf %685, %686 : vector<4x352xf32>
    %688 = arith.addf %664, %687 : vector<4x352xf32>
    %c2_439 = arith.constant 2 : index
    %c91_440 = arith.constant 91 : index
    %689 = vector.load %arg6[%c2_439, %c91_440] : memref<4x484xf32, #tpu.memory_space<vmem>>, vector<1x352xf32>
    %c0_441 = arith.constant 0 : index
    %c70_442 = arith.constant 70 : index
    %690 = vector.load %arg2[%c0_441, %c70_442] : memref<4x100xf32, #tpu.memory_space<vmem>>, vector<4x1xf32>
    %691 = vector.broadcast %690 : vector<4x1xf32> to vector<4x352xf32>
    %692 = vector.broadcast %689 : vector<1x352xf32> to vector<4x352xf32>
    %693 = arith.mulf %691, %692 : vector<4x352xf32>
    %694 = arith.addf %670, %693 : vector<4x352xf32>
    %c3_443 = arith.constant 3 : index
    %c91_444 = arith.constant 91 : index
    %695 = vector.load %arg6[%c3_443, %c91_444] : memref<4x484xf32, #tpu.memory_space<vmem>>, vector<1x352xf32>
    %c0_445 = arith.constant 0 : index
    %c71_446 = arith.constant 71 : index
    %696 = vector.load %arg2[%c0_445, %c71_446] : memref<4x100xf32, #tpu.memory_space<vmem>>, vector<4x1xf32>
    %697 = vector.broadcast %696 : vector<4x1xf32> to vector<4x352xf32>
    %698 = vector.broadcast %695 : vector<1x352xf32> to vector<4x352xf32>
    %699 = arith.mulf %697, %698 : vector<4x352xf32>
    %700 = arith.addf %676, %699 : vector<4x352xf32>
    %c0_447 = arith.constant 0 : index
    %c92_448 = arith.constant 92 : index
    %701 = vector.load %arg6[%c0_447, %c92_448] : memref<4x484xf32, #tpu.memory_space<vmem>>, vector<1x352xf32>
    %c0_449 = arith.constant 0 : index
    %c72 = arith.constant 72 : index
    %702 = vector.load %arg2[%c0_449, %c72] : memref<4x100xf32, #tpu.memory_space<vmem>>, vector<4x1xf32>
    %703 = vector.broadcast %702 : vector<4x1xf32> to vector<4x352xf32>
    %704 = vector.broadcast %701 : vector<1x352xf32> to vector<4x352xf32>
    %705 = arith.mulf %703, %704 : vector<4x352xf32>
    %706 = arith.addf %682, %705 : vector<4x352xf32>
    %c1_450 = arith.constant 1 : index
    %c92_451 = arith.constant 92 : index
    %707 = vector.load %arg6[%c1_450, %c92_451] : memref<4x484xf32, #tpu.memory_space<vmem>>, vector<1x352xf32>
    %c0_452 = arith.constant 0 : index
    %c73 = arith.constant 73 : index
    %708 = vector.load %arg2[%c0_452, %c73] : memref<4x100xf32, #tpu.memory_space<vmem>>, vector<4x1xf32>
    %709 = vector.broadcast %708 : vector<4x1xf32> to vector<4x352xf32>
    %710 = vector.broadcast %707 : vector<1x352xf32> to vector<4x352xf32>
    %711 = arith.mulf %709, %710 : vector<4x352xf32>
    %712 = arith.addf %688, %711 : vector<4x352xf32>
    %c2_453 = arith.constant 2 : index
    %c92_454 = arith.constant 92 : index
    %713 = vector.load %arg6[%c2_453, %c92_454] : memref<4x484xf32, #tpu.memory_space<vmem>>, vector<1x352xf32>
    %c0_455 = arith.constant 0 : index
    %c74 = arith.constant 74 : index
    %714 = vector.load %arg2[%c0_455, %c74] : memref<4x100xf32, #tpu.memory_space<vmem>>, vector<4x1xf32>
    %715 = vector.broadcast %714 : vector<4x1xf32> to vector<4x352xf32>
    %716 = vector.broadcast %713 : vector<1x352xf32> to vector<4x352xf32>
    %717 = arith.mulf %715, %716 : vector<4x352xf32>
    %718 = arith.addf %694, %717 : vector<4x352xf32>
    %c3_456 = arith.constant 3 : index
    %c92_457 = arith.constant 92 : index
    %719 = vector.load %arg6[%c3_456, %c92_457] : memref<4x484xf32, #tpu.memory_space<vmem>>, vector<1x352xf32>
    %c0_458 = arith.constant 0 : index
    %c75 = arith.constant 75 : index
    %720 = vector.load %arg2[%c0_458, %c75] : memref<4x100xf32, #tpu.memory_space<vmem>>, vector<4x1xf32>
    %721 = vector.broadcast %720 : vector<4x1xf32> to vector<4x352xf32>
    %722 = vector.broadcast %719 : vector<1x352xf32> to vector<4x352xf32>
    %723 = arith.mulf %721, %722 : vector<4x352xf32>
    %724 = arith.addf %700, %723 : vector<4x352xf32>
    %c0_459 = arith.constant 0 : index
    %c93 = arith.constant 93 : index
    %725 = vector.load %arg6[%c0_459, %c93] : memref<4x484xf32, #tpu.memory_space<vmem>>, vector<1x352xf32>
    %c0_460 = arith.constant 0 : index
    %c76 = arith.constant 76 : index
    %726 = vector.load %arg2[%c0_460, %c76] : memref<4x100xf32, #tpu.memory_space<vmem>>, vector<4x1xf32>
    %727 = vector.broadcast %726 : vector<4x1xf32> to vector<4x352xf32>
    %728 = vector.broadcast %725 : vector<1x352xf32> to vector<4x352xf32>
    %729 = arith.mulf %727, %728 : vector<4x352xf32>
    %730 = arith.addf %706, %729 : vector<4x352xf32>
    %c1_461 = arith.constant 1 : index
    %c93_462 = arith.constant 93 : index
    %731 = vector.load %arg6[%c1_461, %c93_462] : memref<4x484xf32, #tpu.memory_space<vmem>>, vector<1x352xf32>
    %c0_463 = arith.constant 0 : index
    %c77 = arith.constant 77 : index
    %732 = vector.load %arg2[%c0_463, %c77] : memref<4x100xf32, #tpu.memory_space<vmem>>, vector<4x1xf32>
    %733 = vector.broadcast %732 : vector<4x1xf32> to vector<4x352xf32>
    %734 = vector.broadcast %731 : vector<1x352xf32> to vector<4x352xf32>
    %735 = arith.mulf %733, %734 : vector<4x352xf32>
    %736 = arith.addf %712, %735 : vector<4x352xf32>
    %c2_464 = arith.constant 2 : index
    %c93_465 = arith.constant 93 : index
    %737 = vector.load %arg6[%c2_464, %c93_465] : memref<4x484xf32, #tpu.memory_space<vmem>>, vector<1x352xf32>
    %c0_466 = arith.constant 0 : index
    %c78 = arith.constant 78 : index
    %738 = vector.load %arg2[%c0_466, %c78] : memref<4x100xf32, #tpu.memory_space<vmem>>, vector<4x1xf32>
    %739 = vector.broadcast %738 : vector<4x1xf32> to vector<4x352xf32>
    %740 = vector.broadcast %737 : vector<1x352xf32> to vector<4x352xf32>
    %741 = arith.mulf %739, %740 : vector<4x352xf32>
    %742 = arith.addf %718, %741 : vector<4x352xf32>
    %c3_467 = arith.constant 3 : index
    %c93_468 = arith.constant 93 : index
    %743 = vector.load %arg6[%c3_467, %c93_468] : memref<4x484xf32, #tpu.memory_space<vmem>>, vector<1x352xf32>
    %c0_469 = arith.constant 0 : index
    %c79 = arith.constant 79 : index
    %744 = vector.load %arg2[%c0_469, %c79] : memref<4x100xf32, #tpu.memory_space<vmem>>, vector<4x1xf32>
    %745 = vector.broadcast %744 : vector<4x1xf32> to vector<4x352xf32>
    %746 = vector.broadcast %743 : vector<1x352xf32> to vector<4x352xf32>
    %747 = arith.mulf %745, %746 : vector<4x352xf32>
    %748 = arith.addf %724, %747 : vector<4x352xf32>
    %c0_470 = arith.constant 0 : index
    %c111 = arith.constant 111 : index
    %749 = vector.load %arg6[%c0_470, %c111] : memref<4x484xf32, #tpu.memory_space<vmem>>, vector<1x352xf32>
    %c0_471 = arith.constant 0 : index
    %c80 = arith.constant 80 : index
    %750 = vector.load %arg2[%c0_471, %c80] : memref<4x100xf32, #tpu.memory_space<vmem>>, vector<4x1xf32>
    %751 = vector.broadcast %750 : vector<4x1xf32> to vector<4x352xf32>
    %752 = vector.broadcast %749 : vector<1x352xf32> to vector<4x352xf32>
    %753 = arith.mulf %751, %752 : vector<4x352xf32>
    %754 = arith.addf %730, %753 : vector<4x352xf32>
    %c1_472 = arith.constant 1 : index
    %c111_473 = arith.constant 111 : index
    %755 = vector.load %arg6[%c1_472, %c111_473] : memref<4x484xf32, #tpu.memory_space<vmem>>, vector<1x352xf32>
    %c0_474 = arith.constant 0 : index
    %c81 = arith.constant 81 : index
    %756 = vector.load %arg2[%c0_474, %c81] : memref<4x100xf32, #tpu.memory_space<vmem>>, vector<4x1xf32>
    %757 = vector.broadcast %756 : vector<4x1xf32> to vector<4x352xf32>
    %758 = vector.broadcast %755 : vector<1x352xf32> to vector<4x352xf32>
    %759 = arith.mulf %757, %758 : vector<4x352xf32>
    %760 = arith.addf %736, %759 : vector<4x352xf32>
    %c2_475 = arith.constant 2 : index
    %c111_476 = arith.constant 111 : index
    %761 = vector.load %arg6[%c2_475, %c111_476] : memref<4x484xf32, #tpu.memory_space<vmem>>, vector<1x352xf32>
    %c0_477 = arith.constant 0 : index
    %c82 = arith.constant 82 : index
    %762 = vector.load %arg2[%c0_477, %c82] : memref<4x100xf32, #tpu.memory_space<vmem>>, vector<4x1xf32>
    %763 = vector.broadcast %762 : vector<4x1xf32> to vector<4x352xf32>
    %764 = vector.broadcast %761 : vector<1x352xf32> to vector<4x352xf32>
    %765 = arith.mulf %763, %764 : vector<4x352xf32>
    %766 = arith.addf %742, %765 : vector<4x352xf32>
    %c3_478 = arith.constant 3 : index
    %c111_479 = arith.constant 111 : index
    %767 = vector.load %arg6[%c3_478, %c111_479] : memref<4x484xf32, #tpu.memory_space<vmem>>, vector<1x352xf32>
    %c0_480 = arith.constant 0 : index
    %c83 = arith.constant 83 : index
    %768 = vector.load %arg2[%c0_480, %c83] : memref<4x100xf32, #tpu.memory_space<vmem>>, vector<4x1xf32>
    %769 = vector.broadcast %768 : vector<4x1xf32> to vector<4x352xf32>
    %770 = vector.broadcast %767 : vector<1x352xf32> to vector<4x352xf32>
    %771 = arith.mulf %769, %770 : vector<4x352xf32>
    %772 = arith.addf %748, %771 : vector<4x352xf32>
    %c0_481 = arith.constant 0 : index
    %c112 = arith.constant 112 : index
    %773 = vector.load %arg6[%c0_481, %c112] : memref<4x484xf32, #tpu.memory_space<vmem>>, vector<1x352xf32>
    %c0_482 = arith.constant 0 : index
    %c84 = arith.constant 84 : index
    %774 = vector.load %arg2[%c0_482, %c84] : memref<4x100xf32, #tpu.memory_space<vmem>>, vector<4x1xf32>
    %775 = vector.broadcast %774 : vector<4x1xf32> to vector<4x352xf32>
    %776 = vector.broadcast %773 : vector<1x352xf32> to vector<4x352xf32>
    %777 = arith.mulf %775, %776 : vector<4x352xf32>
    %778 = arith.addf %754, %777 : vector<4x352xf32>
    %c1_483 = arith.constant 1 : index
    %c112_484 = arith.constant 112 : index
    %779 = vector.load %arg6[%c1_483, %c112_484] : memref<4x484xf32, #tpu.memory_space<vmem>>, vector<1x352xf32>
    %c0_485 = arith.constant 0 : index
    %c85 = arith.constant 85 : index
    %780 = vector.load %arg2[%c0_485, %c85] : memref<4x100xf32, #tpu.memory_space<vmem>>, vector<4x1xf32>
    %781 = vector.broadcast %780 : vector<4x1xf32> to vector<4x352xf32>
    %782 = vector.broadcast %779 : vector<1x352xf32> to vector<4x352xf32>
    %783 = arith.mulf %781, %782 : vector<4x352xf32>
    %784 = arith.addf %760, %783 : vector<4x352xf32>
    %c2_486 = arith.constant 2 : index
    %c112_487 = arith.constant 112 : index
    %785 = vector.load %arg6[%c2_486, %c112_487] : memref<4x484xf32, #tpu.memory_space<vmem>>, vector<1x352xf32>
    %c0_488 = arith.constant 0 : index
    %c86 = arith.constant 86 : index
    %786 = vector.load %arg2[%c0_488, %c86] : memref<4x100xf32, #tpu.memory_space<vmem>>, vector<4x1xf32>
    %787 = vector.broadcast %786 : vector<4x1xf32> to vector<4x352xf32>
    %788 = vector.broadcast %785 : vector<1x352xf32> to vector<4x352xf32>
    %789 = arith.mulf %787, %788 : vector<4x352xf32>
    %790 = arith.addf %766, %789 : vector<4x352xf32>
    %c3_489 = arith.constant 3 : index
    %c112_490 = arith.constant 112 : index
    %791 = vector.load %arg6[%c3_489, %c112_490] : memref<4x484xf32, #tpu.memory_space<vmem>>, vector<1x352xf32>
    %c0_491 = arith.constant 0 : index
    %c87 = arith.constant 87 : index
    %792 = vector.load %arg2[%c0_491, %c87] : memref<4x100xf32, #tpu.memory_space<vmem>>, vector<4x1xf32>
    %793 = vector.broadcast %792 : vector<4x1xf32> to vector<4x352xf32>
    %794 = vector.broadcast %791 : vector<1x352xf32> to vector<4x352xf32>
    %795 = arith.mulf %793, %794 : vector<4x352xf32>
    %796 = arith.addf %772, %795 : vector<4x352xf32>
    %c0_492 = arith.constant 0 : index
    %c113_493 = arith.constant 113 : index
    %797 = vector.load %arg6[%c0_492, %c113_493] : memref<4x484xf32, #tpu.memory_space<vmem>>, vector<1x352xf32>
    %c0_494 = arith.constant 0 : index
    %c88 = arith.constant 88 : index
    %798 = vector.load %arg2[%c0_494, %c88] : memref<4x100xf32, #tpu.memory_space<vmem>>, vector<4x1xf32>
    %799 = vector.broadcast %798 : vector<4x1xf32> to vector<4x352xf32>
    %800 = vector.broadcast %797 : vector<1x352xf32> to vector<4x352xf32>
    %801 = arith.mulf %799, %800 : vector<4x352xf32>
    %802 = arith.addf %778, %801 : vector<4x352xf32>
    %c1_495 = arith.constant 1 : index
    %c113_496 = arith.constant 113 : index
    %803 = vector.load %arg6[%c1_495, %c113_496] : memref<4x484xf32, #tpu.memory_space<vmem>>, vector<1x352xf32>
    %c0_497 = arith.constant 0 : index
    %c89_498 = arith.constant 89 : index
    %804 = vector.load %arg2[%c0_497, %c89_498] : memref<4x100xf32, #tpu.memory_space<vmem>>, vector<4x1xf32>
    %805 = vector.broadcast %804 : vector<4x1xf32> to vector<4x352xf32>
    %806 = vector.broadcast %803 : vector<1x352xf32> to vector<4x352xf32>
    %807 = arith.mulf %805, %806 : vector<4x352xf32>
    %808 = arith.addf %784, %807 : vector<4x352xf32>
    %c2_499 = arith.constant 2 : index
    %c113_500 = arith.constant 113 : index
    %809 = vector.load %arg6[%c2_499, %c113_500] : memref<4x484xf32, #tpu.memory_space<vmem>>, vector<1x352xf32>
    %c0_501 = arith.constant 0 : index
    %c90_502 = arith.constant 90 : index
    %810 = vector.load %arg2[%c0_501, %c90_502] : memref<4x100xf32, #tpu.memory_space<vmem>>, vector<4x1xf32>
    %811 = vector.broadcast %810 : vector<4x1xf32> to vector<4x352xf32>
    %812 = vector.broadcast %809 : vector<1x352xf32> to vector<4x352xf32>
    %813 = arith.mulf %811, %812 : vector<4x352xf32>
    %814 = arith.addf %790, %813 : vector<4x352xf32>
    %c3_503 = arith.constant 3 : index
    %c113_504 = arith.constant 113 : index
    %815 = vector.load %arg6[%c3_503, %c113_504] : memref<4x484xf32, #tpu.memory_space<vmem>>, vector<1x352xf32>
    %c0_505 = arith.constant 0 : index
    %c91_506 = arith.constant 91 : index
    %816 = vector.load %arg2[%c0_505, %c91_506] : memref<4x100xf32, #tpu.memory_space<vmem>>, vector<4x1xf32>
    %817 = vector.broadcast %816 : vector<4x1xf32> to vector<4x352xf32>
    %818 = vector.broadcast %815 : vector<1x352xf32> to vector<4x352xf32>
    %819 = arith.mulf %817, %818 : vector<4x352xf32>
    %820 = arith.addf %796, %819 : vector<4x352xf32>
    %c0_507 = arith.constant 0 : index
    %c114 = arith.constant 114 : index
    %821 = vector.load %arg6[%c0_507, %c114] : memref<4x484xf32, #tpu.memory_space<vmem>>, vector<1x352xf32>
    %c0_508 = arith.constant 0 : index
    %c92_509 = arith.constant 92 : index
    %822 = vector.load %arg2[%c0_508, %c92_509] : memref<4x100xf32, #tpu.memory_space<vmem>>, vector<4x1xf32>
    %823 = vector.broadcast %822 : vector<4x1xf32> to vector<4x352xf32>
    %824 = vector.broadcast %821 : vector<1x352xf32> to vector<4x352xf32>
    %825 = arith.mulf %823, %824 : vector<4x352xf32>
    %826 = arith.addf %802, %825 : vector<4x352xf32>
    %c1_510 = arith.constant 1 : index
    %c114_511 = arith.constant 114 : index
    %827 = vector.load %arg6[%c1_510, %c114_511] : memref<4x484xf32, #tpu.memory_space<vmem>>, vector<1x352xf32>
    %c0_512 = arith.constant 0 : index
    %c93_513 = arith.constant 93 : index
    %828 = vector.load %arg2[%c0_512, %c93_513] : memref<4x100xf32, #tpu.memory_space<vmem>>, vector<4x1xf32>
    %829 = vector.broadcast %828 : vector<4x1xf32> to vector<4x352xf32>
    %830 = vector.broadcast %827 : vector<1x352xf32> to vector<4x352xf32>
    %831 = arith.mulf %829, %830 : vector<4x352xf32>
    %832 = arith.addf %808, %831 : vector<4x352xf32>
    %c2_514 = arith.constant 2 : index
    %c114_515 = arith.constant 114 : index
    %833 = vector.load %arg6[%c2_514, %c114_515] : memref<4x484xf32, #tpu.memory_space<vmem>>, vector<1x352xf32>
    %c0_516 = arith.constant 0 : index
    %c94 = arith.constant 94 : index
    %834 = vector.load %arg2[%c0_516, %c94] : memref<4x100xf32, #tpu.memory_space<vmem>>, vector<4x1xf32>
    %835 = vector.broadcast %834 : vector<4x1xf32> to vector<4x352xf32>
    %836 = vector.broadcast %833 : vector<1x352xf32> to vector<4x352xf32>
    %837 = arith.mulf %835, %836 : vector<4x352xf32>
    %838 = arith.addf %814, %837 : vector<4x352xf32>
    %c3_517 = arith.constant 3 : index
    %c114_518 = arith.constant 114 : index
    %839 = vector.load %arg6[%c3_517, %c114_518] : memref<4x484xf32, #tpu.memory_space<vmem>>, vector<1x352xf32>
    %c0_519 = arith.constant 0 : index
    %c95 = arith.constant 95 : index
    %840 = vector.load %arg2[%c0_519, %c95] : memref<4x100xf32, #tpu.memory_space<vmem>>, vector<4x1xf32>
    %841 = vector.broadcast %840 : vector<4x1xf32> to vector<4x352xf32>
    %842 = vector.broadcast %839 : vector<1x352xf32> to vector<4x352xf32>
    %843 = arith.mulf %841, %842 : vector<4x352xf32>
    %844 = arith.addf %820, %843 : vector<4x352xf32>
    %c0_520 = arith.constant 0 : index
    %c115 = arith.constant 115 : index
    %845 = vector.load %arg6[%c0_520, %c115] : memref<4x484xf32, #tpu.memory_space<vmem>>, vector<1x352xf32>
    %c0_521 = arith.constant 0 : index
    %c96 = arith.constant 96 : index
    %846 = vector.load %arg2[%c0_521, %c96] : memref<4x100xf32, #tpu.memory_space<vmem>>, vector<4x1xf32>
    %847 = vector.broadcast %846 : vector<4x1xf32> to vector<4x352xf32>
    %848 = vector.broadcast %845 : vector<1x352xf32> to vector<4x352xf32>
    %849 = arith.mulf %847, %848 : vector<4x352xf32>
    %850 = arith.addf %826, %849 : vector<4x352xf32>
    %c1_522 = arith.constant 1 : index
    %c115_523 = arith.constant 115 : index
    %851 = vector.load %arg6[%c1_522, %c115_523] : memref<4x484xf32, #tpu.memory_space<vmem>>, vector<1x352xf32>
    %c0_524 = arith.constant 0 : index
    %c97 = arith.constant 97 : index
    %852 = vector.load %arg2[%c0_524, %c97] : memref<4x100xf32, #tpu.memory_space<vmem>>, vector<4x1xf32>
    %853 = vector.broadcast %852 : vector<4x1xf32> to vector<4x352xf32>
    %854 = vector.broadcast %851 : vector<1x352xf32> to vector<4x352xf32>
    %855 = arith.mulf %853, %854 : vector<4x352xf32>
    %856 = arith.addf %832, %855 : vector<4x352xf32>
    %c2_525 = arith.constant 2 : index
    %c115_526 = arith.constant 115 : index
    %857 = vector.load %arg6[%c2_525, %c115_526] : memref<4x484xf32, #tpu.memory_space<vmem>>, vector<1x352xf32>
    %c0_527 = arith.constant 0 : index
    %c98 = arith.constant 98 : index
    %858 = vector.load %arg2[%c0_527, %c98] : memref<4x100xf32, #tpu.memory_space<vmem>>, vector<4x1xf32>
    %859 = vector.broadcast %858 : vector<4x1xf32> to vector<4x352xf32>
    %860 = vector.broadcast %857 : vector<1x352xf32> to vector<4x352xf32>
    %861 = arith.mulf %859, %860 : vector<4x352xf32>
    %862 = arith.addf %838, %861 : vector<4x352xf32>
    %c3_528 = arith.constant 3 : index
    %c115_529 = arith.constant 115 : index
    %863 = vector.load %arg6[%c3_528, %c115_529] : memref<4x484xf32, #tpu.memory_space<vmem>>, vector<1x352xf32>
    %c0_530 = arith.constant 0 : index
    %c99 = arith.constant 99 : index
    %864 = vector.load %arg2[%c0_530, %c99] : memref<4x100xf32, #tpu.memory_space<vmem>>, vector<4x1xf32>
    %865 = vector.broadcast %864 : vector<4x1xf32> to vector<4x352xf32>
    %866 = vector.broadcast %863 : vector<1x352xf32> to vector<4x352xf32>
    %867 = arith.mulf %865, %866 : vector<4x352xf32>
    %868 = arith.addf %844, %867 : vector<4x352xf32>
    %869 = arith.addf %850, %856 : vector<4x352xf32>
    %870 = arith.addf %869, %862 : vector<4x352xf32>
    %871 = arith.addf %870, %868 : vector<4x352xf32>
    %cst_531 = arith.constant 0.000000e+00 : f32
    %872 = vector.broadcast %cst_531 : f32 to vector<4x352xf32>
    %873 = arith.maximumf %871, %872 : vector<4x352xf32>
    %c0_532 = arith.constant 0 : index
    %c69_533 = arith.constant 69 : index
    %874 = vector.load %arg6[%c0_532, %c69_533] : memref<4x484xf32, #tpu.memory_space<vmem>>, vector<4x352xf32>
    tpu.vector_store %arg6[%c0_532, %c69_533], %873 {strides = array<i32>} : memref<4x484xf32, #tpu.memory_space<vmem>>, vector<4x352xf32>,
    %c0_534 = arith.constant 0 : index
    %c69_535 = arith.constant 69 : index
    %875 = vector.load %arg6[%c0_534, %c69_535] : memref<4x484xf32, #tpu.memory_space<vmem>>, vector<4x16xf32>
    %c0_536 = arith.constant 0 : index
    %c0_537 = arith.constant 0 : index
    %c0_538 = arith.constant 0 : index
    %c0_539 = arith.constant 0 : index
    %876 = vector.load %arg4[%c0_536, %c0_537, %c0_538, %c0_539] : memref<1x4x16x16xf32, #tpu.memory_space<vmem>>, vector<1x4x1x16xf32>
    %877 = vector.shape_cast %876 : vector<1x4x1x16xf32> to vector<4x16xf32>
    %878 = arith.addf %875, %877 : vector<4x16xf32>
    %c0_540 = arith.constant 0 : index
    %c0_541 = arith.constant 0 : index
    %c0_542 = arith.constant 0 : index
    %c0_543 = arith.constant 0 : index
    %879 = vector.load %arg5[%c0_540, %c0_541, %c0_542, %c0_543] : memref<1x4x16x16xf32, #tpu.memory_space<vmem>>, vector<1x4x1x16xf32>
    %880 = vector.shape_cast %879 : vector<1x4x1x16xf32> to vector<4x16xf32>
    %881 = vector.shape_cast %878 : vector<4x16xf32> to vector<1x4x1x16xf32>
    tpu.vector_store %arg5[%c0_540, %c0_541, %c0_542, %c0_543], %881 {strides = array<i32>} : memref<1x4x16x16xf32, #tpu.memory_space<vmem>>, vector<1x4x1x16xf32>,
    %c0_544 = arith.constant 0 : index
    %c91_545 = arith.constant 91 : index
    %882 = vector.load %arg6[%c0_544, %c91_545] : memref<4x484xf32, #tpu.memory_space<vmem>>, vector<4x16xf32>
    %c0_546 = arith.constant 0 : index
    %c0_547 = arith.constant 0 : index
    %c1_548 = arith.constant 1 : index
    %c0_549 = arith.constant 0 : index
    %883 = vector.load %arg4[%c0_546, %c0_547, %c1_548, %c0_549] : memref<1x4x16x16xf32, #tpu.memory_space<vmem>>, vector<1x4x1x16xf32>
    %884 = vector.shape_cast %883 : vector<1x4x1x16xf32> to vector<4x16xf32>
    %885 = arith.addf %882, %884 : vector<4x16xf32>
    %c0_550 = arith.constant 0 : index
    %c0_551 = arith.constant 0 : index
    %c1_552 = arith.constant 1 : index
    %c0_553 = arith.constant 0 : index
    %886 = vector.load %arg5[%c0_550, %c0_551, %c1_552, %c0_553] : memref<1x4x16x16xf32, #tpu.memory_space<vmem>>, vector<1x4x1x16xf32>
    %887 = vector.shape_cast %886 : vector<1x4x1x16xf32> to vector<4x16xf32>
    %888 = vector.shape_cast %885 : vector<4x16xf32> to vector<1x4x1x16xf32>
    tpu.vector_store %arg5[%c0_550, %c0_551, %c1_552, %c0_553], %888 {strides = array<i32>} : memref<1x4x16x16xf32, #tpu.memory_space<vmem>>, vector<1x4x1x16xf32>,
    %c0_554 = arith.constant 0 : index
    %c113_555 = arith.constant 113 : index
    %889 = vector.load %arg6[%c0_554, %c113_555] : memref<4x484xf32, #tpu.memory_space<vmem>>, vector<4x16xf32>
    %c0_556 = arith.constant 0 : index
    %c0_557 = arith.constant 0 : index
    %c2_558 = arith.constant 2 : index
    %c0_559 = arith.constant 0 : index
    %890 = vector.load %arg4[%c0_556, %c0_557, %c2_558, %c0_559] : memref<1x4x16x16xf32, #tpu.memory_space<vmem>>, vector<1x4x1x16xf32>
    %891 = vector.shape_cast %890 : vector<1x4x1x16xf32> to vector<4x16xf32>
    %892 = arith.addf %889, %891 : vector<4x16xf32>
    %c0_560 = arith.constant 0 : index
    %c0_561 = arith.constant 0 : index
    %c2_562 = arith.constant 2 : index
    %c0_563 = arith.constant 0 : index
    %893 = vector.load %arg5[%c0_560, %c0_561, %c2_562, %c0_563] : memref<1x4x16x16xf32, #tpu.memory_space<vmem>>, vector<1x4x1x16xf32>
    %894 = vector.shape_cast %893 : vector<1x4x1x16xf32> to vector<4x16xf32>
    %895 = vector.shape_cast %892 : vector<4x16xf32> to vector<1x4x1x16xf32>
    tpu.vector_store %arg5[%c0_560, %c0_561, %c2_562, %c0_563], %895 {strides = array<i32>} : memref<1x4x16x16xf32, #tpu.memory_space<vmem>>, vector<1x4x1x16xf32>,
    %c0_564 = arith.constant 0 : index
    %c135_565 = arith.constant 135 : index
    %896 = vector.load %arg6[%c0_564, %c135_565] : memref<4x484xf32, #tpu.memory_space<vmem>>, vector<4x16xf32>
    %c0_566 = arith.constant 0 : index
    %c0_567 = arith.constant 0 : index
    %c3_568 = arith.constant 3 : index
    %c0_569 = arith.constant 0 : index
    %897 = vector.load %arg4[%c0_566, %c0_567, %c3_568, %c0_569] : memref<1x4x16x16xf32, #tpu.memory_space<vmem>>, vector<1x4x1x16xf32>
    %898 = vector.shape_cast %897 : vector<1x4x1x16xf32> to vector<4x16xf32>
    %899 = arith.addf %896, %898 : vector<4x16xf32>
    %c0_570 = arith.constant 0 : index
    %c0_571 = arith.constant 0 : index
    %c3_572 = arith.constant 3 : index
    %c0_573 = arith.constant 0 : index
    %900 = vector.load %arg5[%c0_570, %c0_571, %c3_572, %c0_573] : memref<1x4x16x16xf32, #tpu.memory_space<vmem>>, vector<1x4x1x16xf32>
    %901 = vector.shape_cast %900 : vector<1x4x1x16xf32> to vector<4x16xf32>
    %902 = vector.shape_cast %899 : vector<4x16xf32> to vector<1x4x1x16xf32>
    tpu.vector_store %arg5[%c0_570, %c0_571, %c3_572, %c0_573], %902 {strides = array<i32>} : memref<1x4x16x16xf32, #tpu.memory_space<vmem>>, vector<1x4x1x16xf32>,
    %c0_574 = arith.constant 0 : index
    %c157_575 = arith.constant 157 : index
    %903 = vector.load %arg6[%c0_574, %c157_575] : memref<4x484xf32, #tpu.memory_space<vmem>>, vector<4x16xf32>
    %c0_576 = arith.constant 0 : index
    %c0_577 = arith.constant 0 : index
    %c4_578 = arith.constant 4 : index
    %c0_579 = arith.constant 0 : index
    %904 = vector.load %arg4[%c0_576, %c0_577, %c4_578, %c0_579] : memref<1x4x16x16xf32, #tpu.memory_space<vmem>>, vector<1x4x1x16xf32>
    %905 = vector.shape_cast %904 : vector<1x4x1x16xf32> to vector<4x16xf32>
    %906 = arith.addf %903, %905 : vector<4x16xf32>
    %c0_580 = arith.constant 0 : index
    %c0_581 = arith.constant 0 : index
    %c4_582 = arith.constant 4 : index
    %c0_583 = arith.constant 0 : index
    %907 = vector.load %arg5[%c0_580, %c0_581, %c4_582, %c0_583] : memref<1x4x16x16xf32, #tpu.memory_space<vmem>>, vector<1x4x1x16xf32>
    %908 = vector.shape_cast %907 : vector<1x4x1x16xf32> to vector<4x16xf32>
    %909 = vector.shape_cast %906 : vector<4x16xf32> to vector<1x4x1x16xf32>
    tpu.vector_store %arg5[%c0_580, %c0_581, %c4_582, %c0_583], %909 {strides = array<i32>} : memref<1x4x16x16xf32, #tpu.memory_space<vmem>>, vector<1x4x1x16xf32>,
    %c0_584 = arith.constant 0 : index
    %c179_585 = arith.constant 179 : index
    %910 = vector.load %arg6[%c0_584, %c179_585] : memref<4x484xf32, #tpu.memory_space<vmem>>, vector<4x16xf32>
    %c0_586 = arith.constant 0 : index
    %c0_587 = arith.constant 0 : index
    %c5_588 = arith.constant 5 : index
    %c0_589 = arith.constant 0 : index
    %911 = vector.load %arg4[%c0_586, %c0_587, %c5_588, %c0_589] : memref<1x4x16x16xf32, #tpu.memory_space<vmem>>, vector<1x4x1x16xf32>
    %912 = vector.shape_cast %911 : vector<1x4x1x16xf32> to vector<4x16xf32>
    %913 = arith.addf %910, %912 : vector<4x16xf32>
    %c0_590 = arith.constant 0 : index
    %c0_591 = arith.constant 0 : index
    %c5_592 = arith.constant 5 : index
    %c0_593 = arith.constant 0 : index
    %914 = vector.load %arg5[%c0_590, %c0_591, %c5_592, %c0_593] : memref<1x4x16x16xf32, #tpu.memory_space<vmem>>, vector<1x4x1x16xf32>
    %915 = vector.shape_cast %914 : vector<1x4x1x16xf32> to vector<4x16xf32>
    %916 = vector.shape_cast %913 : vector<4x16xf32> to vector<1x4x1x16xf32>
    tpu.vector_store %arg5[%c0_590, %c0_591, %c5_592, %c0_593], %916 {strides = array<i32>} : memref<1x4x16x16xf32, #tpu.memory_space<vmem>>, vector<1x4x1x16xf32>,
    %c0_594 = arith.constant 0 : index
    %c201_595 = arith.constant 201 : index
    %917 = vector.load %arg6[%c0_594, %c201_595] : memref<4x484xf32, #tpu.memory_space<vmem>>, vector<4x16xf32>
    %c0_596 = arith.constant 0 : index
    %c0_597 = arith.constant 0 : index
    %c6_598 = arith.constant 6 : index
    %c0_599 = arith.constant 0 : index
    %918 = vector.load %arg4[%c0_596, %c0_597, %c6_598, %c0_599] : memref<1x4x16x16xf32, #tpu.memory_space<vmem>>, vector<1x4x1x16xf32>
    %919 = vector.shape_cast %918 : vector<1x4x1x16xf32> to vector<4x16xf32>
    %920 = arith.addf %917, %919 : vector<4x16xf32>
    %c0_600 = arith.constant 0 : index
    %c0_601 = arith.constant 0 : index
    %c6_602 = arith.constant 6 : index
    %c0_603 = arith.constant 0 : index
    %921 = vector.load %arg5[%c0_600, %c0_601, %c6_602, %c0_603] : memref<1x4x16x16xf32, #tpu.memory_space<vmem>>, vector<1x4x1x16xf32>
    %922 = vector.shape_cast %921 : vector<1x4x1x16xf32> to vector<4x16xf32>
    %923 = vector.shape_cast %920 : vector<4x16xf32> to vector<1x4x1x16xf32>
    tpu.vector_store %arg5[%c0_600, %c0_601, %c6_602, %c0_603], %923 {strides = array<i32>} : memref<1x4x16x16xf32, #tpu.memory_space<vmem>>, vector<1x4x1x16xf32>,
    %c0_604 = arith.constant 0 : index
    %c223_605 = arith.constant 223 : index
    %924 = vector.load %arg6[%c0_604, %c223_605] : memref<4x484xf32, #tpu.memory_space<vmem>>, vector<4x16xf32>
    %c0_606 = arith.constant 0 : index
    %c0_607 = arith.constant 0 : index
    %c7_608 = arith.constant 7 : index
    %c0_609 = arith.constant 0 : index
    %925 = vector.load %arg4[%c0_606, %c0_607, %c7_608, %c0_609] : memref<1x4x16x16xf32, #tpu.memory_space<vmem>>, vector<1x4x1x16xf32>
    %926 = vector.shape_cast %925 : vector<1x4x1x16xf32> to vector<4x16xf32>
    %927 = arith.addf %924, %926 : vector<4x16xf32>
    %c0_610 = arith.constant 0 : index
    %c0_611 = arith.constant 0 : index
    %c7_612 = arith.constant 7 : index
    %c0_613 = arith.constant 0 : index
    %928 = vector.load %arg5[%c0_610, %c0_611, %c7_612, %c0_613] : memref<1x4x16x16xf32, #tpu.memory_space<vmem>>, vector<1x4x1x16xf32>
    %929 = vector.shape_cast %928 : vector<1x4x1x16xf32> to vector<4x16xf32>
    %930 = vector.shape_cast %927 : vector<4x16xf32> to vector<1x4x1x16xf32>
    tpu.vector_store %arg5[%c0_610, %c0_611, %c7_612, %c0_613], %930 {strides = array<i32>} : memref<1x4x16x16xf32, #tpu.memory_space<vmem>>, vector<1x4x1x16xf32>,
    %c0_614 = arith.constant 0 : index
    %c245_615 = arith.constant 245 : index
    %931 = vector.load %arg6[%c0_614, %c245_615] : memref<4x484xf32, #tpu.memory_space<vmem>>, vector<4x16xf32>
    %c0_616 = arith.constant 0 : index
    %c0_617 = arith.constant 0 : index
    %c8_618 = arith.constant 8 : index
    %c0_619 = arith.constant 0 : index
    %932 = vector.load %arg4[%c0_616, %c0_617, %c8_618, %c0_619] : memref<1x4x16x16xf32, #tpu.memory_space<vmem>>, vector<1x4x1x16xf32>
    %933 = vector.shape_cast %932 : vector<1x4x1x16xf32> to vector<4x16xf32>
    %934 = arith.addf %931, %933 : vector<4x16xf32>
    %c0_620 = arith.constant 0 : index
    %c0_621 = arith.constant 0 : index
    %c8_622 = arith.constant 8 : index
    %c0_623 = arith.constant 0 : index
    %935 = vector.load %arg5[%c0_620, %c0_621, %c8_622, %c0_623] : memref<1x4x16x16xf32, #tpu.memory_space<vmem>>, vector<1x4x1x16xf32>
    %936 = vector.shape_cast %935 : vector<1x4x1x16xf32> to vector<4x16xf32>
    %937 = vector.shape_cast %934 : vector<4x16xf32> to vector<1x4x1x16xf32>
    tpu.vector_store %arg5[%c0_620, %c0_621, %c8_622, %c0_623], %937 {strides = array<i32>} : memref<1x4x16x16xf32, #tpu.memory_space<vmem>>, vector<1x4x1x16xf32>,
    %c0_624 = arith.constant 0 : index
    %c267_625 = arith.constant 267 : index
    %938 = vector.load %arg6[%c0_624, %c267_625] : memref<4x484xf32, #tpu.memory_space<vmem>>, vector<4x16xf32>
    %c0_626 = arith.constant 0 : index
    %c0_627 = arith.constant 0 : index
    %c9_628 = arith.constant 9 : index
    %c0_629 = arith.constant 0 : index
    %939 = vector.load %arg4[%c0_626, %c0_627, %c9_628, %c0_629] : memref<1x4x16x16xf32, #tpu.memory_space<vmem>>, vector<1x4x1x16xf32>
    %940 = vector.shape_cast %939 : vector<1x4x1x16xf32> to vector<4x16xf32>
    %941 = arith.addf %938, %940 : vector<4x16xf32>
    %c0_630 = arith.constant 0 : index
    %c0_631 = arith.constant 0 : index
    %c9_632 = arith.constant 9 : index
    %c0_633 = arith.constant 0 : index
    %942 = vector.load %arg5[%c0_630, %c0_631, %c9_632, %c0_633] : memref<1x4x16x16xf32, #tpu.memory_space<vmem>>, vector<1x4x1x16xf32>
    %943 = vector.shape_cast %942 : vector<1x4x1x16xf32> to vector<4x16xf32>
    %944 = vector.shape_cast %941 : vector<4x16xf32> to vector<1x4x1x16xf32>
    tpu.vector_store %arg5[%c0_630, %c0_631, %c9_632, %c0_633], %944 {strides = array<i32>} : memref<1x4x16x16xf32, #tpu.memory_space<vmem>>, vector<1x4x1x16xf32>,
    %c0_634 = arith.constant 0 : index
    %c289_635 = arith.constant 289 : index
    %945 = vector.load %arg6[%c0_634, %c289_635] : memref<4x484xf32, #tpu.memory_space<vmem>>, vector<4x16xf32>
    %c0_636 = arith.constant 0 : index
    %c0_637 = arith.constant 0 : index
    %c10_638 = arith.constant 10 : index
    %c0_639 = arith.constant 0 : index
    %946 = vector.load %arg4[%c0_636, %c0_637, %c10_638, %c0_639] : memref<1x4x16x16xf32, #tpu.memory_space<vmem>>, vector<1x4x1x16xf32>
    %947 = vector.shape_cast %946 : vector<1x4x1x16xf32> to vector<4x16xf32>
    %948 = arith.addf %945, %947 : vector<4x16xf32>
    %c0_640 = arith.constant 0 : index
    %c0_641 = arith.constant 0 : index
    %c10_642 = arith.constant 10 : index
    %c0_643 = arith.constant 0 : index
    %949 = vector.load %arg5[%c0_640, %c0_641, %c10_642, %c0_643] : memref<1x4x16x16xf32, #tpu.memory_space<vmem>>, vector<1x4x1x16xf32>
    %950 = vector.shape_cast %949 : vector<1x4x1x16xf32> to vector<4x16xf32>
    %951 = vector.shape_cast %948 : vector<4x16xf32> to vector<1x4x1x16xf32>
    tpu.vector_store %arg5[%c0_640, %c0_641, %c10_642, %c0_643], %951 {strides = array<i32>} : memref<1x4x16x16xf32, #tpu.memory_space<vmem>>, vector<1x4x1x16xf32>,
    %c0_644 = arith.constant 0 : index
    %c311_645 = arith.constant 311 : index
    %952 = vector.load %arg6[%c0_644, %c311_645] : memref<4x484xf32, #tpu.memory_space<vmem>>, vector<4x16xf32>
    %c0_646 = arith.constant 0 : index
    %c0_647 = arith.constant 0 : index
    %c11_648 = arith.constant 11 : index
    %c0_649 = arith.constant 0 : index
    %953 = vector.load %arg4[%c0_646, %c0_647, %c11_648, %c0_649] : memref<1x4x16x16xf32, #tpu.memory_space<vmem>>, vector<1x4x1x16xf32>
    %954 = vector.shape_cast %953 : vector<1x4x1x16xf32> to vector<4x16xf32>
    %955 = arith.addf %952, %954 : vector<4x16xf32>
    %c0_650 = arith.constant 0 : index
    %c0_651 = arith.constant 0 : index
    %c11_652 = arith.constant 11 : index
    %c0_653 = arith.constant 0 : index
    %956 = vector.load %arg5[%c0_650, %c0_651, %c11_652, %c0_653] : memref<1x4x16x16xf32, #tpu.memory_space<vmem>>, vector<1x4x1x16xf32>
    %957 = vector.shape_cast %956 : vector<1x4x1x16xf32> to vector<4x16xf32>
    %958 = vector.shape_cast %955 : vector<4x16xf32> to vector<1x4x1x16xf32>
    tpu.vector_store %arg5[%c0_650, %c0_651, %c11_652, %c0_653], %958 {strides = array<i32>} : memref<1x4x16x16xf32, #tpu.memory_space<vmem>>, vector<1x4x1x16xf32>,
    %c0_654 = arith.constant 0 : index
    %c333_655 = arith.constant 333 : index
    %959 = vector.load %arg6[%c0_654, %c333_655] : memref<4x484xf32, #tpu.memory_space<vmem>>, vector<4x16xf32>
    %c0_656 = arith.constant 0 : index
    %c0_657 = arith.constant 0 : index
    %c12_658 = arith.constant 12 : index
    %c0_659 = arith.constant 0 : index
    %960 = vector.load %arg4[%c0_656, %c0_657, %c12_658, %c0_659] : memref<1x4x16x16xf32, #tpu.memory_space<vmem>>, vector<1x4x1x16xf32>
    %961 = vector.shape_cast %960 : vector<1x4x1x16xf32> to vector<4x16xf32>
    %962 = arith.addf %959, %961 : vector<4x16xf32>
    %c0_660 = arith.constant 0 : index
    %c0_661 = arith.constant 0 : index
    %c12_662 = arith.constant 12 : index
    %c0_663 = arith.constant 0 : index
    %963 = vector.load %arg5[%c0_660, %c0_661, %c12_662, %c0_663] : memref<1x4x16x16xf32, #tpu.memory_space<vmem>>, vector<1x4x1x16xf32>
    %964 = vector.shape_cast %963 : vector<1x4x1x16xf32> to vector<4x16xf32>
    %965 = vector.shape_cast %962 : vector<4x16xf32> to vector<1x4x1x16xf32>
    tpu.vector_store %arg5[%c0_660, %c0_661, %c12_662, %c0_663], %965 {strides = array<i32>} : memref<1x4x16x16xf32, #tpu.memory_space<vmem>>, vector<1x4x1x16xf32>,
    %c0_664 = arith.constant 0 : index
    %c355_665 = arith.constant 355 : index
    %966 = vector.load %arg6[%c0_664, %c355_665] : memref<4x484xf32, #tpu.memory_space<vmem>>, vector<4x16xf32>
    %c0_666 = arith.constant 0 : index
    %c0_667 = arith.constant 0 : index
    %c13_668 = arith.constant 13 : index
    %c0_669 = arith.constant 0 : index
    %967 = vector.load %arg4[%c0_666, %c0_667, %c13_668, %c0_669] : memref<1x4x16x16xf32, #tpu.memory_space<vmem>>, vector<1x4x1x16xf32>
    %968 = vector.shape_cast %967 : vector<1x4x1x16xf32> to vector<4x16xf32>
    %969 = arith.addf %966, %968 : vector<4x16xf32>
    %c0_670 = arith.constant 0 : index
    %c0_671 = arith.constant 0 : index
    %c13_672 = arith.constant 13 : index
    %c0_673 = arith.constant 0 : index
    %970 = vector.load %arg5[%c0_670, %c0_671, %c13_672, %c0_673] : memref<1x4x16x16xf32, #tpu.memory_space<vmem>>, vector<1x4x1x16xf32>
    %971 = vector.shape_cast %970 : vector<1x4x1x16xf32> to vector<4x16xf32>
    %972 = vector.shape_cast %969 : vector<4x16xf32> to vector<1x4x1x16xf32>
    tpu.vector_store %arg5[%c0_670, %c0_671, %c13_672, %c0_673], %972 {strides = array<i32>} : memref<1x4x16x16xf32, #tpu.memory_space<vmem>>, vector<1x4x1x16xf32>,
    %c0_674 = arith.constant 0 : index
    %c377_675 = arith.constant 377 : index
    %973 = vector.load %arg6[%c0_674, %c377_675] : memref<4x484xf32, #tpu.memory_space<vmem>>, vector<4x16xf32>
    %c0_676 = arith.constant 0 : index
    %c0_677 = arith.constant 0 : index
    %c14_678 = arith.constant 14 : index
    %c0_679 = arith.constant 0 : index
    %974 = vector.load %arg4[%c0_676, %c0_677, %c14_678, %c0_679] : memref<1x4x16x16xf32, #tpu.memory_space<vmem>>, vector<1x4x1x16xf32>
    %975 = vector.shape_cast %974 : vector<1x4x1x16xf32> to vector<4x16xf32>
    %976 = arith.addf %973, %975 : vector<4x16xf32>
    %c0_680 = arith.constant 0 : index
    %c0_681 = arith.constant 0 : index
    %c14_682 = arith.constant 14 : index
    %c0_683 = arith.constant 0 : index
    %977 = vector.load %arg5[%c0_680, %c0_681, %c14_682, %c0_683] : memref<1x4x16x16xf32, #tpu.memory_space<vmem>>, vector<1x4x1x16xf32>
    %978 = vector.shape_cast %977 : vector<1x4x1x16xf32> to vector<4x16xf32>
    %979 = vector.shape_cast %976 : vector<4x16xf32> to vector<1x4x1x16xf32>
    tpu.vector_store %arg5[%c0_680, %c0_681, %c14_682, %c0_683], %979 {strides = array<i32>} : memref<1x4x16x16xf32, #tpu.memory_space<vmem>>, vector<1x4x1x16xf32>,
    %c0_684 = arith.constant 0 : index
    %c399_685 = arith.constant 399 : index
    %980 = vector.load %arg6[%c0_684, %c399_685] : memref<4x484xf32, #tpu.memory_space<vmem>>, vector<4x16xf32>
    %c0_686 = arith.constant 0 : index
    %c0_687 = arith.constant 0 : index
    %c15_688 = arith.constant 15 : index
    %c0_689 = arith.constant 0 : index
    %981 = vector.load %arg4[%c0_686, %c0_687, %c15_688, %c0_689] : memref<1x4x16x16xf32, #tpu.memory_space<vmem>>, vector<1x4x1x16xf32>
    %982 = vector.shape_cast %981 : vector<1x4x1x16xf32> to vector<4x16xf32>
    %983 = arith.addf %980, %982 : vector<4x16xf32>
    %c0_690 = arith.constant 0 : index
    %c0_691 = arith.constant 0 : index
    %c15_692 = arith.constant 15 : index
    %c0_693 = arith.constant 0 : index
    %984 = vector.load %arg5[%c0_690, %c0_691, %c15_692, %c0_693] : memref<1x4x16x16xf32, #tpu.memory_space<vmem>>, vector<1x4x1x16xf32>
    %985 = vector.shape_cast %984 : vector<1x4x1x16xf32> to vector<4x16xf32>
    %986 = vector.shape_cast %983 : vector<4x16xf32> to vector<1x4x1x16xf32>
    tpu.vector_store %arg5[%c0_690, %c0_691, %c15_692, %c0_693], %986 {strides = array<i32>} : memref<1x4x16x16xf32, #tpu.memory_space<vmem>>, vector<1x4x1x16xf32>,
    return
  }
  func.func @transform_0(%arg0: i32) -> (i32, i32) {
    %c0_i32 = arith.constant 0 : i32
    %c0_i32_0 = arith.constant 0 : i32
    %c0_i32_1 = arith.constant 0 : i32
    return %c0_i32, %c0_i32_0 : i32, i32
  }
  func.func @transform_1(%arg0: i32) -> (i32, i32) {
    %c0_i32 = arith.constant 0 : i32
    %c0_i32_0 = arith.constant 0 : i32
    %c0_i32_1 = arith.constant 0 : i32
    return %c0_i32, %c0_i32_0 : i32, i32
  }
  func.func @transform_2(%arg0: i32) -> (i32, i32) {
    %c0_i32 = arith.constant 0 : i32
    %c0_i32_0 = arith.constant 0 : i32
    %c0_i32_1 = arith.constant 0 : i32
    return %c0_i32, %c0_i32_0 : i32, i32
  }
  func.func @transform_3(%arg0: i32) -> (i32, i32, i32, i32) {
    %c0_i32 = arith.constant 0 : i32
    %c0_i32_0 = arith.constant 0 : i32
    %c0_i32_1 = arith.constant 0 : i32
    %c0_i32_2 = arith.constant 0 : i32
    return %arg0, %c0_i32, %c0_i32_0, %c0_i32_1 : i32, i32, i32, i32
  }
  func.func @transform_4(%arg0: i32) -> (i32, i32, i32, i32) {
    %c0_i32 = arith.constant 0 : i32
    %c0_i32_0 = arith.constant 0 : i32
    %c0_i32_1 = arith.constant 0 : i32
    %c0_i32_2 = arith.constant 0 : i32
    return %arg0, %c0_i32, %c0_i32_0, %c0_i32_1 : i32, i32, i32, i32
  }
}

</mosaic_0001>

<llo_original>
// kernel: tpu_custom_call.1
$region0: #{tpu_custom_call.1}
  #allocation0 [shape = 'u32[]', space=smem, size = 0x4, offset = 0x4, fixed_abs, tag = 'smem constant byte address 0x4 - core index']
  #allocation1 [shape = 'u32[144,128]{1,0:T(1,128)}', space=vmem, size = 0x12000, scoped, tag = 'internal scratch']
  #allocation2 [shape = 'f32[4,484]{1,0:T(4,128)}', space=vmem, size = 0x2000, scoped, tag = 'scratch operand']
  %s0 = inlined_call_operand.hbm [shape: f32[4,36], index: 0, kind: input, shape index: {}]
  %s1 = inlined_call_operand.hbm [shape: f32[4,100], index: 1, kind: input, shape index: {}]
  %s2 = inlined_call_operand.vmem [shape: f32[1,352], index: 2, kind: input, shape index: {}]
  %s3 = inlined_call_operand.hbm [shape: f32[2,4,16,16], index: 3, kind: input, shape index: {}]
  %s4 = inlined_call_operand.hbm [shape: f32[2,4,16,16], index: 4, kind: output, shape index: {}]
  %s5 = sld [smem:[#allocation0]]
  $region61: #{tpu_custom_call.1} parent=0
    _
  %s7 = ssub.s32 1, %s5
  %s8 = scalar_select 0, %s7, %s5
  $region1: #{tpu_custom_call.1} parent=0
    #allocation3 [shape = 'u8[2048]{0}', space=vmem, size = 0x800, scoped, tag = 'input window, operand 0, single buffered']
    #allocation4 [shape = 's32[2]{0}', space=sflag, size = 0x8, scoped, tag = 'scoped memory for tpu_custom_call.1']
    #allocation5 [shape = 's32[2]{0}', space=sflag, size = 0x8, scoped, tag = 'scoped memory for tpu_custom_call.1']
    #allocation6 [shape = 'u8[2048]{0}', space=vmem, size = 0x800, scoped, tag = 'input window, operand 1, single buffered']
    #allocation7 [shape = 's32[1]{0}', space=sflag, size = 0x4, scoped, tag = 'scoped memory for tpu_custom_call.1']
    #allocation8 [shape = 'u8[65536]{0}', space=vmem, size = 0x10000, scoped, tag = 'input window, operand 3']
    #allocation9 [shape = 'u8[65536]{0}', space=vmem, size = 0x10000, scoped, tag = 'output window, operand 0']
    %9 = vsyncpa [#allocation4], 0
    %10 = vsyncpa [#allocation7], 0
    %11 = vsyncpa [#allocation5], 0
    %s12 = scalar_lea.sflag [#allocation5], 1
    %13 = vsyncpa %s12, 0
    loop: start=0, step=1, limit=4
    $region2: #{tpu_custom_call.1} parent=1 // loop_pre_header
      _
    $region3: #{tpu_custom_call.1} parent=1 // loop_header
      %s15 = sphi 0, %s19
      %p16 = scmp.ge.s32.totalorder %s15, 4
      %s23 = sphi 0, %s23
      %s25 = sphi 0, %s23
      %s26 = sphi 0, %s25
      %s40 = sphi 0, %s26
      %s44 = sphi 0, %s44
      %s46 = sphi 0, %s44
      %s47 = sphi 0, %s46
      %s61 = sphi 0, %s47
      %s65 = sphi 0, %s65
      %s67 = sphi 0, %s65
      %s68 = sphi 0, %s67
      %s82 = sphi 0, %s68
      %s88 = sphi 0, %s90
      %s91 = sphi 0, %s88
      %s92 = sphi 0, %s91
      %s108 = sphi 0, %s92
      %s114 = sphi 0, %s116
      %s117 = sphi 0, %s114
      %s118 = sphi 0, %s117
      %s134 = sphi 0, %s118
    $region4: #{tpu_custom_call.1} parent=1 // loop_header_branch
      %18 = sbr.rel (%p16) target = $region8
    $region5: #{tpu_custom_call.1} parent=1 // loop_body
      %s20 = ssub.s32 %s15, 1
      %s21 = ssub.s32 %s15, 2
      %s22 = sadd.s32 %s15, 1
      %s24 = sadd.s32 %s23, 1
      %p27 = scmp.eq.s32.totalorder %s15, 1
      %p28 = scmp.ne.s32.totalorder %s23, %s25
      %p29 = scmp.eq.s32.totalorder %s15, 0
      %p30 = por %p28, %p29
      %p31 = scmp.ne.s32.totalorder %s23, %s25
      %p32 = scmp.eq.s32.totalorder %s20, 1
      %p33 = por %p31, %p32
      %p34 = scmp.ne.s32.totalorder %s25, %s26
      %p35 = scmp.eq.s32.totalorder %s20, 0
      %p36 = por %p34, %p35
      %p37 = scmp.ne.s32.totalorder %s25, %s26
      %p38 = scmp.eq.s32.totalorder %s21, 1
      %p39 = por %p37, %p38
      %p41 = scmp.ne.s32.totalorder %s26, %s40
      %p42 = scmp.eq.s32.totalorder %s21, 0
      %p43 = por %p41, %p42
      %s45 = sadd.s32 %s44, 1
      %p48 = scmp.eq.s32.totalorder %s15, 1
      %p49 = scmp.ne.s32.totalorder %s44, %s46
      %p50 = scmp.eq.s32.totalorder %s15, 0
      %p51 = por %p49, %p50
      %p52 = scmp.ne.s32.totalorder %s44, %s46
      %p53 = scmp.eq.s32.totalorder %s20, 1
      %p54 = por %p52, %p53
      %p55 = scmp.ne.s32.totalorder %s46, %s47
      %p56 = scmp.eq.s32.totalorder %s20, 0
      %p57 = por %p55, %p56
      %p58 = scmp.ne.s32.totalorder %s46, %s47
      %p59 = scmp.eq.s32.totalorder %s21, 1
      %p60 = por %p58, %p59
      %p62 = scmp.ne.s32.totalorder %s47, %s61
      %p63 = scmp.eq.s32.totalorder %s21, 0
      %p64 = por %p62, %p63
      %s66 = sadd.s32 %s65, 1
      %p69 = scmp.eq.s32.totalorder %s15, 1
      %p70 = scmp.ne.s32.totalorder %s65, %s67
      %p71 = scmp.eq.s32.totalorder %s15, 0
      %p72 = por %p70, %p71
      %p73 = scmp.ne.s32.totalorder %s65, %s67
      %p74 = scmp.eq.s32.totalorder %s20, 1
      %p75 = por %p73, %p74
      %p76 = scmp.ne.s32.totalorder %s67, %s68
      %p77 = scmp.eq.s32.totalorder %s20, 0
      %p78 = por %p76, %p77
      %p79 = scmp.ne.s32.totalorder %s67, %s68
      %p80 = scmp.eq.s32.totalorder %s21, 1
      %p81 = por %p79, %p80
      %p83 = scmp.ne.s32.totalorder %s68, %s82
      %p84 = scmp.eq.s32.totalorder %s21, 0
      %p85 = por %p83, %p84
      %s86 = ssub.s32 %s15, %s22
      %p87 = scmp.eq.s32.totalorder %s86, 0
      %s89 = sadd.s32 %s88, 1
      %s90 = scalar_select %p87, %s88, %s89
      %p93 = pneg %p87
      %p94 = scmp.eq.s32.totalorder %s15, 1
      %p95 = por %p93, %p94
      %p96 = scmp.ne.s32.totalorder %s88, %s91
      %p97 = scmp.eq.s32.totalorder %s15, 0
      %p98 = por %p96, %p97
      %p99 = scmp.ne.s32.totalorder %s88, %s91
      %p100 = scmp.eq.s32.totalorder %s20, 1
      %p101 = por %p99, %p100
      %p102 = scmp.ne.s32.totalorder %s91, %s92
      %p103 = scmp.eq.s32.totalorder %s20, 0
      %p104 = por %p102, %p103
      %p105 = scmp.ne.s32.totalorder %s91, %s92
      %p106 = scmp.eq.s32.totalorder %s21, 1
      %p107 = por %p105, %p106
      %p109 = scmp.ne.s32.totalorder %s92, %s108
      %p110 = scmp.eq.s32.totalorder %s21, 0
      %p111 = por %p109, %p110
      %s112 = ssub.s32 %s15, %s22
      %p113 = scmp.eq.s32.totalorder %s112, 0
      %s115 = sadd.s32 %s114, 1
      %s116 = scalar_select %p113, %s114, %s115
      %p119 = pneg %p113
      %p120 = scmp.eq.s32.totalorder %s15, 1
      %p121 = por %p119, %p120
      %p122 = scmp.ne.s32.totalorder %s114, %s117
      %p123 = scmp.eq.s32.totalorder %s15, 0
      %p124 = por %p122, %p123
      %p125 = scmp.ne.s32.totalorder %s114, %s117
      %p126 = scmp.eq.s32.totalorder %s20, 1
      %p127 = por %p125, %p126
      %p128 = scmp.ne.s32.totalorder %s117, %s118
      %p129 = scmp.eq.s32.totalorder %s20, 0
      %p130 = por %p128, %p129
      %p131 = scmp.ne.s32.totalorder %s117, %s118
      %p132 = scmp.eq.s32.totalorder %s21, 1
      %p133 = por %p131, %p132
      %p135 = scmp.ne.s32.totalorder %s118, %s134
      %p136 = scmp.eq.s32.totalorder %s21, 0
      %p137 = por %p135, %p136
      %p138 = scmp.le.s32.totalorder 1, %s15
      %p139 = scmp.lt.s32.totalorder %s15, 3
      %p140 = pnand %p138, %p139
      %p141 = pneg %p140
      // Predicated region
      $region9: #{tpu_custom_call.1} parent=5 // pred_check
        _
      $region10: #{tpu_custom_call.1} parent=5 // pred_check_branch
        %143 = sbr.rel (%p140) target = $region12
      $region11: #{tpu_custom_call.1} parent=5 // pred_region
        %s144 = ssub.s32 %s15, 1
        // Predicated region
        $region13: #{tpu_custom_call.1} parent=11 // pred_check
          %p145 = pneg %p36
        $region14: #{tpu_custom_call.1} parent=11 // pred_check_branch
          %147 = sbr.rel (%p145) target = $region16
        $region15: #{tpu_custom_call.1} parent=11 // pred_region
          %s149 = ssub.s32 64, 64
          %150 = vsyncadd [#allocation4], %s149
          %s152 = sshll.u32 [#allocation3], 4
          %s153 = int_to_ptr.vmem [resolvable:$true] %s152
          %155 = dma.hbm_to_vmem [thread:$0]  %s0, 64, %s153, [#allocation4]
        $region16: #{tpu_custom_call.1} parent=11 // pred_fallthru
          _
        // Predicated region
        $region17: #{tpu_custom_call.1} parent=11 // pred_check
          %p156 = pneg %p57
        $region18: #{tpu_custom_call.1} parent=11 // pred_check_branch
          %158 = sbr.rel (%p156) target = $region20
        $region19: #{tpu_custom_call.1} parent=11 // pred_region
          %s160 = ssub.s32 64, 64
          %161 = vsyncadd [#allocation7], %s160
          %s163 = sshll.u32 [#allocation6], 4
          %s164 = int_to_ptr.vmem [resolvable:$true] %s163
          %166 = dma.hbm_to_vmem [thread:$0]  %s1, 64, %s164, [#allocation7]
        $region20: #{tpu_custom_call.1} parent=11 // pred_fallthru
          _
        // Predicated region
        $region21: #{tpu_custom_call.1} parent=11 // pred_check
          %p167 = pneg %p78
        $region22: #{tpu_custom_call.1} parent=11 // pred_check_branch
          %169 = sbr.rel (%p167) target = $region24
        $region23: #{tpu_custom_call.1} parent=11 // pred_region
          _
        $region24: #{tpu_custom_call.1} parent=11 // pred_fallthru
          _
      $region12: #{tpu_custom_call.1} parent=5 // pred_fallthru
        _
      %p170 = scmp.lt.s32.totalorder %s15, 2
      // Predicated region
      $region25: #{tpu_custom_call.1} parent=5 // pred_check
        %p171 = pneg %p170
      $region26: #{tpu_custom_call.1} parent=5 // pred_check_branch
        %173 = sbr.rel (%p171) target = $region28
      $region27: #{tpu_custom_call.1} parent=5 // pred_region
        // Predicated region
        $region29: #{tpu_custom_call.1} parent=27 // pred_check
          %p174 = pneg %p98
        $region30: #{tpu_custom_call.1} parent=27 // pred_check_branch
          %176 = sbr.rel (%p174) target = $region32
        $region31: #{tpu_custom_call.1} parent=27 // pred_region
          %s177 = sand.u32 %s15, 1
          %s178 = scalar_lea.sflag [#allocation4], %s177
          %s179 = sand.u32 %s88, 1
          %s180 = smul.addr %s179, 64
          %s181 = scalar_lea.vmem [#allocation8], %s180
          %s183 = ssub.s32 1024, 1024
          %184 = vsyncadd %s178, %s183
          %s185 = smul.addr %s15, 8
          %s186 = smul.addr %s185, 128
          %s187 = scalar_lea.hbm %s3, %s186
          %s188 = sshll.u32 %s181, 4
          %s189 = int_to_ptr.vmem [resolvable:$true] %s188
          %194 = dma.hbm_to_vmem [thread:$0]  %s187, 1024, %s189, %s178, 128, 128, 8
        $region32: #{tpu_custom_call.1} parent=27 // pred_fallthru
          _
      $region28: #{tpu_custom_call.1} parent=5 // pred_fallthru
        _
      %p195 = scmp.le.s32.totalorder 1, %s15
      %p196 = scmp.lt.s32.totalorder %s15, 3
      %p197 = pnand %p195, %p196
      %p198 = pneg %p197
      // Predicated region
      $region33: #{tpu_custom_call.1} parent=5 // pred_check
        _
      $region34: #{tpu_custom_call.1} parent=5 // pred_check_branch
        %200 = sbr.rel (%p197) target = $region36
      $region35: #{tpu_custom_call.1} parent=5 // pred_region
        %s201 = ssub.s32 %s15, 1
        // Predicated region
        $region37: #{tpu_custom_call.1} parent=35 // pred_check
          %p202 = pneg %p36
        $region38: #{tpu_custom_call.1} parent=35 // pred_check_branch
          %204 = sbr.rel (%p202) target = $region40
        $region39: #{tpu_custom_call.1} parent=35 // pred_region
          %205 = dma.done [#allocation4], 64
        $region40: #{tpu_custom_call.1} parent=35 // pred_fallthru
          _
        // Predicated region
        $region41: #{tpu_custom_call.1} parent=35 // pred_check
          %p206 = pneg %p57
        $region42: #{tpu_custom_call.1} parent=35 // pred_check_branch
          %208 = sbr.rel (%p206) target = $region44
        $region43: #{tpu_custom_call.1} parent=35 // pred_region
          %209 = dma.done [#allocation7], 64
        $region44: #{tpu_custom_call.1} parent=35 // pred_fallthru
          _
        %s210 = sand.u32 %s20, 1
        %s211 = scalar_lea.sflag [#allocation4], %s210
        %s212 = sand.u32 %s91, 1
        %s213 = smul.addr %s212, 64
        %s214 = scalar_lea.vmem [#allocation8], %s213
        // Predicated region
        $region45: #{tpu_custom_call.1} parent=35 // pred_check
          %p215 = pneg %p104
        $region46: #{tpu_custom_call.1} parent=35 // pred_check_branch
          %217 = sbr.rel (%p215) target = $region48
        $region47: #{tpu_custom_call.1} parent=35 // pred_region
          %218 = dma.done %s211, 1024
        $region48: #{tpu_custom_call.1} parent=35 // pred_fallthru
          _
        %p219 = pneg %p36
        %p220 = pneg %p33
        %p221 = pneg %p57
        %p222 = pneg %p54
        %p223 = pneg %p78
        %p224 = pneg %p75
        %s225 = sand.u32 %s20, 1
        %s226 = scalar_lea.sflag [#allocation4], %s225
        %s227 = sand.u32 %s91, 1
        %s228 = smul.addr %s227, 64
        %s229 = scalar_lea.vmem [#allocation8], %s228
        %p230 = pneg %p104
        %p231 = pneg %p101
        %p232 = pneg %p130
        %p233 = pneg %p127
        %s234 = sand.u32 %s117, 1
        %s235 = scalar_lea.sflag [#allocation5], %s234
        %s236 = sand.u32 %s117, 1
        %s237 = smul.addr %s236, 64
        %s238 = scalar_lea.vmem [#allocation9], %s237
        %v239 = vld [vmem:[%s2] sm:$0x7]
        %240 = vst [vmem:[#allocation2] sm:$0xff] 0.0
        %vm241 = vcmask 1043456
        %vm242 = vcmask 818180
        %vm243 = vmor %vm242, %vm241
        %244 = vst.msk [vmem:[#allocation2 + $0x8] sm:$0xff] %vm243, 0.0
        %v245 = vld [vmem:[%s214] sm:$0x1]
        %v246 = vld [vmem:[%s214 + $0x10] sm:$0x1]
        %v247 = vld [vmem:[%s214 + $0x20] sm:$0x1]
        %v248 = vld [vmem:[%s214 + $0x30] sm:$0x1]
        %v253 = vrot.slane %v246, 7
        %vm254 = vcmask 1041409
        %v255 = vsel %vm254, %v253, %v245
        %vm256 = vcmask 1045509
        %v257 = vsel %vm256, %v253, %v255
        %v258 = vrot.slane %v247, 6
        %vm259 = vcmask 1042434
        %v260 = vsel %vm259, %v258, %v257
        %vm261 = vcmask 1046534
        %v262 = vsel %vm261, %v258, %v260
        %v263 = vrot.slane %v248, 5
        %vm264 = vcmask 1043459
        %v265 = vsel %vm264, %v263, %v262
        %vm266 = vcmask 1047559
        %v267 = vsel %vm266, %v263, %v265
        %268 = vrot.lane.b32.xlu0 %v267, 69
        %v269 = vpop.permute.xlu0 %268
        %vm271 = vcmask 691752
        %272 = vst.msk [vmem:[#allocation2] sm:$0xf] %vm271, %v269
        %v273 = vld [vmem:[%s214 + $0x1] sm:$0x1]
        %v274 = vld [vmem:[%s214 + $0x11] sm:$0x1]
        %v275 = vld [vmem:[%s214 + $0x21] sm:$0x1]
        %v276 = vld [vmem:[%s214 + $0x31] sm:$0x1]
        %v281 = vrot.slane %v274, 7
        %v282 = vsel %vm254, %v281, %v273
        %v283 = vsel %vm256, %v281, %v282
        %v284 = vrot.slane %v275, 6
        %v285 = vsel %vm259, %v284, %v283
        %v286 = vsel %vm261, %v284, %v285
        %v287 = vrot.slane %v276, 5
        %v288 = vsel %vm264, %v287, %v286
        %v289 = vsel %vm266, %v287, %v288
        %290 = vrot.lane.b32.xlu0 %v289, 91
        %v291 = vpop.permute.xlu0 %290
        %vm293 = vcmask 872152
        %294 = vst.msk [vmem:[#allocation2] sm:$0xf] %vm293, %v291
        %v295 = vld [vmem:[%s214 + $0x2] sm:$0x1]
        %v296 = vld [vmem:[%s214 + $0x12] sm:$0x1]
        %v297 = vld [vmem:[%s214 + $0x22] sm:$0x1]
        %v298 = vld [vmem:[%s214 + $0x32] sm:$0x1]
        %v303 = vrot.slane %v296, 7
        %v304 = vsel %vm254, %v303, %v295
        %v305 = vsel %vm256, %v303, %v304
        %v306 = vrot.slane %v297, 6
        %v307 = vsel %vm259, %v306, %v305
        %v308 = vsel %vm261, %v306, %v307
        %v309 = vrot.slane %v298, 5
        %v310 = vsel %vm264, %v309, %v308
        %v311 = vsel %vm266, %v309, %v310
        %312 = vrot.lane.b32.xlu0 %v311, 113
        %v313 = vpop.permute.xlu0 %312
        %v314 = vrot.slane %v313, 4
        %vm315 = vcmask 924672
        %v316 = vsel %vm315, %v314, %v313
        %vm318 = vcmask 1044360
        %vm319 = vcmask 7172
        %vm320 = vmor %vm319, %vm318
        %321 = vst.msk [vmem:[#allocation2] sm:$0xff] %vm320, %v316
        %v322 = vld [vmem:[%s214 + $0x3] sm:$0x1]
        %v323 = vld [vmem:[%s214 + $0x13] sm:$0x1]
        %v324 = vld [vmem:[%s214 + $0x23] sm:$0x1]
        %v325 = vld [vmem:[%s214 + $0x33] sm:$0x1]
        %v330 = vrot.slane %v323, 7
        %v331 = vsel %vm254, %v330, %v322
        %v332 = vsel %vm256, %v330, %v331
        %v333 = vrot.slane %v324, 6
        %v334 = vsel %vm259, %v333, %v332
        %v335 = vsel %vm261, %v333, %v334
        %v336 = vrot.slane %v325, 5
        %v337 = vsel %vm264, %v336, %v335
        %v338 = vsel %vm266, %v336, %v337
        %339 = vrot.lane.b32.xlu0 %v338, 7
        %v340 = vpop.permute.xlu0 %339
        %vm342 = vcmask 183352
        %343 = vst.msk [vmem:[#allocation2 + $0x4] sm:$0xf] %vm342, %v340
        %v344 = vld [vmem:[%s214 + $0x4] sm:$0x1]
        %v345 = vld [vmem:[%s214 + $0x14] sm:$0x1]
        %v346 = vld [vmem:[%s214 + $0x24] sm:$0x1]
        %v347 = vld [vmem:[%s214 + $0x34] sm:$0x1]
        %v352 = vrot.slane %v345, 7
        %v353 = vsel %vm254, %v352, %v344
        %v354 = vsel %vm256, %v352, %v353
        %v355 = vrot.slane %v346, 6
        %v356 = vsel %vm259, %v355, %v354
        %v357 = vsel %vm261, %v355, %v356
        %v358 = vrot.slane %v347, 5
        %v359 = vsel %vm264, %v358, %v357
        %v360 = vsel %vm266, %v358, %v359
        %361 = vrot.lane.b32.xlu0 %v360, 29
        %v362 = vpop.permute.xlu0 %361
        %vm364 = vcmask 363752
        %365 = vst.msk [vmem:[#allocation2 + $0x4] sm:$0xf] %vm364, %v362
        %v366 = vld [vmem:[%s214 + $0x5] sm:$0x1]
        %v367 = vld [vmem:[%s214 + $0x15] sm:$0x1]
        %v368 = vld [vmem:[%s214 + $0x25] sm:$0x1]
        %v369 = vld [vmem:[%s214 + $0x35] sm:$0x1]
        %v374 = vrot.slane %v367, 7
        %v375 = vsel %vm254, %v374, %v366
        %v376 = vsel %vm256, %v374, %v375
        %v377 = vrot.slane %v368, 6
        %v378 = vsel %vm259, %v377, %v376
        %v379 = vsel %vm261, %v377, %v378
        %v380 = vrot.slane %v369, 5
        %v381 = vsel %vm264, %v380, %v379
        %v382 = vsel %vm266, %v380, %v381
        %383 = vrot.lane.b32.xlu0 %v382, 51
        %v384 = vpop.permute.xlu0 %383
        %vm386 = vcmask 544152
        %387 = vst.msk [vmem:[#allocation2 + $0x4] sm:$0xf] %vm386, %v384
        %v388 = vld [vmem:[%s214 + $0x6] sm:$0x1]
        %v389 = vld [vmem:[%s214 + $0x16] sm:$0x1]
        %v390 = vld [vmem:[%s214 + $0x26] sm:$0x1]
        %v391 = vld [vmem:[%s214 + $0x36] sm:$0x1]
        %v396 = vrot.slane %v389, 7
        %v397 = vsel %vm254, %v396, %v388
        %v398 = vsel %vm256, %v396, %v397
        %v399 = vrot.slane %v390, 6
        %v400 = vsel %vm259, %v399, %v398
        %v401 = vsel %vm261, %v399, %v400
        %v402 = vrot.slane %v391, 5
        %v403 = vsel %vm264, %v402, %v401
        %v404 = vsel %vm266, %v402, %v403
        %405 = vrot.lane.b32.xlu0 %v404, 73
        %v406 = vpop.permute.xlu0 %405
        %vm408 = vcmask 724552
        %409 = vst.msk [vmem:[#allocation2 + $0x4] sm:$0xf] %vm408, %v406
        %v410 = vld [vmem:[%s214 + $0x7] sm:$0x1]
        %v411 = vld [vmem:[%s214 + $0x17] sm:$0x1]
        %v412 = vld [vmem:[%s214 + $0x27] sm:$0x1]
        %v413 = vld [vmem:[%s214 + $0x37] sm:$0x1]
        %v418 = vrot.slane %v411, 7
        %v419 = vsel %vm254, %v418, %v410
        %v420 = vsel %vm256, %v418, %v419
        %v421 = vrot.slane %v412, 6
        %v422 = vsel %vm259, %v421, %v420
        %v423 = vsel %vm261, %v421, %v422
        %v424 = vrot.slane %v413, 5
        %v425 = vsel %vm264, %v424, %v423
        %v426 = vsel %vm266, %v424, %v425
        %427 = vrot.lane.b32.xlu0 %v426, 95
        %v428 = vpop.permute.xlu0 %427
        %vm430 = vcmask 904952
        %431 = vst.msk [vmem:[#allocation2 + $0x4] sm:$0xf] %vm430, %v428
        %v432 = vld [vmem:[%s214 + $0x8] sm:$0x1]
        %v433 = vld [vmem:[%s214 + $0x18] sm:$0x1]
        %v434 = vld [vmem:[%s214 + $0x28] sm:$0x1]
        %v435 = vld [vmem:[%s214 + $0x38] sm:$0x1]
        %v440 = vrot.slane %v433, 7
        %v441 = vsel %vm254, %v440, %v432
        %v442 = vsel %vm256, %v440, %v441
        %v443 = vrot.slane %v434, 6
        %v444 = vsel %vm259, %v443, %v442
        %v445 = vsel %vm261, %v443, %v444
        %v446 = vrot.slane %v435, 5
        %v447 = vsel %vm264, %v446, %v445
        %v448 = vsel %vm266, %v446, %v447
        %449 = vrot.lane.b32.xlu0 %v448, 117
        %v450 = vpop.permute.xlu0 %449
        %v451 = vrot.slane %v450, 4
        %vm452 = vcmask 957440
        %v453 = vsel %vm452, %v451, %v450
        %vm455 = vcmask 1044392
        %vm456 = vcmask 39940
        %vm457 = vmor %vm456, %vm455
        %458 = vst.msk [vmem:[#allocation2 + $0x4] sm:$0xff] %vm457, %v453
        %v459 = vld [vmem:[%s214 + $0x9] sm:$0x1]
        %v460 = vld [vmem:[%s214 + $0x19] sm:$0x1]
        %v461 = vld [vmem:[%s214 + $0x29] sm:$0x1]
        %v462 = vld [vmem:[%s214 + $0x39] sm:$0x1]
        %v467 = vrot.slane %v460, 7
        %v468 = vsel %vm254, %v467, %v459
        %v469 = vsel %vm256, %v467, %v468
        %v470 = vrot.slane %v461, 6
        %v471 = vsel %vm259, %v470, %v469
        %v472 = vsel %vm261, %v470, %v471
        %v473 = vrot.slane %v462, 5
        %v474 = vsel %vm264, %v473, %v472
        %v475 = vsel %vm266, %v473, %v474
        %476 = vrot.lane.b32.xlu0 %v475, 11
        %v477 = vpop.permute.xlu0 %476
        %vm479 = vcmask 216152
        %480 = vst.msk [vmem:[#allocation2 + $0x8] sm:$0xf] %vm479, %v477
        %v481 = vld [vmem:[%s214 + $0xa] sm:$0x1]
        %v482 = vld [vmem:[%s214 + $0x1a] sm:$0x1]
        %v483 = vld [vmem:[%s214 + $0x2a] sm:$0x1]
        %v484 = vld [vmem:[%s214 + $0x3a] sm:$0x1]
        %v489 = vrot.slane %v482, 7
        %v490 = vsel %vm254, %v489, %v481
        %v491 = vsel %vm256, %v489, %v490
        %v492 = vrot.slane %v483, 6
        %v493 = vsel %vm259, %v492, %v491
        %v494 = vsel %vm261, %v492, %v493
        %v495 = vrot.slane %v484, 5
        %v496 = vsel %vm264, %v495, %v494
        %v497 = vsel %vm266, %v495, %v496
        %498 = vrot.lane.b32.xlu0 %v497, 33
        %v499 = vpop.permute.xlu0 %498
        %vm501 = vcmask 396552
        %502 = vst.msk [vmem:[#allocation2 + $0x8] sm:$0xf] %vm501, %v499
        %v503 = vld [vmem:[%s214 + $0xb] sm:$0x1]
        %v504 = vld [vmem:[%s214 + $0x1b] sm:$0x1]
        %v505 = vld [vmem:[%s214 + $0x2b] sm:$0x1]
        %v506 = vld [vmem:[%s214 + $0x3b] sm:$0x1]
        %v511 = vrot.slane %v504, 7
        %v512 = vsel %vm254, %v511, %v503
        %v513 = vsel %vm256, %v511, %v512
        %v514 = vrot.slane %v505, 6
        %v515 = vsel %vm259, %v514, %v513
        %v516 = vsel %vm261, %v514, %v515
        %v517 = vrot.slane %v506, 5
        %v518 = vsel %vm264, %v517, %v516
        %v519 = vsel %vm266, %v517, %v518
        %520 = vrot.lane.b32.xlu0 %v519, 55
        %v521 = vpop.permute.xlu0 %520
        %vm523 = vcmask 576952
        %524 = vst.msk [vmem:[#allocation2 + $0x8] sm:$0xf] %vm523, %v521
        %v525 = vld [vmem:[%s214 + $0xc] sm:$0x1]
        %v526 = vld [vmem:[%s214 + $0x1c] sm:$0x1]
        %v527 = vld [vmem:[%s214 + $0x2c] sm:$0x1]
        %v528 = vld [vmem:[%s214 + $0x3c] sm:$0x1]
        %v533 = vrot.slane %v526, 7
        %v534 = vsel %vm254, %v533, %v525
        %v535 = vsel %vm256, %v533, %v534
        %v536 = vrot.slane %v527, 6
        %v537 = vsel %vm259, %v536, %v535
        %v538 = vsel %vm261, %v536, %v537
        %v539 = vrot.slane %v528, 5
        %v540 = vsel %vm264, %v539, %v538
        %v541 = vsel %vm266, %v539, %v540
        %542 = vrot.lane.b32.xlu0 %v541, 77
        %v543 = vpop.permute.xlu0 %542
        %vm545 = vcmask 757352
        %546 = vst.msk [vmem:[#allocation2 + $0x8] sm:$0xf] %vm545, %v543
        %v547 = vld [vmem:[%s214 + $0xd] sm:$0x1]
        %v548 = vld [vmem:[%s214 + $0x1d] sm:$0x1]
        %v549 = vld [vmem:[%s214 + $0x2d] sm:$0x1]
        %v550 = vld [vmem:[%s214 + $0x3d] sm:$0x1]
        %v555 = vrot.slane %v548, 7
        %v556 = vsel %vm254, %v555, %v547
        %v557 = vsel %vm256, %v555, %v556
        %v558 = vrot.slane %v549, 6
        %v559 = vsel %vm259, %v558, %v557
        %v560 = vsel %vm261, %v558, %v559
        %v561 = vrot.slane %v550, 5
        %v562 = vsel %vm264, %v561, %v560
        %v563 = vsel %vm266, %v561, %v562
        %564 = vrot.lane.b32.xlu0 %v563, 99
        %v565 = vpop.permute.xlu0 %564
        %vm567 = vcmask 937752
        %568 = vst.msk [vmem:[#allocation2 + $0x8] sm:$0xf] %vm567, %v565
        %v569 = vld [vmem:[%s214 + $0xe] sm:$0x1]
        %v570 = vld [vmem:[%s214 + $0x1e] sm:$0x1]
        %v571 = vld [vmem:[%s214 + $0x2e] sm:$0x1]
        %v572 = vld [vmem:[%s214 + $0x3e] sm:$0x1]
        %v577 = vrot.slane %v570, 7
        %v578 = vsel %vm254, %v577, %v569
        %v579 = vsel %vm256, %v577, %v578
        %v580 = vrot.slane %v571, 6
        %v581 = vsel %vm259, %v580, %v579
        %v582 = vsel %vm261, %v580, %v581
        %v583 = vrot.slane %v572, 5
        %v584 = vsel %vm264, %v583, %v582
        %v585 = vsel %vm266, %v583, %v584
        %586 = vrot.lane.b32.xlu0 %v585, 121
        %v587 = vpop.permute.xlu0 %586
        %v588 = vrot.slane %v587, 4
        %vm589 = vcmask 990208
        %v590 = vsel %vm589, %v588, %v587
        %vm592 = vcmask 1044424
        %vm593 = vcmask 72708
        %vm594 = vmor %vm593, %vm592
        %595 = vst.msk [vmem:[#allocation2 + $0x8] sm:$0xff] %vm594, %v590
        %v596 = vld [vmem:[%s214 + $0xf] sm:$0x1]
        %v597 = vld [vmem:[%s214 + $0x1f] sm:$0x1]
        %v598 = vld [vmem:[%s214 + $0x2f] sm:$0x1]
        %v599 = vld [vmem:[%s214 + $0x3f] sm:$0x1]
        %v604 = vrot.slane %v597, 7
        %v605 = vsel %vm254, %v604, %v596
        %v606 = vsel %vm256, %v604, %v605
        %v607 = vrot.slane %v598, 6
        %v608 = vsel %vm259, %v607, %v606
        %v609 = vsel %vm261, %v607, %v608
        %v610 = vrot.slane %v599, 5
        %v611 = vsel %vm264, %v610, %v609
        %v612 = vsel %vm266, %v610, %v611
        %613 = vrot.lane.b32.xlu0 %v612, 15
        %v614 = vpop.permute.xlu0 %613
        %vm616 = vcmask 248952
        %617 = vst.msk [vmem:[#allocation2 + $0xc] sm:$0xf] %vm616, %v614
        %v618 = vld [vmem:[#allocation2] ss:$4 sm:$0xf]
        %v619 = vld [vmem:[#allocation3] sm:$0xf]
        %621 = vset.pattern.permute.xlu0 0
        %622 = vperm.xlu0 %621, %v619
        %v623 = vpop.permute.xlu0 %622
        %v626 = vlaneseq
        %v627 = vshrl.u32 %v626, 7
        %v628 = vsub.s32 0, %v627
        %v629 = vrot.slane %v618, %v628
        %v630 = vlaneseq
        %v631 = vshrl.u32 %v630, 7
        %v632 = vsub.s32 1, %v631
        %v633 = vrot.slane %v618, %v632
        %v634 = vlaneseq
        %v635 = vshrl.u32 %v634, 7
        %v636 = vsub.s32 2, %v635
        %v637 = vrot.slane %v618, %v636
        %v638 = vlaneseq
        %v639 = vshrl.u32 %v638, 7
        %v640 = vsub.s32 3, %v639
        %v641 = vrot.slane %v618, %v640
        %v646 = vmul.f32 %v623, %v629
        %v647 = vmul.f32 %v623, %v633
        %v648 = vmul.f32 %v623, %v637
        %v649 = vmul.f32 %v623, %v641
        %s650 = scalar_lea.vmem [#allocation2], 1
        %v651 = vld [vmem:[%s650] ss:$4 sm:$0xf]
        %652 = vset.pattern.permute.xlu0 1
        %653 = vperm.xlu0 %652, %v619
        %v654 = vpop.permute.xlu0 %653
        %v657 = vlaneseq
        %v658 = vshrl.u32 %v657, 7
        %v659 = vsub.s32 0, %v658
        %v660 = vrot.slane %v651, %v659
        %v661 = vlaneseq
        %v662 = vshrl.u32 %v661, 7
        %v663 = vsub.s32 1, %v662
        %v664 = vrot.slane %v651, %v663
        %v665 = vlaneseq
        %v666 = vshrl.u32 %v665, 7
        %v667 = vsub.s32 2, %v666
        %v668 = vrot.slane %v651, %v667
        %v669 = vlaneseq
        %v670 = vshrl.u32 %v669, 7
        %v671 = vsub.s32 3, %v670
        %v672 = vrot.slane %v651, %v671
        %v677 = vmul.f32 %v654, %v660
        %v678 = vmul.f32 %v654, %v664
        %v679 = vmul.f32 %v654, %v668
        %v680 = vmul.f32 %v654, %v672
        %s681 = scalar_lea.vmem [#allocation2], 2
        %v682 = vld [vmem:[%s681] ss:$4 sm:$0xf]
        %683 = vset.pattern.permute.xlu0 2
        %684 = vperm.xlu0 %683, %v619
        %v685 = vpop.permute.xlu0 %684
        %v688 = vlaneseq
        %v689 = vshrl.u32 %v688, 7
        %v690 = vsub.s32 0, %v689
        %v691 = vrot.slane %v682, %v690
        %v692 = vlaneseq
        %v693 = vshrl.u32 %v692, 7
        %v694 = vsub.s32 1, %v693
        %v695 = vrot.slane %v682, %v694
        %v696 = vlaneseq
        %v697 = vshrl.u32 %v696, 7
        %v698 = vsub.s32 2, %v697
        %v699 = vrot.slane %v682, %v698
        %v700 = vlaneseq
        %v701 = vshrl.u32 %v700, 7
        %v702 = vsub.s32 3, %v701
        %v703 = vrot.slane %v682, %v702
        %v708 = vmul.f32 %v685, %v691
        %v709 = vmul.f32 %v685, %v695
        %v710 = vmul.f32 %v685, %v699
        %v711 = vmul.f32 %v685, %v703
        %s712 = scalar_lea.vmem [#allocation2], 3
        %v713 = vld [vmem:[%s712] ss:$4 sm:$0xf]
        %714 = vset.pattern.permute.xlu0 3
        %715 = vperm.xlu0 %714, %v619
        %v716 = vpop.permute.xlu0 %715
        %v719 = vlaneseq
        %v720 = vshrl.u32 %v719, 7
        %v721 = vsub.s32 0, %v720
        %v722 = vrot.slane %v713, %v721
        %v723 = vlaneseq
        %v724 = vshrl.u32 %v723, 7
        %v725 = vsub.s32 1, %v724
        %v726 = vrot.slane %v713, %v725
        %v727 = vlaneseq
        %v728 = vshrl.u32 %v727, 7
        %v729 = vsub.s32 2, %v728
        %v730 = vrot.slane %v713, %v729
        %v731 = vlaneseq
        %v732 = vshrl.u32 %v731, 7
        %v733 = vsub.s32 3, %v732
        %v734 = vrot.slane %v713, %v733
        %v739 = vmul.f32 %v716, %v722
        %v740 = vmul.f32 %v716, %v726
        %v741 = vmul.f32 %v716, %v730
        %v742 = vmul.f32 %v716, %v734
        %743 = vset.pattern.permute.xlu0 4
        %744 = vperm.xlu0 %743, %v619
        %v745 = vpop.permute.xlu0 %744
        %v747 = vmul.f32 %v745, %v629
        %v748 = vmul.f32 %v745, %v633
        %v749 = vmul.f32 %v745, %v637
        %v750 = vmul.f32 %v745, %v641
        %755 = vrot.lane.b32.xlu0 %v747, 127
        %v756 = vpop.permute.xlu0 %755
        %757 = vrot.lane.b32.xlu0 %v748, 127
        %v758 = vpop.permute.xlu0 %757
        %759 = vrot.lane.b32.xlu0 %v749, 127
        %v760 = vpop.permute.xlu0 %759
        %761 = vrot.lane.b32.xlu0 %v750, 127
        %v762 = vpop.permute.xlu0 %761
        %vm763 = vcmask 1039360
        %v764 = vsel %vm763, %v756, %v758
        %v765 = vsel %vm763, %v758, %v760
        %v766 = vsel %vm763, %v760, %v762
        %v771 = vadd.f32 %v646, %v764
        %v772 = vadd.f32 %v647, %v765
        %v773 = vadd.f32 %v648, %v766
        %v774 = vadd.f32 %v649, %v762
        %775 = vset.pattern.permute.xlu0 5
        %776 = vperm.xlu0 %775, %v619
        %v777 = vpop.permute.xlu0 %776
        %v779 = vmul.f32 %v777, %v660
        %v780 = vmul.f32 %v777, %v664
        %v781 = vmul.f32 %v777, %v668
        %v782 = vmul.f32 %v777, %v672
        %787 = vrot.lane.b32.xlu0 %v779, 127
        %v788 = vpop.permute.xlu0 %787
        %789 = vrot.lane.b32.xlu0 %v780, 127
        %v790 = vpop.permute.xlu0 %789
        %791 = vrot.lane.b32.xlu0 %v781, 127
        %v792 = vpop.permute.xlu0 %791
        %793 = vrot.lane.b32.xlu0 %v782, 127
        %v794 = vpop.permute.xlu0 %793
        %v795 = vsel %vm763, %v788, %v790
        %v796 = vsel %vm763, %v790, %v792
        %v797 = vsel %vm763, %v792, %v794
        %v802 = vadd.f32 %v677, %v795
        %v803 = vadd.f32 %v678, %v796
        %v804 = vadd.f32 %v679, %v797
        %v805 = vadd.f32 %v680, %v794
        %806 = vset.pattern.permute.xlu0 6
        %807 = vperm.xlu0 %806, %v619
        %v808 = vpop.permute.xlu0 %807
        %v810 = vmul.f32 %v808, %v691
        %v811 = vmul.f32 %v808, %v695
        %v812 = vmul.f32 %v808, %v699
        %v813 = vmul.f32 %v808, %v703
        %818 = vrot.lane.b32.xlu0 %v810, 127
        %v819 = vpop.permute.xlu0 %818
        %820 = vrot.lane.b32.xlu0 %v811, 127
        %v821 = vpop.permute.xlu0 %820
        %822 = vrot.lane.b32.xlu0 %v812, 127
        %v823 = vpop.permute.xlu0 %822
        %824 = vrot.lane.b32.xlu0 %v813, 127
        %v825 = vpop.permute.xlu0 %824
        %v826 = vsel %vm763, %v819, %v821
        %v827 = vsel %vm763, %v821, %v823
        %v828 = vsel %vm763, %v823, %v825
        %v833 = vadd.f32 %v708, %v826
        %v834 = vadd.f32 %v709, %v827
        %v835 = vadd.f32 %v710, %v828
        %v836 = vadd.f32 %v711, %v825
        %837 = vset.pattern.permute.xlu0 7
        %838 = vperm.xlu0 %837, %v619
        %v839 = vpop.permute.xlu0 %838
        %v841 = vmul.f32 %v839, %v722
        %v842 = vmul.f32 %v839, %v726
        %v843 = vmul.f32 %v839, %v730
        %v844 = vmul.f32 %v839, %v734
        %849 = vrot.lane.b32.xlu0 %v841, 127
        %v850 = vpop.permute.xlu0 %849
        %851 = vrot.lane.b32.xlu0 %v842, 127
        %v852 = vpop.permute.xlu0 %851
        %853 = vrot.lane.b32.xlu0 %v843, 127
        %v854 = vpop.permute.xlu0 %853
        %855 = vrot.lane.b32.xlu0 %v844, 127
        %v856 = vpop.permute.xlu0 %855
        %v857 = vsel %vm763, %v850, %v852
        %v858 = vsel %vm763, %v852, %v854
        %v859 = vsel %vm763, %v854, %v856
        %v864 = vadd.f32 %v739, %v857
        %v865 = vadd.f32 %v740, %v858
        %v866 = vadd.f32 %v741, %v859
        %v867 = vadd.f32 %v742, %v856
        %868 = vset.pattern.permute.xlu0 8
        %869 = vperm.xlu0 %868, %v619
        %v870 = vpop.permute.xlu0 %869
        %v872 = vmul.f32 %v870, %v629
        %v873 = vmul.f32 %v870, %v633
        %v874 = vmul.f32 %v870, %v637
        %v875 = vmul.f32 %v870, %v641
        %880 = vrot.lane.b32.xlu0 %v872, 126
        %v881 = vpop.permute.xlu0 %880
        %882 = vrot.lane.b32.xlu0 %v873, 126
        %v883 = vpop.permute.xlu0 %882
        %884 = vrot.lane.b32.xlu0 %v874, 126
        %v885 = vpop.permute.xlu0 %884
        %886 = vrot.lane.b32.xlu0 %v875, 126
        %v887 = vpop.permute.xlu0 %886
        %vm888 = vcmask 1031168
        %v889 = vsel %vm888, %v881, %v883
        %v890 = vsel %vm888, %v883, %v885
        %v891 = vsel %vm888, %v885, %v887
        %v896 = vadd.f32 %v771, %v889
        %v897 = vadd.f32 %v772, %v890
        %v898 = vadd.f32 %v773, %v891
        %v899 = vadd.f32 %v774, %v887
        %900 = vset.pattern.permute.xlu0 9
        %901 = vperm.xlu0 %900, %v619
        %v902 = vpop.permute.xlu0 %901
        %v904 = vmul.f32 %v902, %v660
        %v905 = vmul.f32 %v902, %v664
        %v906 = vmul.f32 %v902, %v668
        %v907 = vmul.f32 %v902, %v672
        %912 = vrot.lane.b32.xlu0 %v904, 126
        %v913 = vpop.permute.xlu0 %912
        %914 = vrot.lane.b32.xlu0 %v905, 126
        %v915 = vpop.permute.xlu0 %914
        %916 = vrot.lane.b32.xlu0 %v906, 126
        %v917 = vpop.permute.xlu0 %916
        %918 = vrot.lane.b32.xlu0 %v907, 126
        %v919 = vpop.permute.xlu0 %918
        %v920 = vsel %vm888, %v913, %v915
        %v921 = vsel %vm888, %v915, %v917
        %v922 = vsel %vm888, %v917, %v919
        %v927 = vadd.f32 %v802, %v920
        %v928 = vadd.f32 %v803, %v921
        %v929 = vadd.f32 %v804, %v922
        %v930 = vadd.f32 %v805, %v919
        %931 = vset.pattern.permute.xlu0 10
        %932 = vperm.xlu0 %931, %v619
        %v933 = vpop.permute.xlu0 %932
        %v935 = vmul.f32 %v933, %v691
        %v936 = vmul.f32 %v933, %v695
        %v937 = vmul.f32 %v933, %v699
        %v938 = vmul.f32 %v933, %v703
        %943 = vrot.lane.b32.xlu0 %v935, 126
        %v944 = vpop.permute.xlu0 %943
        %945 = vrot.lane.b32.xlu0 %v936, 126
        %v946 = vpop.permute.xlu0 %945
        %947 = vrot.lane.b32.xlu0 %v937, 126
        %v948 = vpop.permute.xlu0 %947
        %949 = vrot.lane.b32.xlu0 %v938, 126
        %v950 = vpop.permute.xlu0 %949
        %v951 = vsel %vm888, %v944, %v946
        %v952 = vsel %vm888, %v946, %v948
        %v953 = vsel %vm888, %v948, %v950
        %v958 = vadd.f32 %v833, %v951
        %v959 = vadd.f32 %v834, %v952
        %v960 = vadd.f32 %v835, %v953
        %v961 = vadd.f32 %v836, %v950
        %962 = vset.pattern.permute.xlu0 11
        %963 = vperm.xlu0 %962, %v619
        %v964 = vpop.permute.xlu0 %963
        %v966 = vmul.f32 %v964, %v722
        %v967 = vmul.f32 %v964, %v726
        %v968 = vmul.f32 %v964, %v730
        %v969 = vmul.f32 %v964, %v734
        %974 = vrot.lane.b32.xlu0 %v966, 126
        %v975 = vpop.permute.xlu0 %974
        %976 = vrot.lane.b32.xlu0 %v967, 126
        %v977 = vpop.permute.xlu0 %976
        %978 = vrot.lane.b32.xlu0 %v968, 126
        %v979 = vpop.permute.xlu0 %978
        %980 = vrot.lane.b32.xlu0 %v969, 126
        %v981 = vpop.permute.xlu0 %980
        %v982 = vsel %vm888, %v975, %v977
        %v983 = vsel %vm888, %v977, %v979
        %v984 = vsel %vm888, %v979, %v981
        %v989 = vadd.f32 %v864, %v982
        %v990 = vadd.f32 %v865, %v983
        %v991 = vadd.f32 %v866, %v984
        %v992 = vadd.f32 %v867, %v981
        %993 = vset.pattern.permute.xlu0 12
        %994 = vperm.xlu0 %993, %v619
        %v995 = vpop.permute.xlu0 %994
        %v997 = vmul.f32 %v995, %v629
        %v998 = vmul.f32 %v995, %v633
        %v999 = vmul.f32 %v995, %v637
        %v1000 = vmul.f32 %v995, %v641
        %1005 = vrot.lane.b32.xlu0 %v997, 106
        %v1006 = vpop.permute.xlu0 %1005
        %1007 = vrot.lane.b32.xlu0 %v998, 106
        %v1008 = vpop.permute.xlu0 %1007
        %1009 = vrot.lane.b32.xlu0 %v999, 106
        %v1010 = vpop.permute.xlu0 %1009
        %1011 = vrot.lane.b32.xlu0 %v1000, 106
        %v1012 = vpop.permute.xlu0 %1011
        %vm1013 = vcmask 867328
        %v1014 = vsel %vm1013, %v1006, %v1008
        %v1015 = vsel %vm1013, %v1008, %v1010
        %v1016 = vsel %vm1013, %v1010, %v1012
        %v1021 = vadd.f32 %v896, %v1014
        %v1022 = vadd.f32 %v897, %v1015
        %v1023 = vadd.f32 %v898, %v1016
        %v1024 = vadd.f32 %v899, %v1012
        %1025 = vset.pattern.permute.xlu0 13
        %1026 = vperm.xlu0 %1025, %v619
        %v1027 = vpop.permute.xlu0 %1026
        %v1029 = vmul.f32 %v1027, %v660
        %v1030 = vmul.f32 %v1027, %v664
        %v1031 = vmul.f32 %v1027, %v668
        %v1032 = vmul.f32 %v1027, %v672
        %1037 = vrot.lane.b32.xlu0 %v1029, 106
        %v1038 = vpop.permute.xlu0 %1037
        %1039 = vrot.lane.b32.xlu0 %v1030, 106
        %v1040 = vpop.permute.xlu0 %1039
        %1041 = vrot.lane.b32.xlu0 %v1031, 106
        %v1042 = vpop.permute.xlu0 %1041
        %1043 = vrot.lane.b32.xlu0 %v1032, 106
        %v1044 = vpop.permute.xlu0 %1043
        %v1045 = vsel %vm1013, %v1038, %v1040
        %v1046 = vsel %vm1013, %v1040, %v1042
        %v1047 = vsel %vm1013, %v1042, %v1044
        %v1052 = vadd.f32 %v927, %v1045
        %v1053 = vadd.f32 %v928, %v1046
        %v1054 = vadd.f32 %v929, %v1047
        %v1055 = vadd.f32 %v930, %v1044
        %1056 = vset.pattern.permute.xlu0 14
        %1057 = vperm.xlu0 %1056, %v619
        %v1058 = vpop.permute.xlu0 %1057
        %v1060 = vmul.f32 %v1058, %v691
        %v1061 = vmul.f32 %v1058, %v695
        %v1062 = vmul.f32 %v1058, %v699
        %v1063 = vmul.f32 %v1058, %v703
        %1068 = vrot.lane.b32.xlu0 %v1060, 106
        %v1069 = vpop.permute.xlu0 %1068
        %1070 = vrot.lane.b32.xlu0 %v1061, 106
        %v1071 = vpop.permute.xlu0 %1070
        %1072 = vrot.lane.b32.xlu0 %v1062, 106
        %v1073 = vpop.permute.xlu0 %1072
        %1074 = vrot.lane.b32.xlu0 %v1063, 106
        %v1075 = vpop.permute.xlu0 %1074
        %v1076 = vsel %vm1013, %v1069, %v1071
        %v1077 = vsel %vm1013, %v1071, %v1073
        %v1078 = vsel %vm1013, %v1073, %v1075
        %v1083 = vadd.f32 %v958, %v1076
        %v1084 = vadd.f32 %v959, %v1077
        %v1085 = vadd.f32 %v960, %v1078
        %v1086 = vadd.f32 %v961, %v1075
        %1087 = vset.pattern.permute.xlu0 15
        %1088 = vperm.xlu0 %1087, %v619
        %v1089 = vpop.permute.xlu0 %1088
        %v1091 = vmul.f32 %v1089, %v722
        %v1092 = vmul.f32 %v1089, %v726
        %v1093 = vmul.f32 %v1089, %v730
        %v1094 = vmul.f32 %v1089, %v734
        %1099 = vrot.lane.b32.xlu0 %v1091, 106
        %v1100 = vpop.permute.xlu0 %1099
        %1101 = vrot.lane.b32.xlu0 %v1092, 106
        %v1102 = vpop.permute.xlu0 %1101
        %1103 = vrot.lane.b32.xlu0 %v1093, 106
        %v1104 = vpop.permute.xlu0 %1103
        %1105 = vrot.lane.b32.xlu0 %v1094, 106
        %v1106 = vpop.permute.xlu0 %1105
        %v1107 = vsel %vm1013, %v1100, %v1102
        %v1108 = vsel %vm1013, %v1102, %v1104
        %v1109 = vsel %vm1013, %v1104, %v1106
        %v1114 = vadd.f32 %v989, %v1107
        %v1115 = vadd.f32 %v990, %v1108
        %v1116 = vadd.f32 %v991, %v1109
        %v1117 = vadd.f32 %v992, %v1106
        %1118 = vset.pattern.permute.xlu0 16
        %1119 = vperm.xlu0 %1118, %v619
        %v1120 = vpop.permute.xlu0 %1119
        %v1122 = vmul.f32 %v1120, %v629
        %v1123 = vmul.f32 %v1120, %v633
        %v1124 = vmul.f32 %v1120, %v637
        %v1125 = vmul.f32 %v1120, %v641
        %1130 = vrot.lane.b32.xlu0 %v1122, 105
        %v1131 = vpop.permute.xlu0 %1130
        %1132 = vrot.lane.b32.xlu0 %v1123, 105
        %v1133 = vpop.permute.xlu0 %1132
        %1134 = vrot.lane.b32.xlu0 %v1124, 105
        %v1135 = vpop.permute.xlu0 %1134
        %1136 = vrot.lane.b32.xlu0 %v1125, 105
        %v1137 = vpop.permute.xlu0 %1136
        %vm1138 = vcmask 859136
        %v1139 = vsel %vm1138, %v1131, %v1133
        %v1140 = vsel %vm1138, %v1133, %v1135
        %v1141 = vsel %vm1138, %v1135, %v1137
        %v1146 = vadd.f32 %v1021, %v1139
        %v1147 = vadd.f32 %v1022, %v1140
        %v1148 = vadd.f32 %v1023, %v1141
        %v1149 = vadd.f32 %v1024, %v1137
        %1150 = vset.pattern.permute.xlu0 17
        %1151 = vperm.xlu0 %1150, %v619
        %v1152 = vpop.permute.xlu0 %1151
        %v1154 = vmul.f32 %v1152, %v660
        %v1155 = vmul.f32 %v1152, %v664
        %v1156 = vmul.f32 %v1152, %v668
        %v1157 = vmul.f32 %v1152, %v672
        %1162 = vrot.lane.b32.xlu0 %v1154, 105
        %v1163 = vpop.permute.xlu0 %1162
        %1164 = vrot.lane.b32.xlu0 %v1155, 105
        %v1165 = vpop.permute.xlu0 %1164
        %1166 = vrot.lane.b32.xlu0 %v1156, 105
        %v1167 = vpop.permute.xlu0 %1166
        %1168 = vrot.lane.b32.xlu0 %v1157, 105
        %v1169 = vpop.permute.xlu0 %1168
        %v1170 = vsel %vm1138, %v1163, %v1165
        %v1171 = vsel %vm1138, %v1165, %v1167
        %v1172 = vsel %vm1138, %v1167, %v1169
        %v1177 = vadd.f32 %v1052, %v1170
        %v1178 = vadd.f32 %v1053, %v1171
        %v1179 = vadd.f32 %v1054, %v1172
        %v1180 = vadd.f32 %v1055, %v1169
        %1181 = vset.pattern.permute.xlu0 18
        %1182 = vperm.xlu0 %1181, %v619
        %v1183 = vpop.permute.xlu0 %1182
        %v1185 = vmul.f32 %v1183, %v691
        %v1186 = vmul.f32 %v1183, %v695
        %v1187 = vmul.f32 %v1183, %v699
        %v1188 = vmul.f32 %v1183, %v703
        %1193 = vrot.lane.b32.xlu0 %v1185, 105
        %v1194 = vpop.permute.xlu0 %1193
        %1195 = vrot.lane.b32.xlu0 %v1186, 105
        %v1196 = vpop.permute.xlu0 %1195
        %1197 = vrot.lane.b32.xlu0 %v1187, 105
        %v1198 = vpop.permute.xlu0 %1197
        %1199 = vrot.lane.b32.xlu0 %v1188, 105
        %v1200 = vpop.permute.xlu0 %1199
        %v1201 = vsel %vm1138, %v1194, %v1196
        %v1202 = vsel %vm1138, %v1196, %v1198
        %v1203 = vsel %vm1138, %v1198, %v1200
        %v1208 = vadd.f32 %v1083, %v1201
        %v1209 = vadd.f32 %v1084, %v1202
        %v1210 = vadd.f32 %v1085, %v1203
        %v1211 = vadd.f32 %v1086, %v1200
        %1212 = vset.pattern.permute.xlu0 19
        %1213 = vperm.xlu0 %1212, %v619
        %v1214 = vpop.permute.xlu0 %1213
        %v1216 = vmul.f32 %v1214, %v722
        %v1217 = vmul.f32 %v1214, %v726
        %v1218 = vmul.f32 %v1214, %v730
        %v1219 = vmul.f32 %v1214, %v734
        %1224 = vrot.lane.b32.xlu0 %v1216, 105
        %v1225 = vpop.permute.xlu0 %1224
        %1226 = vrot.lane.b32.xlu0 %v1217, 105
        %v1227 = vpop.permute.xlu0 %1226
        %1228 = vrot.lane.b32.xlu0 %v1218, 105
        %v1229 = vpop.permute.xlu0 %1228
        %1230 = vrot.lane.b32.xlu0 %v1219, 105
        %v1231 = vpop.permute.xlu0 %1230
        %v1232 = vsel %vm1138, %v1225, %v1227
        %v1233 = vsel %vm1138, %v1227, %v1229
        %v1234 = vsel %vm1138, %v1229, %v1231
        %v1239 = vadd.f32 %v1114, %v1232
        %v1240 = vadd.f32 %v1115, %v1233
        %v1241 = vadd.f32 %v1116, %v1234
        %v1242 = vadd.f32 %v1117, %v1231
        %1243 = vset.pattern.permute.xlu0 20
        %1244 = vperm.xlu0 %1243, %v619
        %v1245 = vpop.permute.xlu0 %1244
        %v1247 = vmul.f32 %v1245, %v629
        %v1248 = vmul.f32 %v1245, %v633
        %v1249 = vmul.f32 %v1245, %v637
        %v1250 = vmul.f32 %v1245, %v641
        %1255 = vrot.lane.b32.xlu0 %v1247, 104
        %v1256 = vpop.permute.xlu0 %1255
        %1257 = vrot.lane.b32.xlu0 %v1248, 104
        %v1258 = vpop.permute.xlu0 %1257
        %1259 = vrot.lane.b32.xlu0 %v1249, 104
        %v1260 = vpop.permute.xlu0 %1259
        %1261 = vrot.lane.b32.xlu0 %v1250, 104
        %v1262 = vpop.permute.xlu0 %1261
        %vm1263 = vcmask 850944
        %v1264 = vsel %vm1263, %v1256, %v1258
        %v1265 = vsel %vm1263, %v1258, %v1260
        %v1266 = vsel %vm1263, %v1260, %v1262
        %v1271 = vadd.f32 %v1146, %v1264
        %v1272 = vadd.f32 %v1147, %v1265
        %v1273 = vadd.f32 %v1148, %v1266
        %v1274 = vadd.f32 %v1149, %v1262
        %1275 = vset.pattern.permute.xlu0 21
        %1276 = vperm.xlu0 %1275, %v619
        %v1277 = vpop.permute.xlu0 %1276
        %v1279 = vmul.f32 %v1277, %v660
        %v1280 = vmul.f32 %v1277, %v664
        %v1281 = vmul.f32 %v1277, %v668
        %v1282 = vmul.f32 %v1277, %v672
        %1287 = vrot.lane.b32.xlu0 %v1279, 104
        %v1288 = vpop.permute.xlu0 %1287
        %1289 = vrot.lane.b32.xlu0 %v1280, 104
        %v1290 = vpop.permute.xlu0 %1289
        %1291 = vrot.lane.b32.xlu0 %v1281, 104
        %v1292 = vpop.permute.xlu0 %1291
        %1293 = vrot.lane.b32.xlu0 %v1282, 104
        %v1294 = vpop.permute.xlu0 %1293
        %v1295 = vsel %vm1263, %v1288, %v1290
        %v1296 = vsel %vm1263, %v1290, %v1292
        %v1297 = vsel %vm1263, %v1292, %v1294
        %v1302 = vadd.f32 %v1177, %v1295
        %v1303 = vadd.f32 %v1178, %v1296
        %v1304 = vadd.f32 %v1179, %v1297
        %v1305 = vadd.f32 %v1180, %v1294
        %1306 = vset.pattern.permute.xlu0 22
        %1307 = vperm.xlu0 %1306, %v619
        %v1308 = vpop.permute.xlu0 %1307
        %v1310 = vmul.f32 %v1308, %v691
        %v1311 = vmul.f32 %v1308, %v695
        %v1312 = vmul.f32 %v1308, %v699
        %v1313 = vmul.f32 %v1308, %v703
        %1318 = vrot.lane.b32.xlu0 %v1310, 104
        %v1319 = vpop.permute.xlu0 %1318
        %1320 = vrot.lane.b32.xlu0 %v1311, 104
        %v1321 = vpop.permute.xlu0 %1320
        %1322 = vrot.lane.b32.xlu0 %v1312, 104
        %v1323 = vpop.permute.xlu0 %1322
        %1324 = vrot.lane.b32.xlu0 %v1313, 104
        %v1325 = vpop.permute.xlu0 %1324
        %v1326 = vsel %vm1263, %v1319, %v1321
        %v1327 = vsel %vm1263, %v1321, %v1323
        %v1328 = vsel %vm1263, %v1323, %v1325
        %v1333 = vadd.f32 %v1208, %v1326
        %v1334 = vadd.f32 %v1209, %v1327
        %v1335 = vadd.f32 %v1210, %v1328
        %v1336 = vadd.f32 %v1211, %v1325
        %1337 = vset.pattern.permute.xlu0 23
        %1338 = vperm.xlu0 %1337, %v619
        %v1339 = vpop.permute.xlu0 %1338
        %v1341 = vmul.f32 %v1339, %v722
        %v1342 = vmul.f32 %v1339, %v726
        %v1343 = vmul.f32 %v1339, %v730
        %v1344 = vmul.f32 %v1339, %v734
        %1349 = vrot.lane.b32.xlu0 %v1341, 104
        %v1350 = vpop.permute.xlu0 %1349
        %1351 = vrot.lane.b32.xlu0 %v1342, 104
        %v1352 = vpop.permute.xlu0 %1351
        %1353 = vrot.lane.b32.xlu0 %v1343, 104
        %v1354 = vpop.permute.xlu0 %1353
        %1355 = vrot.lane.b32.xlu0 %v1344, 104
        %v1356 = vpop.permute.xlu0 %1355
        %v1357 = vsel %vm1263, %v1350, %v1352
        %v1358 = vsel %vm1263, %v1352, %v1354
        %v1359 = vsel %vm1263, %v1354, %v1356
        %v1364 = vadd.f32 %v1239, %v1357
        %v1365 = vadd.f32 %v1240, %v1358
        %v1366 = vadd.f32 %v1241, %v1359
        %v1367 = vadd.f32 %v1242, %v1356
        %1368 = vset.pattern.permute.xlu0 24
        %1369 = vperm.xlu0 %1368, %v619
        %v1370 = vpop.permute.xlu0 %1369
        %v1372 = vmul.f32 %v1370, %v629
        %v1373 = vmul.f32 %v1370, %v633
        %v1374 = vmul.f32 %v1370, %v637
        %v1375 = vmul.f32 %v1370, %v641
        %1380 = vrot.lane.b32.xlu0 %v1372, 84
        %v1381 = vpop.permute.xlu0 %1380
        %1382 = vrot.lane.b32.xlu0 %v1373, 84
        %v1383 = vpop.permute.xlu0 %1382
        %1384 = vrot.lane.b32.xlu0 %v1374, 84
        %v1385 = vpop.permute.xlu0 %1384
        %1386 = vrot.lane.b32.xlu0 %v1375, 84
        %v1387 = vpop.permute.xlu0 %1386
        %vm1388 = vcmask 687104
        %v1389 = vsel %vm1388, %v1381, %v1383
        %v1390 = vsel %vm1388, %v1383, %v1385
        %v1391 = vsel %vm1388, %v1385, %v1387
        %v1396 = vadd.f32 %v1271, %v1389
        %v1397 = vadd.f32 %v1272, %v1390
        %v1398 = vadd.f32 %v1273, %v1391
        %v1399 = vadd.f32 %v1274, %v1387
        %1400 = vset.pattern.permute.xlu0 25
        %1401 = vperm.xlu0 %1400, %v619
        %v1402 = vpop.permute.xlu0 %1401
        %v1404 = vmul.f32 %v1402, %v660
        %v1405 = vmul.f32 %v1402, %v664
        %v1406 = vmul.f32 %v1402, %v668
        %v1407 = vmul.f32 %v1402, %v672
        %1412 = vrot.lane.b32.xlu0 %v1404, 84
        %v1413 = vpop.permute.xlu0 %1412
        %1414 = vrot.lane.b32.xlu0 %v1405, 84
        %v1415 = vpop.permute.xlu0 %1414
        %1416 = vrot.lane.b32.xlu0 %v1406, 84
        %v1417 = vpop.permute.xlu0 %1416
        %1418 = vrot.lane.b32.xlu0 %v1407, 84
        %v1419 = vpop.permute.xlu0 %1418
        %v1420 = vsel %vm1388, %v1413, %v1415
        %v1421 = vsel %vm1388, %v1415, %v1417
        %v1422 = vsel %vm1388, %v1417, %v1419
        %v1427 = vadd.f32 %v1302, %v1420
        %v1428 = vadd.f32 %v1303, %v1421
        %v1429 = vadd.f32 %v1304, %v1422
        %v1430 = vadd.f32 %v1305, %v1419
        %1431 = vset.pattern.permute.xlu0 26
        %1432 = vperm.xlu0 %1431, %v619
        %v1433 = vpop.permute.xlu0 %1432
        %v1435 = vmul.f32 %v1433, %v691
        %v1436 = vmul.f32 %v1433, %v695
        %v1437 = vmul.f32 %v1433, %v699
        %v1438 = vmul.f32 %v1433, %v703
        %1443 = vrot.lane.b32.xlu0 %v1435, 84
        %v1444 = vpop.permute.xlu0 %1443
        %1445 = vrot.lane.b32.xlu0 %v1436, 84
        %v1446 = vpop.permute.xlu0 %1445
        %1447 = vrot.lane.b32.xlu0 %v1437, 84
        %v1448 = vpop.permute.xlu0 %1447
        %1449 = vrot.lane.b32.xlu0 %v1438, 84
        %v1450 = vpop.permute.xlu0 %1449
        %v1451 = vsel %vm1388, %v1444, %v1446
        %v1452 = vsel %vm1388, %v1446, %v1448
        %v1453 = vsel %vm1388, %v1448, %v1450
        %v1458 = vadd.f32 %v1333, %v1451
        %v1459 = vadd.f32 %v1334, %v1452
        %v1460 = vadd.f32 %v1335, %v1453
        %v1461 = vadd.f32 %v1336, %v1450
        %1462 = vset.pattern.permute.xlu0 27
        %1463 = vperm.xlu0 %1462, %v619
        %v1464 = vpop.permute.xlu0 %1463
        %v1466 = vmul.f32 %v1464, %v722
        %v1467 = vmul.f32 %v1464, %v726
        %v1468 = vmul.f32 %v1464, %v730
        %v1469 = vmul.f32 %v1464, %v734
        %1474 = vrot.lane.b32.xlu0 %v1466, 84
        %v1475 = vpop.permute.xlu0 %1474
        %1476 = vrot.lane.b32.xlu0 %v1467, 84
        %v1477 = vpop.permute.xlu0 %1476
        %1478 = vrot.lane.b32.xlu0 %v1468, 84
        %v1479 = vpop.permute.xlu0 %1478
        %1480 = vrot.lane.b32.xlu0 %v1469, 84
        %v1481 = vpop.permute.xlu0 %1480
        %v1482 = vsel %vm1388, %v1475, %v1477
        %v1483 = vsel %vm1388, %v1477, %v1479
        %v1484 = vsel %vm1388, %v1479, %v1481
        %v1489 = vadd.f32 %v1364, %v1482
        %v1490 = vadd.f32 %v1365, %v1483
        %v1491 = vadd.f32 %v1366, %v1484
        %v1492 = vadd.f32 %v1367, %v1481
        %1493 = vset.pattern.permute.xlu0 28
        %1494 = vperm.xlu0 %1493, %v619
        %v1495 = vpop.permute.xlu0 %1494
        %v1497 = vmul.f32 %v1495, %v629
        %v1498 = vmul.f32 %v1495, %v633
        %v1499 = vmul.f32 %v1495, %v637
        %v1500 = vmul.f32 %v1495, %v641
        %1505 = vrot.lane.b32.xlu0 %v1497, 83
        %v1506 = vpop.permute.xlu0 %1505
        %1507 = vrot.lane.b32.xlu0 %v1498, 83
        %v1508 = vpop.permute.xlu0 %1507
        %1509 = vrot.lane.b32.xlu0 %v1499, 83
        %v1510 = vpop.permute.xlu0 %1509
        %1511 = vrot.lane.b32.xlu0 %v1500, 83
        %v1512 = vpop.permute.xlu0 %1511
        %vm1513 = vcmask 678912
        %v1514 = vsel %vm1513, %v1506, %v1508
        %v1515 = vsel %vm1513, %v1508, %v1510
        %v1516 = vsel %vm1513, %v1510, %v1512
        %v1521 = vadd.f32 %v1396, %v1514
        %v1522 = vadd.f32 %v1397, %v1515
        %v1523 = vadd.f32 %v1398, %v1516
        %v1524 = vadd.f32 %v1399, %v1512
        %1525 = vset.pattern.permute.xlu0 29
        %1526 = vperm.xlu0 %1525, %v619
        %v1527 = vpop.permute.xlu0 %1526
        %v1529 = vmul.f32 %v1527, %v660
        %v1530 = vmul.f32 %v1527, %v664
        %v1531 = vmul.f32 %v1527, %v668
        %v1532 = vmul.f32 %v1527, %v672
        %1537 = vrot.lane.b32.xlu0 %v1529, 83
        %v1538 = vpop.permute.xlu0 %1537
        %1539 = vrot.lane.b32.xlu0 %v1530, 83
        %v1540 = vpop.permute.xlu0 %1539
        %1541 = vrot.lane.b32.xlu0 %v1531, 83
        %v1542 = vpop.permute.xlu0 %1541
        %1543 = vrot.lane.b32.xlu0 %v1532, 83
        %v1544 = vpop.permute.xlu0 %1543
        %v1545 = vsel %vm1513, %v1538, %v1540
        %v1546 = vsel %vm1513, %v1540, %v1542
        %v1547 = vsel %vm1513, %v1542, %v1544
        %v1552 = vadd.f32 %v1427, %v1545
        %v1553 = vadd.f32 %v1428, %v1546
        %v1554 = vadd.f32 %v1429, %v1547
        %v1555 = vadd.f32 %v1430, %v1544
        %1556 = vset.pattern.permute.xlu0 30
        %1557 = vperm.xlu0 %1556, %v619
        %v1558 = vpop.permute.xlu0 %1557
        %v1560 = vmul.f32 %v1558, %v691
        %v1561 = vmul.f32 %v1558, %v695
        %v1562 = vmul.f32 %v1558, %v699
        %v1563 = vmul.f32 %v1558, %v703
        %1568 = vrot.lane.b32.xlu0 %v1560, 83
        %v1569 = vpop.permute.xlu0 %1568
        %1570 = vrot.lane.b32.xlu0 %v1561, 83
        %v1571 = vpop.permute.xlu0 %1570
        %1572 = vrot.lane.b32.xlu0 %v1562, 83
        %v1573 = vpop.permute.xlu0 %1572
        %1574 = vrot.lane.b32.xlu0 %v1563, 83
        %v1575 = vpop.permute.xlu0 %1574
        %v1576 = vsel %vm1513, %v1569, %v1571
        %v1577 = vsel %vm1513, %v1571, %v1573
        %v1578 = vsel %vm1513, %v1573, %v1575
        %v1583 = vadd.f32 %v1458, %v1576
        %v1584 = vadd.f32 %v1459, %v1577
        %v1585 = vadd.f32 %v1460, %v1578
        %v1586 = vadd.f32 %v1461, %v1575
        %1587 = vset.pattern.permute.xlu0 31
        %1588 = vperm.xlu0 %1587, %v619
        %v1589 = vpop.permute.xlu0 %1588
        %v1591 = vmul.f32 %v1589, %v722
        %v1592 = vmul.f32 %v1589, %v726
        %v1593 = vmul.f32 %v1589, %v730
        %v1594 = vmul.f32 %v1589, %v734
        %1599 = vrot.lane.b32.xlu0 %v1591, 83
        %v1600 = vpop.permute.xlu0 %1599
        %1601 = vrot.lane.b32.xlu0 %v1592, 83
        %v1602 = vpop.permute.xlu0 %1601
        %1603 = vrot.lane.b32.xlu0 %v1593, 83
        %v1604 = vpop.permute.xlu0 %1603
        %1605 = vrot.lane.b32.xlu0 %v1594, 83
        %v1606 = vpop.permute.xlu0 %1605
        %v1607 = vsel %vm1513, %v1600, %v1602
        %v1608 = vsel %vm1513, %v1602, %v1604
        %v1609 = vsel %vm1513, %v1604, %v1606
        %v1614 = vadd.f32 %v1489, %v1607
        %v1615 = vadd.f32 %v1490, %v1608
        %v1616 = vadd.f32 %v1491, %v1609
        %v1617 = vadd.f32 %v1492, %v1606
        %1618 = vset.pattern.permute.xlu0 32
        %1619 = vperm.xlu0 %1618, %v619
        %v1620 = vpop.permute.xlu0 %1619
        %v1622 = vmul.f32 %v1620, %v629
        %v1623 = vmul.f32 %v1620, %v633
        %v1624 = vmul.f32 %v1620, %v637
        %v1625 = vmul.f32 %v1620, %v641
        %1630 = vrot.lane.b32.xlu0 %v1622, 82
        %v1631 = vpop.permute.xlu0 %1630
        %1632 = vrot.lane.b32.xlu0 %v1623, 82
        %v1633 = vpop.permute.xlu0 %1632
        %1634 = vrot.lane.b32.xlu0 %v1624, 82
        %v1635 = vpop.permute.xlu0 %1634
        %1636 = vrot.lane.b32.xlu0 %v1625, 82
        %v1637 = vpop.permute.xlu0 %1636
        %vm1638 = vcmask 670720
        %v1639 = vsel %vm1638, %v1631, %v1633
        %v1640 = vsel %vm1638, %v1633, %v1635
        %v1641 = vsel %vm1638, %v1635, %v1637
        %v1646 = vadd.f32 %v1521, %v1639
        %v1647 = vadd.f32 %v1522, %v1640
        %v1648 = vadd.f32 %v1523, %v1641
        %v1649 = vadd.f32 %v1524, %v1637
        %1650 = vset.pattern.permute.xlu0 33
        %1651 = vperm.xlu0 %1650, %v619
        %v1652 = vpop.permute.xlu0 %1651
        %v1654 = vmul.f32 %v1652, %v660
        %v1655 = vmul.f32 %v1652, %v664
        %v1656 = vmul.f32 %v1652, %v668
        %v1657 = vmul.f32 %v1652, %v672
        %1662 = vrot.lane.b32.xlu0 %v1654, 82
        %v1663 = vpop.permute.xlu0 %1662
        %1664 = vrot.lane.b32.xlu0 %v1655, 82
        %v1665 = vpop.permute.xlu0 %1664
        %1666 = vrot.lane.b32.xlu0 %v1656, 82
        %v1667 = vpop.permute.xlu0 %1666
        %1668 = vrot.lane.b32.xlu0 %v1657, 82
        %v1669 = vpop.permute.xlu0 %1668
        %v1670 = vsel %vm1638, %v1663, %v1665
        %v1671 = vsel %vm1638, %v1665, %v1667
        %v1672 = vsel %vm1638, %v1667, %v1669
        %v1677 = vadd.f32 %v1552, %v1670
        %v1678 = vadd.f32 %v1553, %v1671
        %v1679 = vadd.f32 %v1554, %v1672
        %v1680 = vadd.f32 %v1555, %v1669
        %1681 = vset.pattern.permute.xlu0 34
        %1682 = vperm.xlu0 %1681, %v619
        %v1683 = vpop.permute.xlu0 %1682
        %v1685 = vmul.f32 %v1683, %v691
        %v1686 = vmul.f32 %v1683, %v695
        %v1687 = vmul.f32 %v1683, %v699
        %v1688 = vmul.f32 %v1683, %v703
        %1693 = vrot.lane.b32.xlu0 %v1685, 82
        %v1694 = vpop.permute.xlu0 %1693
        %1695 = vrot.lane.b32.xlu0 %v1686, 82
        %v1696 = vpop.permute.xlu0 %1695
        %1697 = vrot.lane.b32.xlu0 %v1687, 82
        %v1698 = vpop.permute.xlu0 %1697
        %1699 = vrot.lane.b32.xlu0 %v1688, 82
        %v1700 = vpop.permute.xlu0 %1699
        %v1701 = vsel %vm1638, %v1694, %v1696
        %v1702 = vsel %vm1638, %v1696, %v1698
        %v1703 = vsel %vm1638, %v1698, %v1700
        %v1708 = vadd.f32 %v1583, %v1701
        %v1709 = vadd.f32 %v1584, %v1702
        %v1710 = vadd.f32 %v1585, %v1703
        %v1711 = vadd.f32 %v1586, %v1700
        %1712 = vset.pattern.permute.xlu0 35
        %1713 = vperm.xlu0 %1712, %v619
        %v1714 = vpop.permute.xlu0 %1713
        %v1716 = vmul.f32 %v1714, %v722
        %v1717 = vmul.f32 %v1714, %v726
        %v1718 = vmul.f32 %v1714, %v730
        %v1719 = vmul.f32 %v1714, %v734
        %1724 = vrot.lane.b32.xlu0 %v1716, 82
        %v1725 = vpop.permute.xlu0 %1724
        %1726 = vrot.lane.b32.xlu0 %v1717, 82
        %v1727 = vpop.permute.xlu0 %1726
        %1728 = vrot.lane.b32.xlu0 %v1718, 82
        %v1729 = vpop.permute.xlu0 %1728
        %1730 = vrot.lane.b32.xlu0 %v1719, 82
        %v1731 = vpop.permute.xlu0 %1730
        %v1732 = vsel %vm1638, %v1725, %v1727
        %v1733 = vsel %vm1638, %v1727, %v1729
        %v1734 = vsel %vm1638, %v1729, %v1731
        %v1739 = vadd.f32 %v1614, %v1732
        %v1740 = vadd.f32 %v1615, %v1733
        %v1741 = vadd.f32 %v1616, %v1734
        %v1742 = vadd.f32 %v1617, %v1731
        %v1743 = vadd.f32 %v1646, %v1677
        %v1744 = vadd.f32 %v1647, %v1678
        %v1745 = vadd.f32 %v1648, %v1679
        %v1746 = vadd.f32 %v1649, %v1680
        %v1747 = vadd.f32 %v1743, %v1708
        %v1748 = vadd.f32 %v1744, %v1709
        %v1749 = vadd.f32 %v1745, %v1710
        %v1750 = vadd.f32 %v1746, %v1711
        %v1751 = vadd.f32 %v1747, %v1739
        %v1752 = vadd.f32 %v1748, %v1740
        %v1753 = vadd.f32 %v1749, %v1741
        %v1754 = vadd.f32 %v1750, %v1742
        %v1755 = vld [vmem:[#allocation2] sm:$0xff]
        %v1756 = vld [vmem:[#allocation2 + $0x8] sm:$0xff]
        %v1757 = vmax.f32 %v1751, 0.0
        %v1758 = vmax.f32 %v1752, 0.0
        %v1759 = vmax.f32 %v1753, 0.0
        %v1760 = vmax.f32 %v1754, 0.0
        %v1763 = vcombine.high %v1755, %v1755
        %v1764 = vcombine.high %v1756, %v1756
        %1765 = vrot.lane.b32.xlu0 %v1755, 105
        %v1766 = vpop.permute.xlu0 %1765
        %1767 = vrot.lane.b32.xlu0 %v1763, 105
        %v1768 = vpop.permute.xlu0 %1767
        %1769 = vrot.lane.b32.xlu0 %v1756, 105
        %v1770 = vpop.permute.xlu0 %1769
        %1771 = vrot.lane.b32.xlu0 %v1764, 105
        %v1772 = vpop.permute.xlu0 %1771
        %v1773 = vsel %vm1138, %v1766, %v1768
        %v1774 = vsel %vm1138, %v1768, %v1770
        %v1775 = vsel %vm1138, %v1770, %v1772
        %v1780 = vsub.f32 %v1757, %v1773
        %v1781 = vsub.f32 %v1758, %v1774
        %v1782 = vsub.f32 %v1759, %v1775
        %v1783 = vsub.f32 %v1760, %v1772
        %v1785 = vlaneseq
        %v1786 = vshrl.u32 %v1785, 7
        %v1787 = vsub.s32 0, %v1786
        %v1788 = vrot.slane %v239, %v1787
        %v1789 = vlaneseq
        %v1790 = vshrl.u32 %v1789, 7
        %v1791 = vsub.s32 1, %v1790
        %v1792 = vrot.slane %v239, %v1791
        %v1793 = vlaneseq
        %v1794 = vshrl.u32 %v1793, 7
        %v1795 = vsub.s32 2, %v1794
        %v1796 = vrot.slane %v239, %v1795
        %1797 = vrot.lane.b32.xlu0 %v1788, 46
        %v1798 = vpop.permute.xlu0 %1797
        %1799 = vrot.lane.b32.xlu0 %v1792, 46
        %v1800 = vpop.permute.xlu0 %1799
        %1801 = vrot.lane.b32.xlu0 %v1796, 46
        %v1802 = vpop.permute.xlu0 %1801
        %vm1803 = vcmask 375808
        %v1804 = vsel %vm1803, %v1798, %v1800
        %v1805 = vsel %vm1803, %v1800, %v1802
        %v1810 = vmul.f32 %v1780, %v1798
        %v1811 = vmul.f32 %v1781, %v1804
        %v1812 = vmul.f32 %v1782, %v1805
        %v1813 = vmul.f32 %v1783, %v1802
        %v1818 = vcombine.low %v1810, %v1811
        %v1819 = vcombine.low %v1812, %v1813
        %1820 = vrot.lane.b32.xlu0 %v1818, 23
        %v1821 = vpop.permute.xlu0 %1820
        %1822 = vrot.lane.b32.xlu0 %v1819, 23
        %v1823 = vpop.permute.xlu0 %1822
        %v1824 = vrot.slane %v1821, 4
        %v1825 = vrot.slane %v1823, 4
        %vm1826 = vcmask 187392
        %v1827 = vsel %vm1826, %v1824, %v1821
        %v1828 = vsel %vm241, %v1824, %v1825
        %v1829 = vsel %vm1826, %v1828, %v1823
        %vm1832 = vcmask 1044008
        %vm1833 = vcmask 1047556
        %vm1834 = vmor %vm1833, %vm1832
        %1835 = vst.msk [vmem:[#allocation2] sm:$0xff] %vm1834, %v1827
        %vm1836 = vcmask 302084
        %vm1837 = vmor %vm1836, %vm241
        %1838 = vst.msk [vmem:[#allocation2 + $0x8] sm:$0xff] %vm1837, %v1829
        %v1839 = vld [vmem:[#allocation2] ss:$4 sm:$0x7]
        %v1840 = vld [vmem:[#allocation6] sm:$0xf]
        %1842 = vset.pattern.permute.xlu0 0
        %1843 = vperm.xlu0 %1842, %v1840
        %v1844 = vpop.permute.xlu0 %1843
        %v1847 = vlaneseq
        %v1848 = vshrl.u32 %v1847, 7
        %v1849 = vsub.s32 0, %v1848
        %v1850 = vrot.slane %v1839, %v1849
        %v1851 = vlaneseq
        %v1852 = vshrl.u32 %v1851, 7
        %v1853 = vsub.s32 1, %v1852
        %v1854 = vrot.slane %v1839, %v1853
        %v1855 = vlaneseq
        %v1856 = vshrl.u32 %v1855, 7
        %v1857 = vsub.s32 2, %v1856
        %v1858 = vrot.slane %v1839, %v1857
        %v1862 = vmul.f32 %v1844, %v1850
        %v1863 = vmul.f32 %v1844, %v1854
        %v1864 = vmul.f32 %v1844, %v1858
        %v1865 = vld [vmem:[%s650] ss:$4 sm:$0x7]
        %1866 = vset.pattern.permute.xlu0 1
        %1867 = vperm.xlu0 %1866, %v1840
        %v1868 = vpop.permute.xlu0 %1867
        %v1871 = vlaneseq
        %v1872 = vshrl.u32 %v1871, 7
        %v1873 = vsub.s32 0, %v1872
        %v1874 = vrot.slane %v1865, %v1873
        %v1875 = vlaneseq
        %v1876 = vshrl.u32 %v1875, 7
        %v1877 = vsub.s32 1, %v1876
        %v1878 = vrot.slane %v1865, %v1877
        %v1879 = vlaneseq
        %v1880 = vshrl.u32 %v1879, 7
        %v1881 = vsub.s32 2, %v1880
        %v1882 = vrot.slane %v1865, %v1881
        %v1886 = vmul.f32 %v1868, %v1874
        %v1887 = vmul.f32 %v1868, %v1878
        %v1888 = vmul.f32 %v1868, %v1882
        %v1889 = vld [vmem:[%s681] ss:$4 sm:$0x7]
        %1890 = vset.pattern.permute.xlu0 2
        %1891 = vperm.xlu0 %1890, %v1840
        %v1892 = vpop.permute.xlu0 %1891
        %v1895 = vlaneseq
        %v1896 = vshrl.u32 %v1895, 7
        %v1897 = vsub.s32 0, %v1896
        %v1898 = vrot.slane %v1889, %v1897
        %v1899 = vlaneseq
        %v1900 = vshrl.u32 %v1899, 7
        %v1901 = vsub.s32 1, %v1900
        %v1902 = vrot.slane %v1889, %v1901
        %v1903 = vlaneseq
        %v1904 = vshrl.u32 %v1903, 7
        %v1905 = vsub.s32 2, %v1904
        %v1906 = vrot.slane %v1889, %v1905
        %v1910 = vmul.f32 %v1892, %v1898
        %v1911 = vmul.f32 %v1892, %v1902
        %v1912 = vmul.f32 %v1892, %v1906
        %v1913 = vld [vmem:[%s712] ss:$4 sm:$0x7]
        %1914 = vset.pattern.permute.xlu0 3
        %1915 = vperm.xlu0 %1914, %v1840
        %v1916 = vpop.permute.xlu0 %1915
        %v1919 = vlaneseq
        %v1920 = vshrl.u32 %v1919, 7
        %v1921 = vsub.s32 0, %v1920
        %v1922 = vrot.slane %v1913, %v1921
        %v1923 = vlaneseq
        %v1924 = vshrl.u32 %v1923, 7
        %v1925 = vsub.s32 1, %v1924
        %v1926 = vrot.slane %v1913, %v1925
        %v1927 = vlaneseq
        %v1928 = vshrl.u32 %v1927, 7
        %v1929 = vsub.s32 2, %v1928
        %v1930 = vrot.slane %v1913, %v1929
        %v1934 = vmul.f32 %v1916, %v1922
        %v1935 = vmul.f32 %v1916, %v1926
        %v1936 = vmul.f32 %v1916, %v1930
        %1937 = vset.pattern.permute.xlu0 4
        %1938 = vperm.xlu0 %1937, %v1840
        %v1939 = vpop.permute.xlu0 %1938
        %v1941 = vmul.f32 %v1939, %v1850
        %v1942 = vmul.f32 %v1939, %v1854
        %v1943 = vmul.f32 %v1939, %v1858
        %1947 = vrot.lane.b32.xlu0 %v1941, 127
        %v1948 = vpop.permute.xlu0 %1947
        %1949 = vrot.lane.b32.xlu0 %v1942, 127
        %v1950 = vpop.permute.xlu0 %1949
        %1951 = vrot.lane.b32.xlu0 %v1943, 127
        %v1952 = vpop.permute.xlu0 %1951
        %v1953 = vsel %vm763, %v1948, %v1950
        %v1954 = vsel %vm763, %v1950, %v1952
        %v1958 = vadd.f32 %v1862, %v1953
        %v1959 = vadd.f32 %v1863, %v1954
        %v1960 = vadd.f32 %v1864, %v1952
        %1961 = vset.pattern.permute.xlu0 5
        %1962 = vperm.xlu0 %1961, %v1840
        %v1963 = vpop.permute.xlu0 %1962
        %v1965 = vmul.f32 %v1963, %v1874
        %v1966 = vmul.f32 %v1963, %v1878
        %v1967 = vmul.f32 %v1963, %v1882
        %1971 = vrot.lane.b32.xlu0 %v1965, 127
        %v1972 = vpop.permute.xlu0 %1971
        %1973 = vrot.lane.b32.xlu0 %v1966, 127
        %v1974 = vpop.permute.xlu0 %1973
        %1975 = vrot.lane.b32.xlu0 %v1967, 127
        %v1976 = vpop.permute.xlu0 %1975
        %v1977 = vsel %vm763, %v1972, %v1974
        %v1978 = vsel %vm763, %v1974, %v1976
        %v1982 = vadd.f32 %v1886, %v1977
        %v1983 = vadd.f32 %v1887, %v1978
        %v1984 = vadd.f32 %v1888, %v1976
        %1985 = vset.pattern.permute.xlu0 6
        %1986 = vperm.xlu0 %1985, %v1840
        %v1987 = vpop.permute.xlu0 %1986
        %v1989 = vmul.f32 %v1987, %v1898
        %v1990 = vmul.f32 %v1987, %v1902
        %v1991 = vmul.f32 %v1987, %v1906
        %1995 = vrot.lane.b32.xlu0 %v1989, 127
        %v1996 = vpop.permute.xlu0 %1995
        %1997 = vrot.lane.b32.xlu0 %v1990, 127
        %v1998 = vpop.permute.xlu0 %1997
        %1999 = vrot.lane.b32.xlu0 %v1991, 127
        %v2000 = vpop.permute.xlu0 %1999
        %v2001 = vsel %vm763, %v1996, %v1998
        %v2002 = vsel %vm763, %v1998, %v2000
        %v2006 = vadd.f32 %v1910, %v2001
        %v2007 = vadd.f32 %v1911, %v2002
        %v2008 = vadd.f32 %v1912, %v2000
        %2009 = vset.pattern.permute.xlu0 7
        %2010 = vperm.xlu0 %2009, %v1840
        %v2011 = vpop.permute.xlu0 %2010
        %v2013 = vmul.f32 %v2011, %v1922
        %v2014 = vmul.f32 %v2011, %v1926
        %v2015 = vmul.f32 %v2011, %v1930
        %2019 = vrot.lane.b32.xlu0 %v2013, 127
        %v2020 = vpop.permute.xlu0 %2019
        %2021 = vrot.lane.b32.xlu0 %v2014, 127
        %v2022 = vpop.permute.xlu0 %2021
        %2023 = vrot.lane.b32.xlu0 %v2015, 127
        %v2024 = vpop.permute.xlu0 %2023
        %v2025 = vsel %vm763, %v2020, %v2022
        %v2026 = vsel %vm763, %v2022, %v2024
        %v2030 = vadd.f32 %v1934, %v2025
        %v2031 = vadd.f32 %v1935, %v2026
        %v2032 = vadd.f32 %v1936, %v2024
        %2033 = vset.pattern.permute.xlu0 8
        %2034 = vperm.xlu0 %2033, %v1840
        %v2035 = vpop.permute.xlu0 %2034
        %v2037 = vmul.f32 %v2035, %v1850
        %v2038 = vmul.f32 %v2035, %v1854
        %v2039 = vmul.f32 %v2035, %v1858
        %2043 = vrot.lane.b32.xlu0 %v2037, 126
        %v2044 = vpop.permute.xlu0 %2043
        %2045 = vrot.lane.b32.xlu0 %v2038, 126
        %v2046 = vpop.permute.xlu0 %2045
        %2047 = vrot.lane.b32.xlu0 %v2039, 126
        %v2048 = vpop.permute.xlu0 %2047
        %v2049 = vsel %vm888, %v2044, %v2046
        %v2050 = vsel %vm888, %v2046, %v2048
        %v2054 = vadd.f32 %v1958, %v2049
        %v2055 = vadd.f32 %v1959, %v2050
        %v2056 = vadd.f32 %v1960, %v2048
        %2057 = vset.pattern.permute.xlu0 9
        %2058 = vperm.xlu0 %2057, %v1840
        %v2059 = vpop.permute.xlu0 %2058
        %v2061 = vmul.f32 %v2059, %v1874
        %v2062 = vmul.f32 %v2059, %v1878
        %v2063 = vmul.f32 %v2059, %v1882
        %2067 = vrot.lane.b32.xlu0 %v2061, 126
        %v2068 = vpop.permute.xlu0 %2067
        %2069 = vrot.lane.b32.xlu0 %v2062, 126
        %v2070 = vpop.permute.xlu0 %2069
        %2071 = vrot.lane.b32.xlu0 %v2063, 126
        %v2072 = vpop.permute.xlu0 %2071
        %v2073 = vsel %vm888, %v2068, %v2070
        %v2074 = vsel %vm888, %v2070, %v2072
        %v2078 = vadd.f32 %v1982, %v2073
        %v2079 = vadd.f32 %v1983, %v2074
        %v2080 = vadd.f32 %v1984, %v2072
        %2081 = vset.pattern.permute.xlu0 10
        %2082 = vperm.xlu0 %2081, %v1840
        %v2083 = vpop.permute.xlu0 %2082
        %v2085 = vmul.f32 %v2083, %v1898
        %v2086 = vmul.f32 %v2083, %v1902
        %v2087 = vmul.f32 %v2083, %v1906
        %2091 = vrot.lane.b32.xlu0 %v2085, 126
        %v2092 = vpop.permute.xlu0 %2091
        %2093 = vrot.lane.b32.xlu0 %v2086, 126
        %v2094 = vpop.permute.xlu0 %2093
        %2095 = vrot.lane.b32.xlu0 %v2087, 126
        %v2096 = vpop.permute.xlu0 %2095
        %v2097 = vsel %vm888, %v2092, %v2094
        %v2098 = vsel %vm888, %v2094, %v2096
        %v2102 = vadd.f32 %v2006, %v2097
        %v2103 = vadd.f32 %v2007, %v2098
        %v2104 = vadd.f32 %v2008, %v2096
        %2105 = vset.pattern.permute.xlu0 11
        %2106 = vperm.xlu0 %2105, %v1840
        %v2107 = vpop.permute.xlu0 %2106
        %v2109 = vmul.f32 %v2107, %v1922
        %v2110 = vmul.f32 %v2107, %v1926
        %v2111 = vmul.f32 %v2107, %v1930
        %2115 = vrot.lane.b32.xlu0 %v2109, 126
        %v2116 = vpop.permute.xlu0 %2115
        %2117 = vrot.lane.b32.xlu0 %v2110, 126
        %v2118 = vpop.permute.xlu0 %2117
        %2119 = vrot.lane.b32.xlu0 %v2111, 126
        %v2120 = vpop.permute.xlu0 %2119
        %v2121 = vsel %vm888, %v2116, %v2118
        %v2122 = vsel %vm888, %v2118, %v2120
        %v2126 = vadd.f32 %v2030, %v2121
        %v2127 = vadd.f32 %v2031, %v2122
        %v2128 = vadd.f32 %v2032, %v2120
        %2129 = vset.pattern.permute.xlu0 12
        %2130 = vperm.xlu0 %2129, %v1840
        %v2131 = vpop.permute.xlu0 %2130
        %v2133 = vmul.f32 %v2131, %v1850
        %v2134 = vmul.f32 %v2131, %v1854
        %v2135 = vmul.f32 %v2131, %v1858
        %2139 = vrot.lane.b32.xlu0 %v2133, 125
        %v2140 = vpop.permute.xlu0 %2139
        %2141 = vrot.lane.b32.xlu0 %v2134, 125
        %v2142 = vpop.permute.xlu0 %2141
        %2143 = vrot.lane.b32.xlu0 %v2135, 125
        %v2144 = vpop.permute.xlu0 %2143
        %vm2145 = vcmask 1022976
        %v2146 = vsel %vm2145, %v2140, %v2142
        %v2147 = vsel %vm2145, %v2142, %v2144
        %v2151 = vadd.f32 %v2054, %v2146
        %v2152 = vadd.f32 %v2055, %v2147
        %v2153 = vadd.f32 %v2056, %v2144
        %2154 = vset.pattern.permute.xlu0 13
        %2155 = vperm.xlu0 %2154, %v1840
        %v2156 = vpop.permute.xlu0 %2155
        %v2158 = vmul.f32 %v2156, %v1874
        %v2159 = vmul.f32 %v2156, %v1878
        %v2160 = vmul.f32 %v2156, %v1882
        %2164 = vrot.lane.b32.xlu0 %v2158, 125
        %v2165 = vpop.permute.xlu0 %2164
        %2166 = vrot.lane.b32.xlu0 %v2159, 125
        %v2167 = vpop.permute.xlu0 %2166
        %2168 = vrot.lane.b32.xlu0 %v2160, 125
        %v2169 = vpop.permute.xlu0 %2168
        %v2170 = vsel %vm2145, %v2165, %v2167
        %v2171 = vsel %vm2145, %v2167, %v2169
        %v2175 = vadd.f32 %v2078, %v2170
        %v2176 = vadd.f32 %v2079, %v2171
        %v2177 = vadd.f32 %v2080, %v2169
        %2178 = vset.pattern.permute.xlu0 14
        %2179 = vperm.xlu0 %2178, %v1840
        %v2180 = vpop.permute.xlu0 %2179
        %v2182 = vmul.f32 %v2180, %v1898
        %v2183 = vmul.f32 %v2180, %v1902
        %v2184 = vmul.f32 %v2180, %v1906
        %2188 = vrot.lane.b32.xlu0 %v2182, 125
        %v2189 = vpop.permute.xlu0 %2188
        %2190 = vrot.lane.b32.xlu0 %v2183, 125
        %v2191 = vpop.permute.xlu0 %2190
        %2192 = vrot.lane.b32.xlu0 %v2184, 125
        %v2193 = vpop.permute.xlu0 %2192
        %v2194 = vsel %vm2145, %v2189, %v2191
        %v2195 = vsel %vm2145, %v2191, %v2193
        %v2199 = vadd.f32 %v2102, %v2194
        %v2200 = vadd.f32 %v2103, %v2195
        %v2201 = vadd.f32 %v2104, %v2193
        %2202 = vset.pattern.permute.xlu0 15
        %2203 = vperm.xlu0 %2202, %v1840
        %v2204 = vpop.permute.xlu0 %2203
        %v2206 = vmul.f32 %v2204, %v1922
        %v2207 = vmul.f32 %v2204, %v1926
        %v2208 = vmul.f32 %v2204, %v1930
        %2212 = vrot.lane.b32.xlu0 %v2206, 125
        %v2213 = vpop.permute.xlu0 %2212
        %2214 = vrot.lane.b32.xlu0 %v2207, 125
        %v2215 = vpop.permute.xlu0 %2214
        %2216 = vrot.lane.b32.xlu0 %v2208, 125
        %v2217 = vpop.permute.xlu0 %2216
        %v2218 = vsel %vm2145, %v2213, %v2215
        %v2219 = vsel %vm2145, %v2215, %v2217
        %v2223 = vadd.f32 %v2126, %v2218
        %v2224 = vadd.f32 %v2127, %v2219
        %v2225 = vadd.f32 %v2128, %v2217
        %2226 = vset.pattern.permute.xlu0 16
        %2227 = vperm.xlu0 %2226, %v1840
        %v2228 = vpop.permute.xlu0 %2227
        %v2230 = vmul.f32 %v2228, %v1850
        %v2231 = vmul.f32 %v2228, %v1854
        %v2232 = vmul.f32 %v2228, %v1858
        %2236 = vrot.lane.b32.xlu0 %v2230, 124
        %v2237 = vpop.permute.xlu0 %2236
        %2238 = vrot.lane.b32.xlu0 %v2231, 124
        %v2239 = vpop.permute.xlu0 %2238
        %2240 = vrot.lane.b32.xlu0 %v2232, 124
        %v2241 = vpop.permute.xlu0 %2240
        %vm2242 = vcmask 1014784
        %v2243 = vsel %vm2242, %v2237, %v2239
        %v2244 = vsel %vm2242, %v2239, %v2241
        %v2248 = vadd.f32 %v2151, %v2243
        %v2249 = vadd.f32 %v2152, %v2244
        %v2250 = vadd.f32 %v2153, %v2241
        %2251 = vset.pattern.permute.xlu0 17
        %2252 = vperm.xlu0 %2251, %v1840
        %v2253 = vpop.permute.xlu0 %2252
        %v2255 = vmul.f32 %v2253, %v1874
        %v2256 = vmul.f32 %v2253, %v1878
        %v2257 = vmul.f32 %v2253, %v1882
        %2261 = vrot.lane.b32.xlu0 %v2255, 124
        %v2262 = vpop.permute.xlu0 %2261
        %2263 = vrot.lane.b32.xlu0 %v2256, 124
        %v2264 = vpop.permute.xlu0 %2263
        %2265 = vrot.lane.b32.xlu0 %v2257, 124
        %v2266 = vpop.permute.xlu0 %2265
        %v2267 = vsel %vm2242, %v2262, %v2264
        %v2268 = vsel %vm2242, %v2264, %v2266
        %v2272 = vadd.f32 %v2175, %v2267
        %v2273 = vadd.f32 %v2176, %v2268
        %v2274 = vadd.f32 %v2177, %v2266
        %2275 = vset.pattern.permute.xlu0 18
        %2276 = vperm.xlu0 %2275, %v1840
        %v2277 = vpop.permute.xlu0 %2276
        %v2279 = vmul.f32 %v2277, %v1898
        %v2280 = vmul.f32 %v2277, %v1902
        %v2281 = vmul.f32 %v2277, %v1906
        %2285 = vrot.lane.b32.xlu0 %v2279, 124
        %v2286 = vpop.permute.xlu0 %2285
        %2287 = vrot.lane.b32.xlu0 %v2280, 124
        %v2288 = vpop.permute.xlu0 %2287
        %2289 = vrot.lane.b32.xlu0 %v2281, 124
        %v2290 = vpop.permute.xlu0 %2289
        %v2291 = vsel %vm2242, %v2286, %v2288
        %v2292 = vsel %vm2242, %v2288, %v2290
        %v2296 = vadd.f32 %v2199, %v2291
        %v2297 = vadd.f32 %v2200, %v2292
        %v2298 = vadd.f32 %v2201, %v2290
        %2299 = vset.pattern.permute.xlu0 19
        %2300 = vperm.xlu0 %2299, %v1840
        %v2301 = vpop.permute.xlu0 %2300
        %v2303 = vmul.f32 %v2301, %v1922
        %v2304 = vmul.f32 %v2301, %v1926
        %v2305 = vmul.f32 %v2301, %v1930
        %2309 = vrot.lane.b32.xlu0 %v2303, 124
        %v2310 = vpop.permute.xlu0 %2309
        %2311 = vrot.lane.b32.xlu0 %v2304, 124
        %v2312 = vpop.permute.xlu0 %2311
        %2313 = vrot.lane.b32.xlu0 %v2305, 124
        %v2314 = vpop.permute.xlu0 %2313
        %v2315 = vsel %vm2242, %v2310, %v2312
        %v2316 = vsel %vm2242, %v2312, %v2314
        %v2320 = vadd.f32 %v2223, %v2315
        %v2321 = vadd.f32 %v2224, %v2316
        %v2322 = vadd.f32 %v2225, %v2314
        %v2323 = vld [vmem:[#allocation2] ss:$4 sm:$0xf]
        %2324 = vset.pattern.permute.xlu0 20
        %2325 = vperm.xlu0 %2324, %v1840
        %v2326 = vpop.permute.xlu0 %2325
        %v2329 = vlaneseq
        %v2330 = vshrl.u32 %v2329, 7
        %v2331 = vsub.s32 0, %v2330
        %v2332 = vrot.slane %v2323, %v2331
        %v2333 = vlaneseq
        %v2334 = vshrl.u32 %v2333, 7
        %v2335 = vsub.s32 1, %v2334
        %v2336 = vrot.slane %v2323, %v2335
        %v2337 = vlaneseq
        %v2338 = vshrl.u32 %v2337, 7
        %v2339 = vsub.s32 2, %v2338
        %v2340 = vrot.slane %v2323, %v2339
        %v2341 = vlaneseq
        %v2342 = vshrl.u32 %v2341, 7
        %v2343 = vsub.s32 3, %v2342
        %v2344 = vrot.slane %v2323, %v2343
        %v2349 = vmul.f32 %v2326, %v2332
        %v2350 = vmul.f32 %v2326, %v2336
        %v2351 = vmul.f32 %v2326, %v2340
        %v2352 = vmul.f32 %v2326, %v2344
        %2357 = vrot.lane.b32.xlu0 %v2349, 106
        %v2358 = vpop.permute.xlu0 %2357
        %2359 = vrot.lane.b32.xlu0 %v2350, 106
        %v2360 = vpop.permute.xlu0 %2359
        %2361 = vrot.lane.b32.xlu0 %v2351, 106
        %v2362 = vpop.permute.xlu0 %2361
        %2363 = vrot.lane.b32.xlu0 %v2352, 106
        %v2364 = vpop.permute.xlu0 %2363
        %v2365 = vsel %vm1013, %v2358, %v2360
        %v2366 = vsel %vm1013, %v2360, %v2362
        %v2367 = vsel %vm1013, %v2362, %v2364
        %v2371 = vadd.f32 %v2248, %v2365
        %v2372 = vadd.f32 %v2249, %v2366
        %v2373 = vadd.f32 %v2250, %v2367
        %v2374 = vld [vmem:[%s650] ss:$4 sm:$0xf]
        %2375 = vset.pattern.permute.xlu0 21
        %2376 = vperm.xlu0 %2375, %v1840
        %v2377 = vpop.permute.xlu0 %2376
        %v2380 = vlaneseq
        %v2381 = vshrl.u32 %v2380, 7
        %v2382 = vsub.s32 0, %v2381
        %v2383 = vrot.slane %v2374, %v2382
        %v2384 = vlaneseq
        %v2385 = vshrl.u32 %v2384, 7
        %v2386 = vsub.s32 1, %v2385
        %v2387 = vrot.slane %v2374, %v2386
        %v2388 = vlaneseq
        %v2389 = vshrl.u32 %v2388, 7
        %v2390 = vsub.s32 2, %v2389
        %v2391 = vrot.slane %v2374, %v2390
        %v2392 = vlaneseq
        %v2393 = vshrl.u32 %v2392, 7
        %v2394 = vsub.s32 3, %v2393
        %v2395 = vrot.slane %v2374, %v2394
        %v2400 = vmul.f32 %v2377, %v2383
        %v2401 = vmul.f32 %v2377, %v2387
        %v2402 = vmul.f32 %v2377, %v2391
        %v2403 = vmul.f32 %v2377, %v2395
        %2408 = vrot.lane.b32.xlu0 %v2400, 106
        %v2409 = vpop.permute.xlu0 %2408
        %2410 = vrot.lane.b32.xlu0 %v2401, 106
        %v2411 = vpop.permute.xlu0 %2410
        %2412 = vrot.lane.b32.xlu0 %v2402, 106
        %v2413 = vpop.permute.xlu0 %2412
        %2414 = vrot.lane.b32.xlu0 %v2403, 106
        %v2415 = vpop.permute.xlu0 %2414
        %v2416 = vsel %vm1013, %v2409, %v2411
        %v2417 = vsel %vm1013, %v2411, %v2413
        %v2418 = vsel %vm1013, %v2413, %v2415
        %v2422 = vadd.f32 %v2272, %v2416
        %v2423 = vadd.f32 %v2273, %v2417
        %v2424 = vadd.f32 %v2274, %v2418
        %v2425 = vld [vmem:[%s681] ss:$4 sm:$0xf]
        %2426 = vset.pattern.permute.xlu0 22
        %2427 = vperm.xlu0 %2426, %v1840
        %v2428 = vpop.permute.xlu0 %2427
        %v2431 = vlaneseq
        %v2432 = vshrl.u32 %v2431, 7
        %v2433 = vsub.s32 0, %v2432
        %v2434 = vrot.slane %v2425, %v2433
        %v2435 = vlaneseq
        %v2436 = vshrl.u32 %v2435, 7
        %v2437 = vsub.s32 1, %v2436
        %v2438 = vrot.slane %v2425, %v2437
        %v2439 = vlaneseq
        %v2440 = vshrl.u32 %v2439, 7
        %v2441 = vsub.s32 2, %v2440
        %v2442 = vrot.slane %v2425, %v2441
        %v2443 = vlaneseq
        %v2444 = vshrl.u32 %v2443, 7
        %v2445 = vsub.s32 3, %v2444
        %v2446 = vrot.slane %v2425, %v2445
        %v2451 = vmul.f32 %v2428, %v2434
        %v2452 = vmul.f32 %v2428, %v2438
        %v2453 = vmul.f32 %v2428, %v2442
        %v2454 = vmul.f32 %v2428, %v2446
        %2459 = vrot.lane.b32.xlu0 %v2451, 106
        %v2460 = vpop.permute.xlu0 %2459
        %2461 = vrot.lane.b32.xlu0 %v2452, 106
        %v2462 = vpop.permute.xlu0 %2461
        %2463 = vrot.lane.b32.xlu0 %v2453, 106
        %v2464 = vpop.permute.xlu0 %2463
        %2465 = vrot.lane.b32.xlu0 %v2454, 106
        %v2466 = vpop.permute.xlu0 %2465
        %v2467 = vsel %vm1013, %v2460, %v2462
        %v2468 = vsel %vm1013, %v2462, %v2464
        %v2469 = vsel %vm1013, %v2464, %v2466
        %v2473 = vadd.f32 %v2296, %v2467
        %v2474 = vadd.f32 %v2297, %v2468
        %v2475 = vadd.f32 %v2298, %v2469
        %v2476 = vld [vmem:[%s712] ss:$4 sm:$0xf]
        %2477 = vset.pattern.permute.xlu0 23
        %2478 = vperm.xlu0 %2477, %v1840
        %v2479 = vpop.permute.xlu0 %2478
        %v2482 = vlaneseq
        %v2483 = vshrl.u32 %v2482, 7
        %v2484 = vsub.s32 0, %v2483
        %v2485 = vrot.slane %v2476, %v2484
        %v2486 = vlaneseq
        %v2487 = vshrl.u32 %v2486, 7
        %v2488 = vsub.s32 1, %v2487
        %v2489 = vrot.slane %v2476, %v2488
        %v2490 = vlaneseq
        %v2491 = vshrl.u32 %v2490, 7
        %v2492 = vsub.s32 2, %v2491
        %v2493 = vrot.slane %v2476, %v2492
        %v2494 = vlaneseq
        %v2495 = vshrl.u32 %v2494, 7
        %v2496 = vsub.s32 3, %v2495
        %v2497 = vrot.slane %v2476, %v2496
        %v2502 = vmul.f32 %v2479, %v2485
        %v2503 = vmul.f32 %v2479, %v2489
        %v2504 = vmul.f32 %v2479, %v2493
        %v2505 = vmul.f32 %v2479, %v2497
        %2510 = vrot.lane.b32.xlu0 %v2502, 106
        %v2511 = vpop.permute.xlu0 %2510
        %2512 = vrot.lane.b32.xlu0 %v2503, 106
        %v2513 = vpop.permute.xlu0 %2512
        %2514 = vrot.lane.b32.xlu0 %v2504, 106
        %v2515 = vpop.permute.xlu0 %2514
        %2516 = vrot.lane.b32.xlu0 %v2505, 106
        %v2517 = vpop.permute.xlu0 %2516
        %v2518 = vsel %vm1013, %v2511, %v2513
        %v2519 = vsel %vm1013, %v2513, %v2515
        %v2520 = vsel %vm1013, %v2515, %v2517
        %v2524 = vadd.f32 %v2320, %v2518
        %v2525 = vadd.f32 %v2321, %v2519
        %v2526 = vadd.f32 %v2322, %v2520
        %2527 = vset.pattern.permute.xlu0 24
        %2528 = vperm.xlu0 %2527, %v1840
        %v2529 = vpop.permute.xlu0 %2528
        %v2531 = vmul.f32 %v2529, %v2332
        %v2532 = vmul.f32 %v2529, %v2336
        %v2533 = vmul.f32 %v2529, %v2340
        %v2534 = vmul.f32 %v2529, %v2344
        %2539 = vrot.lane.b32.xlu0 %v2531, 105
        %v2540 = vpop.permute.xlu0 %2539
        %2541 = vrot.lane.b32.xlu0 %v2532, 105
        %v2542 = vpop.permute.xlu0 %2541
        %2543 = vrot.lane.b32.xlu0 %v2533, 105
        %v2544 = vpop.permute.xlu0 %2543
        %2545 = vrot.lane.b32.xlu0 %v2534, 105
        %v2546 = vpop.permute.xlu0 %2545
        %v2547 = vsel %vm1138, %v2540, %v2542
        %v2548 = vsel %vm1138, %v2542, %v2544
        %v2549 = vsel %vm1138, %v2544, %v2546
        %v2553 = vadd.f32 %v2371, %v2547
        %v2554 = vadd.f32 %v2372, %v2548
        %v2555 = vadd.f32 %v2373, %v2549
        %2556 = vset.pattern.permute.xlu0 25
        %2557 = vperm.xlu0 %2556, %v1840
        %v2558 = vpop.permute.xlu0 %2557
        %v2560 = vmul.f32 %v2558, %v2383
        %v2561 = vmul.f32 %v2558, %v2387
        %v2562 = vmul.f32 %v2558, %v2391
        %v2563 = vmul.f32 %v2558, %v2395
        %2568 = vrot.lane.b32.xlu0 %v2560, 105
        %v2569 = vpop.permute.xlu0 %2568
        %2570 = vrot.lane.b32.xlu0 %v2561, 105
        %v2571 = vpop.permute.xlu0 %2570
        %2572 = vrot.lane.b32.xlu0 %v2562, 105
        %v2573 = vpop.permute.xlu0 %2572
        %2574 = vrot.lane.b32.xlu0 %v2563, 105
        %v2575 = vpop.permute.xlu0 %2574
        %v2576 = vsel %vm1138, %v2569, %v2571
        %v2577 = vsel %vm1138, %v2571, %v2573
        %v2578 = vsel %vm1138, %v2573, %v2575
        %v2582 = vadd.f32 %v2422, %v2576
        %v2583 = vadd.f32 %v2423, %v2577
        %v2584 = vadd.f32 %v2424, %v2578
        %2585 = vset.pattern.permute.xlu0 26
        %2586 = vperm.xlu0 %2585, %v1840
        %v2587 = vpop.permute.xlu0 %2586
        %v2589 = vmul.f32 %v2587, %v2434
        %v2590 = vmul.f32 %v2587, %v2438
        %v2591 = vmul.f32 %v2587, %v2442
        %v2592 = vmul.f32 %v2587, %v2446
        %2597 = vrot.lane.b32.xlu0 %v2589, 105
        %v2598 = vpop.permute.xlu0 %2597
        %2599 = vrot.lane.b32.xlu0 %v2590, 105
        %v2600 = vpop.permute.xlu0 %2599
        %2601 = vrot.lane.b32.xlu0 %v2591, 105
        %v2602 = vpop.permute.xlu0 %2601
        %2603 = vrot.lane.b32.xlu0 %v2592, 105
        %v2604 = vpop.permute.xlu0 %2603
        %v2605 = vsel %vm1138, %v2598, %v2600
        %v2606 = vsel %vm1138, %v2600, %v2602
        %v2607 = vsel %vm1138, %v2602, %v2604
        %v2611 = vadd.f32 %v2473, %v2605
        %v2612 = vadd.f32 %v2474, %v2606
        %v2613 = vadd.f32 %v2475, %v2607
        %2614 = vset.pattern.permute.xlu0 27
        %2615 = vperm.xlu0 %2614, %v1840
        %v2616 = vpop.permute.xlu0 %2615
        %v2618 = vmul.f32 %v2616, %v2485
        %v2619 = vmul.f32 %v2616, %v2489
        %v2620 = vmul.f32 %v2616, %v2493
        %v2621 = vmul.f32 %v2616, %v2497
        %2626 = vrot.lane.b32.xlu0 %v2618, 105
        %v2627 = vpop.permute.xlu0 %2626
        %2628 = vrot.lane.b32.xlu0 %v2619, 105
        %v2629 = vpop.permute.xlu0 %2628
        %2630 = vrot.lane.b32.xlu0 %v2620, 105
        %v2631 = vpop.permute.xlu0 %2630
        %2632 = vrot.lane.b32.xlu0 %v2621, 105
        %v2633 = vpop.permute.xlu0 %2632
        %v2634 = vsel %vm1138, %v2627, %v2629
        %v2635 = vsel %vm1138, %v2629, %v2631
        %v2636 = vsel %vm1138, %v2631, %v2633
        %v2640 = vadd.f32 %v2524, %v2634
        %v2641 = vadd.f32 %v2525, %v2635
        %v2642 = vadd.f32 %v2526, %v2636
        %2643 = vset.pattern.permute.xlu0 28
        %2644 = vperm.xlu0 %2643, %v1840
        %v2645 = vpop.permute.xlu0 %2644
        %v2647 = vmul.f32 %v2645, %v2332
        %v2648 = vmul.f32 %v2645, %v2336
        %v2649 = vmul.f32 %v2645, %v2340
        %v2650 = vmul.f32 %v2645, %v2344
        %2655 = vrot.lane.b32.xlu0 %v2647, 104
        %v2656 = vpop.permute.xlu0 %2655
        %2657 = vrot.lane.b32.xlu0 %v2648, 104
        %v2658 = vpop.permute.xlu0 %2657
        %2659 = vrot.lane.b32.xlu0 %v2649, 104
        %v2660 = vpop.permute.xlu0 %2659
        %2661 = vrot.lane.b32.xlu0 %v2650, 104
        %v2662 = vpop.permute.xlu0 %2661
        %v2663 = vsel %vm1263, %v2656, %v2658
        %v2664 = vsel %vm1263, %v2658, %v2660
        %v2665 = vsel %vm1263, %v2660, %v2662
        %v2669 = vadd.f32 %v2553, %v2663
        %v2670 = vadd.f32 %v2554, %v2664
        %v2671 = vadd.f32 %v2555, %v2665
        %2672 = vset.pattern.permute.xlu0 29
        %2673 = vperm.xlu0 %2672, %v1840
        %v2674 = vpop.permute.xlu0 %2673
        %v2676 = vmul.f32 %v2674, %v2383
        %v2677 = vmul.f32 %v2674, %v2387
        %v2678 = vmul.f32 %v2674, %v2391
        %v2679 = vmul.f32 %v2674, %v2395
        %2684 = vrot.lane.b32.xlu0 %v2676, 104
        %v2685 = vpop.permute.xlu0 %2684
        %2686 = vrot.lane.b32.xlu0 %v2677, 104
        %v2687 = vpop.permute.xlu0 %2686
        %2688 = vrot.lane.b32.xlu0 %v2678, 104
        %v2689 = vpop.permute.xlu0 %2688
        %2690 = vrot.lane.b32.xlu0 %v2679, 104
        %v2691 = vpop.permute.xlu0 %2690
        %v2692 = vsel %vm1263, %v2685, %v2687
        %v2693 = vsel %vm1263, %v2687, %v2689
        %v2694 = vsel %vm1263, %v2689, %v2691
        %v2698 = vadd.f32 %v2582, %v2692
        %v2699 = vadd.f32 %v2583, %v2693
        %v2700 = vadd.f32 %v2584, %v2694
        %2701 = vset.pattern.permute.xlu0 30
        %2702 = vperm.xlu0 %2701, %v1840
        %v2703 = vpop.permute.xlu0 %2702
        %v2705 = vmul.f32 %v2703, %v2434
        %v2706 = vmul.f32 %v2703, %v2438
        %v2707 = vmul.f32 %v2703, %v2442
        %v2708 = vmul.f32 %v2703, %v2446
        %2713 = vrot.lane.b32.xlu0 %v2705, 104
        %v2714 = vpop.permute.xlu0 %2713
        %2715 = vrot.lane.b32.xlu0 %v2706, 104
        %v2716 = vpop.permute.xlu0 %2715
        %2717 = vrot.lane.b32.xlu0 %v2707, 104
        %v2718 = vpop.permute.xlu0 %2717
        %2719 = vrot.lane.b32.xlu0 %v2708, 104
        %v2720 = vpop.permute.xlu0 %2719
        %v2721 = vsel %vm1263, %v2714, %v2716
        %v2722 = vsel %vm1263, %v2716, %v2718
        %v2723 = vsel %vm1263, %v2718, %v2720
        %v2727 = vadd.f32 %v2611, %v2721
        %v2728 = vadd.f32 %v2612, %v2722
        %v2729 = vadd.f32 %v2613, %v2723
        %2730 = vset.pattern.permute.xlu0 31
        %2731 = vperm.xlu0 %2730, %v1840
        %v2732 = vpop.permute.xlu0 %2731
        %v2734 = vmul.f32 %v2732, %v2485
        %v2735 = vmul.f32 %v2732, %v2489
        %v2736 = vmul.f32 %v2732, %v2493
        %v2737 = vmul.f32 %v2732, %v2497
        %2742 = vrot.lane.b32.xlu0 %v2734, 104
        %v2743 = vpop.permute.xlu0 %2742
        %2744 = vrot.lane.b32.xlu0 %v2735, 104
        %v2745 = vpop.permute.xlu0 %2744
        %2746 = vrot.lane.b32.xlu0 %v2736, 104
        %v2747 = vpop.permute.xlu0 %2746
        %2748 = vrot.lane.b32.xlu0 %v2737, 104
        %v2749 = vpop.permute.xlu0 %2748
        %v2750 = vsel %vm1263, %v2743, %v2745
        %v2751 = vsel %vm1263, %v2745, %v2747
        %v2752 = vsel %vm1263, %v2747, %v2749
        %v2756 = vadd.f32 %v2640, %v2750
        %v2757 = vadd.f32 %v2641, %v2751
        %v2758 = vadd.f32 %v2642, %v2752
        %2759 = vset.pattern.permute.xlu0 32
        %2760 = vperm.xlu0 %2759, %v1840
        %v2761 = vpop.permute.xlu0 %2760
        %v2763 = vmul.f32 %v2761, %v2332
        %v2764 = vmul.f32 %v2761, %v2336
        %v2765 = vmul.f32 %v2761, %v2340
        %v2766 = vmul.f32 %v2761, %v2344
        %2771 = vrot.lane.b32.xlu0 %v2763, 103
        %v2772 = vpop.permute.xlu0 %2771
        %2773 = vrot.lane.b32.xlu0 %v2764, 103
        %v2774 = vpop.permute.xlu0 %2773
        %2775 = vrot.lane.b32.xlu0 %v2765, 103
        %v2776 = vpop.permute.xlu0 %2775
        %2777 = vrot.lane.b32.xlu0 %v2766, 103
        %v2778 = vpop.permute.xlu0 %2777
        %vm2779 = vcmask 842752
        %v2780 = vsel %vm2779, %v2772, %v2774
        %v2781 = vsel %vm2779, %v2774, %v2776
        %v2782 = vsel %vm2779, %v2776, %v2778
        %v2786 = vadd.f32 %v2669, %v2780
        %v2787 = vadd.f32 %v2670, %v2781
        %v2788 = vadd.f32 %v2671, %v2782
        %2789 = vset.pattern.permute.xlu0 33
        %2790 = vperm.xlu0 %2789, %v1840
        %v2791 = vpop.permute.xlu0 %2790
        %v2793 = vmul.f32 %v2791, %v2383
        %v2794 = vmul.f32 %v2791, %v2387
        %v2795 = vmul.f32 %v2791, %v2391
        %v2796 = vmul.f32 %v2791, %v2395
        %2801 = vrot.lane.b32.xlu0 %v2793, 103
        %v2802 = vpop.permute.xlu0 %2801
        %2803 = vrot.lane.b32.xlu0 %v2794, 103
        %v2804 = vpop.permute.xlu0 %2803
        %2805 = vrot.lane.b32.xlu0 %v2795, 103
        %v2806 = vpop.permute.xlu0 %2805
        %2807 = vrot.lane.b32.xlu0 %v2796, 103
        %v2808 = vpop.permute.xlu0 %2807
        %v2809 = vsel %vm2779, %v2802, %v2804
        %v2810 = vsel %vm2779, %v2804, %v2806
        %v2811 = vsel %vm2779, %v2806, %v2808
        %v2815 = vadd.f32 %v2698, %v2809
        %v2816 = vadd.f32 %v2699, %v2810
        %v2817 = vadd.f32 %v2700, %v2811
        %2818 = vset.pattern.permute.xlu0 34
        %2819 = vperm.xlu0 %2818, %v1840
        %v2820 = vpop.permute.xlu0 %2819
        %v2822 = vmul.f32 %v2820, %v2434
        %v2823 = vmul.f32 %v2820, %v2438
        %v2824 = vmul.f32 %v2820, %v2442
        %v2825 = vmul.f32 %v2820, %v2446
        %2830 = vrot.lane.b32.xlu0 %v2822, 103
        %v2831 = vpop.permute.xlu0 %2830
        %2832 = vrot.lane.b32.xlu0 %v2823, 103
        %v2833 = vpop.permute.xlu0 %2832
        %2834 = vrot.lane.b32.xlu0 %v2824, 103
        %v2835 = vpop.permute.xlu0 %2834
        %2836 = vrot.lane.b32.xlu0 %v2825, 103
        %v2837 = vpop.permute.xlu0 %2836
        %v2838 = vsel %vm2779, %v2831, %v2833
        %v2839 = vsel %vm2779, %v2833, %v2835
        %v2840 = vsel %vm2779, %v2835, %v2837
        %v2844 = vadd.f32 %v2727, %v2838
        %v2845 = vadd.f32 %v2728, %v2839
        %v2846 = vadd.f32 %v2729, %v2840
        %2847 = vset.pattern.permute.xlu0 35
        %2848 = vperm.xlu0 %2847, %v1840
        %v2849 = vpop.permute.xlu0 %2848
        %v2851 = vmul.f32 %v2849, %v2485
        %v2852 = vmul.f32 %v2849, %v2489
        %v2853 = vmul.f32 %v2849, %v2493
        %v2854 = vmul.f32 %v2849, %v2497
        %2859 = vrot.lane.b32.xlu0 %v2851, 103
        %v2860 = vpop.permute.xlu0 %2859
        %2861 = vrot.lane.b32.xlu0 %v2852, 103
        %v2862 = vpop.permute.xlu0 %2861
        %2863 = vrot.lane.b32.xlu0 %v2853, 103
        %v2864 = vpop.permute.xlu0 %2863
        %2865 = vrot.lane.b32.xlu0 %v2854, 103
        %v2866 = vpop.permute.xlu0 %2865
        %v2867 = vsel %vm2779, %v2860, %v2862
        %v2868 = vsel %vm2779, %v2862, %v2864
        %v2869 = vsel %vm2779, %v2864, %v2866
        %v2873 = vadd.f32 %v2756, %v2867
        %v2874 = vadd.f32 %v2757, %v2868
        %v2875 = vadd.f32 %v2758, %v2869
        %2876 = vset.pattern.permute.xlu0 36
        %2877 = vperm.xlu0 %2876, %v1840
        %v2878 = vpop.permute.xlu0 %2877
        %v2880 = vmul.f32 %v2878, %v2332
        %v2881 = vmul.f32 %v2878, %v2336
        %v2882 = vmul.f32 %v2878, %v2340
        %v2883 = vmul.f32 %v2878, %v2344
        %2888 = vrot.lane.b32.xlu0 %v2880, 102
        %v2889 = vpop.permute.xlu0 %2888
        %2890 = vrot.lane.b32.xlu0 %v2881, 102
        %v2891 = vpop.permute.xlu0 %2890
        %2892 = vrot.lane.b32.xlu0 %v2882, 102
        %v2893 = vpop.permute.xlu0 %2892
        %2894 = vrot.lane.b32.xlu0 %v2883, 102
        %v2895 = vpop.permute.xlu0 %2894
        %vm2896 = vcmask 834560
        %v2897 = vsel %vm2896, %v2889, %v2891
        %v2898 = vsel %vm2896, %v2891, %v2893
        %v2899 = vsel %vm2896, %v2893, %v2895
        %v2903 = vadd.f32 %v2786, %v2897
        %v2904 = vadd.f32 %v2787, %v2898
        %v2905 = vadd.f32 %v2788, %v2899
        %2906 = vset.pattern.permute.xlu0 37
        %2907 = vperm.xlu0 %2906, %v1840
        %v2908 = vpop.permute.xlu0 %2907
        %v2910 = vmul.f32 %v2908, %v2383
        %v2911 = vmul.f32 %v2908, %v2387
        %v2912 = vmul.f32 %v2908, %v2391
        %v2913 = vmul.f32 %v2908, %v2395
        %2918 = vrot.lane.b32.xlu0 %v2910, 102
        %v2919 = vpop.permute.xlu0 %2918
        %2920 = vrot.lane.b32.xlu0 %v2911, 102
        %v2921 = vpop.permute.xlu0 %2920
        %2922 = vrot.lane.b32.xlu0 %v2912, 102
        %v2923 = vpop.permute.xlu0 %2922
        %2924 = vrot.lane.b32.xlu0 %v2913, 102
        %v2925 = vpop.permute.xlu0 %2924
        %v2926 = vsel %vm2896, %v2919, %v2921
        %v2927 = vsel %vm2896, %v2921, %v2923
        %v2928 = vsel %vm2896, %v2923, %v2925
        %v2932 = vadd.f32 %v2815, %v2926
        %v2933 = vadd.f32 %v2816, %v2927
        %v2934 = vadd.f32 %v2817, %v2928
        %2935 = vset.pattern.permute.xlu0 38
        %2936 = vperm.xlu0 %2935, %v1840
        %v2937 = vpop.permute.xlu0 %2936
        %v2939 = vmul.f32 %v2937, %v2434
        %v2940 = vmul.f32 %v2937, %v2438
        %v2941 = vmul.f32 %v2937, %v2442
        %v2942 = vmul.f32 %v2937, %v2446
        %2947 = vrot.lane.b32.xlu0 %v2939, 102
        %v2948 = vpop.permute.xlu0 %2947
        %2949 = vrot.lane.b32.xlu0 %v2940, 102
        %v2950 = vpop.permute.xlu0 %2949
        %2951 = vrot.lane.b32.xlu0 %v2941, 102
        %v2952 = vpop.permute.xlu0 %2951
        %2953 = vrot.lane.b32.xlu0 %v2942, 102
        %v2954 = vpop.permute.xlu0 %2953
        %v2955 = vsel %vm2896, %v2948, %v2950
        %v2956 = vsel %vm2896, %v2950, %v2952
        %v2957 = vsel %vm2896, %v2952, %v2954
        %v2961 = vadd.f32 %v2844, %v2955
        %v2962 = vadd.f32 %v2845, %v2956
        %v2963 = vadd.f32 %v2846, %v2957
        %2964 = vset.pattern.permute.xlu0 39
        %2965 = vperm.xlu0 %2964, %v1840
        %v2966 = vpop.permute.xlu0 %2965
        %v2968 = vmul.f32 %v2966, %v2485
        %v2969 = vmul.f32 %v2966, %v2489
        %v2970 = vmul.f32 %v2966, %v2493
        %v2971 = vmul.f32 %v2966, %v2497
        %2976 = vrot.lane.b32.xlu0 %v2968, 102
        %v2977 = vpop.permute.xlu0 %2976
        %2978 = vrot.lane.b32.xlu0 %v2969, 102
        %v2979 = vpop.permute.xlu0 %2978
        %2980 = vrot.lane.b32.xlu0 %v2970, 102
        %v2981 = vpop.permute.xlu0 %2980
        %2982 = vrot.lane.b32.xlu0 %v2971, 102
        %v2983 = vpop.permute.xlu0 %2982
        %v2984 = vsel %vm2896, %v2977, %v2979
        %v2985 = vsel %vm2896, %v2979, %v2981
        %v2986 = vsel %vm2896, %v2981, %v2983
        %v2990 = vadd.f32 %v2873, %v2984
        %v2991 = vadd.f32 %v2874, %v2985
        %v2992 = vadd.f32 %v2875, %v2986
        %2993 = vset.pattern.permute.xlu0 40
        %2994 = vperm.xlu0 %2993, %v1840
        %v2995 = vpop.permute.xlu0 %2994
        %v2997 = vmul.f32 %v2995, %v2332
        %v2998 = vmul.f32 %v2995, %v2336
        %v2999 = vmul.f32 %v2995, %v2340
        %v3000 = vmul.f32 %v2995, %v2344
        %3005 = vrot.lane.b32.xlu0 %v2997, 84
        %v3006 = vpop.permute.xlu0 %3005
        %3007 = vrot.lane.b32.xlu0 %v2998, 84
        %v3008 = vpop.permute.xlu0 %3007
        %3009 = vrot.lane.b32.xlu0 %v2999, 84
        %v3010 = vpop.permute.xlu0 %3009
        %3011 = vrot.lane.b32.xlu0 %v3000, 84
        %v3012 = vpop.permute.xlu0 %3011
        %v3013 = vsel %vm1388, %v3006, %v3008
        %v3014 = vsel %vm1388, %v3008, %v3010
        %v3015 = vsel %vm1388, %v3010, %v3012
        %v3019 = vadd.f32 %v2903, %v3013
        %v3020 = vadd.f32 %v2904, %v3014
        %v3021 = vadd.f32 %v2905, %v3015
        %3022 = vset.pattern.permute.xlu0 41
        %3023 = vperm.xlu0 %3022, %v1840
        %v3024 = vpop.permute.xlu0 %3023
        %v3026 = vmul.f32 %v3024, %v2383
        %v3027 = vmul.f32 %v3024, %v2387
        %v3028 = vmul.f32 %v3024, %v2391
        %v3029 = vmul.f32 %v3024, %v2395
        %3034 = vrot.lane.b32.xlu0 %v3026, 84
        %v3035 = vpop.permute.xlu0 %3034
        %3036 = vrot.lane.b32.xlu0 %v3027, 84
        %v3037 = vpop.permute.xlu0 %3036
        %3038 = vrot.lane.b32.xlu0 %v3028, 84
        %v3039 = vpop.permute.xlu0 %3038
        %3040 = vrot.lane.b32.xlu0 %v3029, 84
        %v3041 = vpop.permute.xlu0 %3040
        %v3042 = vsel %vm1388, %v3035, %v3037
        %v3043 = vsel %vm1388, %v3037, %v3039
        %v3044 = vsel %vm1388, %v3039, %v3041
        %v3048 = vadd.f32 %v2932, %v3042
        %v3049 = vadd.f32 %v2933, %v3043
        %v3050 = vadd.f32 %v2934, %v3044
        %3051 = vset.pattern.permute.xlu0 42
        %3052 = vperm.xlu0 %3051, %v1840
        %v3053 = vpop.permute.xlu0 %3052
        %v3055 = vmul.f32 %v3053, %v2434
        %v3056 = vmul.f32 %v3053, %v2438
        %v3057 = vmul.f32 %v3053, %v2442
        %v3058 = vmul.f32 %v3053, %v2446
        %3063 = vrot.lane.b32.xlu0 %v3055, 84
        %v3064 = vpop.permute.xlu0 %3063
        %3065 = vrot.lane.b32.xlu0 %v3056, 84
        %v3066 = vpop.permute.xlu0 %3065
        %3067 = vrot.lane.b32.xlu0 %v3057, 84
        %v3068 = vpop.permute.xlu0 %3067
        %3069 = vrot.lane.b32.xlu0 %v3058, 84
        %v3070 = vpop.permute.xlu0 %3069
        %v3071 = vsel %vm1388, %v3064, %v3066
        %v3072 = vsel %vm1388, %v3066, %v3068
        %v3073 = vsel %vm1388, %v3068, %v3070
        %v3077 = vadd.f32 %v2961, %v3071
        %v3078 = vadd.f32 %v2962, %v3072
        %v3079 = vadd.f32 %v2963, %v3073
        %3080 = vset.pattern.permute.xlu0 43
        %3081 = vperm.xlu0 %3080, %v1840
        %v3082 = vpop.permute.xlu0 %3081
        %v3084 = vmul.f32 %v3082, %v2485
        %v3085 = vmul.f32 %v3082, %v2489
        %v3086 = vmul.f32 %v3082, %v2493
        %v3087 = vmul.f32 %v3082, %v2497
        %3092 = vrot.lane.b32.xlu0 %v3084, 84
        %v3093 = vpop.permute.xlu0 %3092
        %3094 = vrot.lane.b32.xlu0 %v3085, 84
        %v3095 = vpop.permute.xlu0 %3094
        %3096 = vrot.lane.b32.xlu0 %v3086, 84
        %v3097 = vpop.permute.xlu0 %3096
        %3098 = vrot.lane.b32.xlu0 %v3087, 84
        %v3099 = vpop.permute.xlu0 %3098
        %v3100 = vsel %vm1388, %v3093, %v3095
        %v3101 = vsel %vm1388, %v3095, %v3097
        %v3102 = vsel %vm1388, %v3097, %v3099
        %v3106 = vadd.f32 %v2990, %v3100
        %v3107 = vadd.f32 %v2991, %v3101
        %v3108 = vadd.f32 %v2992, %v3102
        %3109 = vset.pattern.permute.xlu0 44
        %3110 = vperm.xlu0 %3109, %v1840
        %v3111 = vpop.permute.xlu0 %3110
        %v3113 = vmul.f32 %v3111, %v2332
        %v3114 = vmul.f32 %v3111, %v2336
        %v3115 = vmul.f32 %v3111, %v2340
        %v3116 = vmul.f32 %v3111, %v2344
        %3121 = vrot.lane.b32.xlu0 %v3113, 83
        %v3122 = vpop.permute.xlu0 %3121
        %3123 = vrot.lane.b32.xlu0 %v3114, 83
        %v3124 = vpop.permute.xlu0 %3123
        %3125 = vrot.lane.b32.xlu0 %v3115, 83
        %v3126 = vpop.permute.xlu0 %3125
        %3127 = vrot.lane.b32.xlu0 %v3116, 83
        %v3128 = vpop.permute.xlu0 %3127
        %v3129 = vsel %vm1513, %v3122, %v3124
        %v3130 = vsel %vm1513, %v3124, %v3126
        %v3131 = vsel %vm1513, %v3126, %v3128
        %v3135 = vadd.f32 %v3019, %v3129
        %v3136 = vadd.f32 %v3020, %v3130
        %v3137 = vadd.f32 %v3021, %v3131
        %3138 = vset.pattern.permute.xlu0 45
        %3139 = vperm.xlu0 %3138, %v1840
        %v3140 = vpop.permute.xlu0 %3139
        %v3142 = vmul.f32 %v3140, %v2383
        %v3143 = vmul.f32 %v3140, %v2387
        %v3144 = vmul.f32 %v3140, %v2391
        %v3145 = vmul.f32 %v3140, %v2395
        %3150 = vrot.lane.b32.xlu0 %v3142, 83
        %v3151 = vpop.permute.xlu0 %3150
        %3152 = vrot.lane.b32.xlu0 %v3143, 83
        %v3153 = vpop.permute.xlu0 %3152
        %3154 = vrot.lane.b32.xlu0 %v3144, 83
        %v3155 = vpop.permute.xlu0 %3154
        %3156 = vrot.lane.b32.xlu0 %v3145, 83
        %v3157 = vpop.permute.xlu0 %3156
        %v3158 = vsel %vm1513, %v3151, %v3153
        %v3159 = vsel %vm1513, %v3153, %v3155
        %v3160 = vsel %vm1513, %v3155, %v3157
        %v3164 = vadd.f32 %v3048, %v3158
        %v3165 = vadd.f32 %v3049, %v3159
        %v3166 = vadd.f32 %v3050, %v3160
        %3167 = vset.pattern.permute.xlu0 46
        %3168 = vperm.xlu0 %3167, %v1840
        %v3169 = vpop.permute.xlu0 %3168
        %v3171 = vmul.f32 %v3169, %v2434
        %v3172 = vmul.f32 %v3169, %v2438
        %v3173 = vmul.f32 %v3169, %v2442
        %v3174 = vmul.f32 %v3169, %v2446
        %3179 = vrot.lane.b32.xlu0 %v3171, 83
        %v3180 = vpop.permute.xlu0 %3179
        %3181 = vrot.lane.b32.xlu0 %v3172, 83
        %v3182 = vpop.permute.xlu0 %3181
        %3183 = vrot.lane.b32.xlu0 %v3173, 83
        %v3184 = vpop.permute.xlu0 %3183
        %3185 = vrot.lane.b32.xlu0 %v3174, 83
        %v3186 = vpop.permute.xlu0 %3185
        %v3187 = vsel %vm1513, %v3180, %v3182
        %v3188 = vsel %vm1513, %v3182, %v3184
        %v3189 = vsel %vm1513, %v3184, %v3186
        %v3193 = vadd.f32 %v3077, %v3187
        %v3194 = vadd.f32 %v3078, %v3188
        %v3195 = vadd.f32 %v3079, %v3189
        %3196 = vset.pattern.permute.xlu0 47
        %3197 = vperm.xlu0 %3196, %v1840
        %v3198 = vpop.permute.xlu0 %3197
        %v3200 = vmul.f32 %v3198, %v2485
        %v3201 = vmul.f32 %v3198, %v2489
        %v3202 = vmul.f32 %v3198, %v2493
        %v3203 = vmul.f32 %v3198, %v2497
        %3208 = vrot.lane.b32.xlu0 %v3200, 83
        %v3209 = vpop.permute.xlu0 %3208
        %3210 = vrot.lane.b32.xlu0 %v3201, 83
        %v3211 = vpop.permute.xlu0 %3210
        %3212 = vrot.lane.b32.xlu0 %v3202, 83
        %v3213 = vpop.permute.xlu0 %3212
        %3214 = vrot.lane.b32.xlu0 %v3203, 83
        %v3215 = vpop.permute.xlu0 %3214
        %v3216 = vsel %vm1513, %v3209, %v3211
        %v3217 = vsel %vm1513, %v3211, %v3213
        %v3218 = vsel %vm1513, %v3213, %v3215
        %v3222 = vadd.f32 %v3106, %v3216
        %v3223 = vadd.f32 %v3107, %v3217
        %v3224 = vadd.f32 %v3108, %v3218
        %3225 = vset.pattern.permute.xlu0 48
        %3226 = vperm.xlu0 %3225, %v1840
        %v3227 = vpop.permute.xlu0 %3226
        %v3229 = vmul.f32 %v3227, %v2332
        %v3230 = vmul.f32 %v3227, %v2336
        %v3231 = vmul.f32 %v3227, %v2340
        %v3232 = vmul.f32 %v3227, %v2344
        %3237 = vrot.lane.b32.xlu0 %v3229, 82
        %v3238 = vpop.permute.xlu0 %3237
        %3239 = vrot.lane.b32.xlu0 %v3230, 82
        %v3240 = vpop.permute.xlu0 %3239
        %3241 = vrot.lane.b32.xlu0 %v3231, 82
        %v3242 = vpop.permute.xlu0 %3241
        %3243 = vrot.lane.b32.xlu0 %v3232, 82
        %v3244 = vpop.permute.xlu0 %3243
        %v3245 = vsel %vm1638, %v3238, %v3240
        %v3246 = vsel %vm1638, %v3240, %v3242
        %v3247 = vsel %vm1638, %v3242, %v3244
        %v3251 = vadd.f32 %v3135, %v3245
        %v3252 = vadd.f32 %v3136, %v3246
        %v3253 = vadd.f32 %v3137, %v3247
        %3254 = vset.pattern.permute.xlu0 49
        %3255 = vperm.xlu0 %3254, %v1840
        %v3256 = vpop.permute.xlu0 %3255
        %v3258 = vmul.f32 %v3256, %v2383
        %v3259 = vmul.f32 %v3256, %v2387
        %v3260 = vmul.f32 %v3256, %v2391
        %v3261 = vmul.f32 %v3256, %v2395
        %3266 = vrot.lane.b32.xlu0 %v3258, 82
        %v3267 = vpop.permute.xlu0 %3266
        %3268 = vrot.lane.b32.xlu0 %v3259, 82
        %v3269 = vpop.permute.xlu0 %3268
        %3270 = vrot.lane.b32.xlu0 %v3260, 82
        %v3271 = vpop.permute.xlu0 %3270
        %3272 = vrot.lane.b32.xlu0 %v3261, 82
        %v3273 = vpop.permute.xlu0 %3272
        %v3274 = vsel %vm1638, %v3267, %v3269
        %v3275 = vsel %vm1638, %v3269, %v3271
        %v3276 = vsel %vm1638, %v3271, %v3273
        %v3280 = vadd.f32 %v3164, %v3274
        %v3281 = vadd.f32 %v3165, %v3275
        %v3282 = vadd.f32 %v3166, %v3276
        %3283 = vset.pattern.permute.xlu0 50
        %3284 = vperm.xlu0 %3283, %v1840
        %v3285 = vpop.permute.xlu0 %3284
        %v3287 = vmul.f32 %v3285, %v2434
        %v3288 = vmul.f32 %v3285, %v2438
        %v3289 = vmul.f32 %v3285, %v2442
        %v3290 = vmul.f32 %v3285, %v2446
        %3295 = vrot.lane.b32.xlu0 %v3287, 82
        %v3296 = vpop.permute.xlu0 %3295
        %3297 = vrot.lane.b32.xlu0 %v3288, 82
        %v3298 = vpop.permute.xlu0 %3297
        %3299 = vrot.lane.b32.xlu0 %v3289, 82
        %v3300 = vpop.permute.xlu0 %3299
        %3301 = vrot.lane.b32.xlu0 %v3290, 82
        %v3302 = vpop.permute.xlu0 %3301
        %v3303 = vsel %vm1638, %v3296, %v3298
        %v3304 = vsel %vm1638, %v3298, %v3300
        %v3305 = vsel %vm1638, %v3300, %v3302
        %v3309 = vadd.f32 %v3193, %v3303
        %v3310 = vadd.f32 %v3194, %v3304
        %v3311 = vadd.f32 %v3195, %v3305
        %3312 = vset.pattern.permute.xlu0 51
        %3313 = vperm.xlu0 %3312, %v1840
        %v3314 = vpop.permute.xlu0 %3313
        %v3316 = vmul.f32 %v3314, %v2485
        %v3317 = vmul.f32 %v3314, %v2489
        %v3318 = vmul.f32 %v3314, %v2493
        %v3319 = vmul.f32 %v3314, %v2497
        %3324 = vrot.lane.b32.xlu0 %v3316, 82
        %v3325 = vpop.permute.xlu0 %3324
        %3326 = vrot.lane.b32.xlu0 %v3317, 82
        %v3327 = vpop.permute.xlu0 %3326
        %3328 = vrot.lane.b32.xlu0 %v3318, 82
        %v3329 = vpop.permute.xlu0 %3328
        %3330 = vrot.lane.b32.xlu0 %v3319, 82
        %v3331 = vpop.permute.xlu0 %3330
        %v3332 = vsel %vm1638, %v3325, %v3327
        %v3333 = vsel %vm1638, %v3327, %v3329
        %v3334 = vsel %vm1638, %v3329, %v3331
        %v3338 = vadd.f32 %v3222, %v3332
        %v3339 = vadd.f32 %v3223, %v3333
        %v3340 = vadd.f32 %v3224, %v3334
        %3341 = vset.pattern.permute.xlu0 52
        %3342 = vperm.xlu0 %3341, %v1840
        %v3343 = vpop.permute.xlu0 %3342
        %v3345 = vmul.f32 %v3343, %v2332
        %v3346 = vmul.f32 %v3343, %v2336
        %v3347 = vmul.f32 %v3343, %v2340
        %v3348 = vmul.f32 %v3343, %v2344
        %3353 = vrot.lane.b32.xlu0 %v3345, 81
        %v3354 = vpop.permute.xlu0 %3353
        %3355 = vrot.lane.b32.xlu0 %v3346, 81
        %v3356 = vpop.permute.xlu0 %3355
        %3357 = vrot.lane.b32.xlu0 %v3347, 81
        %v3358 = vpop.permute.xlu0 %3357
        %3359 = vrot.lane.b32.xlu0 %v3348, 81
        %v3360 = vpop.permute.xlu0 %3359
        %vm3361 = vcmask 662528
        %v3362 = vsel %vm3361, %v3354, %v3356
        %v3363 = vsel %vm3361, %v3356, %v3358
        %v3364 = vsel %vm3361, %v3358, %v3360
        %v3368 = vadd.f32 %v3251, %v3362
        %v3369 = vadd.f32 %v3252, %v3363
        %v3370 = vadd.f32 %v3253, %v3364
        %3371 = vset.pattern.permute.xlu0 53
        %3372 = vperm.xlu0 %3371, %v1840
        %v3373 = vpop.permute.xlu0 %3372
        %v3375 = vmul.f32 %v3373, %v2383
        %v3376 = vmul.f32 %v3373, %v2387
        %v3377 = vmul.f32 %v3373, %v2391
        %v3378 = vmul.f32 %v3373, %v2395
        %3383 = vrot.lane.b32.xlu0 %v3375, 81
        %v3384 = vpop.permute.xlu0 %3383
        %3385 = vrot.lane.b32.xlu0 %v3376, 81
        %v3386 = vpop.permute.xlu0 %3385
        %3387 = vrot.lane.b32.xlu0 %v3377, 81
        %v3388 = vpop.permute.xlu0 %3387
        %3389 = vrot.lane.b32.xlu0 %v3378, 81
        %v3390 = vpop.permute.xlu0 %3389
        %v3391 = vsel %vm3361, %v3384, %v3386
        %v3392 = vsel %vm3361, %v3386, %v3388
        %v3393 = vsel %vm3361, %v3388, %v3390
        %v3397 = vadd.f32 %v3280, %v3391
        %v3398 = vadd.f32 %v3281, %v3392
        %v3399 = vadd.f32 %v3282, %v3393
        %3400 = vset.pattern.permute.xlu0 54
        %3401 = vperm.xlu0 %3400, %v1840
        %v3402 = vpop.permute.xlu0 %3401
        %v3404 = vmul.f32 %v3402, %v2434
        %v3405 = vmul.f32 %v3402, %v2438
        %v3406 = vmul.f32 %v3402, %v2442
        %v3407 = vmul.f32 %v3402, %v2446
        %3412 = vrot.lane.b32.xlu0 %v3404, 81
        %v3413 = vpop.permute.xlu0 %3412
        %3414 = vrot.lane.b32.xlu0 %v3405, 81
        %v3415 = vpop.permute.xlu0 %3414
        %3416 = vrot.lane.b32.xlu0 %v3406, 81
        %v3417 = vpop.permute.xlu0 %3416
        %3418 = vrot.lane.b32.xlu0 %v3407, 81
        %v3419 = vpop.permute.xlu0 %3418
        %v3420 = vsel %vm3361, %v3413, %v3415
        %v3421 = vsel %vm3361, %v3415, %v3417
        %v3422 = vsel %vm3361, %v3417, %v3419
        %v3426 = vadd.f32 %v3309, %v3420
        %v3427 = vadd.f32 %v3310, %v3421
        %v3428 = vadd.f32 %v3311, %v3422
        %3429 = vset.pattern.permute.xlu0 55
        %3430 = vperm.xlu0 %3429, %v1840
        %v3431 = vpop.permute.xlu0 %3430
        %v3433 = vmul.f32 %v3431, %v2485
        %v3434 = vmul.f32 %v3431, %v2489
        %v3435 = vmul.f32 %v3431, %v2493
        %v3436 = vmul.f32 %v3431, %v2497
        %3441 = vrot.lane.b32.xlu0 %v3433, 81
        %v3442 = vpop.permute.xlu0 %3441
        %3443 = vrot.lane.b32.xlu0 %v3434, 81
        %v3444 = vpop.permute.xlu0 %3443
        %3445 = vrot.lane.b32.xlu0 %v3435, 81
        %v3446 = vpop.permute.xlu0 %3445
        %3447 = vrot.lane.b32.xlu0 %v3436, 81
        %v3448 = vpop.permute.xlu0 %3447
        %v3449 = vsel %vm3361, %v3442, %v3444
        %v3450 = vsel %vm3361, %v3444, %v3446
        %v3451 = vsel %vm3361, %v3446, %v3448
        %v3455 = vadd.f32 %v3338, %v3449
        %v3456 = vadd.f32 %v3339, %v3450
        %v3457 = vadd.f32 %v3340, %v3451
        %3458 = vset.pattern.permute.xlu0 56
        %3459 = vperm.xlu0 %3458, %v1840
        %v3460 = vpop.permute.xlu0 %3459
        %v3462 = vmul.f32 %v3460, %v2332
        %v3463 = vmul.f32 %v3460, %v2336
        %v3464 = vmul.f32 %v3460, %v2340
        %v3465 = vmul.f32 %v3460, %v2344
        %3470 = vrot.lane.b32.xlu0 %v3462, 80
        %v3471 = vpop.permute.xlu0 %3470
        %3472 = vrot.lane.b32.xlu0 %v3463, 80
        %v3473 = vpop.permute.xlu0 %3472
        %3474 = vrot.lane.b32.xlu0 %v3464, 80
        %v3475 = vpop.permute.xlu0 %3474
        %3476 = vrot.lane.b32.xlu0 %v3465, 80
        %v3477 = vpop.permute.xlu0 %3476
        %vm3478 = vcmask 654336
        %v3479 = vsel %vm3478, %v3471, %v3473
        %v3480 = vsel %vm3478, %v3473, %v3475
        %v3481 = vsel %vm3478, %v3475, %v3477
        %v3485 = vadd.f32 %v3368, %v3479
        %v3486 = vadd.f32 %v3369, %v3480
        %v3487 = vadd.f32 %v3370, %v3481
        %3488 = vset.pattern.permute.xlu0 57
        %3489 = vperm.xlu0 %3488, %v1840
        %v3490 = vpop.permute.xlu0 %3489
        %v3492 = vmul.f32 %v3490, %v2383
        %v3493 = vmul.f32 %v3490, %v2387
        %v3494 = vmul.f32 %v3490, %v2391
        %v3495 = vmul.f32 %v3490, %v2395
        %3500 = vrot.lane.b32.xlu0 %v3492, 80
        %v3501 = vpop.permute.xlu0 %3500
        %3502 = vrot.lane.b32.xlu0 %v3493, 80
        %v3503 = vpop.permute.xlu0 %3502
        %3504 = vrot.lane.b32.xlu0 %v3494, 80
        %v3505 = vpop.permute.xlu0 %3504
        %3506 = vrot.lane.b32.xlu0 %v3495, 80
        %v3507 = vpop.permute.xlu0 %3506
        %v3508 = vsel %vm3478, %v3501, %v3503
        %v3509 = vsel %vm3478, %v3503, %v3505
        %v3510 = vsel %vm3478, %v3505, %v3507
        %v3514 = vadd.f32 %v3397, %v3508
        %v3515 = vadd.f32 %v3398, %v3509
        %v3516 = vadd.f32 %v3399, %v3510
        %3517 = vset.pattern.permute.xlu0 58
        %3518 = vperm.xlu0 %3517, %v1840
        %v3519 = vpop.permute.xlu0 %3518
        %v3521 = vmul.f32 %v3519, %v2434
        %v3522 = vmul.f32 %v3519, %v2438
        %v3523 = vmul.f32 %v3519, %v2442
        %v3524 = vmul.f32 %v3519, %v2446
        %3529 = vrot.lane.b32.xlu0 %v3521, 80
        %v3530 = vpop.permute.xlu0 %3529
        %3531 = vrot.lane.b32.xlu0 %v3522, 80
        %v3532 = vpop.permute.xlu0 %3531
        %3533 = vrot.lane.b32.xlu0 %v3523, 80
        %v3534 = vpop.permute.xlu0 %3533
        %3535 = vrot.lane.b32.xlu0 %v3524, 80
        %v3536 = vpop.permute.xlu0 %3535
        %v3537 = vsel %vm3478, %v3530, %v3532
        %v3538 = vsel %vm3478, %v3532, %v3534
        %v3539 = vsel %vm3478, %v3534, %v3536
        %v3543 = vadd.f32 %v3426, %v3537
        %v3544 = vadd.f32 %v3427, %v3538
        %v3545 = vadd.f32 %v3428, %v3539
        %3546 = vset.pattern.permute.xlu0 59
        %3547 = vperm.xlu0 %3546, %v1840
        %v3548 = vpop.permute.xlu0 %3547
        %v3550 = vmul.f32 %v3548, %v2485
        %v3551 = vmul.f32 %v3548, %v2489
        %v3552 = vmul.f32 %v3548, %v2493
        %v3553 = vmul.f32 %v3548, %v2497
        %3558 = vrot.lane.b32.xlu0 %v3550, 80
        %v3559 = vpop.permute.xlu0 %3558
        %3560 = vrot.lane.b32.xlu0 %v3551, 80
        %v3561 = vpop.permute.xlu0 %3560
        %3562 = vrot.lane.b32.xlu0 %v3552, 80
        %v3563 = vpop.permute.xlu0 %3562
        %3564 = vrot.lane.b32.xlu0 %v3553, 80
        %v3565 = vpop.permute.xlu0 %3564
        %v3566 = vsel %vm3478, %v3559, %v3561
        %v3567 = vsel %vm3478, %v3561, %v3563
        %v3568 = vsel %vm3478, %v3563, %v3565
        %v3572 = vadd.f32 %v3455, %v3566
        %v3573 = vadd.f32 %v3456, %v3567
        %v3574 = vadd.f32 %v3457, %v3568
        %3575 = vset.pattern.permute.xlu0 60
        %3576 = vperm.xlu0 %3575, %v1840
        %v3577 = vpop.permute.xlu0 %3576
        %v3579 = vmul.f32 %v3577, %v2332
        %v3580 = vmul.f32 %v3577, %v2336
        %v3581 = vmul.f32 %v3577, %v2340
        %v3582 = vmul.f32 %v3577, %v2344
        %3587 = vrot.lane.b32.xlu0 %v3579, 62
        %v3588 = vpop.permute.xlu0 %3587
        %3589 = vrot.lane.b32.xlu0 %v3580, 62
        %v3590 = vpop.permute.xlu0 %3589
        %3591 = vrot.lane.b32.xlu0 %v3581, 62
        %v3592 = vpop.permute.xlu0 %3591
        %3593 = vrot.lane.b32.xlu0 %v3582, 62
        %v3594 = vpop.permute.xlu0 %3593
        %vm3595 = vcmask 506880
        %v3596 = vsel %vm3595, %v3588, %v3590
        %v3597 = vsel %vm3595, %v3590, %v3592
        %v3598 = vsel %vm3595, %v3592, %v3594
        %v3602 = vadd.f32 %v3485, %v3596
        %v3603 = vadd.f32 %v3486, %v3597
        %v3604 = vadd.f32 %v3487, %v3598
        %3605 = vset.pattern.permute.xlu0 61
        %3606 = vperm.xlu0 %3605, %v1840
        %v3607 = vpop.permute.xlu0 %3606
        %v3609 = vmul.f32 %v3607, %v2383
        %v3610 = vmul.f32 %v3607, %v2387
        %v3611 = vmul.f32 %v3607, %v2391
        %v3612 = vmul.f32 %v3607, %v2395
        %3617 = vrot.lane.b32.xlu0 %v3609, 62
        %v3618 = vpop.permute.xlu0 %3617
        %3619 = vrot.lane.b32.xlu0 %v3610, 62
        %v3620 = vpop.permute.xlu0 %3619
        %3621 = vrot.lane.b32.xlu0 %v3611, 62
        %v3622 = vpop.permute.xlu0 %3621
        %3623 = vrot.lane.b32.xlu0 %v3612, 62
        %v3624 = vpop.permute.xlu0 %3623
        %v3625 = vsel %vm3595, %v3618, %v3620
        %v3626 = vsel %vm3595, %v3620, %v3622
        %v3627 = vsel %vm3595, %v3622, %v3624
        %v3631 = vadd.f32 %v3514, %v3625
        %v3632 = vadd.f32 %v3515, %v3626
        %v3633 = vadd.f32 %v3516, %v3627
        %3634 = vset.pattern.permute.xlu0 62
        %3635 = vperm.xlu0 %3634, %v1840
        %v3636 = vpop.permute.xlu0 %3635
        %v3638 = vmul.f32 %v3636, %v2434
        %v3639 = vmul.f32 %v3636, %v2438
        %v3640 = vmul.f32 %v3636, %v2442
        %v3641 = vmul.f32 %v3636, %v2446
        %3646 = vrot.lane.b32.xlu0 %v3638, 62
        %v3647 = vpop.permute.xlu0 %3646
        %3648 = vrot.lane.b32.xlu0 %v3639, 62
        %v3649 = vpop.permute.xlu0 %3648
        %3650 = vrot.lane.b32.xlu0 %v3640, 62
        %v3651 = vpop.permute.xlu0 %3650
        %3652 = vrot.lane.b32.xlu0 %v3641, 62
        %v3653 = vpop.permute.xlu0 %3652
        %v3654 = vsel %vm3595, %v3647, %v3649
        %v3655 = vsel %vm3595, %v3649, %v3651
        %v3656 = vsel %vm3595, %v3651, %v3653
        %v3660 = vadd.f32 %v3543, %v3654
        %v3661 = vadd.f32 %v3544, %v3655
        %v3662 = vadd.f32 %v3545, %v3656
        %3663 = vset.pattern.permute.xlu0 63
        %3664 = vperm.xlu0 %3663, %v1840
        %v3665 = vpop.permute.xlu0 %3664
        %v3667 = vmul.f32 %v3665, %v2485
        %v3668 = vmul.f32 %v3665, %v2489
        %v3669 = vmul.f32 %v3665, %v2493
        %v3670 = vmul.f32 %v3665, %v2497
        %3675 = vrot.lane.b32.xlu0 %v3667, 62
        %v3676 = vpop.permute.xlu0 %3675
        %3677 = vrot.lane.b32.xlu0 %v3668, 62
        %v3678 = vpop.permute.xlu0 %3677
        %3679 = vrot.lane.b32.xlu0 %v3669, 62
        %v3680 = vpop.permute.xlu0 %3679
        %3681 = vrot.lane.b32.xlu0 %v3670, 62
        %v3682 = vpop.permute.xlu0 %3681
        %v3683 = vsel %vm3595, %v3676, %v3678
        %v3684 = vsel %vm3595, %v3678, %v3680
        %v3685 = vsel %vm3595, %v3680, %v3682
        %v3689 = vadd.f32 %v3572, %v3683
        %v3690 = vadd.f32 %v3573, %v3684
        %v3691 = vadd.f32 %v3574, %v3685
        %3692 = vset.pattern.permute.xlu0 64
        %3693 = vperm.xlu0 %3692, %v1840
        %v3694 = vpop.permute.xlu0 %3693
        %v3696 = vmul.f32 %v3694, %v2332
        %v3697 = vmul.f32 %v3694, %v2336
        %v3698 = vmul.f32 %v3694, %v2340
        %v3699 = vmul.f32 %v3694, %v2344
        %3704 = vrot.lane.b32.xlu0 %v3696, 61
        %v3705 = vpop.permute.xlu0 %3704
        %3706 = vrot.lane.b32.xlu0 %v3697, 61
        %v3707 = vpop.permute.xlu0 %3706
        %3708 = vrot.lane.b32.xlu0 %v3698, 61
        %v3709 = vpop.permute.xlu0 %3708
        %3710 = vrot.lane.b32.xlu0 %v3699, 61
        %v3711 = vpop.permute.xlu0 %3710
        %vm3712 = vcmask 498688
        %v3713 = vsel %vm3712, %v3705, %v3707
        %v3714 = vsel %vm3712, %v3707, %v3709
        %v3715 = vsel %vm3712, %v3709, %v3711
        %v3719 = vadd.f32 %v3602, %v3713
        %v3720 = vadd.f32 %v3603, %v3714
        %v3721 = vadd.f32 %v3604, %v3715
        %3722 = vset.pattern.permute.xlu0 65
        %3723 = vperm.xlu0 %3722, %v1840
        %v3724 = vpop.permute.xlu0 %3723
        %v3726 = vmul.f32 %v3724, %v2383
        %v3727 = vmul.f32 %v3724, %v2387
        %v3728 = vmul.f32 %v3724, %v2391
        %v3729 = vmul.f32 %v3724, %v2395
        %3734 = vrot.lane.b32.xlu0 %v3726, 61
        %v3735 = vpop.permute.xlu0 %3734
        %3736 = vrot.lane.b32.xlu0 %v3727, 61
        %v3737 = vpop.permute.xlu0 %3736
        %3738 = vrot.lane.b32.xlu0 %v3728, 61
        %v3739 = vpop.permute.xlu0 %3738
        %3740 = vrot.lane.b32.xlu0 %v3729, 61
        %v3741 = vpop.permute.xlu0 %3740
        %v3742 = vsel %vm3712, %v3735, %v3737
        %v3743 = vsel %vm3712, %v3737, %v3739
        %v3744 = vsel %vm3712, %v3739, %v3741
        %v3748 = vadd.f32 %v3631, %v3742
        %v3749 = vadd.f32 %v3632, %v3743
        %v3750 = vadd.f32 %v3633, %v3744
        %3751 = vset.pattern.permute.xlu0 66
        %3752 = vperm.xlu0 %3751, %v1840
        %v3753 = vpop.permute.xlu0 %3752
        %v3755 = vmul.f32 %v3753, %v2434
        %v3756 = vmul.f32 %v3753, %v2438
        %v3757 = vmul.f32 %v3753, %v2442
        %v3758 = vmul.f32 %v3753, %v2446
        %3763 = vrot.lane.b32.xlu0 %v3755, 61
        %v3764 = vpop.permute.xlu0 %3763
        %3765 = vrot.lane.b32.xlu0 %v3756, 61
        %v3766 = vpop.permute.xlu0 %3765
        %3767 = vrot.lane.b32.xlu0 %v3757, 61
        %v3768 = vpop.permute.xlu0 %3767
        %3769 = vrot.lane.b32.xlu0 %v3758, 61
        %v3770 = vpop.permute.xlu0 %3769
        %v3771 = vsel %vm3712, %v3764, %v3766
        %v3772 = vsel %vm3712, %v3766, %v3768
        %v3773 = vsel %vm3712, %v3768, %v3770
        %v3777 = vadd.f32 %v3660, %v3771
        %v3778 = vadd.f32 %v3661, %v3772
        %v3779 = vadd.f32 %v3662, %v3773
        %3780 = vset.pattern.permute.xlu0 67
        %3781 = vperm.xlu0 %3780, %v1840
        %v3782 = vpop.permute.xlu0 %3781
        %v3784 = vmul.f32 %v3782, %v2485
        %v3785 = vmul.f32 %v3782, %v2489
        %v3786 = vmul.f32 %v3782, %v2493
        %v3787 = vmul.f32 %v3782, %v2497
        %3792 = vrot.lane.b32.xlu0 %v3784, 61
        %v3793 = vpop.permute.xlu0 %3792
        %3794 = vrot.lane.b32.xlu0 %v3785, 61
        %v3795 = vpop.permute.xlu0 %3794
        %3796 = vrot.lane.b32.xlu0 %v3786, 61
        %v3797 = vpop.permute.xlu0 %3796
        %3798 = vrot.lane.b32.xlu0 %v3787, 61
        %v3799 = vpop.permute.xlu0 %3798
        %v3800 = vsel %vm3712, %v3793, %v3795
        %v3801 = vsel %vm3712, %v3795, %v3797
        %v3802 = vsel %vm3712, %v3797, %v3799
        %v3806 = vadd.f32 %v3689, %v3800
        %v3807 = vadd.f32 %v3690, %v3801
        %v3808 = vadd.f32 %v3691, %v3802
        %3809 = vset.pattern.permute.xlu0 68
        %3810 = vperm.xlu0 %3809, %v1840
        %v3811 = vpop.permute.xlu0 %3810
        %v3813 = vmul.f32 %v3811, %v2332
        %v3814 = vmul.f32 %v3811, %v2336
        %v3815 = vmul.f32 %v3811, %v2340
        %v3816 = vmul.f32 %v3811, %v2344
        %3821 = vrot.lane.b32.xlu0 %v3813, 60
        %v3822 = vpop.permute.xlu0 %3821
        %3823 = vrot.lane.b32.xlu0 %v3814, 60
        %v3824 = vpop.permute.xlu0 %3823
        %3825 = vrot.lane.b32.xlu0 %v3815, 60
        %v3826 = vpop.permute.xlu0 %3825
        %3827 = vrot.lane.b32.xlu0 %v3816, 60
        %v3828 = vpop.permute.xlu0 %3827
        %vm3829 = vcmask 490496
        %v3830 = vsel %vm3829, %v3822, %v3824
        %v3831 = vsel %vm3829, %v3824, %v3826
        %v3832 = vsel %vm3829, %v3826, %v3828
        %v3836 = vadd.f32 %v3719, %v3830
        %v3837 = vadd.f32 %v3720, %v3831
        %v3838 = vadd.f32 %v3721, %v3832
        %3839 = vset.pattern.permute.xlu0 69
        %3840 = vperm.xlu0 %3839, %v1840
        %v3841 = vpop.permute.xlu0 %3840
        %v3843 = vmul.f32 %v3841, %v2383
        %v3844 = vmul.f32 %v3841, %v2387
        %v3845 = vmul.f32 %v3841, %v2391
        %v3846 = vmul.f32 %v3841, %v2395
        %3851 = vrot.lane.b32.xlu0 %v3843, 60
        %v3852 = vpop.permute.xlu0 %3851
        %3853 = vrot.lane.b32.xlu0 %v3844, 60
        %v3854 = vpop.permute.xlu0 %3853
        %3855 = vrot.lane.b32.xlu0 %v3845, 60
        %v3856 = vpop.permute.xlu0 %3855
        %3857 = vrot.lane.b32.xlu0 %v3846, 60
        %v3858 = vpop.permute.xlu0 %3857
        %v3859 = vsel %vm3829, %v3852, %v3854
        %v3860 = vsel %vm3829, %v3854, %v3856
        %v3861 = vsel %vm3829, %v3856, %v3858
        %v3865 = vadd.f32 %v3748, %v3859
        %v3866 = vadd.f32 %v3749, %v3860
        %v3867 = vadd.f32 %v3750, %v3861
        %3868 = vset.pattern.permute.xlu0 70
        %3869 = vperm.xlu0 %3868, %v1840
        %v3870 = vpop.permute.xlu0 %3869
        %v3872 = vmul.f32 %v3870, %v2434
        %v3873 = vmul.f32 %v3870, %v2438
        %v3874 = vmul.f32 %v3870, %v2442
        %v3875 = vmul.f32 %v3870, %v2446
        %3880 = vrot.lane.b32.xlu0 %v3872, 60
        %v3881 = vpop.permute.xlu0 %3880
        %3882 = vrot.lane.b32.xlu0 %v3873, 60
        %v3883 = vpop.permute.xlu0 %3882
        %3884 = vrot.lane.b32.xlu0 %v3874, 60
        %v3885 = vpop.permute.xlu0 %3884
        %3886 = vrot.lane.b32.xlu0 %v3875, 60
        %v3887 = vpop.permute.xlu0 %3886
        %v3888 = vsel %vm3829, %v3881, %v3883
        %v3889 = vsel %vm3829, %v3883, %v3885
        %v3890 = vsel %vm3829, %v3885, %v3887
        %v3894 = vadd.f32 %v3777, %v3888
        %v3895 = vadd.f32 %v3778, %v3889
        %v3896 = vadd.f32 %v3779, %v3890
        %3897 = vset.pattern.permute.xlu0 71
        %3898 = vperm.xlu0 %3897, %v1840
        %v3899 = vpop.permute.xlu0 %3898
        %v3901 = vmul.f32 %v3899, %v2485
        %v3902 = vmul.f32 %v3899, %v2489
        %v3903 = vmul.f32 %v3899, %v2493
        %v3904 = vmul.f32 %v3899, %v2497
        %3909 = vrot.lane.b32.xlu0 %v3901, 60
        %v3910 = vpop.permute.xlu0 %3909
        %3911 = vrot.lane.b32.xlu0 %v3902, 60
        %v3912 = vpop.permute.xlu0 %3911
        %3913 = vrot.lane.b32.xlu0 %v3903, 60
        %v3914 = vpop.permute.xlu0 %3913
        %3915 = vrot.lane.b32.xlu0 %v3904, 60
        %v3916 = vpop.permute.xlu0 %3915
        %v3917 = vsel %vm3829, %v3910, %v3912
        %v3918 = vsel %vm3829, %v3912, %v3914
        %v3919 = vsel %vm3829, %v3914, %v3916
        %v3923 = vadd.f32 %v3806, %v3917
        %v3924 = vadd.f32 %v3807, %v3918
        %v3925 = vadd.f32 %v3808, %v3919
        %3926 = vset.pattern.permute.xlu0 72
        %3927 = vperm.xlu0 %3926, %v1840
        %v3928 = vpop.permute.xlu0 %3927
        %v3930 = vmul.f32 %v3928, %v2332
        %v3931 = vmul.f32 %v3928, %v2336
        %v3932 = vmul.f32 %v3928, %v2340
        %v3933 = vmul.f32 %v3928, %v2344
        %3938 = vrot.lane.b32.xlu0 %v3930, 59
        %v3939 = vpop.permute.xlu0 %3938
        %3940 = vrot.lane.b32.xlu0 %v3931, 59
        %v3941 = vpop.permute.xlu0 %3940
        %3942 = vrot.lane.b32.xlu0 %v3932, 59
        %v3943 = vpop.permute.xlu0 %3942
        %3944 = vrot.lane.b32.xlu0 %v3933, 59
        %v3945 = vpop.permute.xlu0 %3944
        %vm3946 = vcmask 482304
        %v3947 = vsel %vm3946, %v3939, %v3941
        %v3948 = vsel %vm3946, %v3941, %v3943
        %v3949 = vsel %vm3946, %v3943, %v3945
        %v3953 = vadd.f32 %v3836, %v3947
        %v3954 = vadd.f32 %v3837, %v3948
        %v3955 = vadd.f32 %v3838, %v3949
        %3956 = vset.pattern.permute.xlu0 73
        %3957 = vperm.xlu0 %3956, %v1840
        %v3958 = vpop.permute.xlu0 %3957
        %v3960 = vmul.f32 %v3958, %v2383
        %v3961 = vmul.f32 %v3958, %v2387
        %v3962 = vmul.f32 %v3958, %v2391
        %v3963 = vmul.f32 %v3958, %v2395
        %3968 = vrot.lane.b32.xlu0 %v3960, 59
        %v3969 = vpop.permute.xlu0 %3968
        %3970 = vrot.lane.b32.xlu0 %v3961, 59
        %v3971 = vpop.permute.xlu0 %3970
        %3972 = vrot.lane.b32.xlu0 %v3962, 59
        %v3973 = vpop.permute.xlu0 %3972
        %3974 = vrot.lane.b32.xlu0 %v3963, 59
        %v3975 = vpop.permute.xlu0 %3974
        %v3976 = vsel %vm3946, %v3969, %v3971
        %v3977 = vsel %vm3946, %v3971, %v3973
        %v3978 = vsel %vm3946, %v3973, %v3975
        %v3982 = vadd.f32 %v3865, %v3976
        %v3983 = vadd.f32 %v3866, %v3977
        %v3984 = vadd.f32 %v3867, %v3978
        %3985 = vset.pattern.permute.xlu0 74
        %3986 = vperm.xlu0 %3985, %v1840
        %v3987 = vpop.permute.xlu0 %3986
        %v3989 = vmul.f32 %v3987, %v2434
        %v3990 = vmul.f32 %v3987, %v2438
        %v3991 = vmul.f32 %v3987, %v2442
        %v3992 = vmul.f32 %v3987, %v2446
        %3997 = vrot.lane.b32.xlu0 %v3989, 59
        %v3998 = vpop.permute.xlu0 %3997
        %3999 = vrot.lane.b32.xlu0 %v3990, 59
        %v4000 = vpop.permute.xlu0 %3999
        %4001 = vrot.lane.b32.xlu0 %v3991, 59
        %v4002 = vpop.permute.xlu0 %4001
        %4003 = vrot.lane.b32.xlu0 %v3992, 59
        %v4004 = vpop.permute.xlu0 %4003
        %v4005 = vsel %vm3946, %v3998, %v4000
        %v4006 = vsel %vm3946, %v4000, %v4002
        %v4007 = vsel %vm3946, %v4002, %v4004
        %v4011 = vadd.f32 %v3894, %v4005
        %v4012 = vadd.f32 %v3895, %v4006
        %v4013 = vadd.f32 %v3896, %v4007
        %4014 = vset.pattern.permute.xlu0 75
        %4015 = vperm.xlu0 %4014, %v1840
        %v4016 = vpop.permute.xlu0 %4015
        %v4018 = vmul.f32 %v4016, %v2485
        %v4019 = vmul.f32 %v4016, %v2489
        %v4020 = vmul.f32 %v4016, %v2493
        %v4021 = vmul.f32 %v4016, %v2497
        %4026 = vrot.lane.b32.xlu0 %v4018, 59
        %v4027 = vpop.permute.xlu0 %4026
        %4028 = vrot.lane.b32.xlu0 %v4019, 59
        %v4029 = vpop.permute.xlu0 %4028
        %4030 = vrot.lane.b32.xlu0 %v4020, 59
        %v4031 = vpop.permute.xlu0 %4030
        %4032 = vrot.lane.b32.xlu0 %v4021, 59
        %v4033 = vpop.permute.xlu0 %4032
        %v4034 = vsel %vm3946, %v4027, %v4029
        %v4035 = vsel %vm3946, %v4029, %v4031
        %v4036 = vsel %vm3946, %v4031, %v4033
        %v4040 = vadd.f32 %v3923, %v4034
        %v4041 = vadd.f32 %v3924, %v4035
        %v4042 = vadd.f32 %v3925, %v4036
        %4043 = vset.pattern.permute.xlu0 76
        %4044 = vperm.xlu0 %4043, %v1840
        %v4045 = vpop.permute.xlu0 %4044
        %v4047 = vmul.f32 %v4045, %v2332
        %v4048 = vmul.f32 %v4045, %v2336
        %v4049 = vmul.f32 %v4045, %v2340
        %v4050 = vmul.f32 %v4045, %v2344
        %4055 = vrot.lane.b32.xlu0 %v4047, 58
        %v4056 = vpop.permute.xlu0 %4055
        %4057 = vrot.lane.b32.xlu0 %v4048, 58
        %v4058 = vpop.permute.xlu0 %4057
        %4059 = vrot.lane.b32.xlu0 %v4049, 58
        %v4060 = vpop.permute.xlu0 %4059
        %4061 = vrot.lane.b32.xlu0 %v4050, 58
        %v4062 = vpop.permute.xlu0 %4061
        %vm4063 = vcmask 474112
        %v4064 = vsel %vm4063, %v4056, %v4058
        %v4065 = vsel %vm4063, %v4058, %v4060
        %v4066 = vsel %vm4063, %v4060, %v4062
        %v4070 = vadd.f32 %v3953, %v4064
        %v4071 = vadd.f32 %v3954, %v4065
        %v4072 = vadd.f32 %v3955, %v4066
        %4073 = vset.pattern.permute.xlu0 77
        %4074 = vperm.xlu0 %4073, %v1840
        %v4075 = vpop.permute.xlu0 %4074
        %v4077 = vmul.f32 %v4075, %v2383
        %v4078 = vmul.f32 %v4075, %v2387
        %v4079 = vmul.f32 %v4075, %v2391
        %v4080 = vmul.f32 %v4075, %v2395
        %4085 = vrot.lane.b32.xlu0 %v4077, 58
        %v4086 = vpop.permute.xlu0 %4085
        %4087 = vrot.lane.b32.xlu0 %v4078, 58
        %v4088 = vpop.permute.xlu0 %4087
        %4089 = vrot.lane.b32.xlu0 %v4079, 58
        %v4090 = vpop.permute.xlu0 %4089
        %4091 = vrot.lane.b32.xlu0 %v4080, 58
        %v4092 = vpop.permute.xlu0 %4091
        %v4093 = vsel %vm4063, %v4086, %v4088
        %v4094 = vsel %vm4063, %v4088, %v4090
        %v4095 = vsel %vm4063, %v4090, %v4092
        %v4099 = vadd.f32 %v3982, %v4093
        %v4100 = vadd.f32 %v3983, %v4094
        %v4101 = vadd.f32 %v3984, %v4095
        %4102 = vset.pattern.permute.xlu0 78
        %4103 = vperm.xlu0 %4102, %v1840
        %v4104 = vpop.permute.xlu0 %4103
        %v4106 = vmul.f32 %v4104, %v2434
        %v4107 = vmul.f32 %v4104, %v2438
        %v4108 = vmul.f32 %v4104, %v2442
        %v4109 = vmul.f32 %v4104, %v2446
        %4114 = vrot.lane.b32.xlu0 %v4106, 58
        %v4115 = vpop.permute.xlu0 %4114
        %4116 = vrot.lane.b32.xlu0 %v4107, 58
        %v4117 = vpop.permute.xlu0 %4116
        %4118 = vrot.lane.b32.xlu0 %v4108, 58
        %v4119 = vpop.permute.xlu0 %4118
        %4120 = vrot.lane.b32.xlu0 %v4109, 58
        %v4121 = vpop.permute.xlu0 %4120
        %v4122 = vsel %vm4063, %v4115, %v4117
        %v4123 = vsel %vm4063, %v4117, %v4119
        %v4124 = vsel %vm4063, %v4119, %v4121
        %v4128 = vadd.f32 %v4011, %v4122
        %v4129 = vadd.f32 %v4012, %v4123
        %v4130 = vadd.f32 %v4013, %v4124
        %4131 = vset.pattern.permute.xlu0 79
        %4132 = vperm.xlu0 %4131, %v1840
        %v4133 = vpop.permute.xlu0 %4132
        %v4135 = vmul.f32 %v4133, %v2485
        %v4136 = vmul.f32 %v4133, %v2489
        %v4137 = vmul.f32 %v4133, %v2493
        %v4138 = vmul.f32 %v4133, %v2497
        %4143 = vrot.lane.b32.xlu0 %v4135, 58
        %v4144 = vpop.permute.xlu0 %4143
        %4145 = vrot.lane.b32.xlu0 %v4136, 58
        %v4146 = vpop.permute.xlu0 %4145
        %4147 = vrot.lane.b32.xlu0 %v4137, 58
        %v4148 = vpop.permute.xlu0 %4147
        %4149 = vrot.lane.b32.xlu0 %v4138, 58
        %v4150 = vpop.permute.xlu0 %4149
        %v4151 = vsel %vm4063, %v4144, %v4146
        %v4152 = vsel %vm4063, %v4146, %v4148
        %v4153 = vsel %vm4063, %v4148, %v4150
        %v4157 = vadd.f32 %v4040, %v4151
        %v4158 = vadd.f32 %v4041, %v4152
        %v4159 = vadd.f32 %v4042, %v4153
        %4160 = vset.pattern.permute.xlu0 80
        %4161 = vperm.xlu0 %4160, %v1840
        %v4162 = vpop.permute.xlu0 %4161
        %v4164 = vmul.f32 %v4162, %v2332
        %v4165 = vmul.f32 %v4162, %v2336
        %v4166 = vmul.f32 %v4162, %v2340
        %v4167 = vmul.f32 %v4162, %v2344
        %4172 = vrot.lane.b32.xlu0 %v4164, 40
        %v4173 = vpop.permute.xlu0 %4172
        %4174 = vrot.lane.b32.xlu0 %v4165, 40
        %v4175 = vpop.permute.xlu0 %4174
        %4176 = vrot.lane.b32.xlu0 %v4166, 40
        %v4177 = vpop.permute.xlu0 %4176
        %4178 = vrot.lane.b32.xlu0 %v4167, 40
        %v4179 = vpop.permute.xlu0 %4178
        %vm4180 = vcmask 326656
        %v4181 = vsel %vm4180, %v4173, %v4175
        %v4182 = vsel %vm4180, %v4175, %v4177
        %v4183 = vsel %vm4180, %v4177, %v4179
        %v4187 = vadd.f32 %v4070, %v4181
        %v4188 = vadd.f32 %v4071, %v4182
        %v4189 = vadd.f32 %v4072, %v4183
        %4190 = vset.pattern.permute.xlu0 81
        %4191 = vperm.xlu0 %4190, %v1840
        %v4192 = vpop.permute.xlu0 %4191
        %v4194 = vmul.f32 %v4192, %v2383
        %v4195 = vmul.f32 %v4192, %v2387
        %v4196 = vmul.f32 %v4192, %v2391
        %v4197 = vmul.f32 %v4192, %v2395
        %4202 = vrot.lane.b32.xlu0 %v4194, 40
        %v4203 = vpop.permute.xlu0 %4202
        %4204 = vrot.lane.b32.xlu0 %v4195, 40
        %v4205 = vpop.permute.xlu0 %4204
        %4206 = vrot.lane.b32.xlu0 %v4196, 40
        %v4207 = vpop.permute.xlu0 %4206
        %4208 = vrot.lane.b32.xlu0 %v4197, 40
        %v4209 = vpop.permute.xlu0 %4208
        %v4210 = vsel %vm4180, %v4203, %v4205
        %v4211 = vsel %vm4180, %v4205, %v4207
        %v4212 = vsel %vm4180, %v4207, %v4209
        %v4216 = vadd.f32 %v4099, %v4210
        %v4217 = vadd.f32 %v4100, %v4211
        %v4218 = vadd.f32 %v4101, %v4212
        %4219 = vset.pattern.permute.xlu0 82
        %4220 = vperm.xlu0 %4219, %v1840
        %v4221 = vpop.permute.xlu0 %4220
        %v4223 = vmul.f32 %v4221, %v2434
        %v4224 = vmul.f32 %v4221, %v2438
        %v4225 = vmul.f32 %v4221, %v2442
        %v4226 = vmul.f32 %v4221, %v2446
        %4231 = vrot.lane.b32.xlu0 %v4223, 40
        %v4232 = vpop.permute.xlu0 %4231
        %4233 = vrot.lane.b32.xlu0 %v4224, 40
        %v4234 = vpop.permute.xlu0 %4233
        %4235 = vrot.lane.b32.xlu0 %v4225, 40
        %v4236 = vpop.permute.xlu0 %4235
        %4237 = vrot.lane.b32.xlu0 %v4226, 40
        %v4238 = vpop.permute.xlu0 %4237
        %v4239 = vsel %vm4180, %v4232, %v4234
        %v4240 = vsel %vm4180, %v4234, %v4236
        %v4241 = vsel %vm4180, %v4236, %v4238
        %v4245 = vadd.f32 %v4128, %v4239
        %v4246 = vadd.f32 %v4129, %v4240
        %v4247 = vadd.f32 %v4130, %v4241
        %4248 = vset.pattern.permute.xlu0 83
        %4249 = vperm.xlu0 %4248, %v1840
        %v4250 = vpop.permute.xlu0 %4249
        %v4252 = vmul.f32 %v4250, %v2485
        %v4253 = vmul.f32 %v4250, %v2489
        %v4254 = vmul.f32 %v4250, %v2493
        %v4255 = vmul.f32 %v4250, %v2497
        %4260 = vrot.lane.b32.xlu0 %v4252, 40
        %v4261 = vpop.permute.xlu0 %4260
        %4262 = vrot.lane.b32.xlu0 %v4253, 40
        %v4263 = vpop.permute.xlu0 %4262
        %4264 = vrot.lane.b32.xlu0 %v4254, 40
        %v4265 = vpop.permute.xlu0 %4264
        %4266 = vrot.lane.b32.xlu0 %v4255, 40
        %v4267 = vpop.permute.xlu0 %4266
        %v4268 = vsel %vm4180, %v4261, %v4263
        %v4269 = vsel %vm4180, %v4263, %v4265
        %v4270 = vsel %vm4180, %v4265, %v4267
        %v4274 = vadd.f32 %v4157, %v4268
        %v4275 = vadd.f32 %v4158, %v4269
        %v4276 = vadd.f32 %v4159, %v4270
        %4277 = vset.pattern.permute.xlu0 84
        %4278 = vperm.xlu0 %4277, %v1840
        %v4279 = vpop.permute.xlu0 %4278
        %v4281 = vmul.f32 %v4279, %v2332
        %v4282 = vmul.f32 %v4279, %v2336
        %v4283 = vmul.f32 %v4279, %v2340
        %v4284 = vmul.f32 %v4279, %v2344
        %4289 = vrot.lane.b32.xlu0 %v4281, 39
        %v4290 = vpop.permute.xlu0 %4289
        %4291 = vrot.lane.b32.xlu0 %v4282, 39
        %v4292 = vpop.permute.xlu0 %4291
        %4293 = vrot.lane.b32.xlu0 %v4283, 39
        %v4294 = vpop.permute.xlu0 %4293
        %4295 = vrot.lane.b32.xlu0 %v4284, 39
        %v4296 = vpop.permute.xlu0 %4295
        %vm4297 = vcmask 318464
        %v4298 = vsel %vm4297, %v4290, %v4292
        %v4299 = vsel %vm4297, %v4292, %v4294
        %v4300 = vsel %vm4297, %v4294, %v4296
        %v4304 = vadd.f32 %v4187, %v4298
        %v4305 = vadd.f32 %v4188, %v4299
        %v4306 = vadd.f32 %v4189, %v4300
        %4307 = vset.pattern.permute.xlu0 85
        %4308 = vperm.xlu0 %4307, %v1840
        %v4309 = vpop.permute.xlu0 %4308
        %v4311 = vmul.f32 %v4309, %v2383
        %v4312 = vmul.f32 %v4309, %v2387
        %v4313 = vmul.f32 %v4309, %v2391
        %v4314 = vmul.f32 %v4309, %v2395
        %4319 = vrot.lane.b32.xlu0 %v4311, 39
        %v4320 = vpop.permute.xlu0 %4319
        %4321 = vrot.lane.b32.xlu0 %v4312, 39
        %v4322 = vpop.permute.xlu0 %4321
        %4323 = vrot.lane.b32.xlu0 %v4313, 39
        %v4324 = vpop.permute.xlu0 %4323
        %4325 = vrot.lane.b32.xlu0 %v4314, 39
        %v4326 = vpop.permute.xlu0 %4325
        %v4327 = vsel %vm4297, %v4320, %v4322
        %v4328 = vsel %vm4297, %v4322, %v4324
        %v4329 = vsel %vm4297, %v4324, %v4326
        %v4333 = vadd.f32 %v4216, %v4327
        %v4334 = vadd.f32 %v4217, %v4328
        %v4335 = vadd.f32 %v4218, %v4329
        %4336 = vset.pattern.permute.xlu0 86
        %4337 = vperm.xlu0 %4336, %v1840
        %v4338 = vpop.permute.xlu0 %4337
        %v4340 = vmul.f32 %v4338, %v2434
        %v4341 = vmul.f32 %v4338, %v2438
        %v4342 = vmul.f32 %v4338, %v2442
        %v4343 = vmul.f32 %v4338, %v2446
        %4348 = vrot.lane.b32.xlu0 %v4340, 39
        %v4349 = vpop.permute.xlu0 %4348
        %4350 = vrot.lane.b32.xlu0 %v4341, 39
        %v4351 = vpop.permute.xlu0 %4350
        %4352 = vrot.lane.b32.xlu0 %v4342, 39
        %v4353 = vpop.permute.xlu0 %4352
        %4354 = vrot.lane.b32.xlu0 %v4343, 39
        %v4355 = vpop.permute.xlu0 %4354
        %v4356 = vsel %vm4297, %v4349, %v4351
        %v4357 = vsel %vm4297, %v4351, %v4353
        %v4358 = vsel %vm4297, %v4353, %v4355
        %v4362 = vadd.f32 %v4245, %v4356
        %v4363 = vadd.f32 %v4246, %v4357
        %v4364 = vadd.f32 %v4247, %v4358
        %4365 = vset.pattern.permute.xlu0 87
        %4366 = vperm.xlu0 %4365, %v1840
        %v4367 = vpop.permute.xlu0 %4366
        %v4369 = vmul.f32 %v4367, %v2485
        %v4370 = vmul.f32 %v4367, %v2489
        %v4371 = vmul.f32 %v4367, %v2493
        %v4372 = vmul.f32 %v4367, %v2497
        %4377 = vrot.lane.b32.xlu0 %v4369, 39
        %v4378 = vpop.permute.xlu0 %4377
        %4379 = vrot.lane.b32.xlu0 %v4370, 39
        %v4380 = vpop.permute.xlu0 %4379
        %4381 = vrot.lane.b32.xlu0 %v4371, 39
        %v4382 = vpop.permute.xlu0 %4381
        %4383 = vrot.lane.b32.xlu0 %v4372, 39
        %v4384 = vpop.permute.xlu0 %4383
        %v4385 = vsel %vm4297, %v4378, %v4380
        %v4386 = vsel %vm4297, %v4380, %v4382
        %v4387 = vsel %vm4297, %v4382, %v4384
        %v4391 = vadd.f32 %v4274, %v4385
        %v4392 = vadd.f32 %v4275, %v4386
        %v4393 = vadd.f32 %v4276, %v4387
        %4394 = vset.pattern.permute.xlu0 88
        %4395 = vperm.xlu0 %4394, %v1840
        %v4396 = vpop.permute.xlu0 %4395
        %v4398 = vmul.f32 %v4396, %v2332
        %v4399 = vmul.f32 %v4396, %v2336
        %v4400 = vmul.f32 %v4396, %v2340
        %v4401 = vmul.f32 %v4396, %v2344
        %4406 = vrot.lane.b32.xlu0 %v4398, 38
        %v4407 = vpop.permute.xlu0 %4406
        %4408 = vrot.lane.b32.xlu0 %v4399, 38
        %v4409 = vpop.permute.xlu0 %4408
        %4410 = vrot.lane.b32.xlu0 %v4400, 38
        %v4411 = vpop.permute.xlu0 %4410
        %4412 = vrot.lane.b32.xlu0 %v4401, 38
        %v4413 = vpop.permute.xlu0 %4412
        %vm4414 = vcmask 310272
        %v4415 = vsel %vm4414, %v4407, %v4409
        %v4416 = vsel %vm4414, %v4409, %v4411
        %v4417 = vsel %vm4414, %v4411, %v4413
        %v4421 = vadd.f32 %v4304, %v4415
        %v4422 = vadd.f32 %v4305, %v4416
        %v4423 = vadd.f32 %v4306, %v4417
        %4424 = vset.pattern.permute.xlu0 89
        %4425 = vperm.xlu0 %4424, %v1840
        %v4426 = vpop.permute.xlu0 %4425
        %v4428 = vmul.f32 %v4426, %v2383
        %v4429 = vmul.f32 %v4426, %v2387
        %v4430 = vmul.f32 %v4426, %v2391
        %v4431 = vmul.f32 %v4426, %v2395
        %4436 = vrot.lane.b32.xlu0 %v4428, 38
        %v4437 = vpop.permute.xlu0 %4436
        %4438 = vrot.lane.b32.xlu0 %v4429, 38
        %v4439 = vpop.permute.xlu0 %4438
        %4440 = vrot.lane.b32.xlu0 %v4430, 38
        %v4441 = vpop.permute.xlu0 %4440
        %4442 = vrot.lane.b32.xlu0 %v4431, 38
        %v4443 = vpop.permute.xlu0 %4442
        %v4444 = vsel %vm4414, %v4437, %v4439
        %v4445 = vsel %vm4414, %v4439, %v4441
        %v4446 = vsel %vm4414, %v4441, %v4443
        %v4450 = vadd.f32 %v4333, %v4444
        %v4451 = vadd.f32 %v4334, %v4445
        %v4452 = vadd.f32 %v4335, %v4446
        %4453 = vset.pattern.permute.xlu0 90
        %4454 = vperm.xlu0 %4453, %v1840
        %v4455 = vpop.permute.xlu0 %4454
        %v4457 = vmul.f32 %v4455, %v2434
        %v4458 = vmul.f32 %v4455, %v2438
        %v4459 = vmul.f32 %v4455, %v2442
        %v4460 = vmul.f32 %v4455, %v2446
        %4465 = vrot.lane.b32.xlu0 %v4457, 38
        %v4466 = vpop.permute.xlu0 %4465
        %4467 = vrot.lane.b32.xlu0 %v4458, 38
        %v4468 = vpop.permute.xlu0 %4467
        %4469 = vrot.lane.b32.xlu0 %v4459, 38
        %v4470 = vpop.permute.xlu0 %4469
        %4471 = vrot.lane.b32.xlu0 %v4460, 38
        %v4472 = vpop.permute.xlu0 %4471
        %v4473 = vsel %vm4414, %v4466, %v4468
        %v4474 = vsel %vm4414, %v4468, %v4470
        %v4475 = vsel %vm4414, %v4470, %v4472
        %v4479 = vadd.f32 %v4362, %v4473
        %v4480 = vadd.f32 %v4363, %v4474
        %v4481 = vadd.f32 %v4364, %v4475
        %4482 = vset.pattern.permute.xlu0 91
        %4483 = vperm.xlu0 %4482, %v1840
        %v4484 = vpop.permute.xlu0 %4483
        %v4486 = vmul.f32 %v4484, %v2485
        %v4487 = vmul.f32 %v4484, %v2489
        %v4488 = vmul.f32 %v4484, %v2493
        %v4489 = vmul.f32 %v4484, %v2497
        %4494 = vrot.lane.b32.xlu0 %v4486, 38
        %v4495 = vpop.permute.xlu0 %4494
        %4496 = vrot.lane.b32.xlu0 %v4487, 38
        %v4497 = vpop.permute.xlu0 %4496
        %4498 = vrot.lane.b32.xlu0 %v4488, 38
        %v4499 = vpop.permute.xlu0 %4498
        %4500 = vrot.lane.b32.xlu0 %v4489, 38
        %v4501 = vpop.permute.xlu0 %4500
        %v4502 = vsel %vm4414, %v4495, %v4497
        %v4503 = vsel %vm4414, %v4497, %v4499
        %v4504 = vsel %vm4414, %v4499, %v4501
        %v4508 = vadd.f32 %v4391, %v4502
        %v4509 = vadd.f32 %v4392, %v4503
        %v4510 = vadd.f32 %v4393, %v4504
        %4511 = vset.pattern.permute.xlu0 92
        %4512 = vperm.xlu0 %4511, %v1840
        %v4513 = vpop.permute.xlu0 %4512
        %v4515 = vmul.f32 %v4513, %v2332
        %v4516 = vmul.f32 %v4513, %v2336
        %v4517 = vmul.f32 %v4513, %v2340
        %v4518 = vmul.f32 %v4513, %v2344
        %4523 = vrot.lane.b32.xlu0 %v4515, 37
        %v4524 = vpop.permute.xlu0 %4523
        %4525 = vrot.lane.b32.xlu0 %v4516, 37
        %v4526 = vpop.permute.xlu0 %4525
        %4527 = vrot.lane.b32.xlu0 %v4517, 37
        %v4528 = vpop.permute.xlu0 %4527
        %4529 = vrot.lane.b32.xlu0 %v4518, 37
        %v4530 = vpop.permute.xlu0 %4529
        %vm4531 = vcmask 302080
        %v4532 = vsel %vm4531, %v4524, %v4526
        %v4533 = vsel %vm4531, %v4526, %v4528
        %v4534 = vsel %vm4531, %v4528, %v4530
        %v4538 = vadd.f32 %v4421, %v4532
        %v4539 = vadd.f32 %v4422, %v4533
        %v4540 = vadd.f32 %v4423, %v4534
        %4541 = vset.pattern.permute.xlu0 93
        %4542 = vperm.xlu0 %4541, %v1840
        %v4543 = vpop.permute.xlu0 %4542
        %v4545 = vmul.f32 %v4543, %v2383
        %v4546 = vmul.f32 %v4543, %v2387
        %v4547 = vmul.f32 %v4543, %v2391
        %v4548 = vmul.f32 %v4543, %v2395
        %4553 = vrot.lane.b32.xlu0 %v4545, 37
        %v4554 = vpop.permute.xlu0 %4553
        %4555 = vrot.lane.b32.xlu0 %v4546, 37
        %v4556 = vpop.permute.xlu0 %4555
        %4557 = vrot.lane.b32.xlu0 %v4547, 37
        %v4558 = vpop.permute.xlu0 %4557
        %4559 = vrot.lane.b32.xlu0 %v4548, 37
        %v4560 = vpop.permute.xlu0 %4559
        %v4561 = vsel %vm4531, %v4554, %v4556
        %v4562 = vsel %vm4531, %v4556, %v4558
        %v4563 = vsel %vm4531, %v4558, %v4560
        %v4567 = vadd.f32 %v4450, %v4561
        %v4568 = vadd.f32 %v4451, %v4562
        %v4569 = vadd.f32 %v4452, %v4563
        %4570 = vset.pattern.permute.xlu0 94
        %4571 = vperm.xlu0 %4570, %v1840
        %v4572 = vpop.permute.xlu0 %4571
        %v4574 = vmul.f32 %v4572, %v2434
        %v4575 = vmul.f32 %v4572, %v2438
        %v4576 = vmul.f32 %v4572, %v2442
        %v4577 = vmul.f32 %v4572, %v2446
        %4582 = vrot.lane.b32.xlu0 %v4574, 37
        %v4583 = vpop.permute.xlu0 %4582
        %4584 = vrot.lane.b32.xlu0 %v4575, 37
        %v4585 = vpop.permute.xlu0 %4584
        %4586 = vrot.lane.b32.xlu0 %v4576, 37
        %v4587 = vpop.permute.xlu0 %4586
        %4588 = vrot.lane.b32.xlu0 %v4577, 37
        %v4589 = vpop.permute.xlu0 %4588
        %v4590 = vsel %vm4531, %v4583, %v4585
        %v4591 = vsel %vm4531, %v4585, %v4587
        %v4592 = vsel %vm4531, %v4587, %v4589
        %v4596 = vadd.f32 %v4479, %v4590
        %v4597 = vadd.f32 %v4480, %v4591
        %v4598 = vadd.f32 %v4481, %v4592
        %4599 = vset.pattern.permute.xlu0 95
        %4600 = vperm.xlu0 %4599, %v1840
        %v4601 = vpop.permute.xlu0 %4600
        %v4603 = vmul.f32 %v4601, %v2485
        %v4604 = vmul.f32 %v4601, %v2489
        %v4605 = vmul.f32 %v4601, %v2493
        %v4606 = vmul.f32 %v4601, %v2497
        %4611 = vrot.lane.b32.xlu0 %v4603, 37
        %v4612 = vpop.permute.xlu0 %4611
        %4613 = vrot.lane.b32.xlu0 %v4604, 37
        %v4614 = vpop.permute.xlu0 %4613
        %4615 = vrot.lane.b32.xlu0 %v4605, 37
        %v4616 = vpop.permute.xlu0 %4615
        %4617 = vrot.lane.b32.xlu0 %v4606, 37
        %v4618 = vpop.permute.xlu0 %4617
        %v4619 = vsel %vm4531, %v4612, %v4614
        %v4620 = vsel %vm4531, %v4614, %v4616
        %v4621 = vsel %vm4531, %v4616, %v4618
        %v4625 = vadd.f32 %v4508, %v4619
        %v4626 = vadd.f32 %v4509, %v4620
        %v4627 = vadd.f32 %v4510, %v4621
        %4628 = vset.pattern.permute.xlu0 96
        %4629 = vperm.xlu0 %4628, %v1840
        %v4630 = vpop.permute.xlu0 %4629
        %v4632 = vmul.f32 %v4630, %v2332
        %v4633 = vmul.f32 %v4630, %v2336
        %v4634 = vmul.f32 %v4630, %v2340
        %v4635 = vmul.f32 %v4630, %v2344
        %4640 = vrot.lane.b32.xlu0 %v4632, 36
        %v4641 = vpop.permute.xlu0 %4640
        %4642 = vrot.lane.b32.xlu0 %v4633, 36
        %v4643 = vpop.permute.xlu0 %4642
        %4644 = vrot.lane.b32.xlu0 %v4634, 36
        %v4645 = vpop.permute.xlu0 %4644
        %4646 = vrot.lane.b32.xlu0 %v4635, 36
        %v4647 = vpop.permute.xlu0 %4646
        %vm4648 = vcmask 293888
        %v4649 = vsel %vm4648, %v4641, %v4643
        %v4650 = vsel %vm4648, %v4643, %v4645
        %v4651 = vsel %vm4648, %v4645, %v4647
        %v4655 = vadd.f32 %v4538, %v4649
        %v4656 = vadd.f32 %v4539, %v4650
        %v4657 = vadd.f32 %v4540, %v4651
        %4658 = vset.pattern.permute.xlu0 97
        %4659 = vperm.xlu0 %4658, %v1840
        %v4660 = vpop.permute.xlu0 %4659
        %v4662 = vmul.f32 %v4660, %v2383
        %v4663 = vmul.f32 %v4660, %v2387
        %v4664 = vmul.f32 %v4660, %v2391
        %v4665 = vmul.f32 %v4660, %v2395
        %4670 = vrot.lane.b32.xlu0 %v4662, 36
        %v4671 = vpop.permute.xlu0 %4670
        %4672 = vrot.lane.b32.xlu0 %v4663, 36
        %v4673 = vpop.permute.xlu0 %4672
        %4674 = vrot.lane.b32.xlu0 %v4664, 36
        %v4675 = vpop.permute.xlu0 %4674
        %4676 = vrot.lane.b32.xlu0 %v4665, 36
        %v4677 = vpop.permute.xlu0 %4676
        %v4678 = vsel %vm4648, %v4671, %v4673
        %v4679 = vsel %vm4648, %v4673, %v4675
        %v4680 = vsel %vm4648, %v4675, %v4677
        %v4684 = vadd.f32 %v4567, %v4678
        %v4685 = vadd.f32 %v4568, %v4679
        %v4686 = vadd.f32 %v4569, %v4680
        %4687 = vset.pattern.permute.xlu0 98
        %4688 = vperm.xlu0 %4687, %v1840
        %v4689 = vpop.permute.xlu0 %4688
        %v4691 = vmul.f32 %v4689, %v2434
        %v4692 = vmul.f32 %v4689, %v2438
        %v4693 = vmul.f32 %v4689, %v2442
        %v4694 = vmul.f32 %v4689, %v2446
        %4699 = vrot.lane.b32.xlu0 %v4691, 36
        %v4700 = vpop.permute.xlu0 %4699
        %4701 = vrot.lane.b32.xlu0 %v4692, 36
        %v4702 = vpop.permute.xlu0 %4701
        %4703 = vrot.lane.b32.xlu0 %v4693, 36
        %v4704 = vpop.permute.xlu0 %4703
        %4705 = vrot.lane.b32.xlu0 %v4694, 36
        %v4706 = vpop.permute.xlu0 %4705
        %v4707 = vsel %vm4648, %v4700, %v4702
        %v4708 = vsel %vm4648, %v4702, %v4704
        %v4709 = vsel %vm4648, %v4704, %v4706
        %v4713 = vadd.f32 %v4596, %v4707
        %v4714 = vadd.f32 %v4597, %v4708
        %v4715 = vadd.f32 %v4598, %v4709
        %4716 = vset.pattern.permute.xlu0 99
        %4717 = vperm.xlu0 %4716, %v1840
        %v4718 = vpop.permute.xlu0 %4717
        %v4720 = vmul.f32 %v4718, %v2485
        %v4721 = vmul.f32 %v4718, %v2489
        %v4722 = vmul.f32 %v4718, %v2493
        %v4723 = vmul.f32 %v4718, %v2497
        %4728 = vrot.lane.b32.xlu0 %v4720, 36
        %v4729 = vpop.permute.xlu0 %4728
        %4730 = vrot.lane.b32.xlu0 %v4721, 36
        %v4731 = vpop.permute.xlu0 %4730
        %4732 = vrot.lane.b32.xlu0 %v4722, 36
        %v4733 = vpop.permute.xlu0 %4732
        %4734 = vrot.lane.b32.xlu0 %v4723, 36
        %v4735 = vpop.permute.xlu0 %4734
        %v4736 = vsel %vm4648, %v4729, %v4731
        %v4737 = vsel %vm4648, %v4731, %v4733
        %v4738 = vsel %vm4648, %v4733, %v4735
        %v4742 = vadd.f32 %v4625, %v4736
        %v4743 = vadd.f32 %v4626, %v4737
        %v4744 = vadd.f32 %v4627, %v4738
        %v4745 = vadd.f32 %v4655, %v4684
        %v4746 = vadd.f32 %v4656, %v4685
        %v4747 = vadd.f32 %v4657, %v4686
        %v4748 = vadd.f32 %v4745, %v4713
        %v4749 = vadd.f32 %v4746, %v4714
        %v4750 = vadd.f32 %v4747, %v4715
        %v4751 = vadd.f32 %v4748, %v4742
        %v4752 = vadd.f32 %v4749, %v4743
        %v4753 = vadd.f32 %v4750, %v4744
        %v4754 = vmax.f32 %v4751, 0.0
        %v4755 = vmax.f32 %v4752, 0.0
        %v4756 = vmax.f32 %v4753, 0.0
        %v4760 = vcombine.low %v4754, %v4755
        %4761 = vrot.lane.b32.xlu0 %v4760, 46
        %v4762 = vpop.permute.xlu0 %4761
        %4763 = vrot.lane.b32.xlu0 %v4756, 46
        %v4764 = vpop.permute.xlu0 %4763
        %v4765 = vrot.slane %v4762, 4
        %v4766 = vrot.slane %v4764, 4
        %v4767 = vsel %vm1803, %v4765, %v4762
        %v4768 = vsel %vm241, %v4765, %v4766
        %v4769 = vsel %vm1803, %v4768, %v4764
        %4772 = vst.msk [vmem:[#allocation2] sm:$0xff] %vm1834, %v4767
        %4773 = vst.msk [vmem:[#allocation2 + $0x8] sm:$0xff] %vm1837, %v4769
        %v4774 = vld [vmem:[#allocation2] sm:$0xf]
        %v4775 = vld [vmem:[%s214] sm:$0x1]
        %v4776 = vld [vmem:[%s214 + $0x10] sm:$0x1]
        %v4777 = vld [vmem:[%s214 + $0x20] sm:$0x1]
        %v4778 = vld [vmem:[%s214 + $0x30] sm:$0x1]
        %v4783 = vrot.slane %v4776, 7
        %v4784 = vsel %vm254, %v4783, %v4775
        %v4785 = vsel %vm256, %v4783, %v4784
        %v4786 = vrot.slane %v4777, 6
        %v4787 = vsel %vm259, %v4786, %v4785
        %v4788 = vsel %vm261, %v4786, %v4787
        %v4789 = vrot.slane %v4778, 5
        %v4790 = vsel %vm264, %v4789, %v4788
        %v4791 = vsel %vm266, %v4789, %v4790
        %4792 = vrot.lane.b32.xlu0 %v4791, 69
        %v4793 = vpop.permute.xlu0 %4792
        %v4795 = vadd.f32 %v4774, %v4793
        %v4798 = vunpack.c.l.s4 1966171168
        %v4799 = vunpack.c.0.s8 %v4798
        %v4800 = vlaneseq
        %v4801 = vshrl.u32 %v4800, 7
        %v4802 = vsub.s32 %v4799, %v4801
        %v4803 = vrot.slane %v4795, %v4802
        %v4804 = vcombine.high %v4803, %v4803
        %v4806 = vunpack.c.l.s4 1966171168
        %v4807 = vunpack.c.0.s8 %v4806
        %v4808 = vlaneseq
        %v4809 = vshrl.u32 %v4808, 7
        %v4810 = vsub.s32 %v4807, %v4809
        %v4811 = vrot.slane %v4803, %v4810
        %v4813 = vunpack.c.l.s4 1966171168
        %v4814 = vunpack.c.0.s8 %v4813
        %v4815 = vlaneseq
        %v4816 = vshrl.u32 %v4815, 7
        %v4817 = vsub.s32 %v4814, %v4816
        %v4818 = vrot.slane %v4804, %v4817
        %v4819 = vcombine.high %v4811, %v4811
        %v4820 = vcombine.high %v4818, %v4818
        %v4821 = vlaneseq
        %v4822 = vshrl.u32 %v4821, 7
        %v4823 = vsub.s32 0, %v4822
        %v4824 = vrot.slane %v4811, %v4823
        %v4825 = vlaneseq
        %v4826 = vshrl.u32 %v4825, 7
        %v4827 = vsub.s32 0, %v4826
        %v4828 = vrot.slane %v4818, %v4827
        %v4829 = vlaneseq
        %v4830 = vshrl.u32 %v4829, 7
        %v4831 = vsub.s32 0, %v4830
        %v4832 = vrot.slane %v4819, %v4831
        %v4833 = vlaneseq
        %v4834 = vshrl.u32 %v4833, 7
        %v4835 = vsub.s32 0, %v4834
        %v4836 = vrot.slane %v4820, %v4835
        %4837 = vrot.lane.b32.xlu0 %v4824, 59
        %v4838 = vpop.permute.xlu0 %4837
        %4839 = vrot.lane.b32.xlu0 %v4828, 59
        %v4840 = vpop.permute.xlu0 %4839
        %4841 = vrot.lane.b32.xlu0 %v4832, 59
        %v4842 = vpop.permute.xlu0 %4841
        %4843 = vrot.lane.b32.xlu0 %v4836, 59
        %v4844 = vpop.permute.xlu0 %4843
        %vm4849 = vcmask 122880
        %4850 = vst.msk [vmem:[%s238] sm:$0x1] %vm4849, %v4838
        %4851 = vst.msk [vmem:[%s238 + $0x10] sm:$0x1] %vm4849, %v4840
        %4852 = vst.msk [vmem:[%s238 + $0x20] sm:$0x1] %vm4849, %v4842
        %4853 = vst.msk [vmem:[%s238 + $0x30] sm:$0x1] %vm4849, %v4844
        %v4854 = vld [vmem:[#allocation2] sm:$0xf]
        %v4855 = vld [vmem:[%s214 + $0x1] sm:$0x1]
        %v4856 = vld [vmem:[%s214 + $0x11] sm:$0x1]
        %v4857 = vld [vmem:[%s214 + $0x21] sm:$0x1]
        %v4858 = vld [vmem:[%s214 + $0x31] sm:$0x1]
        %v4863 = vrot.slane %v4856, 7
        %v4864 = vsel %vm254, %v4863, %v4855
        %v4865 = vsel %vm256, %v4863, %v4864
        %v4866 = vrot.slane %v4857, 6
        %v4867 = vsel %vm259, %v4866, %v4865
        %v4868 = vsel %vm261, %v4866, %v4867
        %v4869 = vrot.slane %v4858, 5
        %v4870 = vsel %vm264, %v4869, %v4868
        %v4871 = vsel %vm266, %v4869, %v4870
        %4872 = vrot.lane.b32.xlu0 %v4871, 91
        %v4873 = vpop.permute.xlu0 %4872
        %v4875 = vadd.f32 %v4854, %v4873
        %v4878 = vunpack.c.l.s4 1966171168
        %v4879 = vunpack.c.0.s8 %v4878
        %v4880 = vlaneseq
        %v4881 = vshrl.u32 %v4880, 7
        %v4882 = vsub.s32 %v4879, %v4881
        %v4883 = vrot.slane %v4875, %v4882
        %v4884 = vcombine.high %v4883, %v4883
        %v4886 = vunpack.c.l.s4 1966171168
        %v4887 = vunpack.c.0.s8 %v4886
        %v4888 = vlaneseq
        %v4889 = vshrl.u32 %v4888, 7
        %v4890 = vsub.s32 %v4887, %v4889
        %v4891 = vrot.slane %v4883, %v4890
        %v4893 = vunpack.c.l.s4 1966171168
        %v4894 = vunpack.c.0.s8 %v4893
        %v4895 = vlaneseq
        %v4896 = vshrl.u32 %v4895, 7
        %v4897 = vsub.s32 %v4894, %v4896
        %v4898 = vrot.slane %v4884, %v4897
        %v4899 = vcombine.high %v4891, %v4891
        %v4900 = vcombine.high %v4898, %v4898
        %v4901 = vlaneseq
        %v4902 = vshrl.u32 %v4901, 7
        %v4903 = vsub.s32 0, %v4902
        %v4904 = vrot.slane %v4891, %v4903
        %v4905 = vlaneseq
        %v4906 = vshrl.u32 %v4905, 7
        %v4907 = vsub.s32 0, %v4906
        %v4908 = vrot.slane %v4898, %v4907
        %v4909 = vlaneseq
        %v4910 = vshrl.u32 %v4909, 7
        %v4911 = vsub.s32 0, %v4910
        %v4912 = vrot.slane %v4899, %v4911
        %v4913 = vlaneseq
        %v4914 = vshrl.u32 %v4913, 7
        %v4915 = vsub.s32 0, %v4914
        %v4916 = vrot.slane %v4900, %v4915
        %4917 = vrot.lane.b32.xlu0 %v4904, 37
        %v4918 = vpop.permute.xlu0 %4917
        %4919 = vrot.lane.b32.xlu0 %v4908, 37
        %v4920 = vpop.permute.xlu0 %4919
        %4921 = vrot.lane.b32.xlu0 %v4912, 37
        %v4922 = vpop.permute.xlu0 %4921
        %4923 = vrot.lane.b32.xlu0 %v4916, 37
        %v4924 = vpop.permute.xlu0 %4923
        %4929 = vst.msk [vmem:[%s238 + $0x1] sm:$0x1] %vm4849, %v4918
        %4930 = vst.msk [vmem:[%s238 + $0x11] sm:$0x1] %vm4849, %v4920
        %4931 = vst.msk [vmem:[%s238 + $0x21] sm:$0x1] %vm4849, %v4922
        %4932 = vst.msk [vmem:[%s238 + $0x31] sm:$0x1] %vm4849, %v4924
        %v4933 = vld [vmem:[#allocation2] sm:$0xff]
        %v4934 = vld [vmem:[%s214 + $0x2] sm:$0x1]
        %v4935 = vld [vmem:[%s214 + $0x12] sm:$0x1]
        %v4936 = vld [vmem:[%s214 + $0x22] sm:$0x1]
        %v4937 = vld [vmem:[%s214 + $0x32] sm:$0x1]
        %v4942 = vrot.slane %v4935, 7
        %v4943 = vsel %vm254, %v4942, %v4934
        %v4944 = vsel %vm256, %v4942, %v4943
        %v4945 = vrot.slane %v4936, 6
        %v4946 = vsel %vm259, %v4945, %v4944
        %v4947 = vsel %vm261, %v4945, %v4946
        %v4948 = vrot.slane %v4937, 5
        %v4949 = vsel %vm264, %v4948, %v4947
        %v4950 = vsel %vm266, %v4948, %v4949
        %4951 = vrot.lane.b32.xlu0 %v4950, 113
        %v4952 = vpop.permute.xlu0 %4951
        %v4953 = vrot.slane %v4952, 4
        %v4954 = vsel %vm315, %v4953, %v4952
        %v4956 = vadd.f32 %v4933, %v4954
        %v4959 = vunpack.c.l.s4 1966171168
        %v4960 = vunpack.c.0.s8 %v4959
        %v4961 = vlaneseq
        %v4962 = vshrl.u32 %v4961, 7
        %v4963 = vsub.s32 %v4960, %v4962
        %v4964 = vrot.slane %v4956, %v4963
        %v4965 = vcombine.high %v4964, %v4964
        %v4967 = vunpack.c.l.s4 1966171168
        %v4968 = vunpack.c.0.s8 %v4967
        %v4969 = vlaneseq
        %v4970 = vshrl.u32 %v4969, 7
        %v4971 = vsub.s32 %v4968, %v4970
        %v4972 = vrot.slane %v4964, %v4971
        %v4974 = vunpack.c.l.s4 1966171168
        %v4975 = vunpack.c.0.s8 %v4974
        %v4976 = vlaneseq
        %v4977 = vshrl.u32 %v4976, 7
        %v4978 = vsub.s32 %v4975, %v4977
        %v4979 = vrot.slane %v4965, %v4978
        %v4980 = vcombine.high %v4972, %v4972
        %v4981 = vcombine.high %v4979, %v4979
        %v4982 = vlaneseq
        %v4983 = vshrl.u32 %v4982, 7
        %v4984 = vsub.s32 0, %v4983
        %v4985 = vrot.slane %v4972, %v4984
        %v4986 = vlaneseq
        %v4987 = vshrl.u32 %v4986, 7
        %v4988 = vsub.s32 1, %v4987
        %v4989 = vrot.slane %v4972, %v4988
        %v4990 = vlaneseq
        %v4991 = vshrl.u32 %v4990, 7
        %v4992 = vsub.s32 0, %v4991
        %v4993 = vrot.slane %v4979, %v4992
        %v4994 = vlaneseq
        %v4995 = vshrl.u32 %v4994, 7
        %v4996 = vsub.s32 1, %v4995
        %v4997 = vrot.slane %v4979, %v4996
        %v4998 = vlaneseq
        %v4999 = vshrl.u32 %v4998, 7
        %v5000 = vsub.s32 0, %v4999
        %v5001 = vrot.slane %v4980, %v5000
        %v5002 = vlaneseq
        %v5003 = vshrl.u32 %v5002, 7
        %v5004 = vsub.s32 1, %v5003
        %v5005 = vrot.slane %v4980, %v5004
        %v5006 = vlaneseq
        %v5007 = vshrl.u32 %v5006, 7
        %v5008 = vsub.s32 0, %v5007
        %v5009 = vrot.slane %v4981, %v5008
        %v5010 = vlaneseq
        %v5011 = vshrl.u32 %v5010, 7
        %v5012 = vsub.s32 1, %v5011
        %v5013 = vrot.slane %v4981, %v5012
        %5014 = vrot.lane.b32.xlu0 %v4985, 15
        %v5015 = vpop.permute.xlu0 %5014
        %5016 = vrot.lane.b32.xlu0 %v4989, 15
        %v5017 = vpop.permute.xlu0 %5016
        %5018 = vrot.lane.b32.xlu0 %v4993, 15
        %v5019 = vpop.permute.xlu0 %5018
        %5020 = vrot.lane.b32.xlu0 %v4997, 15
        %v5021 = vpop.permute.xlu0 %5020
        %5022 = vrot.lane.b32.xlu0 %v5001, 15
        %v5023 = vpop.permute.xlu0 %5022
        %5024 = vrot.lane.b32.xlu0 %v5005, 15
        %v5025 = vpop.permute.xlu0 %5024
        %5026 = vrot.lane.b32.xlu0 %v5009, 15
        %v5027 = vpop.permute.xlu0 %5026
        %5028 = vrot.lane.b32.xlu0 %v5013, 15
        %v5029 = vpop.permute.xlu0 %5028
        %vm5030 = vcmask 121856
        %v5031 = vsel %vm5030, %v5015, %v5017
        %v5032 = vsel %vm5030, %v5019, %v5021
        %v5033 = vsel %vm5030, %v5023, %v5025
        %v5034 = vsel %vm5030, %v5027, %v5029
        %5039 = vst.msk [vmem:[%s238 + $0x2] sm:$0x1] %vm4849, %v5031
        %5040 = vst.msk [vmem:[%s238 + $0x12] sm:$0x1] %vm4849, %v5032
        %5041 = vst.msk [vmem:[%s238 + $0x22] sm:$0x1] %vm4849, %v5033
        %5042 = vst.msk [vmem:[%s238 + $0x32] sm:$0x1] %vm4849, %v5034
        %v5043 = vld [vmem:[#allocation2 + $0x4] sm:$0xf]
        %v5044 = vld [vmem:[%s214 + $0x3] sm:$0x1]
        %v5045 = vld [vmem:[%s214 + $0x13] sm:$0x1]
        %v5046 = vld [vmem:[%s214 + $0x23] sm:$0x1]
        %v5047 = vld [vmem:[%s214 + $0x33] sm:$0x1]
        %v5052 = vrot.slane %v5045, 7
        %v5053 = vsel %vm254, %v5052, %v5044
        %v5054 = vsel %vm256, %v5052, %v5053
        %v5055 = vrot.slane %v5046, 6
        %v5056 = vsel %vm259, %v5055, %v5054
        %v5057 = vsel %vm261, %v5055, %v5056
        %v5058 = vrot.slane %v5047, 5
        %v5059 = vsel %vm264, %v5058, %v5057
        %v5060 = vsel %vm266, %v5058, %v5059
        %5061 = vrot.lane.b32.xlu0 %v5060, 7
        %v5062 = vpop.permute.xlu0 %5061
        %v5064 = vadd.f32 %v5043, %v5062
        %v5067 = vunpack.c.l.s4 1966171168
        %v5068 = vunpack.c.0.s8 %v5067
        %v5069 = vlaneseq
        %v5070 = vshrl.u32 %v5069, 7
        %v5071 = vsub.s32 %v5068, %v5070
        %v5072 = vrot.slane %v5064, %v5071
        %v5073 = vcombine.high %v5072, %v5072
        %v5075 = vunpack.c.l.s4 1966171168
        %v5076 = vunpack.c.0.s8 %v5075
        %v5077 = vlaneseq
        %v5078 = vshrl.u32 %v5077, 7
        %v5079 = vsub.s32 %v5076, %v5078
        %v5080 = vrot.slane %v5072, %v5079
        %v5082 = vunpack.c.l.s4 1966171168
        %v5083 = vunpack.c.0.s8 %v5082
        %v5084 = vlaneseq
        %v5085 = vshrl.u32 %v5084, 7
        %v5086 = vsub.s32 %v5083, %v5085
        %v5087 = vrot.slane %v5073, %v5086
        %v5088 = vcombine.high %v5080, %v5080
        %v5089 = vcombine.high %v5087, %v5087
        %v5090 = vlaneseq
        %v5091 = vshrl.u32 %v5090, 7
        %v5092 = vsub.s32 0, %v5091
        %v5093 = vrot.slane %v5080, %v5092
        %v5094 = vlaneseq
        %v5095 = vshrl.u32 %v5094, 7
        %v5096 = vsub.s32 0, %v5095
        %v5097 = vrot.slane %v5087, %v5096
        %v5098 = vlaneseq
        %v5099 = vshrl.u32 %v5098, 7
        %v5100 = vsub.s32 0, %v5099
        %v5101 = vrot.slane %v5088, %v5100
        %v5102 = vlaneseq
        %v5103 = vshrl.u32 %v5102, 7
        %v5104 = vsub.s32 0, %v5103
        %v5105 = vrot.slane %v5089, %v5104
        %5106 = vrot.lane.b32.xlu0 %v5093, 121
        %v5107 = vpop.permute.xlu0 %5106
        %5108 = vrot.lane.b32.xlu0 %v5097, 121
        %v5109 = vpop.permute.xlu0 %5108
        %5110 = vrot.lane.b32.xlu0 %v5101, 121
        %v5111 = vpop.permute.xlu0 %5110
        %5112 = vrot.lane.b32.xlu0 %v5105, 121
        %v5113 = vpop.permute.xlu0 %5112
        %5118 = vst.msk [vmem:[%s238 + $0x3] sm:$0x1] %vm4849, %v5107
        %5119 = vst.msk [vmem:[%s238 + $0x13] sm:$0x1] %vm4849, %v5109
        %5120 = vst.msk [vmem:[%s238 + $0x23] sm:$0x1] %vm4849, %v5111
        %5121 = vst.msk [vmem:[%s238 + $0x33] sm:$0x1] %vm4849, %v5113
        %v5122 = vld [vmem:[#allocation2 + $0x4] sm:$0xf]
        %v5123 = vld [vmem:[%s214 + $0x4] sm:$0x1]
        %v5124 = vld [vmem:[%s214 + $0x14] sm:$0x1]
        %v5125 = vld [vmem:[%s214 + $0x24] sm:$0x1]
        %v5126 = vld [vmem:[%s214 + $0x34] sm:$0x1]
        %v5131 = vrot.slane %v5124, 7
        %v5132 = vsel %vm254, %v5131, %v5123
        %v5133 = vsel %vm256, %v5131, %v5132
        %v5134 = vrot.slane %v5125, 6
        %v5135 = vsel %vm259, %v5134, %v5133
        %v5136 = vsel %vm261, %v5134, %v5135
        %v5137 = vrot.slane %v5126, 5
        %v5138 = vsel %vm264, %v5137, %v5136
        %v5139 = vsel %vm266, %v5137, %v5138
        %5140 = vrot.lane.b32.xlu0 %v5139, 29
        %v5141 = vpop.permute.xlu0 %5140
        %v5143 = vadd.f32 %v5122, %v5141
        %v5146 = vunpack.c.l.s4 1966171168
        %v5147 = vunpack.c.0.s8 %v5146
        %v5148 = vlaneseq
        %v5149 = vshrl.u32 %v5148, 7
        %v5150 = vsub.s32 %v5147, %v5149
        %v5151 = vrot.slane %v5143, %v5150
        %v5152 = vcombine.high %v5151, %v5151
        %v5154 = vunpack.c.l.s4 1966171168
        %v5155 = vunpack.c.0.s8 %v5154
        %v5156 = vlaneseq
        %v5157 = vshrl.u32 %v5156, 7
        %v5158 = vsub.s32 %v5155, %v5157
        %v5159 = vrot.slane %v5151, %v5158
        %v5161 = vunpack.c.l.s4 1966171168
        %v5162 = vunpack.c.0.s8 %v5161
        %v5163 = vlaneseq
        %v5164 = vshrl.u32 %v5163, 7
        %v5165 = vsub.s32 %v5162, %v5164
        %v5166 = vrot.slane %v5152, %v5165
        %v5167 = vcombine.high %v5159, %v5159
        %v5168 = vcombine.high %v5166, %v5166
        %v5169 = vlaneseq
        %v5170 = vshrl.u32 %v5169, 7
        %v5171 = vsub.s32 0, %v5170
        %v5172 = vrot.slane %v5159, %v5171
        %v5173 = vlaneseq
        %v5174 = vshrl.u32 %v5173, 7
        %v5175 = vsub.s32 0, %v5174
        %v5176 = vrot.slane %v5166, %v5175
        %v5177 = vlaneseq
        %v5178 = vshrl.u32 %v5177, 7
        %v5179 = vsub.s32 0, %v5178
        %v5180 = vrot.slane %v5167, %v5179
        %v5181 = vlaneseq
        %v5182 = vshrl.u32 %v5181, 7
        %v5183 = vsub.s32 0, %v5182
        %v5184 = vrot.slane %v5168, %v5183
        %5185 = vrot.lane.b32.xlu0 %v5172, 99
        %v5186 = vpop.permute.xlu0 %5185
        %5187 = vrot.lane.b32.xlu0 %v5176, 99
        %v5188 = vpop.permute.xlu0 %5187
        %5189 = vrot.lane.b32.xlu0 %v5180, 99
        %v5190 = vpop.permute.xlu0 %5189
        %5191 = vrot.lane.b32.xlu0 %v5184, 99
        %v5192 = vpop.permute.xlu0 %5191
        %5197 = vst.msk [vmem:[%s238 + $0x4] sm:$0x1] %vm4849, %v5186
        %5198 = vst.msk [vmem:[%s238 + $0x14] sm:$0x1] %vm4849, %v5188
        %5199 = vst.msk [vmem:[%s238 + $0x24] sm:$0x1] %vm4849, %v5190
        %5200 = vst.msk [vmem:[%s238 + $0x34] sm:$0x1] %vm4849, %v5192
        %v5201 = vld [vmem:[#allocation2 + $0x4] sm:$0xf]
        %v5202 = vld [vmem:[%s214 + $0x5] sm:$0x1]
        %v5203 = vld [vmem:[%s214 + $0x15] sm:$0x1]
        %v5204 = vld [vmem:[%s214 + $0x25] sm:$0x1]
        %v5205 = vld [vmem:[%s214 + $0x35] sm:$0x1]
        %v5210 = vrot.slane %v5203, 7
        %v5211 = vsel %vm254, %v5210, %v5202
        %v5212 = vsel %vm256, %v5210, %v5211
        %v5213 = vrot.slane %v5204, 6
        %v5214 = vsel %vm259, %v5213, %v5212
        %v5215 = vsel %vm261, %v5213, %v5214
        %v5216 = vrot.slane %v5205, 5
        %v5217 = vsel %vm264, %v5216, %v5215
        %v5218 = vsel %vm266, %v5216, %v5217
        %5219 = vrot.lane.b32.xlu0 %v5218, 51
        %v5220 = vpop.permute.xlu0 %5219
        %v5222 = vadd.f32 %v5201, %v5220
        %v5225 = vunpack.c.l.s4 1966171168
        %v5226 = vunpack.c.0.s8 %v5225
        %v5227 = vlaneseq
        %v5228 = vshrl.u32 %v5227, 7
        %v5229 = vsub.s32 %v5226, %v5228
        %v5230 = vrot.slane %v5222, %v5229
        %v5231 = vcombine.high %v5230, %v5230
        %v5233 = vunpack.c.l.s4 1966171168
        %v5234 = vunpack.c.0.s8 %v5233
        %v5235 = vlaneseq
        %v5236 = vshrl.u32 %v5235, 7
        %v5237 = vsub.s32 %v5234, %v5236
        %v5238 = vrot.slane %v5230, %v5237
        %v5240 = vunpack.c.l.s4 1966171168
        %v5241 = vunpack.c.0.s8 %v5240
        %v5242 = vlaneseq
        %v5243 = vshrl.u32 %v5242, 7
        %v5244 = vsub.s32 %v5241, %v5243
        %v5245 = vrot.slane %v5231, %v5244
        %v5246 = vcombine.high %v5238, %v5238
        %v5247 = vcombine.high %v5245, %v5245
        %v5248 = vlaneseq
        %v5249 = vshrl.u32 %v5248, 7
        %v5250 = vsub.s32 0, %v5249
        %v5251 = vrot.slane %v5238, %v5250
        %v5252 = vlaneseq
        %v5253 = vshrl.u32 %v5252, 7
        %v5254 = vsub.s32 0, %v5253
        %v5255 = vrot.slane %v5245, %v5254
        %v5256 = vlaneseq
        %v5257 = vshrl.u32 %v5256, 7
        %v5258 = vsub.s32 0, %v5257
        %v5259 = vrot.slane %v5246, %v5258
        %v5260 = vlaneseq
        %v5261 = vshrl.u32 %v5260, 7
        %v5262 = vsub.s32 0, %v5261
        %v5263 = vrot.slane %v5247, %v5262
        %5264 = vrot.lane.b32.xlu0 %v5251, 77
        %v5265 = vpop.permute.xlu0 %5264
        %5266 = vrot.lane.b32.xlu0 %v5255, 77
        %v5267 = vpop.permute.xlu0 %5266
        %5268 = vrot.lane.b32.xlu0 %v5259, 77
        %v5269 = vpop.permute.xlu0 %5268
        %5270 = vrot.lane.b32.xlu0 %v5263, 77
        %v5271 = vpop.permute.xlu0 %5270
        %5276 = vst.msk [vmem:[%s238 + $0x5] sm:$0x1] %vm4849, %v5265
        %5277 = vst.msk [vmem:[%s238 + $0x15] sm:$0x1] %vm4849, %v5267
        %5278 = vst.msk [vmem:[%s238 + $0x25] sm:$0x1] %vm4849, %v5269
        %5279 = vst.msk [vmem:[%s238 + $0x35] sm:$0x1] %vm4849, %v5271
        %v5280 = vld [vmem:[#allocation2 + $0x4] sm:$0xf]
        %v5281 = vld [vmem:[%s214 + $0x6] sm:$0x1]
        %v5282 = vld [vmem:[%s214 + $0x16] sm:$0x1]
        %v5283 = vld [vmem:[%s214 + $0x26] sm:$0x1]
        %v5284 = vld [vmem:[%s214 + $0x36] sm:$0x1]
        %v5289 = vrot.slane %v5282, 7
        %v5290 = vsel %vm254, %v5289, %v5281
        %v5291 = vsel %vm256, %v5289, %v5290
        %v5292 = vrot.slane %v5283, 6
        %v5293 = vsel %vm259, %v5292, %v5291
        %v5294 = vsel %vm261, %v5292, %v5293
        %v5295 = vrot.slane %v5284, 5
        %v5296 = vsel %vm264, %v5295, %v5294
        %v5297 = vsel %vm266, %v5295, %v5296
        %5298 = vrot.lane.b32.xlu0 %v5297, 73
        %v5299 = vpop.permute.xlu0 %5298
        %v5301 = vadd.f32 %v5280, %v5299
        %v5304 = vunpack.c.l.s4 1966171168
        %v5305 = vunpack.c.0.s8 %v5304
        %v5306 = vlaneseq
        %v5307 = vshrl.u32 %v5306, 7
        %v5308 = vsub.s32 %v5305, %v5307
        %v5309 = vrot.slane %v5301, %v5308
        %v5310 = vcombine.high %v5309, %v5309
        %v5312 = vunpack.c.l.s4 1966171168
        %v5313 = vunpack.c.0.s8 %v5312
        %v5314 = vlaneseq
        %v5315 = vshrl.u32 %v5314, 7
        %v5316 = vsub.s32 %v5313, %v5315
        %v5317 = vrot.slane %v5309, %v5316
        %v5319 = vunpack.c.l.s4 1966171168
        %v5320 = vunpack.c.0.s8 %v5319
        %v5321 = vlaneseq
        %v5322 = vshrl.u32 %v5321, 7
        %v5323 = vsub.s32 %v5320, %v5322
        %v5324 = vrot.slane %v5310, %v5323
        %v5325 = vcombine.high %v5317, %v5317
        %v5326 = vcombine.high %v5324, %v5324
        %v5327 = vlaneseq
        %v5328 = vshrl.u32 %v5327, 7
        %v5329 = vsub.s32 0, %v5328
        %v5330 = vrot.slane %v5317, %v5329
        %v5331 = vlaneseq
        %v5332 = vshrl.u32 %v5331, 7
        %v5333 = vsub.s32 0, %v5332
        %v5334 = vrot.slane %v5324, %v5333
        %v5335 = vlaneseq
        %v5336 = vshrl.u32 %v5335, 7
        %v5337 = vsub.s32 0, %v5336
        %v5338 = vrot.slane %v5325, %v5337
        %v5339 = vlaneseq
        %v5340 = vshrl.u32 %v5339, 7
        %v5341 = vsub.s32 0, %v5340
        %v5342 = vrot.slane %v5326, %v5341
        %5343 = vrot.lane.b32.xlu0 %v5330, 55
        %v5344 = vpop.permute.xlu0 %5343
        %5345 = vrot.lane.b32.xlu0 %v5334, 55
        %v5346 = vpop.permute.xlu0 %5345
        %5347 = vrot.lane.b32.xlu0 %v5338, 55
        %v5348 = vpop.permute.xlu0 %5347
        %5349 = vrot.lane.b32.xlu0 %v5342, 55
        %v5350 = vpop.permute.xlu0 %5349
        %5355 = vst.msk [vmem:[%s238 + $0x6] sm:$0x1] %vm4849, %v5344
        %5356 = vst.msk [vmem:[%s238 + $0x16] sm:$0x1] %vm4849, %v5346
        %5357 = vst.msk [vmem:[%s238 + $0x26] sm:$0x1] %vm4849, %v5348
        %5358 = vst.msk [vmem:[%s238 + $0x36] sm:$0x1] %vm4849, %v5350
        %v5359 = vld [vmem:[#allocation2 + $0x4] sm:$0xf]
        %v5360 = vld [vmem:[%s214 + $0x7] sm:$0x1]
        %v5361 = vld [vmem:[%s214 + $0x17] sm:$0x1]
        %v5362 = vld [vmem:[%s214 + $0x27] sm:$0x1]
        %v5363 = vld [vmem:[%s214 + $0x37] sm:$0x1]
        %v5368 = vrot.slane %v5361, 7
        %v5369 = vsel %vm254, %v5368, %v5360
        %v5370 = vsel %vm256, %v5368, %v5369
        %v5371 = vrot.slane %v5362, 6
        %v5372 = vsel %vm259, %v5371, %v5370
        %v5373 = vsel %vm261, %v5371, %v5372
        %v5374 = vrot.slane %v5363, 5
        %v5375 = vsel %vm264, %v5374, %v5373
        %v5376 = vsel %vm266, %v5374, %v5375
        %5377 = vrot.lane.b32.xlu0 %v5376, 95
        %v5378 = vpop.permute.xlu0 %5377
        %v5380 = vadd.f32 %v5359, %v5378
        %v5383 = vunpack.c.l.s4 1966171168
        %v5384 = vunpack.c.0.s8 %v5383
        %v5385 = vlaneseq
        %v5386 = vshrl.u32 %v5385, 7
        %v5387 = vsub.s32 %v5384, %v5386
        %v5388 = vrot.slane %v5380, %v5387
        %v5389 = vcombine.high %v5388, %v5388
        %v5391 = vunpack.c.l.s4 1966171168
        %v5392 = vunpack.c.0.s8 %v5391
        %v5393 = vlaneseq
        %v5394 = vshrl.u32 %v5393, 7
        %v5395 = vsub.s32 %v5392, %v5394
        %v5396 = vrot.slane %v5388, %v5395
        %v5398 = vunpack.c.l.s4 1966171168
        %v5399 = vunpack.c.0.s8 %v5398
        %v5400 = vlaneseq
        %v5401 = vshrl.u32 %v5400, 7
        %v5402 = vsub.s32 %v5399, %v5401
        %v5403 = vrot.slane %v5389, %v5402
        %v5404 = vcombine.high %v5396, %v5396
        %v5405 = vcombine.high %v5403, %v5403
        %v5406 = vlaneseq
        %v5407 = vshrl.u32 %v5406, 7
        %v5408 = vsub.s32 0, %v5407
        %v5409 = vrot.slane %v5396, %v5408
        %v5410 = vlaneseq
        %v5411 = vshrl.u32 %v5410, 7
        %v5412 = vsub.s32 0, %v5411
        %v5413 = vrot.slane %v5403, %v5412
        %v5414 = vlaneseq
        %v5415 = vshrl.u32 %v5414, 7
        %v5416 = vsub.s32 0, %v5415
        %v5417 = vrot.slane %v5404, %v5416
        %v5418 = vlaneseq
        %v5419 = vshrl.u32 %v5418, 7
        %v5420 = vsub.s32 0, %v5419
        %v5421 = vrot.slane %v5405, %v5420
        %5422 = vrot.lane.b32.xlu0 %v5409, 33
        %v5423 = vpop.permute.xlu0 %5422
        %5424 = vrot.lane.b32.xlu0 %v5413, 33
        %v5425 = vpop.permute.xlu0 %5424
        %5426 = vrot.lane.b32.xlu0 %v5417, 33
        %v5427 = vpop.permute.xlu0 %5426
        %5428 = vrot.lane.b32.xlu0 %v5421, 33
        %v5429 = vpop.permute.xlu0 %5428
        %5434 = vst.msk [vmem:[%s238 + $0x7] sm:$0x1] %vm4849, %v5423
        %5435 = vst.msk [vmem:[%s238 + $0x17] sm:$0x1] %vm4849, %v5425
        %5436 = vst.msk [vmem:[%s238 + $0x27] sm:$0x1] %vm4849, %v5427
        %5437 = vst.msk [vmem:[%s238 + $0x37] sm:$0x1] %vm4849, %v5429
        %v5438 = vld [vmem:[#allocation2 + $0x4] sm:$0xff]
        %v5439 = vld [vmem:[%s214 + $0x8] sm:$0x1]
        %v5440 = vld [vmem:[%s214 + $0x18] sm:$0x1]
        %v5441 = vld [vmem:[%s214 + $0x28] sm:$0x1]
        %v5442 = vld [vmem:[%s214 + $0x38] sm:$0x1]
        %v5447 = vrot.slane %v5440, 7
        %v5448 = vsel %vm254, %v5447, %v5439
        %v5449 = vsel %vm256, %v5447, %v5448
        %v5450 = vrot.slane %v5441, 6
        %v5451 = vsel %vm259, %v5450, %v5449
        %v5452 = vsel %vm261, %v5450, %v5451
        %v5453 = vrot.slane %v5442, 5
        %v5454 = vsel %vm264, %v5453, %v5452
        %v5455 = vsel %vm266, %v5453, %v5454
        %5456 = vrot.lane.b32.xlu0 %v5455, 117
        %v5457 = vpop.permute.xlu0 %5456
        %v5458 = vrot.slane %v5457, 4
        %v5459 = vsel %vm452, %v5458, %v5457
        %v5461 = vadd.f32 %v5438, %v5459
        %v5464 = vunpack.c.l.s4 1966171168
        %v5465 = vunpack.c.0.s8 %v5464
        %v5466 = vlaneseq
        %v5467 = vshrl.u32 %v5466, 7
        %v5468 = vsub.s32 %v5465, %v5467
        %v5469 = vrot.slane %v5461, %v5468
        %v5470 = vcombine.high %v5469, %v5469
        %v5472 = vunpack.c.l.s4 1966171168
        %v5473 = vunpack.c.0.s8 %v5472
        %v5474 = vlaneseq
        %v5475 = vshrl.u32 %v5474, 7
        %v5476 = vsub.s32 %v5473, %v5475
        %v5477 = vrot.slane %v5469, %v5476
        %v5479 = vunpack.c.l.s4 1966171168
        %v5480 = vunpack.c.0.s8 %v5479
        %v5481 = vlaneseq
        %v5482 = vshrl.u32 %v5481, 7
        %v5483 = vsub.s32 %v5480, %v5482
        %v5484 = vrot.slane %v5470, %v5483
        %v5485 = vcombine.high %v5477, %v5477
        %v5486 = vcombine.high %v5484, %v5484
        %v5487 = vlaneseq
        %v5488 = vshrl.u32 %v5487, 7
        %v5489 = vsub.s32 0, %v5488
        %v5490 = vrot.slane %v5477, %v5489
        %v5491 = vlaneseq
        %v5492 = vshrl.u32 %v5491, 7
        %v5493 = vsub.s32 1, %v5492
        %v5494 = vrot.slane %v5477, %v5493
        %v5495 = vlaneseq
        %v5496 = vshrl.u32 %v5495, 7
        %v5497 = vsub.s32 0, %v5496
        %v5498 = vrot.slane %v5484, %v5497
        %v5499 = vlaneseq
        %v5500 = vshrl.u32 %v5499, 7
        %v5501 = vsub.s32 1, %v5500
        %v5502 = vrot.slane %v5484, %v5501
        %v5503 = vlaneseq
        %v5504 = vshrl.u32 %v5503, 7
        %v5505 = vsub.s32 0, %v5504
        %v5506 = vrot.slane %v5485, %v5505
        %v5507 = vlaneseq
        %v5508 = vshrl.u32 %v5507, 7
        %v5509 = vsub.s32 1, %v5508
        %v5510 = vrot.slane %v5485, %v5509
        %v5511 = vlaneseq
        %v5512 = vshrl.u32 %v5511, 7
        %v5513 = vsub.s32 0, %v5512
        %v5514 = vrot.slane %v5486, %v5513
        %v5515 = vlaneseq
        %v5516 = vshrl.u32 %v5515, 7
        %v5517 = vsub.s32 1, %v5516
        %v5518 = vrot.slane %v5486, %v5517
        %5519 = vrot.lane.b32.xlu0 %v5490, 11
        %v5520 = vpop.permute.xlu0 %5519
        %5521 = vrot.lane.b32.xlu0 %v5494, 11
        %v5522 = vpop.permute.xlu0 %5521
        %5523 = vrot.lane.b32.xlu0 %v5498, 11
        %v5524 = vpop.permute.xlu0 %5523
        %5525 = vrot.lane.b32.xlu0 %v5502, 11
        %v5526 = vpop.permute.xlu0 %5525
        %5527 = vrot.lane.b32.xlu0 %v5506, 11
        %v5528 = vpop.permute.xlu0 %5527
        %5529 = vrot.lane.b32.xlu0 %v5510, 11
        %v5530 = vpop.permute.xlu0 %5529
        %5531 = vrot.lane.b32.xlu0 %v5514, 11
        %v5532 = vpop.permute.xlu0 %5531
        %5533 = vrot.lane.b32.xlu0 %v5518, 11
        %v5534 = vpop.permute.xlu0 %5533
        %vm5535 = vcmask 89088
        %v5536 = vsel %vm5535, %v5520, %v5522
        %v5537 = vsel %vm5535, %v5524, %v5526
        %v5538 = vsel %vm5535, %v5528, %v5530
        %v5539 = vsel %vm5535, %v5532, %v5534
        %5544 = vst.msk [vmem:[%s238 + $0x8] sm:$0x1] %vm4849, %v5536
        %5545 = vst.msk [vmem:[%s238 + $0x18] sm:$0x1] %vm4849, %v5537
        %5546 = vst.msk [vmem:[%s238 + $0x28] sm:$0x1] %vm4849, %v5538
        %5547 = vst.msk [vmem:[%s238 + $0x38] sm:$0x1] %vm4849, %v5539
        %v5548 = vld [vmem:[#allocation2 + $0x8] sm:$0xf]
        %v5549 = vld [vmem:[%s214 + $0x9] sm:$0x1]
        %v5550 = vld [vmem:[%s214 + $0x19] sm:$0x1]
        %v5551 = vld [vmem:[%s214 + $0x29] sm:$0x1]
        %v5552 = vld [vmem:[%s214 + $0x39] sm:$0x1]
        %v5557 = vrot.slane %v5550, 7
        %v5558 = vsel %vm254, %v5557, %v5549
        %v5559 = vsel %vm256, %v5557, %v5558
        %v5560 = vrot.slane %v5551, 6
        %v5561 = vsel %vm259, %v5560, %v5559
        %v5562 = vsel %vm261, %v5560, %v5561
        %v5563 = vrot.slane %v5552, 5
        %v5564 = vsel %vm264, %v5563, %v5562
        %v5565 = vsel %vm266, %v5563, %v5564
        %5566 = vrot.lane.b32.xlu0 %v5565, 11
        %v5567 = vpop.permute.xlu0 %5566
        %v5569 = vadd.f32 %v5548, %v5567
        %v5572 = vunpack.c.l.s4 1966171168
        %v5573 = vunpack.c.0.s8 %v5572
        %v5574 = vlaneseq
        %v5575 = vshrl.u32 %v5574, 7
        %v5576 = vsub.s32 %v5573, %v5575
        %v5577 = vrot.slane %v5569, %v5576
        %v5578 = vcombine.high %v5577, %v5577
        %v5580 = vunpack.c.l.s4 1966171168
        %v5581 = vunpack.c.0.s8 %v5580
        %v5582 = vlaneseq
        %v5583 = vshrl.u32 %v5582, 7
        %v5584 = vsub.s32 %v5581, %v5583
        %v5585 = vrot.slane %v5577, %v5584
        %v5587 = vunpack.c.l.s4 1966171168
        %v5588 = vunpack.c.0.s8 %v5587
        %v5589 = vlaneseq
        %v5590 = vshrl.u32 %v5589, 7
        %v5591 = vsub.s32 %v5588, %v5590
        %v5592 = vrot.slane %v5578, %v5591
        %v5593 = vcombine.high %v5585, %v5585
        %v5594 = vcombine.high %v5592, %v5592
        %v5595 = vlaneseq
        %v5596 = vshrl.u32 %v5595, 7
        %v5597 = vsub.s32 0, %v5596
        %v5598 = vrot.slane %v5585, %v5597
        %v5599 = vlaneseq
        %v5600 = vshrl.u32 %v5599, 7
        %v5601 = vsub.s32 0, %v5600
        %v5602 = vrot.slane %v5592, %v5601
        %v5603 = vlaneseq
        %v5604 = vshrl.u32 %v5603, 7
        %v5605 = vsub.s32 0, %v5604
        %v5606 = vrot.slane %v5593, %v5605
        %v5607 = vlaneseq
        %v5608 = vshrl.u32 %v5607, 7
        %v5609 = vsub.s32 0, %v5608
        %v5610 = vrot.slane %v5594, %v5609
        %5611 = vrot.lane.b32.xlu0 %v5598, 117
        %v5612 = vpop.permute.xlu0 %5611
        %5613 = vrot.lane.b32.xlu0 %v5602, 117
        %v5614 = vpop.permute.xlu0 %5613
        %5615 = vrot.lane.b32.xlu0 %v5606, 117
        %v5616 = vpop.permute.xlu0 %5615
        %5617 = vrot.lane.b32.xlu0 %v5610, 117
        %v5618 = vpop.permute.xlu0 %5617
        %5623 = vst.msk [vmem:[%s238 + $0x9] sm:$0x1] %vm4849, %v5612
        %5624 = vst.msk [vmem:[%s238 + $0x19] sm:$0x1] %vm4849, %v5614
        %5625 = vst.msk [vmem:[%s238 + $0x29] sm:$0x1] %vm4849, %v5616
        %5626 = vst.msk [vmem:[%s238 + $0x39] sm:$0x1] %vm4849, %v5618
        %v5627 = vld [vmem:[#allocation2 + $0x8] sm:$0xf]
        %v5628 = vld [vmem:[%s214 + $0xa] sm:$0x1]
        %v5629 = vld [vmem:[%s214 + $0x1a] sm:$0x1]
        %v5630 = vld [vmem:[%s214 + $0x2a] sm:$0x1]
        %v5631 = vld [vmem:[%s214 + $0x3a] sm:$0x1]
        %v5636 = vrot.slane %v5629, 7
        %v5637 = vsel %vm254, %v5636, %v5628
        %v5638 = vsel %vm256, %v5636, %v5637
        %v5639 = vrot.slane %v5630, 6
        %v5640 = vsel %vm259, %v5639, %v5638
        %v5641 = vsel %vm261, %v5639, %v5640
        %v5642 = vrot.slane %v5631, 5
        %v5643 = vsel %vm264, %v5642, %v5641
        %v5644 = vsel %vm266, %v5642, %v5643
        %5645 = vrot.lane.b32.xlu0 %v5644, 33
        %v5646 = vpop.permute.xlu0 %5645
        %v5648 = vadd.f32 %v5627, %v5646
        %v5651 = vunpack.c.l.s4 1966171168
        %v5652 = vunpack.c.0.s8 %v5651
        %v5653 = vlaneseq
        %v5654 = vshrl.u32 %v5653, 7
        %v5655 = vsub.s32 %v5652, %v5654
        %v5656 = vrot.slane %v5648, %v5655
        %v5657 = vcombine.high %v5656, %v5656
        %v5659 = vunpack.c.l.s4 1966171168
        %v5660 = vunpack.c.0.s8 %v5659
        %v5661 = vlaneseq
        %v5662 = vshrl.u32 %v5661, 7
        %v5663 = vsub.s32 %v5660, %v5662
        %v5664 = vrot.slane %v5656, %v5663
        %v5666 = vunpack.c.l.s4 1966171168
        %v5667 = vunpack.c.0.s8 %v5666
        %v5668 = vlaneseq
        %v5669 = vshrl.u32 %v5668, 7
        %v5670 = vsub.s32 %v5667, %v5669
        %v5671 = vrot.slane %v5657, %v5670
        %v5672 = vcombine.high %v5664, %v5664
        %v5673 = vcombine.high %v5671, %v5671
        %v5674 = vlaneseq
        %v5675 = vshrl.u32 %v5674, 7
        %v5676 = vsub.s32 0, %v5675
        %v5677 = vrot.slane %v5664, %v5676
        %v5678 = vlaneseq
        %v5679 = vshrl.u32 %v5678, 7
        %v5680 = vsub.s32 0, %v5679
        %v5681 = vrot.slane %v5671, %v5680
        %v5682 = vlaneseq
        %v5683 = vshrl.u32 %v5682, 7
        %v5684 = vsub.s32 0, %v5683
        %v5685 = vrot.slane %v5672, %v5684
        %v5686 = vlaneseq
        %v5687 = vshrl.u32 %v5686, 7
        %v5688 = vsub.s32 0, %v5687
        %v5689 = vrot.slane %v5673, %v5688
        %5690 = vrot.lane.b32.xlu0 %v5677, 95
        %v5691 = vpop.permute.xlu0 %5690
        %5692 = vrot.lane.b32.xlu0 %v5681, 95
        %v5693 = vpop.permute.xlu0 %5692
        %5694 = vrot.lane.b32.xlu0 %v5685, 95
        %v5695 = vpop.permute.xlu0 %5694
        %5696 = vrot.lane.b32.xlu0 %v5689, 95
        %v5697 = vpop.permute.xlu0 %5696
        %5702 = vst.msk [vmem:[%s238 + $0xa] sm:$0x1] %vm4849, %v5691
        %5703 = vst.msk [vmem:[%s238 + $0x1a] sm:$0x1] %vm4849, %v5693
        %5704 = vst.msk [vmem:[%s238 + $0x2a] sm:$0x1] %vm4849, %v5695
        %5705 = vst.msk [vmem:[%s238 + $0x3a] sm:$0x1] %vm4849, %v5697
        %v5706 = vld [vmem:[#allocation2 + $0x8] sm:$0xf]
        %v5707 = vld [vmem:[%s214 + $0xb] sm:$0x1]
        %v5708 = vld [vmem:[%s214 + $0x1b] sm:$0x1]
        %v5709 = vld [vmem:[%s214 + $0x2b] sm:$0x1]
        %v5710 = vld [vmem:[%s214 + $0x3b] sm:$0x1]
        %v5715 = vrot.slane %v5708, 7
        %v5716 = vsel %vm254, %v5715, %v5707
        %v5717 = vsel %vm256, %v5715, %v5716
        %v5718 = vrot.slane %v5709, 6
        %v5719 = vsel %vm259, %v5718, %v5717
        %v5720 = vsel %vm261, %v5718, %v5719
        %v5721 = vrot.slane %v5710, 5
        %v5722 = vsel %vm264, %v5721, %v5720
        %v5723 = vsel %vm266, %v5721, %v5722
        %5724 = vrot.lane.b32.xlu0 %v5723, 55
        %v5725 = vpop.permute.xlu0 %5724
        %v5727 = vadd.f32 %v5706, %v5725
        %v5730 = vunpack.c.l.s4 1966171168
        %v5731 = vunpack.c.0.s8 %v5730
        %v5732 = vlaneseq
        %v5733 = vshrl.u32 %v5732, 7
        %v5734 = vsub.s32 %v5731, %v5733
        %v5735 = vrot.slane %v5727, %v5734
        %v5736 = vcombine.high %v5735, %v5735
        %v5738 = vunpack.c.l.s4 1966171168
        %v5739 = vunpack.c.0.s8 %v5738
        %v5740 = vlaneseq
        %v5741 = vshrl.u32 %v5740, 7
        %v5742 = vsub.s32 %v5739, %v5741
        %v5743 = vrot.slane %v5735, %v5742
        %v5745 = vunpack.c.l.s4 1966171168
        %v5746 = vunpack.c.0.s8 %v5745
        %v5747 = vlaneseq
        %v5748 = vshrl.u32 %v5747, 7
        %v5749 = vsub.s32 %v5746, %v5748
        %v5750 = vrot.slane %v5736, %v5749
        %v5751 = vcombine.high %v5743, %v5743
        %v5752 = vcombine.high %v5750, %v5750
        %v5753 = vlaneseq
        %v5754 = vshrl.u32 %v5753, 7
        %v5755 = vsub.s32 0, %v5754
        %v5756 = vrot.slane %v5743, %v5755
        %v5757 = vlaneseq
        %v5758 = vshrl.u32 %v5757, 7
        %v5759 = vsub.s32 0, %v5758
        %v5760 = vrot.slane %v5750, %v5759
        %v5761 = vlaneseq
        %v5762 = vshrl.u32 %v5761, 7
        %v5763 = vsub.s32 0, %v5762
        %v5764 = vrot.slane %v5751, %v5763
        %v5765 = vlaneseq
        %v5766 = vshrl.u32 %v5765, 7
        %v5767 = vsub.s32 0, %v5766
        %v5768 = vrot.slane %v5752, %v5767
        %5769 = vrot.lane.b32.xlu0 %v5756, 73
        %v5770 = vpop.permute.xlu0 %5769
        %5771 = vrot.lane.b32.xlu0 %v5760, 73
        %v5772 = vpop.permute.xlu0 %5771
        %5773 = vrot.lane.b32.xlu0 %v5764, 73
        %v5774 = vpop.permute.xlu0 %5773
        %5775 = vrot.lane.b32.xlu0 %v5768, 73
        %v5776 = vpop.permute.xlu0 %5775
        %5781 = vst.msk [vmem:[%s238 + $0xb] sm:$0x1] %vm4849, %v5770
        %5782 = vst.msk [vmem:[%s238 + $0x1b] sm:$0x1] %vm4849, %v5772
        %5783 = vst.msk [vmem:[%s238 + $0x2b] sm:$0x1] %vm4849, %v5774
        %5784 = vst.msk [vmem:[%s238 + $0x3b] sm:$0x1] %vm4849, %v5776
        %v5785 = vld [vmem:[#allocation2 + $0x8] sm:$0xf]
        %v5786 = vld [vmem:[%s214 + $0xc] sm:$0x1]
        %v5787 = vld [vmem:[%s214 + $0x1c] sm:$0x1]
        %v5788 = vld [vmem:[%s214 + $0x2c] sm:$0x1]
        %v5789 = vld [vmem:[%s214 + $0x3c] sm:$0x1]
        %v5794 = vrot.slane %v5787, 7
        %v5795 = vsel %vm254, %v5794, %v5786
        %v5796 = vsel %vm256, %v5794, %v5795
        %v5797 = vrot.slane %v5788, 6
        %v5798 = vsel %vm259, %v5797, %v5796
        %v5799 = vsel %vm261, %v5797, %v5798
        %v5800 = vrot.slane %v5789, 5
        %v5801 = vsel %vm264, %v5800, %v5799
        %v5802 = vsel %vm266, %v5800, %v5801
        %5803 = vrot.lane.b32.xlu0 %v5802, 77
        %v5804 = vpop.permute.xlu0 %5803
        %v5806 = vadd.f32 %v5785, %v5804
        %v5809 = vunpack.c.l.s4 1966171168
        %v5810 = vunpack.c.0.s8 %v5809
        %v5811 = vlaneseq
        %v5812 = vshrl.u32 %v5811, 7
        %v5813 = vsub.s32 %v5810, %v5812
        %v5814 = vrot.slane %v5806, %v5813
        %v5815 = vcombine.high %v5814, %v5814
        %v5817 = vunpack.c.l.s4 1966171168
        %v5818 = vunpack.c.0.s8 %v5817
        %v5819 = vlaneseq
        %v5820 = vshrl.u32 %v5819, 7
        %v5821 = vsub.s32 %v5818, %v5820
        %v5822 = vrot.slane %v5814, %v5821
        %v5824 = vunpack.c.l.s4 1966171168
        %v5825 = vunpack.c.0.s8 %v5824
        %v5826 = vlaneseq
        %v5827 = vshrl.u32 %v5826, 7
        %v5828 = vsub.s32 %v5825, %v5827
        %v5829 = vrot.slane %v5815, %v5828
        %v5830 = vcombine.high %v5822, %v5822
        %v5831 = vcombine.high %v5829, %v5829
        %v5832 = vlaneseq
        %v5833 = vshrl.u32 %v5832, 7
        %v5834 = vsub.s32 0, %v5833
        %v5835 = vrot.slane %v5822, %v5834
        %v5836 = vlaneseq
        %v5837 = vshrl.u32 %v5836, 7
        %v5838 = vsub.s32 0, %v5837
        %v5839 = vrot.slane %v5829, %v5838
        %v5840 = vlaneseq
        %v5841 = vshrl.u32 %v5840, 7
        %v5842 = vsub.s32 0, %v5841
        %v5843 = vrot.slane %v5830, %v5842
        %v5844 = vlaneseq
        %v5845 = vshrl.u32 %v5844, 7
        %v5846 = vsub.s32 0, %v5845
        %v5847 = vrot.slane %v5831, %v5846
        %5848 = vrot.lane.b32.xlu0 %v5835, 51
        %v5849 = vpop.permute.xlu0 %5848
        %5850 = vrot.lane.b32.xlu0 %v5839, 51
        %v5851 = vpop.permute.xlu0 %5850
        %5852 = vrot.lane.b32.xlu0 %v5843, 51
        %v5853 = vpop.permute.xlu0 %5852
        %5854 = vrot.lane.b32.xlu0 %v5847, 51
        %v5855 = vpop.permute.xlu0 %5854
        %5860 = vst.msk [vmem:[%s238 + $0xc] sm:$0x1] %vm4849, %v5849
        %5861 = vst.msk [vmem:[%s238 + $0x1c] sm:$0x1] %vm4849, %v5851
        %5862 = vst.msk [vmem:[%s238 + $0x2c] sm:$0x1] %vm4849, %v5853
        %5863 = vst.msk [vmem:[%s238 + $0x3c] sm:$0x1] %vm4849, %v5855
        %v5864 = vld [vmem:[#allocation2 + $0x8] sm:$0xf]
        %v5865 = vld [vmem:[%s214 + $0xd] sm:$0x1]
        %v5866 = vld [vmem:[%s214 + $0x1d] sm:$0x1]
        %v5867 = vld [vmem:[%s214 + $0x2d] sm:$0x1]
        %v5868 = vld [vmem:[%s214 + $0x3d] sm:$0x1]
        %v5873 = vrot.slane %v5866, 7
        %v5874 = vsel %vm254, %v5873, %v5865
        %v5875 = vsel %vm256, %v5873, %v5874
        %v5876 = vrot.slane %v5867, 6
        %v5877 = vsel %vm259, %v5876, %v5875
        %v5878 = vsel %vm261, %v5876, %v5877
        %v5879 = vrot.slane %v5868, 5
        %v5880 = vsel %vm264, %v5879, %v5878
        %v5881 = vsel %vm266, %v5879, %v5880
        %5882 = vrot.lane.b32.xlu0 %v5881, 99
        %v5883 = vpop.permute.xlu0 %5882
        %v5885 = vadd.f32 %v5864, %v5883
        %v5888 = vunpack.c.l.s4 1966171168
        %v5889 = vunpack.c.0.s8 %v5888
        %v5890 = vlaneseq
        %v5891 = vshrl.u32 %v5890, 7
        %v5892 = vsub.s32 %v5889, %v5891
        %v5893 = vrot.slane %v5885, %v5892
        %v5894 = vcombine.high %v5893, %v5893
        %v5896 = vunpack.c.l.s4 1966171168
        %v5897 = vunpack.c.0.s8 %v5896
        %v5898 = vlaneseq
        %v5899 = vshrl.u32 %v5898, 7
        %v5900 = vsub.s32 %v5897, %v5899
        %v5901 = vrot.slane %v5893, %v5900
        %v5903 = vunpack.c.l.s4 1966171168
        %v5904 = vunpack.c.0.s8 %v5903
        %v5905 = vlaneseq
        %v5906 = vshrl.u32 %v5905, 7
        %v5907 = vsub.s32 %v5904, %v5906
        %v5908 = vrot.slane %v5894, %v5907
        %v5909 = vcombine.high %v5901, %v5901
        %v5910 = vcombine.high %v5908, %v5908
        %v5911 = vlaneseq
        %v5912 = vshrl.u32 %v5911, 7
        %v5913 = vsub.s32 0, %v5912
        %v5914 = vrot.slane %v5901, %v5913
        %v5915 = vlaneseq
        %v5916 = vshrl.u32 %v5915, 7
        %v5917 = vsub.s32 0, %v5916
        %v5918 = vrot.slane %v5908, %v5917
        %v5919 = vlaneseq
        %v5920 = vshrl.u32 %v5919, 7
        %v5921 = vsub.s32 0, %v5920
        %v5922 = vrot.slane %v5909, %v5921
        %v5923 = vlaneseq
        %v5924 = vshrl.u32 %v5923, 7
        %v5925 = vsub.s32 0, %v5924
        %v5926 = vrot.slane %v5910, %v5925
        %5927 = vrot.lane.b32.xlu0 %v5914, 29
        %v5928 = vpop.permute.xlu0 %5927
        %5929 = vrot.lane.b32.xlu0 %v5918, 29
        %v5930 = vpop.permute.xlu0 %5929
        %5931 = vrot.lane.b32.xlu0 %v5922, 29
        %v5932 = vpop.permute.xlu0 %5931
        %5933 = vrot.lane.b32.xlu0 %v5926, 29
        %v5934 = vpop.permute.xlu0 %5933
        %5939 = vst.msk [vmem:[%s238 + $0xd] sm:$0x1] %vm4849, %v5928
        %5940 = vst.msk [vmem:[%s238 + $0x1d] sm:$0x1] %vm4849, %v5930
        %5941 = vst.msk [vmem:[%s238 + $0x2d] sm:$0x1] %vm4849, %v5932
        %5942 = vst.msk [vmem:[%s238 + $0x3d] sm:$0x1] %vm4849, %v5934
        %v5943 = vld [vmem:[#allocation2 + $0x8] sm:$0xff]
        %v5944 = vld [vmem:[%s214 + $0xe] sm:$0x1]
        %v5945 = vld [vmem:[%s214 + $0x1e] sm:$0x1]
        %v5946 = vld [vmem:[%s214 + $0x2e] sm:$0x1]
        %v5947 = vld [vmem:[%s214 + $0x3e] sm:$0x1]
        %v5952 = vrot.slane %v5945, 7
        %v5953 = vsel %vm254, %v5952, %v5944
        %v5954 = vsel %vm256, %v5952, %v5953
        %v5955 = vrot.slane %v5946, 6
        %v5956 = vsel %vm259, %v5955, %v5954
        %v5957 = vsel %vm261, %v5955, %v5956
        %v5958 = vrot.slane %v5947, 5
        %v5959 = vsel %vm264, %v5958, %v5957
        %v5960 = vsel %vm266, %v5958, %v5959
        %5961 = vrot.lane.b32.xlu0 %v5960, 121
        %v5962 = vpop.permute.xlu0 %5961
        %v5963 = vrot.slane %v5962, 4
        %v5964 = vsel %vm589, %v5963, %v5962
        %v5966 = vadd.f32 %v5943, %v5964
        %v5969 = vunpack.c.l.s4 1966171168
        %v5970 = vunpack.c.0.s8 %v5969
        %v5971 = vlaneseq
        %v5972 = vshrl.u32 %v5971, 7
        %v5973 = vsub.s32 %v5970, %v5972
        %v5974 = vrot.slane %v5966, %v5973
        %v5975 = vcombine.high %v5974, %v5974
        %v5977 = vunpack.c.l.s4 1966171168
        %v5978 = vunpack.c.0.s8 %v5977
        %v5979 = vlaneseq
        %v5980 = vshrl.u32 %v5979, 7
        %v5981 = vsub.s32 %v5978, %v5980
        %v5982 = vrot.slane %v5974, %v5981
        %v5984 = vunpack.c.l.s4 1966171168
        %v5985 = vunpack.c.0.s8 %v5984
        %v5986 = vlaneseq
        %v5987 = vshrl.u32 %v5986, 7
        %v5988 = vsub.s32 %v5985, %v5987
        %v5989 = vrot.slane %v5975, %v5988
        %v5990 = vcombine.high %v5982, %v5982
        %v5991 = vcombine.high %v5989, %v5989
        %v5992 = vlaneseq
        %v5993 = vshrl.u32 %v5992, 7
        %v5994 = vsub.s32 0, %v5993
        %v5995 = vrot.slane %v5982, %v5994
        %v5996 = vlaneseq
        %v5997 = vshrl.u32 %v5996, 7
        %v5998 = vsub.s32 1, %v5997
        %v5999 = vrot.slane %v5982, %v5998
        %v6000 = vlaneseq
        %v6001 = vshrl.u32 %v6000, 7
        %v6002 = vsub.s32 0, %v6001
        %v6003 = vrot.slane %v5989, %v6002
        %v6004 = vlaneseq
        %v6005 = vshrl.u32 %v6004, 7
        %v6006 = vsub.s32 1, %v6005
        %v6007 = vrot.slane %v5989, %v6006
        %v6008 = vlaneseq
        %v6009 = vshrl.u32 %v6008, 7
        %v6010 = vsub.s32 0, %v6009
        %v6011 = vrot.slane %v5990, %v6010
        %v6012 = vlaneseq
        %v6013 = vshrl.u32 %v6012, 7
        %v6014 = vsub.s32 1, %v6013
        %v6015 = vrot.slane %v5990, %v6014
        %v6016 = vlaneseq
        %v6017 = vshrl.u32 %v6016, 7
        %v6018 = vsub.s32 0, %v6017
        %v6019 = vrot.slane %v5991, %v6018
        %v6020 = vlaneseq
        %v6021 = vshrl.u32 %v6020, 7
        %v6022 = vsub.s32 1, %v6021
        %v6023 = vrot.slane %v5991, %v6022
        %6024 = vrot.lane.b32.xlu0 %v5995, 7
        %v6025 = vpop.permute.xlu0 %6024
        %6026 = vrot.lane.b32.xlu0 %v5999, 7
        %v6027 = vpop.permute.xlu0 %6026
        %6028 = vrot.lane.b32.xlu0 %v6003, 7
        %v6029 = vpop.permute.xlu0 %6028
        %6030 = vrot.lane.b32.xlu0 %v6007, 7
        %v6031 = vpop.permute.xlu0 %6030
        %6032 = vrot.lane.b32.xlu0 %v6011, 7
        %v6033 = vpop.permute.xlu0 %6032
        %6034 = vrot.lane.b32.xlu0 %v6015, 7
        %v6035 = vpop.permute.xlu0 %6034
        %6036 = vrot.lane.b32.xlu0 %v6019, 7
        %v6037 = vpop.permute.xlu0 %6036
        %6038 = vrot.lane.b32.xlu0 %v6023, 7
        %v6039 = vpop.permute.xlu0 %6038
        %vm6040 = vcmask 56320
        %v6041 = vsel %vm6040, %v6025, %v6027
        %v6042 = vsel %vm6040, %v6029, %v6031
        %v6043 = vsel %vm6040, %v6033, %v6035
        %v6044 = vsel %vm6040, %v6037, %v6039
        %6049 = vst.msk [vmem:[%s238 + $0xe] sm:$0x1] %vm4849, %v6041
        %6050 = vst.msk [vmem:[%s238 + $0x1e] sm:$0x1] %vm4849, %v6042
        %6051 = vst.msk [vmem:[%s238 + $0x2e] sm:$0x1] %vm4849, %v6043
        %6052 = vst.msk [vmem:[%s238 + $0x3e] sm:$0x1] %vm4849, %v6044
        %v6053 = vld [vmem:[#allocation2 + $0xc] sm:$0xf]
        %v6054 = vld [vmem:[%s214 + $0xf] sm:$0x1]
        %v6055 = vld [vmem:[%s214 + $0x1f] sm:$0x1]
        %v6056 = vld [vmem:[%s214 + $0x2f] sm:$0x1]
        %v6057 = vld [vmem:[%s214 + $0x3f] sm:$0x1]
        %v6062 = vrot.slane %v6055, 7
        %v6063 = vsel %vm254, %v6062, %v6054
        %v6064 = vsel %vm256, %v6062, %v6063
        %v6065 = vrot.slane %v6056, 6
        %v6066 = vsel %vm259, %v6065, %v6064
        %v6067 = vsel %vm261, %v6065, %v6066
        %v6068 = vrot.slane %v6057, 5
        %v6069 = vsel %vm264, %v6068, %v6067
        %v6070 = vsel %vm266, %v6068, %v6069
        %6071 = vrot.lane.b32.xlu0 %v6070, 15
        %v6072 = vpop.permute.xlu0 %6071
        %v6074 = vadd.f32 %v6053, %v6072
        %v6077 = vunpack.c.l.s4 1966171168
        %v6078 = vunpack.c.0.s8 %v6077
        %v6079 = vlaneseq
        %v6080 = vshrl.u32 %v6079, 7
        %v6081 = vsub.s32 %v6078, %v6080
        %v6082 = vrot.slane %v6074, %v6081
        %v6083 = vcombine.high %v6082, %v6082
        %v6085 = vunpack.c.l.s4 1966171168
        %v6086 = vunpack.c.0.s8 %v6085
        %v6087 = vlaneseq
        %v6088 = vshrl.u32 %v6087, 7
        %v6089 = vsub.s32 %v6086, %v6088
        %v6090 = vrot.slane %v6082, %v6089
        %v6092 = vunpack.c.l.s4 1966171168
        %v6093 = vunpack.c.0.s8 %v6092
        %v6094 = vlaneseq
        %v6095 = vshrl.u32 %v6094, 7
        %v6096 = vsub.s32 %v6093, %v6095
        %v6097 = vrot.slane %v6083, %v6096
        %v6098 = vcombine.high %v6090, %v6090
        %v6099 = vcombine.high %v6097, %v6097
        %v6100 = vlaneseq
        %v6101 = vshrl.u32 %v6100, 7
        %v6102 = vsub.s32 0, %v6101
        %v6103 = vrot.slane %v6090, %v6102
        %v6104 = vlaneseq
        %v6105 = vshrl.u32 %v6104, 7
        %v6106 = vsub.s32 0, %v6105
        %v6107 = vrot.slane %v6097, %v6106
        %v6108 = vlaneseq
        %v6109 = vshrl.u32 %v6108, 7
        %v6110 = vsub.s32 0, %v6109
        %v6111 = vrot.slane %v6098, %v6110
        %v6112 = vlaneseq
        %v6113 = vshrl.u32 %v6112, 7
        %v6114 = vsub.s32 0, %v6113
        %v6115 = vrot.slane %v6099, %v6114
        %6116 = vrot.lane.b32.xlu0 %v6103, 113
        %v6117 = vpop.permute.xlu0 %6116
        %6118 = vrot.lane.b32.xlu0 %v6107, 113
        %v6119 = vpop.permute.xlu0 %6118
        %6120 = vrot.lane.b32.xlu0 %v6111, 113
        %v6121 = vpop.permute.xlu0 %6120
        %6122 = vrot.lane.b32.xlu0 %v6115, 113
        %v6123 = vpop.permute.xlu0 %6122
        %6128 = vst.msk [vmem:[%s238 + $0xf] sm:$0x1] %vm4849, %v6117
        %6129 = vst.msk [vmem:[%s238 + $0x1f] sm:$0x1] %vm4849, %v6119
        %6130 = vst.msk [vmem:[%s238 + $0x2f] sm:$0x1] %vm4849, %v6121
        %6131 = vst.msk [vmem:[%s238 + $0x3f] sm:$0x1] %vm4849, %v6123
        %s6132 = sand.u32 %s117, 1
        %s6133 = scalar_lea.sflag [#allocation5], %s6132
        %s6134 = sand.u32 %s117, 1
        %s6135 = smul.addr %s6134, 64
        %s6136 = scalar_lea.vmem [#allocation9], %s6135
        // Predicated region
        $region49: #{tpu_custom_call.1} parent=35 // pred_check
          %p6137 = pneg %p127
        $region50: #{tpu_custom_call.1} parent=35 // pred_check_branch
          %6139 = sbr.rel (%p6137) target = $region52
        $region51: #{tpu_custom_call.1} parent=35 // pred_region
          %s6141 = ssub.s32 1024, 1024
          %6142 = vsyncadd %s6133, %s6141
          %s6143 = smul.addr %s20, 8
          %s6144 = smul.addr %s6143, 128
          %s6145 = scalar_lea.hbm %s4, %s6144
          %s6146 = sshll.u32 %s6136, 4
          %s6147 = int_to_ptr.vmem [resolvable:$true] %s6146
          %6152 = dma.vmem_to_hbm [thread:$0]  %s6147, 1024, %s6145, %s6133, 128, 128, 8
        $region52: #{tpu_custom_call.1} parent=35 // pred_fallthru
          _
      $region36: #{tpu_custom_call.1} parent=5 // pred_fallthru
        _
      %p6153 = scmp.le.s32.totalorder 2, %s15
      // Predicated region
      $region53: #{tpu_custom_call.1} parent=5 // pred_check
        %p6154 = pneg %p6153
      $region54: #{tpu_custom_call.1} parent=5 // pred_check_branch
        %6156 = sbr.rel (%p6154) target = $region56
      $region55: #{tpu_custom_call.1} parent=5 // pred_region
        %s6157 = ssub.s32 %s15, 2
        // Predicated region
        $region57: #{tpu_custom_call.1} parent=55 // pred_check
          %p6158 = pneg %p133
        $region58: #{tpu_custom_call.1} parent=55 // pred_check_branch
          %6160 = sbr.rel (%p6158) target = $region60
        $region59: #{tpu_custom_call.1} parent=55 // pred_region
          %s6161 = sand.u32 %s118, 1
          %s6162 = scalar_lea.sflag [#allocation5], %s6161
          %s6163 = sand.u32 %s118, 1
          %s6164 = smul.addr %s6163, 64
          %s6165 = scalar_lea.vmem [#allocation9], %s6164
          %6166 = dma.done %s6162, 1024
        $region60: #{tpu_custom_call.1} parent=55 // pred_fallthru
          _
      $region56: #{tpu_custom_call.1} parent=5 // pred_fallthru
        _
    $region6: #{tpu_custom_call.1} parent=1 // loop_footer
      %s19 = sadd.s32 1, %s15
    $region7: #{tpu_custom_call.1} parent=1 // loop_footer_branch
      %14 = sbr.rel target = $region3
    $region8: #{tpu_custom_call.1} parent=1 // loop_exit
      _
    %6167 = vsyncpa [#allocation4], 1
    %s6168 = scalar_lea.sflag [#allocation4], 1
    %6169 = vsyncpa %s6168, 1
    %6170 = vsyncpa [#allocation7], 1
    %6171 = vsyncpa [#allocation5], 1
    %s6172 = scalar_lea.sflag [#allocation5], 1
    %6173 = vsyncpa %s6172, 1

</llo_original>
